<compile_context>
chip_gen: v5e
topology: v5e:2x2
jax: 0.10.0
libtpu: 0.0.40
codegen_flags: <defaults>
</compile_context>

<pallas_src>
import functools

import jax
import jax.numpy as jnp
from jax.experimental import pallas as pl
from jax.experimental.pallas import tpu as pltpu


def _round_up(x, m):
    return (x + m - 1) // m * m


def _pick_tile(dim, tmax, align=128, even_blocks=False):
    """128-aligned tile <= tmax that balances blocks and minimizes padding.

    even_blocks=True forces an even block count (when >1) so the parallel N
    axis splits evenly across v7x's two TensorCores."""
    d = _round_up(dim, align)
    nblocks = -(-d // tmax)                      # ceil
    if even_blocks and nblocks > 1 and nblocks % 2:
        nblocks += 1
    return _round_up(-(-d // nblocks), align)


# ------------------------- model dims & static geometry -------------------- #

D_IN = 2176   # stands in for 22000
D_H = 512     # stands in for 2000
D_3 = 1280    # stands in for 5000

NH = _round_up(D_H, 128)   # lane-aligned half width for the fused fc21|fc22

TK_MAX = 2048              # up to 8 MiB bf16 weight tiles (per perf review)
TN_MAX = 2048


def _layer_geometry(fan_in, fan_out, tk_max=TK_MAX, tn_max=TN_MAX):
    tn = _pick_tile(fan_out, tn_max, even_blocks=True)   # parallel axis
    tk = _pick_tile(fan_in, tk_max)                       # reduction axis
    return {
        "k": fan_in, "n": fan_out, "tk": tk, "tn": tn,
        "kp": _round_up(fan_in, tk), "np": _round_up(fan_out, tn),
    }


GEOM = {
    "fc1": _layer_geometry(D_IN, D_H),
    "fc2": _layer_geometry(D_H, 2 * NH),   # fused fc21 | fc22
    "fc3": _layer_geometry(D_H, D_3),
    "fc4": _layer_geometry(D_3, D_IN),
}


# ----------------------------- Pallas kernel ------------------------------- #

def _linear_kernel(x_ref, w_ref, b_ref, o_ref, acc_ref, *, relu):
    """One (N-tile, K-tile) grid step of  out = relu?(x @ W + b).

    f32 accumulation lives in acc_ref (VMEM scratch); the output block is only
    written (and cast to its dtype, possibly bf16) in the last-K epilogue."""
    k = pl.program_id(1)

    @pl.when(k == 0)
    def _():
        acc_ref[...] = jnp.zeros_like(acc_ref)

    acc_ref[...] += jnp.dot(x_ref[...], w_ref[...],
                            preferred_element_type=jnp.float32)

    @pl.when(k == pl.num_programs(1) - 1)
    def _():
        out = acc_ref[...] + b_ref[...]
        if relu:
            out = jnp.maximum(out, 0.0)
        o_ref[...] = out.astype(o_ref.dtype)


def linear(x, w, b, g, *, relu=False, out_dtype=jnp.float32):
    """Fused Linear (+ optional ReLU) via pallas_call.

    x: (B, K) float; w: (Kp, Np) bf16 (pre-padded at init); b: (1, Np) f32.
    Returns (B, N) in out_dtype.  Zero-padded K rows / N cols give exact
    results; the padded N is sliced off the output (a tiny XLA slice)."""
    B = x.shape[0]
    assert x.shape[1] == g["k"], (x.shape, g["k"])
    Kp, Np, tk, tn = g["kp"], g["np"], g["tk"], g["tn"]
    assert w.shape == (Kp, Np), (w.shape, Kp, Np)
    assert b.shape == (1, Np), (b.shape, Np)

    x = x.astype(jnp.bfloat16)                 # bf16 streaming; f32 accumulate
    if Kp != g["k"]:
        # Activation pad only: B*Kp bf16 is a few hundred KB at most.
        x = jnp.pad(x, ((0, 0), (0, Kp - g["k"])))

    kernel = functools.partial(_linear_kernel, relu=relu)
    flops = 2 * B * Kp * Np
    bytes_accessed = (Kp * Np * 2                      # bf16 weights (dominant)
                      + B * Kp * 2                     # bf16 activations
                      + Np * 4                         # f32 bias
                      + B * Np * jnp.dtype(out_dtype).itemsize)

    out = pl.pallas_call(
        kernel,
        out_shape=jax.ShapeDtypeStruct((B, Np), out_dtype),
        grid_spec=pltpu.PrefetchScalarGridSpec(
            num_scalar_prefetch=0,
            grid=(Np // tn, Kp // tk),                       # reduction (K) last
            in_specs=[
                # Activation re-fetch per N-tile is <1.5% of the weight stream
                # at these dims, so keep the simple streamed spec; full VMEM
                # residency comes with the single-call fusion TODO above.
                pl.BlockSpec((B, tk), lambda j, k: (0, k)),   # bf16 activations
                pl.BlockSpec((tk, tn), lambda j, k: (k, j)),  # bf16 weights
                pl.BlockSpec((1, tn), lambda j, k: (0, j)),   # f32 bias
            ],
            out_specs=pl.BlockSpec((B, tn), lambda j, k: (0, j)),
            scratch_shapes=[pltpu.VMEM((B, tn), jnp.float32)],  # f32 accumulator
        ),
        compiler_params=pltpu.CompilerParams(
            dimension_semantics=("parallel", "arbitrary"),
            vmem_limit_bytes=48 * 1024 * 1024),
        cost_estimate=pl.CostEstimate(flops=flops, transcendentals=0,
                                      bytes_accessed=bytes_accessed),
    )(x, w, b)
    return out[:, :g["n"]] if Np != g["n"] else out


# ------------------------------- VAE model --------------------------------- #

def init_params(key):
    """PyTorch-style init U(-1/sqrt(fan_in), 1/sqrt(fan_in)); bf16 weights.

    Weights/biases are padded to their tiled (Kp, Np) shapes HERE, once, so the
    jitted forward never pads the big weight matrices."""
    def lin(key, fan_in, fan_out):
        kw, kb = jax.random.split(key)
        bound = 1.0 / jnp.sqrt(jnp.float32(fan_in))
        w = jax.random.uniform(kw, (fan_in, fan_out), jnp.float32, -bound, bound)
        b = jax.random.uniform(kb, (1, fan_out), jnp.float32, -bound, bound)
        return w.astype(jnp.bfloat16), b

    def pad_to(w, b, g):
        K, N = w.shape
        w = jnp.pad(w, ((0, g["kp"] - K), (0, g["np"] - N)))
        b = jnp.pad(b, ((0, 0), (0, g["np"] - N)))
        return w, b

    k1, k21, k22, k3, k4 = jax.random.split(key, 5)
    w1, b1 = lin(k1, D_IN, D_H)
    w21, b21 = lin(k21, D_H, D_H)
    w22, b22 = lin(k22, D_H, D_H)
    w3, b3 = lin(k3, D_H, D_3)
    w4, b4 = lin(k4, D_3, D_IN)

    # fc21 | fc22 fused along N -> one weight stream, one kernel launch.
    # Each half padded to NH (128-multiple) so the mu/logvar split is
    # lane-aligned (matters for the real D_H=2000 model).
    def pad_half(w, b):
        return (jnp.pad(w, ((0, 0), (0, NH - D_H))),
                jnp.pad(b, ((0, 0), (0, NH - D_H))))

    w21, b21 = pad_half(w21, b21)
    w22, b22 = pad_half(w22, b22)
    w2 = jnp.concatenate([w21, w22], axis=1)
    b2 = jnp.concatenate([b21, b22], axis=1)

    return {
        "fc1": pad_to(w1, b1, GEOM["fc1"]),
        "fc2": pad_to(w2, b2, GEOM["fc2"]),
        "fc3": pad_to(w3, b3, GEOM["fc3"]),
        "fc4": pad_to(w4, b4, GEOM["fc4"]),
    }


def vae_forward(params, x, *, training=False, eps=None):
    """Mirrors VAE.forward: returns (recon, mu, logvar)."""
    x = x.reshape(-1, D_IN)                                   # x.view(-1, 22000)

    # encode
    h1 = linear(x, *params["fc1"], GEOM["fc1"], relu=True,
                out_dtype=jnp.bfloat16)                       # F.relu(fc1(x))
    mu_lv = linear(h1, *params["fc2"], GEOM["fc2"])           # fused fc21 | fc22
    mu, logvar = mu_lv[:, :D_H], mu_lv[:, NH:NH + D_H]

    # reparameterize (elementwise glue in plain JAX; matmuls are the hot path)
    if training:
        std = jnp.exp(logvar)   # faithful to the PyTorch source: exp(logvar)
        z = eps * std + mu
    else:
        z = mu

    # decode
    h3 = linear(z, *params["fc3"], GEOM["fc3"], relu=True,
                out_dtype=jnp.bfloat16)                       # F.relu(fc3(z))
    recon = linear(h3, *params["fc4"], GEOM["fc4"])
    return recon, mu, logvar


# --------------------------------- main ------------------------------------ #

if __name__ == "__main__":
    key = jax.random.PRNGKey(0)
    kp, kx = jax.random.split(key)

    params = init_params(kp)
    batch = 2
    x = jax.random.normal(kx, (batch, D_IN), jnp.float32)

    # eval-mode forward (self.training == False -> z = mu)
    recon, mu, logvar = jax.jit(vae_forward)(params, x)
    jax.block_until_ready((recon, mu, logvar))

    # pure-JAX reference (same bf16 weight / activation quantization, same
    # padded-weight layout so only the kernel numerics differ)
    def ref_forward(params, x):
        def ref_linear(a, w, b, g, relu=False):
            a = a.astype(jnp.bfloat16).astype(jnp.float32)
            if a.shape[1] != g["kp"]:
                a = jnp.pad(a, ((0, 0), (0, g["kp"] - a.shape[1])))
            y = a @ w.astype(jnp.float32) + b
            if relu:
                y = jnp.maximum(y, 0.0)
            return y[:, :g["n"]]

        a = x.reshape(-1, D_IN)
        h1 = ref_linear(a, *params["fc1"], GEOM["fc1"],
                        relu=True).astype(jnp.bfloat16)
        mu_lv = ref_linear(h1, *params["fc2"], GEOM["fc2"])
        mu_r, lv_r = mu_lv[:, :D_H], mu_lv[:, NH:NH + D_H]
        h3 = ref_linear(mu_r, *params["fc3"], GEOM["fc3"],
                        relu=True).astype(jnp.bfloat16)
        recon_r = ref_linear(h3, *params["fc4"], GEOM["fc4"])
        return recon_r, mu_r, lv_r

    r_ref, mu_ref, lv_ref = ref_forward(params, x)
    assert recon.shape == (batch, D_IN) and mu.shape == (batch, D_H)
    assert logvar.shape == (batch, D_H)
    assert jnp.allclose(recon, r_ref, atol=2e-3, rtol=2e-3)
    assert jnp.allclose(mu, mu_ref, atol=2e-3, rtol=2e-3)
    assert jnp.allclose(logvar, lv_ref, atol=2e-3, rtol=2e-3)

    print("KERNEL_OK")
</pallas_src>

<mosaic_0001>
module attributes {stable_mosaic.version = 11 : i64} {
  func.func @_linear_kernel(%arg0: i32, %arg1: i32, %arg2: memref<2x1152xbf16, #tpu.memory_space<vmem>>, %arg3: memref<1152x512xbf16, #tpu.memory_space<vmem>>, %arg4: memref<1x512xf32, #tpu.memory_space<vmem>>, %arg5: memref<2x512xbf16, #tpu.memory_space<vmem>>, %arg6: memref<2x512xf32, #tpu.memory_space<vmem>>) attributes {dimension_semantics = [#tpu.dimension_semantics<parallel>, #tpu.dimension_semantics<arbitrary>], iteration_bounds = array<i64: 1, 2>, scalar_prefetch = 0 : i64, scratch_operands = 1 : i64, tpu.core_type = #tpu.core_type<tc>, window_params = [{transform_indices = @transform_0, window_bounds = array<i64: 2, 1152>}, {transform_indices = @transform_1, window_bounds = array<i64: 1152, 512>}, {transform_indices = @transform_2, window_bounds = array<i64: 1, 512>}, {transform_indices = @transform_3, window_bounds = array<i64: 2, 512>}]} {
    %c0_i32 = arith.constant 0 : i32
    %0 = arith.cmpi eq, %arg1, %c0_i32 : i32
    %1 = arith.extui %0 : i1 to i32
    %c0_i32_0 = arith.constant 0 : i32
    %2 = arith.cmpi ne, %1, %c0_i32_0 : i32
    scf.if %2 {
      %cst_9 = arith.constant 0.000000e+00 : f32
      %12 = vector.broadcast %cst_9 : f32 to vector<2x512xf32>
      %c0_10 = arith.constant 0 : index
      %c0_11 = arith.constant 0 : index
      %13 = vector.load %arg6[%c0_10, %c0_11] : memref<2x512xf32, #tpu.memory_space<vmem>>, vector<2x512xf32>
      tpu.vector_store %arg6[%c0_10, %c0_11], %12 {strides = array<i32>} : memref<2x512xf32, #tpu.memory_space<vmem>>, vector<2x512xf32>,
    } else {
    }
    %c0 = arith.constant 0 : index
    %c0_1 = arith.constant 0 : index
    %3 = vector.load %arg6[%c0, %c0_1] : memref<2x512xf32, #tpu.memory_space<vmem>>, vector<2x512xf32>
    %c0_2 = arith.constant 0 : index
    %c0_3 = arith.constant 0 : index
    %4 = vector.load %arg2[%c0_2, %c0_3] : memref<2x1152xbf16, #tpu.memory_space<vmem>>, vector<2x1152xbf16>
    %c0_4 = arith.constant 0 : index
    %c0_5 = arith.constant 0 : index
    %5 = vector.load %arg3[%c0_4, %c0_5] : memref<1152x512xbf16, #tpu.memory_space<vmem>>, vector<1152x512xbf16>
    %cst = arith.constant dense<0.000000e+00> : vector<2x512xf32>
    %6 = tpu.matmul %4, %5, %cst {dimension_numbers = #tpu.dot_dimension_numbers<[1], [0], [0], [1], [0, 0, 1, 1], [], []>} : vector<2x1152xbf16>, vector<1152x512xbf16>, vector<2x512xf32> -> vector<2x512xf32>
    %7 = arith.addf %3, %6 : vector<2x512xf32>
    %c0_6 = arith.constant 0 : index
    %c0_7 = arith.constant 0 : index
    %8 = vector.load %arg6[%c0_6, %c0_7] : memref<2x512xf32, #tpu.memory_space<vmem>>, vector<2x512xf32>
    tpu.vector_store %arg6[%c0_6, %c0_7], %7 {strides = array<i32>} : memref<2x512xf32, #tpu.memory_space<vmem>>, vector<2x512xf32>,
    %c1_i32 = arith.constant 1 : i32
    %9 = arith.cmpi eq, %arg1, %c1_i32 : i32
    %10 = arith.extui %9 : i1 to i32
    %c0_i32_8 = arith.constant 0 : i32
    %11 = arith.cmpi ne, %10, %c0_i32_8 : i32
    scf.if %11 {
      %c0_9 = arith.constant 0 : index
      %c0_10 = arith.constant 0 : index
      %12 = vector.load %arg6[%c0_9, %c0_10] : memref<2x512xf32, #tpu.memory_space<vmem>>, vector<2x512xf32>
      %c0_11 = arith.constant 0 : index
      %c0_12 = arith.constant 0 : index
      %13 = vector.load %arg4[%c0_11, %c0_12] : memref<1x512xf32, #tpu.memory_space<vmem>>, vector<1x512xf32>
      %14 = vector.broadcast %13 : vector<1x512xf32> to vector<2x512xf32>
      %15 = arith.addf %12, %14 : vector<2x512xf32>
      %cst_13 = arith.constant 0.000000e+00 : f32
      %16 = vector.broadcast %cst_13 : f32 to vector<2x512xf32>
      %17 = arith.maximumf %15, %16 : vector<2x512xf32>
      %18 = arith.truncf %17 : vector<2x512xf32> to vector<2x512xbf16>
      %c0_14 = arith.constant 0 : index
      %c0_15 = arith.constant 0 : index
      %19 = vector.load %arg5[%c0_14, %c0_15] : memref<2x512xbf16, #tpu.memory_space<vmem>>, vector<2x512xbf16>
      tpu.vector_store %arg5[%c0_14, %c0_15], %18 {strides = array<i32>} : memref<2x512xbf16, #tpu.memory_space<vmem>>, vector<2x512xbf16>,
    } else {
    }
    return
  }
  func.func @transform_0(%arg0: i32, %arg1: i32) -> (i32, i32) {
    %c0_i32 = arith.constant 0 : i32
    %c0_i32_0 = arith.constant 0 : i32
    return %c0_i32, %arg1 : i32, i32
  }
  func.func @transform_1(%arg0: i32, %arg1: i32) -> (i32, i32) {
    %c0_i32 = arith.constant 0 : i32
    return %arg1, %arg0 : i32, i32
  }
  func.func @transform_2(%arg0: i32, %arg1: i32) -> (i32, i32) {
    %c0_i32 = arith.constant 0 : i32
    %c0_i32_0 = arith.constant 0 : i32
    return %c0_i32, %arg0 : i32, i32
  }
  func.func @transform_3(%arg0: i32, %arg1: i32) -> (i32, i32) {
    %c0_i32 = arith.constant 0 : i32
    %c0_i32_0 = arith.constant 0 : i32
    return %c0_i32, %arg0 : i32, i32
  }
}

module attributes {stable_mosaic.version = 11 : i64} {
  func.func @_linear_kernel(%arg0: i32, %arg1: i32, %arg2: memref<2x512xbf16, #tpu.memory_space<vmem>>, %arg3: memref<512x1024xbf16, #tpu.memory_space<vmem>>, %arg4: memref<1x1024xf32, #tpu.memory_space<vmem>>, %arg5: memref<2x1024xf32, #tpu.memory_space<vmem>>, %arg6: memref<2x1024xf32, #tpu.memory_space<vmem>>) attributes {dimension_semantics = [#tpu.dimension_semantics<parallel>, #tpu.dimension_semantics<arbitrary>], iteration_bounds = array<i64: 1, 1>, scalar_prefetch = 0 : i64, scratch_operands = 1 : i64, tpu.core_type = #tpu.core_type<tc>, window_params = [{transform_indices = @transform_0, window_bounds = array<i64: 2, 512>}, {transform_indices = @transform_1, window_bounds = array<i64: 512, 1024>}, {transform_indices = @transform_2, window_bounds = array<i64: 1, 1024>}, {transform_indices = @transform_3, window_bounds = array<i64: 2, 1024>}]} {
    %c0_i32 = arith.constant 0 : i32
    %0 = arith.cmpi eq, %arg1, %c0_i32 : i32
    %1 = arith.extui %0 : i1 to i32
    %c0_i32_0 = arith.constant 0 : i32
    %2 = arith.cmpi ne, %1, %c0_i32_0 : i32
    scf.if %2 {
      %cst_10 = arith.constant 0.000000e+00 : f32
      %12 = vector.broadcast %cst_10 : f32 to vector<2x1024xf32>
      %c0_11 = arith.constant 0 : index
      %c0_12 = arith.constant 0 : index
      %13 = vector.load %arg6[%c0_11, %c0_12] : memref<2x1024xf32, #tpu.memory_space<vmem>>, vector<2x1024xf32>
      tpu.vector_store %arg6[%c0_11, %c0_12], %12 {strides = array<i32>} : memref<2x1024xf32, #tpu.memory_space<vmem>>, vector<2x1024xf32>,
    } else {
    }
    %c0 = arith.constant 0 : index
    %c0_1 = arith.constant 0 : index
    %3 = vector.load %arg6[%c0, %c0_1] : memref<2x1024xf32, #tpu.memory_space<vmem>>, vector<2x1024xf32>
    %c0_2 = arith.constant 0 : index
    %c0_3 = arith.constant 0 : index
    %4 = vector.load %arg2[%c0_2, %c0_3] : memref<2x512xbf16, #tpu.memory_space<vmem>>, vector<2x512xbf16>
    %c0_4 = arith.constant 0 : index
    %c0_5 = arith.constant 0 : index
    %5 = vector.load %arg3[%c0_4, %c0_5] : memref<512x1024xbf16, #tpu.memory_space<vmem>>, vector<512x1024xbf16>
    %cst = arith.constant dense<0.000000e+00> : vector<2x1024xf32>
    %6 = tpu.matmul %4, %5, %cst {dimension_numbers = #tpu.dot_dimension_numbers<[1], [0], [0], [1], [0, 0, 1, 1], [], []>} : vector<2x512xbf16>, vector<512x1024xbf16>, vector<2x1024xf32> -> vector<2x1024xf32>
    %7 = arith.addf %3, %6 : vector<2x1024xf32>
    %c0_6 = arith.constant 0 : index
    %c0_7 = arith.constant 0 : index
    %8 = vector.load %arg6[%c0_6, %c0_7] : memref<2x1024xf32, #tpu.memory_space<vmem>>, vector<2x1024xf32>
    tpu.vector_store %arg6[%c0_6, %c0_7], %7 {strides = array<i32>} : memref<2x1024xf32, #tpu.memory_space<vmem>>, vector<2x1024xf32>,
    %c0_i32_8 = arith.constant 0 : i32
    %9 = arith.cmpi eq, %arg1, %c0_i32_8 : i32
    %10 = arith.extui %9 : i1 to i32
    %c0_i32_9 = arith.constant 0 : i32
    %11 = arith.cmpi ne, %10, %c0_i32_9 : i32
    scf.if %11 {
      %c0_10 = arith.constant 0 : index
      %c0_11 = arith.constant 0 : index
      %12 = vector.load %arg6[%c0_10, %c0_11] : memref<2x1024xf32, #tpu.memory_space<vmem>>, vector<2x1024xf32>
      %c0_12 = arith.constant 0 : index
      %c0_13 = arith.constant 0 : index
      %13 = vector.load %arg4[%c0_12, %c0_13] : memref<1x1024xf32, #tpu.memory_space<vmem>>, vector<1x1024xf32>
      %14 = vector.broadcast %13 : vector<1x1024xf32> to vector<2x1024xf32>
      %15 = arith.addf %12, %14 : vector<2x1024xf32>
      %c0_14 = arith.constant 0 : index
      %c0_15 = arith.constant 0 : index
      %16 = vector.load %arg5[%c0_14, %c0_15] : memref<2x1024xf32, #tpu.memory_space<vmem>>, vector<2x1024xf32>
      tpu.vector_store %arg5[%c0_14, %c0_15], %15 {strides = array<i32>} : memref<2x1024xf32, #tpu.memory_space<vmem>>, vector<2x1024xf32>,
    } else {
    }
    return
  }
  func.func @transform_0(%arg0: i32, %arg1: i32) -> (i32, i32) {
    %c0_i32 = arith.constant 0 : i32
    %c0_i32_0 = arith.constant 0 : i32
    return %c0_i32, %arg1 : i32, i32
  }
  func.func @transform_1(%arg0: i32, %arg1: i32) -> (i32, i32) {
    %c0_i32 = arith.constant 0 : i32
    return %arg1, %arg0 : i32, i32
  }
  func.func @transform_2(%arg0: i32, %arg1: i32) -> (i32, i32) {
    %c0_i32 = arith.constant 0 : i32
    %c0_i32_0 = arith.constant 0 : i32
    return %c0_i32, %arg0 : i32, i32
  }
  func.func @transform_3(%arg0: i32, %arg1: i32) -> (i32, i32) {
    %c0_i32 = arith.constant 0 : i32
    %c0_i32_0 = arith.constant 0 : i32
    return %c0_i32, %arg0 : i32, i32
  }
}

module attributes {stable_mosaic.version = 11 : i64} {
  func.func @_linear_kernel(%arg0: i32, %arg1: i32, %arg2: memref<2x512xbf16, #tpu.memory_space<vmem>>, %arg3: memref<512x1280xbf16, #tpu.memory_space<vmem>>, %arg4: memref<1x1280xf32, #tpu.memory_space<vmem>>, %arg5: memref<2x1280xbf16, #tpu.memory_space<vmem>>, %arg6: memref<2x1280xf32, #tpu.memory_space<vmem>>) attributes {dimension_semantics = [#tpu.dimension_semantics<parallel>, #tpu.dimension_semantics<arbitrary>], iteration_bounds = array<i64: 1, 1>, scalar_prefetch = 0 : i64, scratch_operands = 1 : i64, tpu.core_type = #tpu.core_type<tc>, window_params = [{transform_indices = @transform_0, window_bounds = array<i64: 2, 512>}, {transform_indices = @transform_1, window_bounds = array<i64: 512, 1280>}, {transform_indices = @transform_2, window_bounds = array<i64: 1, 1280>}, {transform_indices = @transform_3, window_bounds = array<i64: 2, 1280>}]} {
    %c0_i32 = arith.constant 0 : i32
    %0 = arith.cmpi eq, %arg1, %c0_i32 : i32
    %1 = arith.extui %0 : i1 to i32
    %c0_i32_0 = arith.constant 0 : i32
    %2 = arith.cmpi ne, %1, %c0_i32_0 : i32
    scf.if %2 {
      %cst_10 = arith.constant 0.000000e+00 : f32
      %12 = vector.broadcast %cst_10 : f32 to vector<2x1280xf32>
      %c0_11 = arith.constant 0 : index
      %c0_12 = arith.constant 0 : index
      %13 = vector.load %arg6[%c0_11, %c0_12] : memref<2x1280xf32, #tpu.memory_space<vmem>>, vector<2x1280xf32>
      tpu.vector_store %arg6[%c0_11, %c0_12], %12 {strides = array<i32>} : memref<2x1280xf32, #tpu.memory_space<vmem>>, vector<2x1280xf32>,
    } else {
    }
    %c0 = arith.constant 0 : index
    %c0_1 = arith.constant 0 : index
    %3 = vector.load %arg6[%c0, %c0_1] : memref<2x1280xf32, #tpu.memory_space<vmem>>, vector<2x1280xf32>
    %c0_2 = arith.constant 0 : index
    %c0_3 = arith.constant 0 : index
    %4 = vector.load %arg2[%c0_2, %c0_3] : memref<2x512xbf16, #tpu.memory_space<vmem>>, vector<2x512xbf16>
    %c0_4 = arith.constant 0 : index
    %c0_5 = arith.constant 0 : index
    %5 = vector.load %arg3[%c0_4, %c0_5] : memref<512x1280xbf16, #tpu.memory_space<vmem>>, vector<512x1280xbf16>
    %cst = arith.constant dense<0.000000e+00> : vector<2x1280xf32>
    %6 = tpu.matmul %4, %5, %cst {dimension_numbers = #tpu.dot_dimension_numbers<[1], [0], [0], [1], [0, 0, 1, 1], [], []>} : vector<2x512xbf16>, vector<512x1280xbf16>, vector<2x1280xf32> -> vector<2x1280xf32>
    %7 = arith.addf %3, %6 : vector<2x1280xf32>
    %c0_6 = arith.constant 0 : index
    %c0_7 = arith.constant 0 : index
    %8 = vector.load %arg6[%c0_6, %c0_7] : memref<2x1280xf32, #tpu.memory_space<vmem>>, vector<2x1280xf32>
    tpu.vector_store %arg6[%c0_6, %c0_7], %7 {strides = array<i32>} : memref<2x1280xf32, #tpu.memory_space<vmem>>, vector<2x1280xf32>,
    %c0_i32_8 = arith.constant 0 : i32
    %9 = arith.cmpi eq, %arg1, %c0_i32_8 : i32
    %10 = arith.extui %9 : i1 to i32
    %c0_i32_9 = arith.constant 0 : i32
    %11 = arith.cmpi ne, %10, %c0_i32_9 : i32
    scf.if %11 {
      %c0_10 = arith.constant 0 : index
      %c0_11 = arith.constant 0 : index
      %12 = vector.load %arg6[%c0_10, %c0_11] : memref<2x1280xf32, #tpu.memory_space<vmem>>, vector<2x1280xf32>
      %c0_12 = arith.constant 0 : index
      %c0_13 = arith.constant 0 : index
      %13 = vector.load %arg4[%c0_12, %c0_13] : memref<1x1280xf32, #tpu.memory_space<vmem>>, vector<1x1280xf32>
      %14 = vector.broadcast %13 : vector<1x1280xf32> to vector<2x1280xf32>
      %15 = arith.addf %12, %14 : vector<2x1280xf32>
      %cst_14 = arith.constant 0.000000e+00 : f32
      %16 = vector.broadcast %cst_14 : f32 to vector<2x1280xf32>
      %17 = arith.maximumf %15, %16 : vector<2x1280xf32>
      %18 = arith.truncf %17 : vector<2x1280xf32> to vector<2x1280xbf16>
      %c0_15 = arith.constant 0 : index
      %c0_16 = arith.constant 0 : index
      %19 = vector.load %arg5[%c0_15, %c0_16] : memref<2x1280xbf16, #tpu.memory_space<vmem>>, vector<2x1280xbf16>
      tpu.vector_store %arg5[%c0_15, %c0_16], %18 {strides = array<i32>} : memref<2x1280xbf16, #tpu.memory_space<vmem>>, vector<2x1280xbf16>,
    } else {
    }
    return
  }
  func.func @transform_0(%arg0: i32, %arg1: i32) -> (i32, i32) {
    %c0_i32 = arith.constant 0 : i32
    %c0_i32_0 = arith.constant 0 : i32
    return %c0_i32, %arg1 : i32, i32
  }
  func.func @transform_1(%arg0: i32, %arg1: i32) -> (i32, i32) {
    %c0_i32 = arith.constant 0 : i32
    return %arg1, %arg0 : i32, i32
  }
  func.func @transform_2(%arg0: i32, %arg1: i32) -> (i32, i32) {
    %c0_i32 = arith.constant 0 : i32
    %c0_i32_0 = arith.constant 0 : i32
    return %c0_i32, %arg0 : i32, i32
  }
  func.func @transform_3(%arg0: i32, %arg1: i32) -> (i32, i32) {
    %c0_i32 = arith.constant 0 : i32
    %c0_i32_0 = arith.constant 0 : i32
    return %c0_i32, %arg0 : i32, i32
  }
}

module attributes {stable_mosaic.version = 11 : i64} {
  func.func @_linear_kernel(%arg0: i32, %arg1: i32, %arg2: memref<2x1280xbf16, #tpu.memory_space<vmem>>, %arg3: memref<1280x1152xbf16, #tpu.memory_space<vmem>>, %arg4: memref<1x1152xf32, #tpu.memory_space<vmem>>, %arg5: memref<2x1152xf32, #tpu.memory_space<vmem>>, %arg6: memref<2x1152xf32, #tpu.memory_space<vmem>>) attributes {dimension_semantics = [#tpu.dimension_semantics<parallel>, #tpu.dimension_semantics<arbitrary>], iteration_bounds = array<i64: 2, 1>, scalar_prefetch = 0 : i64, scratch_operands = 1 : i64, tpu.core_type = #tpu.core_type<tc>, window_params = [{transform_indices = @transform_0, window_bounds = array<i64: 2, 1280>}, {transform_indices = @transform_1, window_bounds = array<i64: 1280, 1152>}, {transform_indices = @transform_2, window_bounds = array<i64: 1, 1152>}, {transform_indices = @transform_3, window_bounds = array<i64: 2, 1152>}]} {
    %c0_i32 = arith.constant 0 : i32
    %0 = arith.cmpi eq, %arg1, %c0_i32 : i32
    %1 = arith.extui %0 : i1 to i32
    %c0_i32_0 = arith.constant 0 : i32
    %2 = arith.cmpi ne, %1, %c0_i32_0 : i32
    scf.if %2 {
      %cst_10 = arith.constant 0.000000e+00 : f32
      %12 = vector.broadcast %cst_10 : f32 to vector<2x1152xf32>
      %c0_11 = arith.constant 0 : index
      %c0_12 = arith.constant 0 : index
      %13 = vector.load %arg6[%c0_11, %c0_12] : memref<2x1152xf32, #tpu.memory_space<vmem>>, vector<2x1152xf32>
      tpu.vector_store %arg6[%c0_11, %c0_12], %12 {strides = array<i32>} : memref<2x1152xf32, #tpu.memory_space<vmem>>, vector<2x1152xf32>,
    } else {
    }
    %c0 = arith.constant 0 : index
    %c0_1 = arith.constant 0 : index
    %3 = vector.load %arg6[%c0, %c0_1] : memref<2x1152xf32, #tpu.memory_space<vmem>>, vector<2x1152xf32>
    %c0_2 = arith.constant 0 : index
    %c0_3 = arith.constant 0 : index
    %4 = vector.load %arg2[%c0_2, %c0_3] : memref<2x1280xbf16, #tpu.memory_space<vmem>>, vector<2x1280xbf16>
    %c0_4 = arith.constant 0 : index
    %c0_5 = arith.constant 0 : index
    %5 = vector.load %arg3[%c0_4, %c0_5] : memref<1280x1152xbf16, #tpu.memory_space<vmem>>, vector<1280x1152xbf16>
    %cst = arith.constant dense<0.000000e+00> : vector<2x1152xf32>
    %6 = tpu.matmul %4, %5, %cst {dimension_numbers = #tpu.dot_dimension_numbers<[1], [0], [0], [1], [0, 0, 1, 1], [], []>} : vector<2x1280xbf16>, vector<1280x1152xbf16>, vector<2x1152xf32> -> vector<2x1152xf32>
    %7 = arith.addf %3, %6 : vector<2x1152xf32>
    %c0_6 = arith.constant 0 : index
    %c0_7 = arith.constant 0 : index
    %8 = vector.load %arg6[%c0_6, %c0_7] : memref<2x1152xf32, #tpu.memory_space<vmem>>, vector<2x1152xf32>
    tpu.vector_store %arg6[%c0_6, %c0_7], %7 {strides = array<i32>} : memref<2x1152xf32, #tpu.memory_space<vmem>>, vector<2x1152xf32>,
    %c0_i32_8 = arith.constant 0 : i32
    %9 = arith.cmpi eq, %arg1, %c0_i32_8 : i32
    %10 = arith.extui %9 : i1 to i32
    %c0_i32_9 = arith.constant 0 : i32
    %11 = arith.cmpi ne, %10, %c0_i32_9 : i32
    scf.if %11 {
      %c0_10 = arith.constant 0 : index
      %c0_11 = arith.constant 0 : index
      %12 = vector.load %arg6[%c0_10, %c0_11] : memref<2x1152xf32, #tpu.memory_space<vmem>>, vector<2x1152xf32>
      %c0_12 = arith.constant 0 : index
      %c0_13 = arith.constant 0 : index
      %13 = vector.load %arg4[%c0_12, %c0_13] : memref<1x1152xf32, #tpu.memory_space<vmem>>, vector<1x1152xf32>
      %14 = vector.broadcast %13 : vector<1x1152xf32> to vector<2x1152xf32>
      %15 = arith.addf %12, %14 : vector<2x1152xf32>
      %c0_14 = arith.constant 0 : index
      %c0_15 = arith.constant 0 : index
      %16 = vector.load %arg5[%c0_14, %c0_15] : memref<2x1152xf32, #tpu.memory_space<vmem>>, vector<2x1152xf32>
      tpu.vector_store %arg5[%c0_14, %c0_15], %15 {strides = array<i32>} : memref<2x1152xf32, #tpu.memory_space<vmem>>, vector<2x1152xf32>,
    } else {
    }
    return
  }
  func.func @transform_0(%arg0: i32, %arg1: i32) -> (i32, i32) {
    %c0_i32 = arith.constant 0 : i32
    %c0_i32_0 = arith.constant 0 : i32
    return %c0_i32, %arg1 : i32, i32
  }
  func.func @transform_1(%arg0: i32, %arg1: i32) -> (i32, i32) {
    %c0_i32 = arith.constant 0 : i32
    return %arg1, %arg0 : i32, i32
  }
  func.func @transform_2(%arg0: i32, %arg1: i32) -> (i32, i32) {
    %c0_i32 = arith.constant 0 : i32
    %c0_i32_0 = arith.constant 0 : i32
    return %c0_i32, %arg0 : i32, i32
  }
  func.func @transform_3(%arg0: i32, %arg1: i32) -> (i32, i32) {
    %c0_i32 = arith.constant 0 : i32
    %c0_i32_0 = arith.constant 0 : i32
    return %c0_i32, %arg0 : i32, i32
  }
}

</mosaic_0001>

<llo_original>
// kernel: vae_forward.4
$region0: #{vae_forward.4}
  #allocation0 [shape = 'u32[]', space=smem, size = 0x4, offset = 0x4, fixed_abs, tag = 'smem constant byte address 0x4 - core index']
  #allocation1 [shape = 'u32[72,128]{1,0:T(1,128)}', space=vmem, size = 0x9000, scoped, tag = 'internal scratch']
  #allocation2 [shape = 'f32[2,512]{1,0:T(2,128)}', space=vmem, size = 0x1000, scoped, tag = 'scratch operand']
  %s0 = inlined_call_operand.vmem [shape: bf16[2,2304], index: 0, kind: input, shape index: {}]
  %s1 = inlined_call_operand.hbm [shape: bf16[2304,512], index: 1, kind: input, shape index: {}]
  %s2 = inlined_call_operand.hbm [shape: f32[1,512], index: 2, kind: input, shape index: {}]
  %s3 = inlined_call_operand.vmem [shape: bf16[2,512], index: 3, kind: output, shape index: {}]
  %s4 = sld [smem:[#allocation0]]
  $region61: #{vae_forward.4} parent=0
    _
  %s6 = ssub.s32 1, %s4
  %s7 = scalar_select 0, %s6, %s4
  $region1: #{vae_forward.4} parent=0
    #allocation3 [shape = 'u8[2359296]{0}', space=vmem, size = 0x240000, scoped, tag = 'input window, operand 1']
    #allocation4 [shape = 's32[2]{0}', space=sflag, size = 0x8, scoped, tag = 'scoped memory for vae_forward.4']
    #allocation5 [shape = 'u8[2048]{0}', space=vmem, size = 0x800, scoped, tag = 'input window, operand 2, single buffered']
    #allocation6 [shape = 's32[1]{0}', space=sflag, size = 0x4, scoped, tag = 'scoped memory for vae_forward.4']
    %8 = vsyncpa [#allocation4], 0
    %s9 = scalar_lea.sflag [#allocation4], 1
    %10 = vsyncpa %s9, 0
    %11 = vsyncpa [#allocation6], 0
    loop: start=0, step=1, limit=4
    $region2: #{vae_forward.4} parent=1 // loop_pre_header
      _
    $region3: #{vae_forward.4} parent=1 // loop_header
      %s13 = sphi 0, %s17
      %p14 = scmp.ge.s32.totalorder %s13, 4
      %s20 = sphi 0, %s32
      %s21 = sphi 0, %s28
      %s22 = sphi 0, %s20
      %s23 = sphi 0, %s21
      %s24 = sphi 0, %s22
      %s25 = sphi 0, %s23
      %s35 = sphi 0, %s37
      %s38 = sphi 0, %s35
      %s39 = sphi 0, %s38
      %s55 = sphi 0, %s39
      %s63 = sphi 0, %s65
      %s66 = sphi 0, %s63
      %s67 = sphi 0, %s66
      %s83 = sphi 0, %s67
      %s89 = sphi 0, %s91
      %s92 = sphi 0, %s89
      %s93 = sphi 0, %s92
      %s109 = sphi 0, %s93
      %s115 = sphi 0, %s117
      %s118 = sphi 0, %s115
      %s119 = sphi 0, %s118
      %s135 = sphi 0, %s119
    $region4: #{vae_forward.4} parent=1 // loop_header_branch
      %16 = sbr.rel (%p14) target = $region8
    $region5: #{vae_forward.4} parent=1 // loop_body
      %s18 = ssub.s32 %s13, 1
      %s19 = ssub.s32 %s13, 2
      %s26 = sadd.s32 1, %s21
      %p27 = scmp.ge.s32.totalorder %s26, 2
      %s28 = scalar_select %p27, 0, %s26
      %s29 = sadd.s32 1, %s20
      %s30 = scalar_select %p27, %s29, %s20
      %p31 = scmp.ge.s32.totalorder %s30, 1
      %s32 = scalar_select %p31, 0, %s30
      %s33 = ssub.s32 %s21, %s28
      %p34 = scmp.eq.s32.totalorder %s33, 0
      %s36 = sadd.s32 %s35, 1
      %s37 = scalar_select %p34, %s35, %s36
      %p40 = pneg %p34
      %p41 = scmp.eq.s32.totalorder %s13, 1
      %p42 = por %p40, %p41
      %p43 = scmp.ne.s32.totalorder %s35, %s38
      %p44 = scmp.eq.s32.totalorder %s13, 0
      %p45 = por %p43, %p44
      %p46 = scmp.ne.s32.totalorder %s35, %s38
      %p47 = scmp.eq.s32.totalorder %s18, 1
      %p48 = por %p46, %p47
      %p49 = scmp.ne.s32.totalorder %s38, %s39
      %p50 = scmp.eq.s32.totalorder %s18, 0
      %p51 = por %p49, %p50
      %p52 = scmp.ne.s32.totalorder %s38, %s39
      %p53 = scmp.eq.s32.totalorder %s19, 1
      %p54 = por %p52, %p53
      %p56 = scmp.ne.s32.totalorder %s39, %s55
      %p57 = scmp.eq.s32.totalorder %s19, 0
      %p58 = por %p56, %p57
      %s59 = ssub.s32 %s21, %s28
      %s60 = ssub.s32 %s20, %s32
      %s61 = sor.u32 %s59, %s60
      %p62 = scmp.eq.s32.totalorder %s61, 0
      %s64 = sadd.s32 %s63, 1
      %s65 = scalar_select %p62, %s63, %s64
      %p68 = pneg %p62
      %p69 = scmp.eq.s32.totalorder %s13, 1
      %p70 = por %p68, %p69
      %p71 = scmp.ne.s32.totalorder %s63, %s66
      %p72 = scmp.eq.s32.totalorder %s13, 0
      %p73 = por %p71, %p72
      %p74 = scmp.ne.s32.totalorder %s63, %s66
      %p75 = scmp.eq.s32.totalorder %s18, 1
      %p76 = por %p74, %p75
      %p77 = scmp.ne.s32.totalorder %s66, %s67
      %p78 = scmp.eq.s32.totalorder %s18, 0
      %p79 = por %p77, %p78
      %p80 = scmp.ne.s32.totalorder %s66, %s67
      %p81 = scmp.eq.s32.totalorder %s19, 1
      %p82 = por %p80, %p81
      %p84 = scmp.ne.s32.totalorder %s67, %s83
      %p85 = scmp.eq.s32.totalorder %s19, 0
      %p86 = por %p84, %p85
      %s87 = ssub.s32 %s20, %s32
      %p88 = scmp.eq.s32.totalorder %s87, 0
      %s90 = sadd.s32 %s89, 1
      %s91 = scalar_select %p88, %s89, %s90
      %p94 = pneg %p88
      %p95 = scmp.eq.s32.totalorder %s13, 1
      %p96 = por %p94, %p95
      %p97 = scmp.ne.s32.totalorder %s89, %s92
      %p98 = scmp.eq.s32.totalorder %s13, 0
      %p99 = por %p97, %p98
      %p100 = scmp.ne.s32.totalorder %s89, %s92
      %p101 = scmp.eq.s32.totalorder %s18, 1
      %p102 = por %p100, %p101
      %p103 = scmp.ne.s32.totalorder %s92, %s93
      %p104 = scmp.eq.s32.totalorder %s18, 0
      %p105 = por %p103, %p104
      %p106 = scmp.ne.s32.totalorder %s92, %s93
      %p107 = scmp.eq.s32.totalorder %s19, 1
      %p108 = por %p106, %p107
      %p110 = scmp.ne.s32.totalorder %s93, %s109
      %p111 = scmp.eq.s32.totalorder %s19, 0
      %p112 = por %p110, %p111
      %s113 = ssub.s32 %s20, %s32
      %p114 = scmp.eq.s32.totalorder %s113, 0
      %s116 = sadd.s32 %s115, 1
      %s117 = scalar_select %p114, %s115, %s116
      %p120 = pneg %p114
      %p121 = scmp.eq.s32.totalorder %s13, 1
      %p122 = por %p120, %p121
      %p123 = scmp.ne.s32.totalorder %s115, %s118
      %p124 = scmp.eq.s32.totalorder %s13, 0
      %p125 = por %p123, %p124
      %p126 = scmp.ne.s32.totalorder %s115, %s118
      %p127 = scmp.eq.s32.totalorder %s18, 1
      %p128 = por %p126, %p127
      %p129 = scmp.ne.s32.totalorder %s118, %s119
      %p130 = scmp.eq.s32.totalorder %s18, 0
      %p131 = por %p129, %p130
      %p132 = scmp.ne.s32.totalorder %s118, %s119
      %p133 = scmp.eq.s32.totalorder %s19, 1
      %p134 = por %p132, %p133
      %p136 = scmp.ne.s32.totalorder %s119, %s135
      %p137 = scmp.eq.s32.totalorder %s19, 0
      %p138 = por %p136, %p137
      %p139 = scmp.le.s32.totalorder 1, %s13
      %p140 = scmp.lt.s32.totalorder %s13, 3
      %p141 = pnand %p139, %p140
      %p142 = pneg %p141
      // Predicated region
      $region9: #{vae_forward.4} parent=5 // pred_check
        _
      $region10: #{vae_forward.4} parent=5 // pred_check_branch
        %144 = sbr.rel (%p141) target = $region12
      $region11: #{vae_forward.4} parent=5 // pred_region
        %s145 = ssub.s32 %s13, 1
        // Predicated region
        $region13: #{vae_forward.4} parent=11 // pred_check
          %p146 = pneg %p105
        $region14: #{vae_forward.4} parent=11 // pred_check_branch
          %148 = sbr.rel (%p146) target = $region16
        $region15: #{vae_forward.4} parent=11 // pred_region
          %s149 = smul.u32 4, %s22
          %151 = vsyncadd [#allocation6], 0
          %s152 = scalar_lea.hbm %s2, %s149
          %s154 = sshll.u32 %s152, 4
          %s155 = int_to_ptr.hbm [resolvable:$true] %s154
          %s156 = sshll.u32 [#allocation5], 4
          %s157 = int_to_ptr.vmem [resolvable:$true] %s156
          %159 = dma.hbm_to_vmem [thread:$0]  %s155, 64, %s157, [#allocation6]
        $region16: #{vae_forward.4} parent=11 // pred_fallthru
          _
      $region12: #{vae_forward.4} parent=5 // pred_fallthru
        _
      %p160 = scmp.lt.s32.totalorder %s13, 2
      // Predicated region
      $region17: #{vae_forward.4} parent=5 // pred_check
        %p161 = pneg %p160
      $region18: #{vae_forward.4} parent=5 // pred_check_branch
        %163 = sbr.rel (%p161) target = $region20
      $region19: #{vae_forward.4} parent=5 // pred_region
        // Predicated region
        $region21: #{vae_forward.4} parent=19 // pred_check
          %p164 = pneg %p45
        $region22: #{vae_forward.4} parent=19 // pred_check_branch
          %166 = sbr.rel (%p164) target = $region24
        $region23: #{vae_forward.4} parent=19 // pred_region
          %s167 = smul.u32 9, %s21
          %p168 = scmp.lt.s32.totalorder %s167, 17
          %s169 = scalar_select %p168, %s167, 17
          %s170 = scalar_lea.vmem %s0, %s169
          %s171 = smul.u32 9, %s21
        $region24: #{vae_forward.4} parent=19 // pred_fallthru
          _
        // Predicated region
        $region25: #{vae_forward.4} parent=19 // pred_check
          %p172 = pneg %p73
        $region26: #{vae_forward.4} parent=19 // pred_check_branch
          %174 = sbr.rel (%p172) target = $region28
        $region27: #{vae_forward.4} parent=19 // pred_region
          %s175 = sand.u32 %s63, 1
          %s176 = scalar_lea.sflag [#allocation4], %s175
          %s177 = sand.u32 %s63, 1
          %s178 = smul.addr %s177, 2304
          %s179 = scalar_lea.vmem [#allocation3], %s178
          %s180 = smul.u32 144, %s21
          %s181 = smul.u32 4, %s20
          %183 = vsyncadd %s176, 0
          %s184 = smul.addr %s180, 4
          %s185 = sadd.s32 %s181, %s184
          %s186 = smul.addr %s185, 4
          %s187 = scalar_lea.hbm %s1, %s186
          %s188 = sshll.u32 %s187, 4
          %s189 = int_to_ptr.hbm [resolvable:$true] %s188
          %s190 = sshll.u32 %s179, 4
          %s191 = int_to_ptr.vmem [resolvable:$true] %s190
          %196 = dma.hbm_to_vmem [thread:$0]  %s189, 36864, %s191, %s176, 256, 256, 16
        $region28: #{vae_forward.4} parent=19 // pred_fallthru
          _
      $region20: #{vae_forward.4} parent=5 // pred_fallthru
        _
      %p197 = scmp.le.s32.totalorder 1, %s13
      %p198 = scmp.lt.s32.totalorder %s13, 3
      %p199 = pnand %p197, %p198
      %p200 = pneg %p199
      // Predicated region
      $region29: #{vae_forward.4} parent=5 // pred_check
        _
      $region30: #{vae_forward.4} parent=5 // pred_check_branch
        %202 = sbr.rel (%p199) target = $region32
      $region31: #{vae_forward.4} parent=5 // pred_region
        %s203 = ssub.s32 %s13, 1
        %s204 = sand.u32 %s66, 1
        %s205 = scalar_lea.sflag [#allocation4], %s204
        %s206 = sand.u32 %s66, 1
        %s207 = smul.addr %s206, 2304
        %s208 = scalar_lea.vmem [#allocation3], %s207
        // Predicated region
        $region33: #{vae_forward.4} parent=31 // pred_check
          %p209 = pneg %p79
        $region34: #{vae_forward.4} parent=31 // pred_check_branch
          %211 = sbr.rel (%p209) target = $region36
        $region35: #{vae_forward.4} parent=31 // pred_region
          %213 = dma.done %s205, 36864
        $region36: #{vae_forward.4} parent=31 // pred_fallthru
          _
        // Predicated region
        $region37: #{vae_forward.4} parent=31 // pred_check
          %p214 = pneg %p105
        $region38: #{vae_forward.4} parent=31 // pred_check_branch
          %216 = sbr.rel (%p214) target = $region40
        $region39: #{vae_forward.4} parent=31 // pred_region
          %218 = dma.done [#allocation6], 64
        $region40: #{vae_forward.4} parent=31 // pred_fallthru
          _
        %s219 = smul.u32 9, %s23
        %p220 = scmp.lt.s32.totalorder %s219, 17
        %s221 = scalar_select %p220, %s219, 17
        %s222 = scalar_lea.vmem %s0, %s221
        %p223 = pneg %p51
        %p224 = pneg %p48
        %s225 = sand.u32 %s66, 1
        %s226 = scalar_lea.sflag [#allocation4], %s225
        %s227 = sand.u32 %s66, 1
        %s228 = smul.addr %s227, 2304
        %s229 = scalar_lea.vmem [#allocation3], %s228
        %p230 = pneg %p79
        %p231 = pneg %p76
        %p232 = pneg %p105
        %p233 = pneg %p102
        %p234 = pneg %p131
        %p235 = pneg %p128
        %s236 = smul.u32 4, %s22
        %p237 = scmp.lt.s32.totalorder %s236, 3
        %s238 = scalar_select %p237, %s236, 3
        %s239 = scalar_lea.vmem %s3, %s238
        %s240 = smul.u32 9, %s23
        %p241 = scmp.lt.s32.totalorder %s240, 17
        %s242 = scalar_select %p241, %s240, 17
        %s243 = scalar_lea.vmem %s0, %s242
        %s244 = smul.u32 9, %s23
        %s245 = smul.u32 144, %s23
        %s246 = smul.u32 4, %s22
        %s247 = smul.u32 4, %s22
        %s248 = smul.u32 4, %s22
        %p249 = scmp.lt.s32.totalorder %s248, 3
        %s250 = scalar_select %p249, %s248, 3
        %s251 = scalar_lea.vmem %s3, %s250
        %s252 = smul.u32 4, %s22
        %p253 = scmp.eq.s32.totalorder %s23, 0
        // Predicated region
        $region41: #{vae_forward.4} parent=31 // pred_check
          %p254 = pneg %p253
        $region42: #{vae_forward.4} parent=31 // pred_check_branch
          %256 = sbr.rel (%p254) target = $region44
        $region43: #{vae_forward.4} parent=31 // pred_region
          %257 = vst [vmem:[#allocation2] sm:$0xff] 0.0
        $region44: #{vae_forward.4} parent=31 // pred_fallthru
          _
        %v258 = vld [vmem:[#allocation2] sm:$0xff]
        %v259 = vld [vmem:[%s243] sm:$0xff]
        %v260 = vld [vmem:[%s243 + $0x8] sm:$0x1]
        %v261 = vld [vmem:[%s208] sm:$0xff]
        %v262 = vld [vmem:[%s208 + $0x8] sm:$0xff]
        %v263 = vld [vmem:[%s208 + $0x10] sm:$0xff]
        %v264 = vld [vmem:[%s208 + $0x18] sm:$0xff]
        %v265 = vld [vmem:[%s208 + $0x20] sm:$0xff]
        %v266 = vld [vmem:[%s208 + $0x28] sm:$0xff]
        %v267 = vld [vmem:[%s208 + $0x30] sm:$0xff]
        %v268 = vld [vmem:[%s208 + $0x38] sm:$0xff]
        %v269 = vld [vmem:[%s208 + $0x40] sm:$0xff]
        %v270 = vld [vmem:[%s208 + $0x48] sm:$0xff]
        %v271 = vld [vmem:[%s208 + $0x50] sm:$0xff]
        %v272 = vld [vmem:[%s208 + $0x58] sm:$0xff]
        %v273 = vld [vmem:[%s208 + $0x60] sm:$0xff]
        %v274 = vld [vmem:[%s208 + $0x68] sm:$0xff]
        %v275 = vld [vmem:[%s208 + $0x70] sm:$0xff]
        %v276 = vld [vmem:[%s208 + $0x78] sm:$0xff]
        %v277 = vld [vmem:[%s208 + $0x80] sm:$0xff]
        %v278 = vld [vmem:[%s208 + $0x88] sm:$0xff]
        %v279 = vld [vmem:[%s208 + $0x90] sm:$0xff]
        %v280 = vld [vmem:[%s208 + $0x98] sm:$0xff]
        %v281 = vld [vmem:[%s208 + $0xa0] sm:$0xff]
        %v282 = vld [vmem:[%s208 + $0xa8] sm:$0xff]
        %v283 = vld [vmem:[%s208 + $0xb0] sm:$0xff]
        %v284 = vld [vmem:[%s208 + $0xb8] sm:$0xff]
        %v285 = vld [vmem:[%s208 + $0xc0] sm:$0xff]
        %v286 = vld [vmem:[%s208 + $0xc8] sm:$0xff]
        %v287 = vld [vmem:[%s208 + $0xd0] sm:$0xff]
        %v288 = vld [vmem:[%s208 + $0xd8] sm:$0xff]
        %v289 = vld [vmem:[%s208 + $0xe0] sm:$0xff]
        %v290 = vld [vmem:[%s208 + $0xe8] sm:$0xff]
        %v291 = vld [vmem:[%s208 + $0xf0] sm:$0xff]
        %v292 = vld [vmem:[%s208 + $0xf8] sm:$0xff]
        %v293 = vld [vmem:[%s208 + $0x100] sm:$0xff]
        %v294 = vld [vmem:[%s208 + $0x108] sm:$0xff]
        %v295 = vld [vmem:[%s208 + $0x110] sm:$0xff]
        %v296 = vld [vmem:[%s208 + $0x118] sm:$0xff]
        %v297 = vld [vmem:[%s208 + $0x120] sm:$0xff]
        %v298 = vld [vmem:[%s208 + $0x128] sm:$0xff]
        %v299 = vld [vmem:[%s208 + $0x130] sm:$0xff]
        %v300 = vld [vmem:[%s208 + $0x138] sm:$0xff]
        %v301 = vld [vmem:[%s208 + $0x140] sm:$0xff]
        %v302 = vld [vmem:[%s208 + $0x148] sm:$0xff]
        %v303 = vld [vmem:[%s208 + $0x150] sm:$0xff]
        %v304 = vld [vmem:[%s208 + $0x158] sm:$0xff]
        %v305 = vld [vmem:[%s208 + $0x160] sm:$0xff]
        %v306 = vld [vmem:[%s208 + $0x168] sm:$0xff]
        %v307 = vld [vmem:[%s208 + $0x170] sm:$0xff]
        %v308 = vld [vmem:[%s208 + $0x178] sm:$0xff]
        %v309 = vld [vmem:[%s208 + $0x180] sm:$0xff]
        %v310 = vld [vmem:[%s208 + $0x188] sm:$0xff]
        %v311 = vld [vmem:[%s208 + $0x190] sm:$0xff]
        %v312 = vld [vmem:[%s208 + $0x198] sm:$0xff]
        %v313 = vld [vmem:[%s208 + $0x1a0] sm:$0xff]
        %v314 = vld [vmem:[%s208 + $0x1a8] sm:$0xff]
        %v315 = vld [vmem:[%s208 + $0x1b0] sm:$0xff]
        %v316 = vld [vmem:[%s208 + $0x1b8] sm:$0xff]
        %v317 = vld [vmem:[%s208 + $0x1c0] sm:$0xff]
        %v318 = vld [vmem:[%s208 + $0x1c8] sm:$0xff]
        %v319 = vld [vmem:[%s208 + $0x1d0] sm:$0xff]
        %v320 = vld [vmem:[%s208 + $0x1d8] sm:$0xff]
        %v321 = vld [vmem:[%s208 + $0x1e0] sm:$0xff]
        %v322 = vld [vmem:[%s208 + $0x1e8] sm:$0xff]
        %v323 = vld [vmem:[%s208 + $0x1f0] sm:$0xff]
        %v324 = vld [vmem:[%s208 + $0x1f8] sm:$0xff]
        %v325 = vld [vmem:[%s208 + $0x200] sm:$0xff]
        %v326 = vld [vmem:[%s208 + $0x208] sm:$0xff]
        %v327 = vld [vmem:[%s208 + $0x210] sm:$0xff]
        %v328 = vld [vmem:[%s208 + $0x218] sm:$0xff]
        %v329 = vld [vmem:[%s208 + $0x220] sm:$0xff]
        %v330 = vld [vmem:[%s208 + $0x228] sm:$0xff]
        %v331 = vld [vmem:[%s208 + $0x230] sm:$0xff]
        %v332 = vld [vmem:[%s208 + $0x238] sm:$0xff]
        %v333 = vld [vmem:[%s208 + $0x240] sm:$0xff]
        %v334 = vld [vmem:[%s208 + $0x248] sm:$0xff]
        %v335 = vld [vmem:[%s208 + $0x250] sm:$0xff]
        %v336 = vld [vmem:[%s208 + $0x258] sm:$0xff]
        %v337 = vld [vmem:[%s208 + $0x260] sm:$0xff]
        %v338 = vld [vmem:[%s208 + $0x268] sm:$0xff]
        %v339 = vld [vmem:[%s208 + $0x270] sm:$0xff]
        %v340 = vld [vmem:[%s208 + $0x278] sm:$0xff]
        %v341 = vld [vmem:[%s208 + $0x280] sm:$0xff]
        %v342 = vld [vmem:[%s208 + $0x288] sm:$0xff]
        %v343 = vld [vmem:[%s208 + $0x290] sm:$0xff]
        %v344 = vld [vmem:[%s208 + $0x298] sm:$0xff]
        %v345 = vld [vmem:[%s208 + $0x2a0] sm:$0xff]
        %v346 = vld [vmem:[%s208 + $0x2a8] sm:$0xff]
        %v347 = vld [vmem:[%s208 + $0x2b0] sm:$0xff]
        %v348 = vld [vmem:[%s208 + $0x2b8] sm:$0xff]
        %v349 = vld [vmem:[%s208 + $0x2c0] sm:$0xff]
        %v350 = vld [vmem:[%s208 + $0x2c8] sm:$0xff]
        %v351 = vld [vmem:[%s208 + $0x2d0] sm:$0xff]
        %v352 = vld [vmem:[%s208 + $0x2d8] sm:$0xff]
        %v353 = vld [vmem:[%s208 + $0x2e0] sm:$0xff]
        %v354 = vld [vmem:[%s208 + $0x2e8] sm:$0xff]
        %v355 = vld [vmem:[%s208 + $0x2f0] sm:$0xff]
        %v356 = vld [vmem:[%s208 + $0x2f8] sm:$0xff]
        %v357 = vld [vmem:[%s208 + $0x300] sm:$0xff]
        %v358 = vld [vmem:[%s208 + $0x308] sm:$0xff]
        %v359 = vld [vmem:[%s208 + $0x310] sm:$0xff]
        %v360 = vld [vmem:[%s208 + $0x318] sm:$0xff]
        %v361 = vld [vmem:[%s208 + $0x320] sm:$0xff]
        %v362 = vld [vmem:[%s208 + $0x328] sm:$0xff]
        %v363 = vld [vmem:[%s208 + $0x330] sm:$0xff]
        %v364 = vld [vmem:[%s208 + $0x338] sm:$0xff]
        %v365 = vld [vmem:[%s208 + $0x340] sm:$0xff]
        %v366 = vld [vmem:[%s208 + $0x348] sm:$0xff]
        %v367 = vld [vmem:[%s208 + $0x350] sm:$0xff]
        %v368 = vld [vmem:[%s208 + $0x358] sm:$0xff]
        %v369 = vld [vmem:[%s208 + $0x360] sm:$0xff]
        %v370 = vld [vmem:[%s208 + $0x368] sm:$0xff]
        %v371 = vld [vmem:[%s208 + $0x370] sm:$0xff]
        %v372 = vld [vmem:[%s208 + $0x378] sm:$0xff]
        %v373 = vld [vmem:[%s208 + $0x380] sm:$0xff]
        %v374 = vld [vmem:[%s208 + $0x388] sm:$0xff]
        %v375 = vld [vmem:[%s208 + $0x390] sm:$0xff]
        %v376 = vld [vmem:[%s208 + $0x398] sm:$0xff]
        %v377 = vld [vmem:[%s208 + $0x3a0] sm:$0xff]
        %v378 = vld [vmem:[%s208 + $0x3a8] sm:$0xff]
        %v379 = vld [vmem:[%s208 + $0x3b0] sm:$0xff]
        %v380 = vld [vmem:[%s208 + $0x3b8] sm:$0xff]
        %v381 = vld [vmem:[%s208 + $0x3c0] sm:$0xff]
        %v382 = vld [vmem:[%s208 + $0x3c8] sm:$0xff]
        %v383 = vld [vmem:[%s208 + $0x3d0] sm:$0xff]
        %v384 = vld [vmem:[%s208 + $0x3d8] sm:$0xff]
        %v385 = vld [vmem:[%s208 + $0x3e0] sm:$0xff]
        %v386 = vld [vmem:[%s208 + $0x3e8] sm:$0xff]
        %v387 = vld [vmem:[%s208 + $0x3f0] sm:$0xff]
        %v388 = vld [vmem:[%s208 + $0x3f8] sm:$0xff]
        %v389 = vld [vmem:[%s208 + $0x400] sm:$0xff]
        %v390 = vld [vmem:[%s208 + $0x408] sm:$0xff]
        %v391 = vld [vmem:[%s208 + $0x410] sm:$0xff]
        %v392 = vld [vmem:[%s208 + $0x418] sm:$0xff]
        %v393 = vld [vmem:[%s208 + $0x420] sm:$0xff]
        %v394 = vld [vmem:[%s208 + $0x428] sm:$0xff]
        %v395 = vld [vmem:[%s208 + $0x430] sm:$0xff]
        %v396 = vld [vmem:[%s208 + $0x438] sm:$0xff]
        %v397 = vld [vmem:[%s208 + $0x440] sm:$0xff]
        %v398 = vld [vmem:[%s208 + $0x448] sm:$0xff]
        %v399 = vld [vmem:[%s208 + $0x450] sm:$0xff]
        %v400 = vld [vmem:[%s208 + $0x458] sm:$0xff]
        %v401 = vld [vmem:[%s208 + $0x460] sm:$0xff]
        %v402 = vld [vmem:[%s208 + $0x468] sm:$0xff]
        %v403 = vld [vmem:[%s208 + $0x470] sm:$0xff]
        %v404 = vld [vmem:[%s208 + $0x478] sm:$0xff]
        %v405 = vld [vmem:[%s208 + $0x480] sm:$0xff]
        %v406 = vld [vmem:[%s208 + $0x488] sm:$0xff]
        %v407 = vld [vmem:[%s208 + $0x490] sm:$0xff]
        %v408 = vld [vmem:[%s208 + $0x498] sm:$0xff]
        %v409 = vld [vmem:[%s208 + $0x4a0] sm:$0xff]
        %v410 = vld [vmem:[%s208 + $0x4a8] sm:$0xff]
        %v411 = vld [vmem:[%s208 + $0x4b0] sm:$0xff]
        %v412 = vld [vmem:[%s208 + $0x4b8] sm:$0xff]
        %v413 = vld [vmem:[%s208 + $0x4c0] sm:$0xff]
        %v414 = vld [vmem:[%s208 + $0x4c8] sm:$0xff]
        %v415 = vld [vmem:[%s208 + $0x4d0] sm:$0xff]
        %v416 = vld [vmem:[%s208 + $0x4d8] sm:$0xff]
        %v417 = vld [vmem:[%s208 + $0x4e0] sm:$0xff]
        %v418 = vld [vmem:[%s208 + $0x4e8] sm:$0xff]
        %v419 = vld [vmem:[%s208 + $0x4f0] sm:$0xff]
        %v420 = vld [vmem:[%s208 + $0x4f8] sm:$0xff]
        %v421 = vld [vmem:[%s208 + $0x500] sm:$0xff]
        %v422 = vld [vmem:[%s208 + $0x508] sm:$0xff]
        %v423 = vld [vmem:[%s208 + $0x510] sm:$0xff]
        %v424 = vld [vmem:[%s208 + $0x518] sm:$0xff]
        %v425 = vld [vmem:[%s208 + $0x520] sm:$0xff]
        %v426 = vld [vmem:[%s208 + $0x528] sm:$0xff]
        %v427 = vld [vmem:[%s208 + $0x530] sm:$0xff]
        %v428 = vld [vmem:[%s208 + $0x538] sm:$0xff]
        %v429 = vld [vmem:[%s208 + $0x540] sm:$0xff]
        %v430 = vld [vmem:[%s208 + $0x548] sm:$0xff]
        %v431 = vld [vmem:[%s208 + $0x550] sm:$0xff]
        %v432 = vld [vmem:[%s208 + $0x558] sm:$0xff]
        %v433 = vld [vmem:[%s208 + $0x560] sm:$0xff]
        %v434 = vld [vmem:[%s208 + $0x568] sm:$0xff]
        %v435 = vld [vmem:[%s208 + $0x570] sm:$0xff]
        %v436 = vld [vmem:[%s208 + $0x578] sm:$0xff]
        %v437 = vld [vmem:[%s208 + $0x580] sm:$0xff]
        %v438 = vld [vmem:[%s208 + $0x588] sm:$0xff]
        %v439 = vld [vmem:[%s208 + $0x590] sm:$0xff]
        %v440 = vld [vmem:[%s208 + $0x598] sm:$0xff]
        %v441 = vld [vmem:[%s208 + $0x5a0] sm:$0xff]
        %v442 = vld [vmem:[%s208 + $0x5a8] sm:$0xff]
        %v443 = vld [vmem:[%s208 + $0x5b0] sm:$0xff]
        %v444 = vld [vmem:[%s208 + $0x5b8] sm:$0xff]
        %v445 = vld [vmem:[%s208 + $0x5c0] sm:$0xff]
        %v446 = vld [vmem:[%s208 + $0x5c8] sm:$0xff]
        %v447 = vld [vmem:[%s208 + $0x5d0] sm:$0xff]
        %v448 = vld [vmem:[%s208 + $0x5d8] sm:$0xff]
        %v449 = vld [vmem:[%s208 + $0x5e0] sm:$0xff]
        %v450 = vld [vmem:[%s208 + $0x5e8] sm:$0xff]
        %v451 = vld [vmem:[%s208 + $0x5f0] sm:$0xff]
        %v452 = vld [vmem:[%s208 + $0x5f8] sm:$0xff]
        %v453 = vld [vmem:[%s208 + $0x600] sm:$0xff]
        %v454 = vld [vmem:[%s208 + $0x608] sm:$0xff]
        %v455 = vld [vmem:[%s208 + $0x610] sm:$0xff]
        %v456 = vld [vmem:[%s208 + $0x618] sm:$0xff]
        %v457 = vld [vmem:[%s208 + $0x620] sm:$0xff]
        %v458 = vld [vmem:[%s208 + $0x628] sm:$0xff]
        %v459 = vld [vmem:[%s208 + $0x630] sm:$0xff]
        %v460 = vld [vmem:[%s208 + $0x638] sm:$0xff]
        %v461 = vld [vmem:[%s208 + $0x640] sm:$0xff]
        %v462 = vld [vmem:[%s208 + $0x648] sm:$0xff]
        %v463 = vld [vmem:[%s208 + $0x650] sm:$0xff]
        %v464 = vld [vmem:[%s208 + $0x658] sm:$0xff]
        %v465 = vld [vmem:[%s208 + $0x660] sm:$0xff]
        %v466 = vld [vmem:[%s208 + $0x668] sm:$0xff]
        %v467 = vld [vmem:[%s208 + $0x670] sm:$0xff]
        %v468 = vld [vmem:[%s208 + $0x678] sm:$0xff]
        %v469 = vld [vmem:[%s208 + $0x680] sm:$0xff]
        %v470 = vld [vmem:[%s208 + $0x688] sm:$0xff]
        %v471 = vld [vmem:[%s208 + $0x690] sm:$0xff]
        %v472 = vld [vmem:[%s208 + $0x698] sm:$0xff]
        %v473 = vld [vmem:[%s208 + $0x6a0] sm:$0xff]
        %v474 = vld [vmem:[%s208 + $0x6a8] sm:$0xff]
        %v475 = vld [vmem:[%s208 + $0x6b0] sm:$0xff]
        %v476 = vld [vmem:[%s208 + $0x6b8] sm:$0xff]
        %v477 = vld [vmem:[%s208 + $0x6c0] sm:$0xff]
        %v478 = vld [vmem:[%s208 + $0x6c8] sm:$0xff]
        %v479 = vld [vmem:[%s208 + $0x6d0] sm:$0xff]
        %v480 = vld [vmem:[%s208 + $0x6d8] sm:$0xff]
        %v481 = vld [vmem:[%s208 + $0x6e0] sm:$0xff]
        %v482 = vld [vmem:[%s208 + $0x6e8] sm:$0xff]
        %v483 = vld [vmem:[%s208 + $0x6f0] sm:$0xff]
        %v484 = vld [vmem:[%s208 + $0x6f8] sm:$0xff]
        %v485 = vld [vmem:[%s208 + $0x700] sm:$0xff]
        %v486 = vld [vmem:[%s208 + $0x708] sm:$0xff]
        %v487 = vld [vmem:[%s208 + $0x710] sm:$0xff]
        %v488 = vld [vmem:[%s208 + $0x718] sm:$0xff]
        %v489 = vld [vmem:[%s208 + $0x720] sm:$0xff]
        %v490 = vld [vmem:[%s208 + $0x728] sm:$0xff]
        %v491 = vld [vmem:[%s208 + $0x730] sm:$0xff]
        %v492 = vld [vmem:[%s208 + $0x738] sm:$0xff]
        %v493 = vld [vmem:[%s208 + $0x740] sm:$0xff]
        %v494 = vld [vmem:[%s208 + $0x748] sm:$0xff]
        %v495 = vld [vmem:[%s208 + $0x750] sm:$0xff]
        %v496 = vld [vmem:[%s208 + $0x758] sm:$0xff]
        %v497 = vld [vmem:[%s208 + $0x760] sm:$0xff]
        %v498 = vld [vmem:[%s208 + $0x768] sm:$0xff]
        %v499 = vld [vmem:[%s208 + $0x770] sm:$0xff]
        %v500 = vld [vmem:[%s208 + $0x778] sm:$0xff]
        %v501 = vld [vmem:[%s208 + $0x780] sm:$0xff]
        %v502 = vld [vmem:[%s208 + $0x788] sm:$0xff]
        %v503 = vld [vmem:[%s208 + $0x790] sm:$0xff]
        %v504 = vld [vmem:[%s208 + $0x798] sm:$0xff]
        %v505 = vld [vmem:[%s208 + $0x7a0] sm:$0xff]
        %v506 = vld [vmem:[%s208 + $0x7a8] sm:$0xff]
        %v507 = vld [vmem:[%s208 + $0x7b0] sm:$0xff]
        %v508 = vld [vmem:[%s208 + $0x7b8] sm:$0xff]
        %v509 = vld [vmem:[%s208 + $0x7c0] sm:$0xff]
        %v510 = vld [vmem:[%s208 + $0x7c8] sm:$0xff]
        %v511 = vld [vmem:[%s208 + $0x7d0] sm:$0xff]
        %v512 = vld [vmem:[%s208 + $0x7d8] sm:$0xff]
        %v513 = vld [vmem:[%s208 + $0x7e0] sm:$0xff]
        %v514 = vld [vmem:[%s208 + $0x7e8] sm:$0xff]
        %v515 = vld [vmem:[%s208 + $0x7f0] sm:$0xff]
        %v516 = vld [vmem:[%s208 + $0x7f8] sm:$0xff]
        %v517 = vld [vmem:[%s208 + $0x800] sm:$0xff]
        %v518 = vld [vmem:[%s208 + $0x808] sm:$0xff]
        %v519 = vld [vmem:[%s208 + $0x810] sm:$0xff]
        %v520 = vld [vmem:[%s208 + $0x818] sm:$0xff]
        %v521 = vld [vmem:[%s208 + $0x820] sm:$0xff]
        %v522 = vld [vmem:[%s208 + $0x828] sm:$0xff]
        %v523 = vld [vmem:[%s208 + $0x830] sm:$0xff]
        %v524 = vld [vmem:[%s208 + $0x838] sm:$0xff]
        %v525 = vld [vmem:[%s208 + $0x840] sm:$0xff]
        %v526 = vld [vmem:[%s208 + $0x848] sm:$0xff]
        %v527 = vld [vmem:[%s208 + $0x850] sm:$0xff]
        %v528 = vld [vmem:[%s208 + $0x858] sm:$0xff]
        %v529 = vld [vmem:[%s208 + $0x860] sm:$0xff]
        %v530 = vld [vmem:[%s208 + $0x868] sm:$0xff]
        %v531 = vld [vmem:[%s208 + $0x870] sm:$0xff]
        %v532 = vld [vmem:[%s208 + $0x878] sm:$0xff]
        %v533 = vld [vmem:[%s208 + $0x880] sm:$0xff]
        %v534 = vld [vmem:[%s208 + $0x888] sm:$0xff]
        %v535 = vld [vmem:[%s208 + $0x890] sm:$0xff]
        %v536 = vld [vmem:[%s208 + $0x898] sm:$0xff]
        %v537 = vld [vmem:[%s208 + $0x8a0] sm:$0xff]
        %v538 = vld [vmem:[%s208 + $0x8a8] sm:$0xff]
        %v539 = vld [vmem:[%s208 + $0x8b0] sm:$0xff]
        %v540 = vld [vmem:[%s208 + $0x8b8] sm:$0xff]
        %v541 = vld [vmem:[%s208 + $0x8c0] sm:$0xff]
        %v542 = vld [vmem:[%s208 + $0x8c8] sm:$0xff]
        %v543 = vld [vmem:[%s208 + $0x8d0] sm:$0xff]
        %v544 = vld [vmem:[%s208 + $0x8d8] sm:$0xff]
        %v545 = vld [vmem:[%s208 + $0x8e0] sm:$0xff]
        %v546 = vld [vmem:[%s208 + $0x8e8] sm:$0xff]
        %v547 = vld [vmem:[%s208 + $0x8f0] sm:$0xff]
        %v548 = vld [vmem:[%s208 + $0x8f8] sm:$0xff]
        %550 = vst [vmem:[#allocation1] ss:$9 sm:$0xff] %v259
        %v551 = vld [vmem:[#allocation1] sm:$0xff]
        %v552 = vld [vmem:[#allocation1 + $0x9] sm:$0xff]
        %v553 = vld [vmem:[#allocation1 + $0x12] sm:$0xff]
        %v554 = vld [vmem:[#allocation1 + $0x1b] sm:$0xff]
        %v555 = vld [vmem:[#allocation1 + $0x24] sm:$0xff]
        %v556 = vld [vmem:[#allocation1 + $0x2d] sm:$0xff]
        %v557 = vld [vmem:[#allocation1 + $0x36] sm:$0xff]
        %v558 = vld [vmem:[#allocation1 + $0x3f] sm:$0xff]
        %560 = vst [vmem:[#allocation1] ss:$9 sm:$0xff] %v260
        %v561 = vld [vmem:[#allocation1] sm:$0xff]
        %v859 = vunpack.c.l.b16 %v261
        %v860 = vunpack.c.h.b16 %v261
        %v861 = vunpack.c.l.b16 %v262
        %v862 = vunpack.c.h.b16 %v262
        %v863 = vunpack.c.l.b16 %v263
        %v864 = vunpack.c.h.b16 %v263
        %v865 = vunpack.c.l.b16 %v264
        %v866 = vunpack.c.h.b16 %v264
        %v867 = vunpack.c.l.b16 %v265
        %v868 = vunpack.c.h.b16 %v265
        %v869 = vunpack.c.l.b16 %v266
        %v870 = vunpack.c.h.b16 %v266
        %v871 = vunpack.c.l.b16 %v267
        %v872 = vunpack.c.h.b16 %v267
        %v873 = vunpack.c.l.b16 %v268
        %v874 = vunpack.c.h.b16 %v268
        %v875 = vunpack.c.l.b16 %v269
        %v876 = vunpack.c.h.b16 %v269
        %v877 = vunpack.c.l.b16 %v270
        %v878 = vunpack.c.h.b16 %v270
        %v879 = vunpack.c.l.b16 %v271
        %v880 = vunpack.c.h.b16 %v271
        %v881 = vunpack.c.l.b16 %v272
        %v882 = vunpack.c.h.b16 %v272
        %v883 = vunpack.c.l.b16 %v273
        %v884 = vunpack.c.h.b16 %v273
        %v885 = vunpack.c.l.b16 %v274
        %v886 = vunpack.c.h.b16 %v274
        %v887 = vunpack.c.l.b16 %v275
        %v888 = vunpack.c.h.b16 %v275
        %v889 = vunpack.c.l.b16 %v276
        %v890 = vunpack.c.h.b16 %v276
        %v891 = vunpack.c.l.b16 %v277
        %v892 = vunpack.c.h.b16 %v277
        %v893 = vunpack.c.l.b16 %v278
        %v894 = vunpack.c.h.b16 %v278
        %v895 = vunpack.c.l.b16 %v279
        %v896 = vunpack.c.h.b16 %v279
        %v897 = vunpack.c.l.b16 %v280
        %v898 = vunpack.c.h.b16 %v280
        %v899 = vunpack.c.l.b16 %v281
        %v900 = vunpack.c.h.b16 %v281
        %v901 = vunpack.c.l.b16 %v282
        %v902 = vunpack.c.h.b16 %v282
        %v903 = vunpack.c.l.b16 %v283
        %v904 = vunpack.c.h.b16 %v283
        %v905 = vunpack.c.l.b16 %v284
        %v906 = vunpack.c.h.b16 %v284
        %v907 = vunpack.c.l.b16 %v285
        %v908 = vunpack.c.h.b16 %v285
        %v909 = vunpack.c.l.b16 %v286
        %v910 = vunpack.c.h.b16 %v286
        %v911 = vunpack.c.l.b16 %v287
        %v912 = vunpack.c.h.b16 %v287
        %v913 = vunpack.c.l.b16 %v288
        %v914 = vunpack.c.h.b16 %v288
        %v915 = vunpack.c.l.b16 %v289
        %v916 = vunpack.c.h.b16 %v289
        %v917 = vunpack.c.l.b16 %v290
        %v918 = vunpack.c.h.b16 %v290
        %v919 = vunpack.c.l.b16 %v291
        %v920 = vunpack.c.h.b16 %v291
        %v921 = vunpack.c.l.b16 %v292
        %v922 = vunpack.c.h.b16 %v292
        %v923 = vunpack.c.l.b16 %v293
        %v924 = vunpack.c.h.b16 %v293
        %v925 = vunpack.c.l.b16 %v294
        %v926 = vunpack.c.h.b16 %v294
        %v927 = vunpack.c.l.b16 %v295
        %v928 = vunpack.c.h.b16 %v295
        %v929 = vunpack.c.l.b16 %v296
        %v930 = vunpack.c.h.b16 %v296
        %v931 = vunpack.c.l.b16 %v297
        %v932 = vunpack.c.h.b16 %v297
        %v933 = vunpack.c.l.b16 %v298
        %v934 = vunpack.c.h.b16 %v298
        %v935 = vunpack.c.l.b16 %v299
        %v936 = vunpack.c.h.b16 %v299
        %v937 = vunpack.c.l.b16 %v300
        %v938 = vunpack.c.h.b16 %v300
        %v939 = vunpack.c.l.b16 %v301
        %v940 = vunpack.c.h.b16 %v301
        %v941 = vunpack.c.l.b16 %v302
        %v942 = vunpack.c.h.b16 %v302
        %v943 = vunpack.c.l.b16 %v303
        %v944 = vunpack.c.h.b16 %v303
        %v945 = vunpack.c.l.b16 %v304
        %v946 = vunpack.c.h.b16 %v304
        %v947 = vunpack.c.l.b16 %v305
        %v948 = vunpack.c.h.b16 %v305
        %v949 = vunpack.c.l.b16 %v306
        %v950 = vunpack.c.h.b16 %v306
        %v951 = vunpack.c.l.b16 %v307
        %v952 = vunpack.c.h.b16 %v307
        %v953 = vunpack.c.l.b16 %v308
        %v954 = vunpack.c.h.b16 %v308
        %v955 = vunpack.c.l.b16 %v309
        %v956 = vunpack.c.h.b16 %v309
        %v957 = vunpack.c.l.b16 %v310
        %v958 = vunpack.c.h.b16 %v310
        %v959 = vunpack.c.l.b16 %v311
        %v960 = vunpack.c.h.b16 %v311
        %v961 = vunpack.c.l.b16 %v312
        %v962 = vunpack.c.h.b16 %v312
        %v963 = vunpack.c.l.b16 %v313
        %v964 = vunpack.c.h.b16 %v313
        %v965 = vunpack.c.l.b16 %v314
        %v966 = vunpack.c.h.b16 %v314
        %v967 = vunpack.c.l.b16 %v315
        %v968 = vunpack.c.h.b16 %v315
        %v969 = vunpack.c.l.b16 %v316
        %v970 = vunpack.c.h.b16 %v316
        %v971 = vunpack.c.l.b16 %v317
        %v972 = vunpack.c.h.b16 %v317
        %v973 = vunpack.c.l.b16 %v318
        %v974 = vunpack.c.h.b16 %v318
        %v975 = vunpack.c.l.b16 %v319
        %v976 = vunpack.c.h.b16 %v319
        %v977 = vunpack.c.l.b16 %v320
        %v978 = vunpack.c.h.b16 %v320
        %v979 = vunpack.c.l.b16 %v321
        %v980 = vunpack.c.h.b16 %v321
        %v981 = vunpack.c.l.b16 %v322
        %v982 = vunpack.c.h.b16 %v322
        %v983 = vunpack.c.l.b16 %v323
        %v984 = vunpack.c.h.b16 %v323
        %v985 = vunpack.c.l.b16 %v324
        %v986 = vunpack.c.h.b16 %v324
        %v987 = vunpack.c.l.b16 %v325
        %v988 = vunpack.c.h.b16 %v325
        %v989 = vunpack.c.l.b16 %v326
        %v990 = vunpack.c.h.b16 %v326
        %v991 = vunpack.c.l.b16 %v327
        %v992 = vunpack.c.h.b16 %v327
        %v993 = vunpack.c.l.b16 %v328
        %v994 = vunpack.c.h.b16 %v328
        %v995 = vunpack.c.l.b16 %v329
        %v996 = vunpack.c.h.b16 %v329
        %v997 = vunpack.c.l.b16 %v330
        %v998 = vunpack.c.h.b16 %v330
        %v999 = vunpack.c.l.b16 %v331
        %v1000 = vunpack.c.h.b16 %v331
        %v1001 = vunpack.c.l.b16 %v332
        %v1002 = vunpack.c.h.b16 %v332
        %v1003 = vunpack.c.l.b16 %v333
        %v1004 = vunpack.c.h.b16 %v333
        %v1005 = vunpack.c.l.b16 %v334
        %v1006 = vunpack.c.h.b16 %v334
        %v1007 = vunpack.c.l.b16 %v335
        %v1008 = vunpack.c.h.b16 %v335
        %v1009 = vunpack.c.l.b16 %v336
        %v1010 = vunpack.c.h.b16 %v336
        %v1011 = vunpack.c.l.b16 %v337
        %v1012 = vunpack.c.h.b16 %v337
        %v1013 = vunpack.c.l.b16 %v338
        %v1014 = vunpack.c.h.b16 %v338
        %v1015 = vunpack.c.l.b16 %v339
        %v1016 = vunpack.c.h.b16 %v339
        %v1017 = vunpack.c.l.b16 %v340
        %v1018 = vunpack.c.h.b16 %v340
        %v1019 = vunpack.c.l.b16 %v341
        %v1020 = vunpack.c.h.b16 %v341
        %v1021 = vunpack.c.l.b16 %v342
        %v1022 = vunpack.c.h.b16 %v342
        %v1023 = vunpack.c.l.b16 %v343
        %v1024 = vunpack.c.h.b16 %v343
        %v1025 = vunpack.c.l.b16 %v344
        %v1026 = vunpack.c.h.b16 %v344
        %v1027 = vunpack.c.l.b16 %v345
        %v1028 = vunpack.c.h.b16 %v345
        %v1029 = vunpack.c.l.b16 %v346
        %v1030 = vunpack.c.h.b16 %v346
        %v1031 = vunpack.c.l.b16 %v347
        %v1032 = vunpack.c.h.b16 %v347
        %v1033 = vunpack.c.l.b16 %v348
        %v1034 = vunpack.c.h.b16 %v348
        %v1035 = vunpack.c.l.b16 %v349
        %v1036 = vunpack.c.h.b16 %v349
        %v1037 = vunpack.c.l.b16 %v350
        %v1038 = vunpack.c.h.b16 %v350
        %v1039 = vunpack.c.l.b16 %v351
        %v1040 = vunpack.c.h.b16 %v351
        %v1041 = vunpack.c.l.b16 %v352
        %v1042 = vunpack.c.h.b16 %v352
        %v1043 = vunpack.c.l.b16 %v353
        %v1044 = vunpack.c.h.b16 %v353
        %v1045 = vunpack.c.l.b16 %v354
        %v1046 = vunpack.c.h.b16 %v354
        %v1047 = vunpack.c.l.b16 %v355
        %v1048 = vunpack.c.h.b16 %v355
        %v1049 = vunpack.c.l.b16 %v356
        %v1050 = vunpack.c.h.b16 %v356
        %v1051 = vunpack.c.l.b16 %v357
        %v1052 = vunpack.c.h.b16 %v357
        %v1053 = vunpack.c.l.b16 %v358
        %v1054 = vunpack.c.h.b16 %v358
        %v1055 = vunpack.c.l.b16 %v359
        %v1056 = vunpack.c.h.b16 %v359
        %v1057 = vunpack.c.l.b16 %v360
        %v1058 = vunpack.c.h.b16 %v360
        %v1059 = vunpack.c.l.b16 %v361
        %v1060 = vunpack.c.h.b16 %v361
        %v1061 = vunpack.c.l.b16 %v362
        %v1062 = vunpack.c.h.b16 %v362
        %v1063 = vunpack.c.l.b16 %v363
        %v1064 = vunpack.c.h.b16 %v363
        %v1065 = vunpack.c.l.b16 %v364
        %v1066 = vunpack.c.h.b16 %v364
        %v1067 = vunpack.c.l.b16 %v365
        %v1068 = vunpack.c.h.b16 %v365
        %v1069 = vunpack.c.l.b16 %v366
        %v1070 = vunpack.c.h.b16 %v366
        %v1071 = vunpack.c.l.b16 %v367
        %v1072 = vunpack.c.h.b16 %v367
        %v1073 = vunpack.c.l.b16 %v368
        %v1074 = vunpack.c.h.b16 %v368
        %v1075 = vunpack.c.l.b16 %v369
        %v1076 = vunpack.c.h.b16 %v369
        %v1077 = vunpack.c.l.b16 %v370
        %v1078 = vunpack.c.h.b16 %v370
        %v1079 = vunpack.c.l.b16 %v371
        %v1080 = vunpack.c.h.b16 %v371
        %v1081 = vunpack.c.l.b16 %v372
        %v1082 = vunpack.c.h.b16 %v372
        %v1083 = vunpack.c.l.b16 %v373
        %v1084 = vunpack.c.h.b16 %v373
        %v1085 = vunpack.c.l.b16 %v374
        %v1086 = vunpack.c.h.b16 %v374
        %v1087 = vunpack.c.l.b16 %v375
        %v1088 = vunpack.c.h.b16 %v375
        %v1089 = vunpack.c.l.b16 %v376
        %v1090 = vunpack.c.h.b16 %v376
        %v1091 = vunpack.c.l.b16 %v377
        %v1092 = vunpack.c.h.b16 %v377
        %v1093 = vunpack.c.l.b16 %v378
        %v1094 = vunpack.c.h.b16 %v378
        %v1095 = vunpack.c.l.b16 %v379
        %v1096 = vunpack.c.h.b16 %v379
        %v1097 = vunpack.c.l.b16 %v380
        %v1098 = vunpack.c.h.b16 %v380
        %v1099 = vunpack.c.l.b16 %v381
        %v1100 = vunpack.c.h.b16 %v381
        %v1101 = vunpack.c.l.b16 %v382
        %v1102 = vunpack.c.h.b16 %v382
        %v1103 = vunpack.c.l.b16 %v383
        %v1104 = vunpack.c.h.b16 %v383
        %v1105 = vunpack.c.l.b16 %v384
        %v1106 = vunpack.c.h.b16 %v384
        %v1107 = vunpack.c.l.b16 %v385
        %v1108 = vunpack.c.h.b16 %v385
        %v1109 = vunpack.c.l.b16 %v386
        %v1110 = vunpack.c.h.b16 %v386
        %v1111 = vunpack.c.l.b16 %v387
        %v1112 = vunpack.c.h.b16 %v387
        %v1113 = vunpack.c.l.b16 %v388
        %v1114 = vunpack.c.h.b16 %v388
        %v1115 = vunpack.c.l.b16 %v389
        %v1116 = vunpack.c.h.b16 %v389
        %v1117 = vunpack.c.l.b16 %v390
        %v1118 = vunpack.c.h.b16 %v390
        %v1119 = vunpack.c.l.b16 %v391
        %v1120 = vunpack.c.h.b16 %v391
        %v1121 = vunpack.c.l.b16 %v392
        %v1122 = vunpack.c.h.b16 %v392
        %v1123 = vunpack.c.l.b16 %v393
        %v1124 = vunpack.c.h.b16 %v393
        %v1125 = vunpack.c.l.b16 %v394
        %v1126 = vunpack.c.h.b16 %v394
        %v1127 = vunpack.c.l.b16 %v395
        %v1128 = vunpack.c.h.b16 %v395
        %v1129 = vunpack.c.l.b16 %v396
        %v1130 = vunpack.c.h.b16 %v396
        %v1131 = vunpack.c.l.b16 %v397
        %v1132 = vunpack.c.h.b16 %v397
        %v1133 = vunpack.c.l.b16 %v398
        %v1134 = vunpack.c.h.b16 %v398
        %v1135 = vunpack.c.l.b16 %v399
        %v1136 = vunpack.c.h.b16 %v399
        %v1137 = vunpack.c.l.b16 %v400
        %v1138 = vunpack.c.h.b16 %v400
        %v1139 = vunpack.c.l.b16 %v401
        %v1140 = vunpack.c.h.b16 %v401
        %v1141 = vunpack.c.l.b16 %v402
        %v1142 = vunpack.c.h.b16 %v402
        %v1143 = vunpack.c.l.b16 %v403
        %v1144 = vunpack.c.h.b16 %v403
        %v1145 = vunpack.c.l.b16 %v404
        %v1146 = vunpack.c.h.b16 %v404
        %v1147 = vunpack.c.l.b16 %v405
        %v1148 = vunpack.c.h.b16 %v405
        %v1149 = vunpack.c.l.b16 %v406
        %v1150 = vunpack.c.h.b16 %v406
        %v1151 = vunpack.c.l.b16 %v407
        %v1152 = vunpack.c.h.b16 %v407
        %v1153 = vunpack.c.l.b16 %v408
        %v1154 = vunpack.c.h.b16 %v408
        %v1155 = vunpack.c.l.b16 %v409
        %v1156 = vunpack.c.h.b16 %v409
        %v1157 = vunpack.c.l.b16 %v410
        %v1158 = vunpack.c.h.b16 %v410
        %v1159 = vunpack.c.l.b16 %v411
        %v1160 = vunpack.c.h.b16 %v411
        %v1161 = vunpack.c.l.b16 %v412
        %v1162 = vunpack.c.h.b16 %v412
        %v1163 = vunpack.c.l.b16 %v413
        %v1164 = vunpack.c.h.b16 %v413
        %v1165 = vunpack.c.l.b16 %v414
        %v1166 = vunpack.c.h.b16 %v414
        %v1167 = vunpack.c.l.b16 %v415
        %v1168 = vunpack.c.h.b16 %v415
        %v1169 = vunpack.c.l.b16 %v416
        %v1170 = vunpack.c.h.b16 %v416
        %v1171 = vunpack.c.l.b16 %v417
        %v1172 = vunpack.c.h.b16 %v417
        %v1173 = vunpack.c.l.b16 %v418
        %v1174 = vunpack.c.h.b16 %v418
        %v1175 = vunpack.c.l.b16 %v419
        %v1176 = vunpack.c.h.b16 %v419
        %v1177 = vunpack.c.l.b16 %v420
        %v1178 = vunpack.c.h.b16 %v420
        %v1179 = vunpack.c.l.b16 %v421
        %v1180 = vunpack.c.h.b16 %v421
        %v1181 = vunpack.c.l.b16 %v422
        %v1182 = vunpack.c.h.b16 %v422
        %v1183 = vunpack.c.l.b16 %v423
        %v1184 = vunpack.c.h.b16 %v423
        %v1185 = vunpack.c.l.b16 %v424
        %v1186 = vunpack.c.h.b16 %v424
        %v1187 = vunpack.c.l.b16 %v425
        %v1188 = vunpack.c.h.b16 %v425
        %v1189 = vunpack.c.l.b16 %v426
        %v1190 = vunpack.c.h.b16 %v426
        %v1191 = vunpack.c.l.b16 %v427
        %v1192 = vunpack.c.h.b16 %v427
        %v1193 = vunpack.c.l.b16 %v428
        %v1194 = vunpack.c.h.b16 %v428
        %v1195 = vunpack.c.l.b16 %v429
        %v1196 = vunpack.c.h.b16 %v429
        %v1197 = vunpack.c.l.b16 %v430
        %v1198 = vunpack.c.h.b16 %v430
        %v1199 = vunpack.c.l.b16 %v431
        %v1200 = vunpack.c.h.b16 %v431
        %v1201 = vunpack.c.l.b16 %v432
        %v1202 = vunpack.c.h.b16 %v432
        %v1203 = vunpack.c.l.b16 %v433
        %v1204 = vunpack.c.h.b16 %v433
        %v1205 = vunpack.c.l.b16 %v434
        %v1206 = vunpack.c.h.b16 %v434
        %v1207 = vunpack.c.l.b16 %v435
        %v1208 = vunpack.c.h.b16 %v435
        %v1209 = vunpack.c.l.b16 %v436
        %v1210 = vunpack.c.h.b16 %v436
        %v1211 = vunpack.c.l.b16 %v437
        %v1212 = vunpack.c.h.b16 %v437
        %v1213 = vunpack.c.l.b16 %v438
        %v1214 = vunpack.c.h.b16 %v438
        %v1215 = vunpack.c.l.b16 %v439
        %v1216 = vunpack.c.h.b16 %v439
        %v1217 = vunpack.c.l.b16 %v440
        %v1218 = vunpack.c.h.b16 %v440
        %v1219 = vunpack.c.l.b16 %v441
        %v1220 = vunpack.c.h.b16 %v441
        %v1221 = vunpack.c.l.b16 %v442
        %v1222 = vunpack.c.h.b16 %v442
        %v1223 = vunpack.c.l.b16 %v443
        %v1224 = vunpack.c.h.b16 %v443
        %v1225 = vunpack.c.l.b16 %v444
        %v1226 = vunpack.c.h.b16 %v444
        %v1227 = vunpack.c.l.b16 %v445
        %v1228 = vunpack.c.h.b16 %v445
        %v1229 = vunpack.c.l.b16 %v446
        %v1230 = vunpack.c.h.b16 %v446
        %v1231 = vunpack.c.l.b16 %v447
        %v1232 = vunpack.c.h.b16 %v447
        %v1233 = vunpack.c.l.b16 %v448
        %v1234 = vunpack.c.h.b16 %v448
        %v1235 = vunpack.c.l.b16 %v449
        %v1236 = vunpack.c.h.b16 %v449
        %v1237 = vunpack.c.l.b16 %v450
        %v1238 = vunpack.c.h.b16 %v450
        %v1239 = vunpack.c.l.b16 %v451
        %v1240 = vunpack.c.h.b16 %v451
        %v1241 = vunpack.c.l.b16 %v452
        %v1242 = vunpack.c.h.b16 %v452
        %v1243 = vunpack.c.l.b16 %v453
        %v1244 = vunpack.c.h.b16 %v453
        %v1245 = vunpack.c.l.b16 %v454
        %v1246 = vunpack.c.h.b16 %v454
        %v1247 = vunpack.c.l.b16 %v455
        %v1248 = vunpack.c.h.b16 %v455
        %v1249 = vunpack.c.l.b16 %v456
        %v1250 = vunpack.c.h.b16 %v456
        %v1251 = vunpack.c.l.b16 %v457
        %v1252 = vunpack.c.h.b16 %v457
        %v1253 = vunpack.c.l.b16 %v458
        %v1254 = vunpack.c.h.b16 %v458
        %v1255 = vunpack.c.l.b16 %v459
        %v1256 = vunpack.c.h.b16 %v459
        %v1257 = vunpack.c.l.b16 %v460
        %v1258 = vunpack.c.h.b16 %v460
        %v1259 = vunpack.c.l.b16 %v461
        %v1260 = vunpack.c.h.b16 %v461
        %v1261 = vunpack.c.l.b16 %v462
        %v1262 = vunpack.c.h.b16 %v462
        %v1263 = vunpack.c.l.b16 %v463
        %v1264 = vunpack.c.h.b16 %v463
        %v1265 = vunpack.c.l.b16 %v464
        %v1266 = vunpack.c.h.b16 %v464
        %v1267 = vunpack.c.l.b16 %v465
        %v1268 = vunpack.c.h.b16 %v465
        %v1269 = vunpack.c.l.b16 %v466
        %v1270 = vunpack.c.h.b16 %v466
        %v1271 = vunpack.c.l.b16 %v467
        %v1272 = vunpack.c.h.b16 %v467
        %v1273 = vunpack.c.l.b16 %v468
        %v1274 = vunpack.c.h.b16 %v468
        %v1275 = vunpack.c.l.b16 %v469
        %v1276 = vunpack.c.h.b16 %v469
        %v1277 = vunpack.c.l.b16 %v470
        %v1278 = vunpack.c.h.b16 %v470
        %v1279 = vunpack.c.l.b16 %v471
        %v1280 = vunpack.c.h.b16 %v471
        %v1281 = vunpack.c.l.b16 %v472
        %v1282 = vunpack.c.h.b16 %v472
        %v1283 = vunpack.c.l.b16 %v473
        %v1284 = vunpack.c.h.b16 %v473
        %v1285 = vunpack.c.l.b16 %v474
        %v1286 = vunpack.c.h.b16 %v474
        %v1287 = vunpack.c.l.b16 %v475
        %v1288 = vunpack.c.h.b16 %v475
        %v1289 = vunpack.c.l.b16 %v476
        %v1290 = vunpack.c.h.b16 %v476
        %v1291 = vunpack.c.l.b16 %v477
        %v1292 = vunpack.c.h.b16 %v477
        %v1293 = vunpack.c.l.b16 %v478
        %v1294 = vunpack.c.h.b16 %v478
        %v1295 = vunpack.c.l.b16 %v479
        %v1296 = vunpack.c.h.b16 %v479
        %v1297 = vunpack.c.l.b16 %v480
        %v1298 = vunpack.c.h.b16 %v480
        %v1299 = vunpack.c.l.b16 %v481
        %v1300 = vunpack.c.h.b16 %v481
        %v1301 = vunpack.c.l.b16 %v482
        %v1302 = vunpack.c.h.b16 %v482
        %v1303 = vunpack.c.l.b16 %v483
        %v1304 = vunpack.c.h.b16 %v483
        %v1305 = vunpack.c.l.b16 %v484
        %v1306 = vunpack.c.h.b16 %v484
        %v1307 = vunpack.c.l.b16 %v485
        %v1308 = vunpack.c.h.b16 %v485
        %v1309 = vunpack.c.l.b16 %v486
        %v1310 = vunpack.c.h.b16 %v486
        %v1311 = vunpack.c.l.b16 %v487
        %v1312 = vunpack.c.h.b16 %v487
        %v1313 = vunpack.c.l.b16 %v488
        %v1314 = vunpack.c.h.b16 %v488
        %v1315 = vunpack.c.l.b16 %v489
        %v1316 = vunpack.c.h.b16 %v489
        %v1317 = vunpack.c.l.b16 %v490
        %v1318 = vunpack.c.h.b16 %v490
        %v1319 = vunpack.c.l.b16 %v491
        %v1320 = vunpack.c.h.b16 %v491
        %v1321 = vunpack.c.l.b16 %v492
        %v1322 = vunpack.c.h.b16 %v492
        %v1323 = vunpack.c.l.b16 %v493
        %v1324 = vunpack.c.h.b16 %v493
        %v1325 = vunpack.c.l.b16 %v494
        %v1326 = vunpack.c.h.b16 %v494
        %v1327 = vunpack.c.l.b16 %v495
        %v1328 = vunpack.c.h.b16 %v495
        %v1329 = vunpack.c.l.b16 %v496
        %v1330 = vunpack.c.h.b16 %v496
        %v1331 = vunpack.c.l.b16 %v497
        %v1332 = vunpack.c.h.b16 %v497
        %v1333 = vunpack.c.l.b16 %v498
        %v1334 = vunpack.c.h.b16 %v498
        %v1335 = vunpack.c.l.b16 %v499
        %v1336 = vunpack.c.h.b16 %v499
        %v1337 = vunpack.c.l.b16 %v500
        %v1338 = vunpack.c.h.b16 %v500
        %v1339 = vunpack.c.l.b16 %v501
        %v1340 = vunpack.c.h.b16 %v501
        %v1341 = vunpack.c.l.b16 %v502
        %v1342 = vunpack.c.h.b16 %v502
        %v1343 = vunpack.c.l.b16 %v503
        %v1344 = vunpack.c.h.b16 %v503
        %v1345 = vunpack.c.l.b16 %v504
        %v1346 = vunpack.c.h.b16 %v504
        %v1347 = vunpack.c.l.b16 %v505
        %v1348 = vunpack.c.h.b16 %v505
        %v1349 = vunpack.c.l.b16 %v506
        %v1350 = vunpack.c.h.b16 %v506
        %v1351 = vunpack.c.l.b16 %v507
        %v1352 = vunpack.c.h.b16 %v507
        %v1353 = vunpack.c.l.b16 %v508
        %v1354 = vunpack.c.h.b16 %v508
        %v1355 = vunpack.c.l.b16 %v509
        %v1356 = vunpack.c.h.b16 %v509
        %v1357 = vunpack.c.l.b16 %v510
        %v1358 = vunpack.c.h.b16 %v510
        %v1359 = vunpack.c.l.b16 %v511
        %v1360 = vunpack.c.h.b16 %v511
        %v1361 = vunpack.c.l.b16 %v512
        %v1362 = vunpack.c.h.b16 %v512
        %v1363 = vunpack.c.l.b16 %v513
        %v1364 = vunpack.c.h.b16 %v513
        %v1365 = vunpack.c.l.b16 %v514
        %v1366 = vunpack.c.h.b16 %v514
        %v1367 = vunpack.c.l.b16 %v515
        %v1368 = vunpack.c.h.b16 %v515
        %v1369 = vunpack.c.l.b16 %v516
        %v1370 = vunpack.c.h.b16 %v516
        %v1371 = vunpack.c.l.b16 %v517
        %v1372 = vunpack.c.h.b16 %v517
        %v1373 = vunpack.c.l.b16 %v518
        %v1374 = vunpack.c.h.b16 %v518
        %v1375 = vunpack.c.l.b16 %v519
        %v1376 = vunpack.c.h.b16 %v519
        %v1377 = vunpack.c.l.b16 %v520
        %v1378 = vunpack.c.h.b16 %v520
        %v1379 = vunpack.c.l.b16 %v521
        %v1380 = vunpack.c.h.b16 %v521
        %v1381 = vunpack.c.l.b16 %v522
        %v1382 = vunpack.c.h.b16 %v522
        %v1383 = vunpack.c.l.b16 %v523
        %v1384 = vunpack.c.h.b16 %v523
        %v1385 = vunpack.c.l.b16 %v524
        %v1386 = vunpack.c.h.b16 %v524
        %v1387 = vunpack.c.l.b16 %v525
        %v1388 = vunpack.c.h.b16 %v525
        %v1389 = vunpack.c.l.b16 %v526
        %v1390 = vunpack.c.h.b16 %v526
        %v1391 = vunpack.c.l.b16 %v527
        %v1392 = vunpack.c.h.b16 %v527
        %v1393 = vunpack.c.l.b16 %v528
        %v1394 = vunpack.c.h.b16 %v528
        %v1395 = vunpack.c.l.b16 %v529
        %v1396 = vunpack.c.h.b16 %v529
        %v1397 = vunpack.c.l.b16 %v530
        %v1398 = vunpack.c.h.b16 %v530
        %v1399 = vunpack.c.l.b16 %v531
        %v1400 = vunpack.c.h.b16 %v531
        %v1401 = vunpack.c.l.b16 %v532
        %v1402 = vunpack.c.h.b16 %v532
        %v1403 = vunpack.c.l.b16 %v533
        %v1404 = vunpack.c.h.b16 %v533
        %v1405 = vunpack.c.l.b16 %v534
        %v1406 = vunpack.c.h.b16 %v534
        %v1407 = vunpack.c.l.b16 %v535
        %v1408 = vunpack.c.h.b16 %v535
        %v1409 = vunpack.c.l.b16 %v536
        %v1410 = vunpack.c.h.b16 %v536
        %v1411 = vunpack.c.l.b16 %v537
        %v1412 = vunpack.c.h.b16 %v537
        %v1413 = vunpack.c.l.b16 %v538
        %v1414 = vunpack.c.h.b16 %v538
        %v1415 = vunpack.c.l.b16 %v539
        %v1416 = vunpack.c.h.b16 %v539
        %v1417 = vunpack.c.l.b16 %v540
        %v1418 = vunpack.c.h.b16 %v540
        %v1419 = vunpack.c.l.b16 %v541
        %v1420 = vunpack.c.h.b16 %v541
        %v1421 = vunpack.c.l.b16 %v542
        %v1422 = vunpack.c.h.b16 %v542
        %v1423 = vunpack.c.l.b16 %v543
        %v1424 = vunpack.c.h.b16 %v543
        %v1425 = vunpack.c.l.b16 %v544
        %v1426 = vunpack.c.h.b16 %v544
        %v1427 = vunpack.c.l.b16 %v545
        %v1428 = vunpack.c.h.b16 %v545
        %v1429 = vunpack.c.l.b16 %v546
        %v1430 = vunpack.c.h.b16 %v546
        %v1431 = vunpack.c.l.b16 %v547
        %v1432 = vunpack.c.h.b16 %v547
        %v1433 = vunpack.c.l.b16 %v548
        %v1434 = vunpack.c.h.b16 %v548
        %v1435 = vpack.c.b16 %v863, %v859
        %v1436 = vpack.c.b16 %v864, %v860
        %v1437 = vpack.c.b16 %v865, %v861
        %v1438 = vpack.c.b16 %v866, %v862
        %v1439 = vpack.c.b16 %v871, %v867
        %v1440 = vpack.c.b16 %v872, %v868
        %v1441 = vpack.c.b16 %v873, %v869
        %v1442 = vpack.c.b16 %v874, %v870
        %v1443 = vpack.c.b16 %v879, %v875
        %v1444 = vpack.c.b16 %v880, %v876
        %v1445 = vpack.c.b16 %v881, %v877
        %v1446 = vpack.c.b16 %v882, %v878
        %v1447 = vpack.c.b16 %v887, %v883
        %v1448 = vpack.c.b16 %v888, %v884
        %v1449 = vpack.c.b16 %v889, %v885
        %v1450 = vpack.c.b16 %v890, %v886
        %v1451 = vpack.c.b16 %v895, %v891
        %v1452 = vpack.c.b16 %v896, %v892
        %v1453 = vpack.c.b16 %v897, %v893
        %v1454 = vpack.c.b16 %v898, %v894
        %v1455 = vpack.c.b16 %v903, %v899
        %v1456 = vpack.c.b16 %v904, %v900
        %v1457 = vpack.c.b16 %v905, %v901
        %v1458 = vpack.c.b16 %v906, %v902
        %v1459 = vpack.c.b16 %v911, %v907
        %v1460 = vpack.c.b16 %v912, %v908
        %v1461 = vpack.c.b16 %v913, %v909
        %v1462 = vpack.c.b16 %v914, %v910
        %v1463 = vpack.c.b16 %v919, %v915
        %v1464 = vpack.c.b16 %v920, %v916
        %v1465 = vpack.c.b16 %v921, %v917
        %v1466 = vpack.c.b16 %v922, %v918
        %v1467 = vpack.c.b16 %v927, %v923
        %v1468 = vpack.c.b16 %v928, %v924
        %v1469 = vpack.c.b16 %v929, %v925
        %v1470 = vpack.c.b16 %v930, %v926
        %v1471 = vpack.c.b16 %v935, %v931
        %v1472 = vpack.c.b16 %v936, %v932
        %v1473 = vpack.c.b16 %v937, %v933
        %v1474 = vpack.c.b16 %v938, %v934
        %v1475 = vpack.c.b16 %v943, %v939
        %v1476 = vpack.c.b16 %v944, %v940
        %v1477 = vpack.c.b16 %v945, %v941
        %v1478 = vpack.c.b16 %v946, %v942
        %v1479 = vpack.c.b16 %v951, %v947
        %v1480 = vpack.c.b16 %v952, %v948
        %v1481 = vpack.c.b16 %v953, %v949
        %v1482 = vpack.c.b16 %v954, %v950
        %v1483 = vpack.c.b16 %v959, %v955
        %v1484 = vpack.c.b16 %v960, %v956
        %v1485 = vpack.c.b16 %v961, %v957
        %v1486 = vpack.c.b16 %v962, %v958
        %v1487 = vpack.c.b16 %v967, %v963
        %v1488 = vpack.c.b16 %v968, %v964
        %v1489 = vpack.c.b16 %v969, %v965
        %v1490 = vpack.c.b16 %v970, %v966
        %v1491 = vpack.c.b16 %v975, %v971
        %v1492 = vpack.c.b16 %v976, %v972
        %v1493 = vpack.c.b16 %v977, %v973
        %v1494 = vpack.c.b16 %v978, %v974
        %v1495 = vpack.c.b16 %v983, %v979
        %v1496 = vpack.c.b16 %v984, %v980
        %v1497 = vpack.c.b16 %v985, %v981
        %v1498 = vpack.c.b16 %v986, %v982
        %v1499 = vpack.c.b16 %v991, %v987
        %v1500 = vpack.c.b16 %v992, %v988
        %v1501 = vpack.c.b16 %v993, %v989
        %v1502 = vpack.c.b16 %v994, %v990
        %v1503 = vpack.c.b16 %v999, %v995
        %v1504 = vpack.c.b16 %v1000, %v996
        %v1505 = vpack.c.b16 %v1001, %v997
        %v1506 = vpack.c.b16 %v1002, %v998
        %v1507 = vpack.c.b16 %v1007, %v1003
        %v1508 = vpack.c.b16 %v1008, %v1004
        %v1509 = vpack.c.b16 %v1009, %v1005
        %v1510 = vpack.c.b16 %v1010, %v1006
        %v1511 = vpack.c.b16 %v1015, %v1011
        %v1512 = vpack.c.b16 %v1016, %v1012
        %v1513 = vpack.c.b16 %v1017, %v1013
        %v1514 = vpack.c.b16 %v1018, %v1014
        %v1515 = vpack.c.b16 %v1023, %v1019
        %v1516 = vpack.c.b16 %v1024, %v1020
        %v1517 = vpack.c.b16 %v1025, %v1021
        %v1518 = vpack.c.b16 %v1026, %v1022
        %v1519 = vpack.c.b16 %v1031, %v1027
        %v1520 = vpack.c.b16 %v1032, %v1028
        %v1521 = vpack.c.b16 %v1033, %v1029
        %v1522 = vpack.c.b16 %v1034, %v1030
        %v1523 = vpack.c.b16 %v1039, %v1035
        %v1524 = vpack.c.b16 %v1040, %v1036
        %v1525 = vpack.c.b16 %v1041, %v1037
        %v1526 = vpack.c.b16 %v1042, %v1038
        %v1527 = vpack.c.b16 %v1047, %v1043
        %v1528 = vpack.c.b16 %v1048, %v1044
        %v1529 = vpack.c.b16 %v1049, %v1045
        %v1530 = vpack.c.b16 %v1050, %v1046
        %v1531 = vpack.c.b16 %v1055, %v1051
        %v1532 = vpack.c.b16 %v1056, %v1052
        %v1533 = vpack.c.b16 %v1057, %v1053
        %v1534 = vpack.c.b16 %v1058, %v1054
        %v1535 = vpack.c.b16 %v1063, %v1059
        %v1536 = vpack.c.b16 %v1064, %v1060
        %v1537 = vpack.c.b16 %v1065, %v1061
        %v1538 = vpack.c.b16 %v1066, %v1062
        %v1539 = vpack.c.b16 %v1071, %v1067
        %v1540 = vpack.c.b16 %v1072, %v1068
        %v1541 = vpack.c.b16 %v1073, %v1069
        %v1542 = vpack.c.b16 %v1074, %v1070
        %v1543 = vpack.c.b16 %v1079, %v1075
        %v1544 = vpack.c.b16 %v1080, %v1076
        %v1545 = vpack.c.b16 %v1081, %v1077
        %v1546 = vpack.c.b16 %v1082, %v1078
        %v1547 = vpack.c.b16 %v1087, %v1083
        %v1548 = vpack.c.b16 %v1088, %v1084
        %v1549 = vpack.c.b16 %v1089, %v1085
        %v1550 = vpack.c.b16 %v1090, %v1086
        %v1551 = vpack.c.b16 %v1095, %v1091
        %v1552 = vpack.c.b16 %v1096, %v1092
        %v1553 = vpack.c.b16 %v1097, %v1093
        %v1554 = vpack.c.b16 %v1098, %v1094
        %v1555 = vpack.c.b16 %v1103, %v1099
        %v1556 = vpack.c.b16 %v1104, %v1100
        %v1557 = vpack.c.b16 %v1105, %v1101
        %v1558 = vpack.c.b16 %v1106, %v1102
        %v1559 = vpack.c.b16 %v1111, %v1107
        %v1560 = vpack.c.b16 %v1112, %v1108
        %v1561 = vpack.c.b16 %v1113, %v1109
        %v1562 = vpack.c.b16 %v1114, %v1110
        %v1563 = vpack.c.b16 %v1119, %v1115
        %v1564 = vpack.c.b16 %v1120, %v1116
        %v1565 = vpack.c.b16 %v1121, %v1117
        %v1566 = vpack.c.b16 %v1122, %v1118
        %v1567 = vpack.c.b16 %v1127, %v1123
        %v1568 = vpack.c.b16 %v1128, %v1124
        %v1569 = vpack.c.b16 %v1129, %v1125
        %v1570 = vpack.c.b16 %v1130, %v1126
        %v1571 = vpack.c.b16 %v1135, %v1131
        %v1572 = vpack.c.b16 %v1136, %v1132
        %v1573 = vpack.c.b16 %v1137, %v1133
        %v1574 = vpack.c.b16 %v1138, %v1134
        %v1575 = vpack.c.b16 %v1143, %v1139
        %v1576 = vpack.c.b16 %v1144, %v1140
        %v1577 = vpack.c.b16 %v1145, %v1141
        %v1578 = vpack.c.b16 %v1146, %v1142
        %v1579 = vpack.c.b16 %v1151, %v1147
        %v1580 = vpack.c.b16 %v1152, %v1148
        %v1581 = vpack.c.b16 %v1153, %v1149
        %v1582 = vpack.c.b16 %v1154, %v1150
        %v1583 = vpack.c.b16 %v1159, %v1155
        %v1584 = vpack.c.b16 %v1160, %v1156
        %v1585 = vpack.c.b16 %v1161, %v1157
        %v1586 = vpack.c.b16 %v1162, %v1158
        %v1587 = vpack.c.b16 %v1167, %v1163
        %v1588 = vpack.c.b16 %v1168, %v1164
        %v1589 = vpack.c.b16 %v1169, %v1165
        %v1590 = vpack.c.b16 %v1170, %v1166
        %v1591 = vpack.c.b16 %v1175, %v1171
        %v1592 = vpack.c.b16 %v1176, %v1172
        %v1593 = vpack.c.b16 %v1177, %v1173
        %v1594 = vpack.c.b16 %v1178, %v1174
        %v1595 = vpack.c.b16 %v1183, %v1179
        %v1596 = vpack.c.b16 %v1184, %v1180
        %v1597 = vpack.c.b16 %v1185, %v1181
        %v1598 = vpack.c.b16 %v1186, %v1182
        %v1599 = vpack.c.b16 %v1191, %v1187
        %v1600 = vpack.c.b16 %v1192, %v1188
        %v1601 = vpack.c.b16 %v1193, %v1189
        %v1602 = vpack.c.b16 %v1194, %v1190
        %v1603 = vpack.c.b16 %v1199, %v1195
        %v1604 = vpack.c.b16 %v1200, %v1196
        %v1605 = vpack.c.b16 %v1201, %v1197
        %v1606 = vpack.c.b16 %v1202, %v1198
        %v1607 = vpack.c.b16 %v1207, %v1203
        %v1608 = vpack.c.b16 %v1208, %v1204
        %v1609 = vpack.c.b16 %v1209, %v1205
        %v1610 = vpack.c.b16 %v1210, %v1206
        %v1611 = vpack.c.b16 %v1215, %v1211
        %v1612 = vpack.c.b16 %v1216, %v1212
        %v1613 = vpack.c.b16 %v1217, %v1213
        %v1614 = vpack.c.b16 %v1218, %v1214
        %v1615 = vpack.c.b16 %v1223, %v1219
        %v1616 = vpack.c.b16 %v1224, %v1220
        %v1617 = vpack.c.b16 %v1225, %v1221
        %v1618 = vpack.c.b16 %v1226, %v1222
        %v1619 = vpack.c.b16 %v1231, %v1227
        %v1620 = vpack.c.b16 %v1232, %v1228
        %v1621 = vpack.c.b16 %v1233, %v1229
        %v1622 = vpack.c.b16 %v1234, %v1230
        %v1623 = vpack.c.b16 %v1239, %v1235
        %v1624 = vpack.c.b16 %v1240, %v1236
        %v1625 = vpack.c.b16 %v1241, %v1237
        %v1626 = vpack.c.b16 %v1242, %v1238
        %v1627 = vpack.c.b16 %v1247, %v1243
        %v1628 = vpack.c.b16 %v1248, %v1244
        %v1629 = vpack.c.b16 %v1249, %v1245
        %v1630 = vpack.c.b16 %v1250, %v1246
        %v1631 = vpack.c.b16 %v1255, %v1251
        %v1632 = vpack.c.b16 %v1256, %v1252
        %v1633 = vpack.c.b16 %v1257, %v1253
        %v1634 = vpack.c.b16 %v1258, %v1254
        %v1635 = vpack.c.b16 %v1263, %v1259
        %v1636 = vpack.c.b16 %v1264, %v1260
        %v1637 = vpack.c.b16 %v1265, %v1261
        %v1638 = vpack.c.b16 %v1266, %v1262
        %v1639 = vpack.c.b16 %v1271, %v1267
        %v1640 = vpack.c.b16 %v1272, %v1268
        %v1641 = vpack.c.b16 %v1273, %v1269
        %v1642 = vpack.c.b16 %v1274, %v1270
        %v1643 = vpack.c.b16 %v1279, %v1275
        %v1644 = vpack.c.b16 %v1280, %v1276
        %v1645 = vpack.c.b16 %v1281, %v1277
        %v1646 = vpack.c.b16 %v1282, %v1278
        %v1647 = vpack.c.b16 %v1287, %v1283
        %v1648 = vpack.c.b16 %v1288, %v1284
        %v1649 = vpack.c.b16 %v1289, %v1285
        %v1650 = vpack.c.b16 %v1290, %v1286
        %v1651 = vpack.c.b16 %v1295, %v1291
        %v1652 = vpack.c.b16 %v1296, %v1292
        %v1653 = vpack.c.b16 %v1297, %v1293
        %v1654 = vpack.c.b16 %v1298, %v1294
        %v1655 = vpack.c.b16 %v1303, %v1299
        %v1656 = vpack.c.b16 %v1304, %v1300
        %v1657 = vpack.c.b16 %v1305, %v1301
        %v1658 = vpack.c.b16 %v1306, %v1302
        %v1659 = vpack.c.b16 %v1311, %v1307
        %v1660 = vpack.c.b16 %v1312, %v1308
        %v1661 = vpack.c.b16 %v1313, %v1309
        %v1662 = vpack.c.b16 %v1314, %v1310
        %v1663 = vpack.c.b16 %v1319, %v1315
        %v1664 = vpack.c.b16 %v1320, %v1316
        %v1665 = vpack.c.b16 %v1321, %v1317
        %v1666 = vpack.c.b16 %v1322, %v1318
        %v1667 = vpack.c.b16 %v1327, %v1323
        %v1668 = vpack.c.b16 %v1328, %v1324
        %v1669 = vpack.c.b16 %v1329, %v1325
        %v1670 = vpack.c.b16 %v1330, %v1326
        %v1671 = vpack.c.b16 %v1335, %v1331
        %v1672 = vpack.c.b16 %v1336, %v1332
        %v1673 = vpack.c.b16 %v1337, %v1333
        %v1674 = vpack.c.b16 %v1338, %v1334
        %v1675 = vpack.c.b16 %v1343, %v1339
        %v1676 = vpack.c.b16 %v1344, %v1340
        %v1677 = vpack.c.b16 %v1345, %v1341
        %v1678 = vpack.c.b16 %v1346, %v1342
        %v1679 = vpack.c.b16 %v1351, %v1347
        %v1680 = vpack.c.b16 %v1352, %v1348
        %v1681 = vpack.c.b16 %v1353, %v1349
        %v1682 = vpack.c.b16 %v1354, %v1350
        %v1683 = vpack.c.b16 %v1359, %v1355
        %v1684 = vpack.c.b16 %v1360, %v1356
        %v1685 = vpack.c.b16 %v1361, %v1357
        %v1686 = vpack.c.b16 %v1362, %v1358
        %v1687 = vpack.c.b16 %v1367, %v1363
        %v1688 = vpack.c.b16 %v1368, %v1364
        %v1689 = vpack.c.b16 %v1369, %v1365
        %v1690 = vpack.c.b16 %v1370, %v1366
        %v1691 = vpack.c.b16 %v1375, %v1371
        %v1692 = vpack.c.b16 %v1376, %v1372
        %v1693 = vpack.c.b16 %v1377, %v1373
        %v1694 = vpack.c.b16 %v1378, %v1374
        %v1695 = vpack.c.b16 %v1383, %v1379
        %v1696 = vpack.c.b16 %v1384, %v1380
        %v1697 = vpack.c.b16 %v1385, %v1381
        %v1698 = vpack.c.b16 %v1386, %v1382
        %v1699 = vpack.c.b16 %v1391, %v1387
        %v1700 = vpack.c.b16 %v1392, %v1388
        %v1701 = vpack.c.b16 %v1393, %v1389
        %v1702 = vpack.c.b16 %v1394, %v1390
        %v1703 = vpack.c.b16 %v1399, %v1395
        %v1704 = vpack.c.b16 %v1400, %v1396
        %v1705 = vpack.c.b16 %v1401, %v1397
        %v1706 = vpack.c.b16 %v1402, %v1398
        %v1707 = vpack.c.b16 %v1407, %v1403
        %v1708 = vpack.c.b16 %v1408, %v1404
        %v1709 = vpack.c.b16 %v1409, %v1405
        %v1710 = vpack.c.b16 %v1410, %v1406
        %v1711 = vpack.c.b16 %v1415, %v1411
        %v1712 = vpack.c.b16 %v1416, %v1412
        %v1713 = vpack.c.b16 %v1417, %v1413
        %v1714 = vpack.c.b16 %v1418, %v1414
        %v1715 = vpack.c.b16 %v1423, %v1419
        %v1716 = vpack.c.b16 %v1424, %v1420
        %v1717 = vpack.c.b16 %v1425, %v1421
        %v1718 = vpack.c.b16 %v1426, %v1422
        %v1719 = vpack.c.b16 %v1431, %v1427
        %v1720 = vpack.c.b16 %v1432, %v1428
        %v1721 = vpack.c.b16 %v1433, %v1429
        %v1722 = vpack.c.b16 %v1434, %v1430
        %2011 = vmatpush.bf16.msra.mxu0 %v1463
        %2012 = vmatpush.bf16.msra.mxu0 %v1459
        %2013 = vmatpush.bf16.msra.mxu0 %v1455
        %2014 = vmatpush.bf16.msra.mxu0 %v1451
        %2015 = vmatpush.bf16.msra.mxu0 %v1447
        %2016 = vmatpush.bf16.msra.mxu0 %v1443
        %2017 = vmatpush.bf16.msra.mxu0 %v1439
        %2018 = vmatpush.bf16.msra.mxu0 %v1435
        %2019 = vmatmul.bf16.gmra.mxu0 %v551
        %v2020 = vpop.f32.mrf.mxu0
        %v2021 = vadd.f32 0.0, %v2020
        %v2022 = vpop.f32.mrf.mxu0
        %2023 = vdwg.mxu0
        %2024 = vmatpush.bf16.msra.mxu0 %v1495
        %2025 = vmatpush.bf16.msra.mxu0 %v1491
        %2026 = vmatpush.bf16.msra.mxu0 %v1487
        %2027 = vmatpush.bf16.msra.mxu0 %v1483
        %2028 = vmatpush.bf16.msra.mxu0 %v1479
        %2029 = vmatpush.bf16.msra.mxu0 %v1475
        %2030 = vmatpush.bf16.msra.mxu0 %v1471
        %2031 = vmatpush.bf16.msra.mxu0 %v1467
        %2032 = vmatmul.bf16.gmra.mxu0 %v552
        %v2033 = vpop.f32.mrf.mxu0
        %v2034 = vadd.f32 %v2021, %v2033
        %v2035 = vpop.f32.mrf.mxu0
        %2036 = vdwg.mxu0
        %2037 = vmatpush.bf16.msra.mxu0 %v1527
        %2038 = vmatpush.bf16.msra.mxu0 %v1523
        %2039 = vmatpush.bf16.msra.mxu0 %v1519
        %2040 = vmatpush.bf16.msra.mxu0 %v1515
        %2041 = vmatpush.bf16.msra.mxu0 %v1511
        %2042 = vmatpush.bf16.msra.mxu0 %v1507
        %2043 = vmatpush.bf16.msra.mxu0 %v1503
        %2044 = vmatpush.bf16.msra.mxu0 %v1499
        %2045 = vmatmul.bf16.gmra.mxu0 %v553
        %v2046 = vpop.f32.mrf.mxu0
        %v2047 = vadd.f32 %v2034, %v2046
        %v2048 = vpop.f32.mrf.mxu0
        %2049 = vdwg.mxu0
        %2050 = vmatpush.bf16.msra.mxu0 %v1559
        %2051 = vmatpush.bf16.msra.mxu0 %v1555
        %2052 = vmatpush.bf16.msra.mxu0 %v1551
        %2053 = vmatpush.bf16.msra.mxu0 %v1547
        %2054 = vmatpush.bf16.msra.mxu0 %v1543
        %2055 = vmatpush.bf16.msra.mxu0 %v1539
        %2056 = vmatpush.bf16.msra.mxu0 %v1535
        %2057 = vmatpush.bf16.msra.mxu0 %v1531
        %2058 = vmatmul.bf16.gmra.mxu0 %v554
        %v2059 = vpop.f32.mrf.mxu0
        %v2060 = vadd.f32 %v2047, %v2059
        %v2061 = vpop.f32.mrf.mxu0
        %2062 = vdwg.mxu0
        %2063 = vmatpush.bf16.msra.mxu0 %v1591
        %2064 = vmatpush.bf16.msra.mxu0 %v1587
        %2065 = vmatpush.bf16.msra.mxu0 %v1583
        %2066 = vmatpush.bf16.msra.mxu0 %v1579
        %2067 = vmatpush.bf16.msra.mxu0 %v1575
        %2068 = vmatpush.bf16.msra.mxu0 %v1571
        %2069 = vmatpush.bf16.msra.mxu0 %v1567
        %2070 = vmatpush.bf16.msra.mxu0 %v1563
        %2071 = vmatmul.bf16.gmra.mxu0 %v555
        %v2072 = vpop.f32.mrf.mxu0
        %v2073 = vadd.f32 %v2060, %v2072
        %v2074 = vpop.f32.mrf.mxu0
        %2075 = vdwg.mxu0
        %2076 = vmatpush.bf16.msra.mxu0 %v1623
        %2077 = vmatpush.bf16.msra.mxu0 %v1619
        %2078 = vmatpush.bf16.msra.mxu0 %v1615
        %2079 = vmatpush.bf16.msra.mxu0 %v1611
        %2080 = vmatpush.bf16.msra.mxu0 %v1607
        %2081 = vmatpush.bf16.msra.mxu0 %v1603
        %2082 = vmatpush.bf16.msra.mxu0 %v1599
        %2083 = vmatpush.bf16.msra.mxu0 %v1595
        %2084 = vmatmul.bf16.gmra.mxu0 %v556
        %v2085 = vpop.f32.mrf.mxu0
        %v2086 = vadd.f32 %v2073, %v2085
        %v2087 = vpop.f32.mrf.mxu0
        %2088 = vdwg.mxu0
        %2089 = vmatpush.bf16.msra.mxu0 %v1655
        %2090 = vmatpush.bf16.msra.mxu0 %v1651
        %2091 = vmatpush.bf16.msra.mxu0 %v1647
        %2092 = vmatpush.bf16.msra.mxu0 %v1643
        %2093 = vmatpush.bf16.msra.mxu0 %v1639
        %2094 = vmatpush.bf16.msra.mxu0 %v1635
        %2095 = vmatpush.bf16.msra.mxu0 %v1631
        %2096 = vmatpush.bf16.msra.mxu0 %v1627
        %2097 = vmatmul.bf16.gmra.mxu0 %v557
        %v2098 = vpop.f32.mrf.mxu0
        %v2099 = vadd.f32 %v2086, %v2098
        %v2100 = vpop.f32.mrf.mxu0
        %2101 = vdwg.mxu0
        %2102 = vmatpush.bf16.msra.mxu0 %v1687
        %2103 = vmatpush.bf16.msra.mxu0 %v1683
        %2104 = vmatpush.bf16.msra.mxu0 %v1679
        %2105 = vmatpush.bf16.msra.mxu0 %v1675
        %2106 = vmatpush.bf16.msra.mxu0 %v1671
        %2107 = vmatpush.bf16.msra.mxu0 %v1667
        %2108 = vmatpush.bf16.msra.mxu0 %v1663
        %2109 = vmatpush.bf16.msra.mxu0 %v1659
        %2110 = vmatmul.bf16.gmra.mxu0 %v558
        %v2111 = vpop.f32.mrf.mxu0
        %v2112 = vadd.f32 %v2099, %v2111
        %v2113 = vpop.f32.mrf.mxu0
        %2114 = vdwg.mxu0
        %2115 = vmatpush.bf16.msra.mxu0 %v1719
        %2116 = vmatpush.bf16.msra.mxu0 %v1715
        %2117 = vmatpush.bf16.msra.mxu0 %v1711
        %2118 = vmatpush.bf16.msra.mxu0 %v1707
        %2119 = vmatpush.bf16.msra.mxu0 %v1703
        %2120 = vmatpush.bf16.msra.mxu0 %v1699
        %2121 = vmatpush.bf16.msra.mxu0 %v1695
        %2122 = vmatpush.bf16.msra.mxu0 %v1691
        %2123 = vmatmul.bf16.gmra.mxu0 %v561
        %v2124 = vpop.f32.mrf.mxu0
        %v2125 = vadd.f32 %v2112, %v2124
        %v2126 = vpop.f32.mrf.mxu0
        %2127 = vdwg.mxu0
        %2128 = vmatpush.bf16.msra.mxu0 %v1464
        %2129 = vmatpush.bf16.msra.mxu0 %v1460
        %2130 = vmatpush.bf16.msra.mxu0 %v1456
        %2131 = vmatpush.bf16.msra.mxu0 %v1452
        %2132 = vmatpush.bf16.msra.mxu0 %v1448
        %2133 = vmatpush.bf16.msra.mxu0 %v1444
        %2134 = vmatpush.bf16.msra.mxu0 %v1440
        %2135 = vmatpush.bf16.msra.mxu0 %v1436
        %2136 = vmatmul.bf16.gmra.mxu0 %v551
        %v2137 = vpop.f32.mrf.mxu0
        %v2138 = vadd.f32 0.0, %v2137
        %v2139 = vpop.f32.mrf.mxu0
        %2140 = vdwg.mxu0
        %2141 = vmatpush.bf16.msra.mxu0 %v1496
        %2142 = vmatpush.bf16.msra.mxu0 %v1492
        %2143 = vmatpush.bf16.msra.mxu0 %v1488
        %2144 = vmatpush.bf16.msra.mxu0 %v1484
        %2145 = vmatpush.bf16.msra.mxu0 %v1480
        %2146 = vmatpush.bf16.msra.mxu0 %v1476
        %2147 = vmatpush.bf16.msra.mxu0 %v1472
        %2148 = vmatpush.bf16.msra.mxu0 %v1468
        %2149 = vmatmul.bf16.gmra.mxu0 %v552
        %v2150 = vpop.f32.mrf.mxu0
        %v2151 = vadd.f32 %v2138, %v2150
        %v2152 = vpop.f32.mrf.mxu0
        %2153 = vdwg.mxu0
        %2154 = vmatpush.bf16.msra.mxu0 %v1528
        %2155 = vmatpush.bf16.msra.mxu0 %v1524
        %2156 = vmatpush.bf16.msra.mxu0 %v1520
        %2157 = vmatpush.bf16.msra.mxu0 %v1516
        %2158 = vmatpush.bf16.msra.mxu0 %v1512
        %2159 = vmatpush.bf16.msra.mxu0 %v1508
        %2160 = vmatpush.bf16.msra.mxu0 %v1504
        %2161 = vmatpush.bf16.msra.mxu0 %v1500
        %2162 = vmatmul.bf16.gmra.mxu0 %v553
        %v2163 = vpop.f32.mrf.mxu0
        %v2164 = vadd.f32 %v2151, %v2163
        %v2165 = vpop.f32.mrf.mxu0
        %2166 = vdwg.mxu0
        %2167 = vmatpush.bf16.msra.mxu0 %v1560
        %2168 = vmatpush.bf16.msra.mxu0 %v1556
        %2169 = vmatpush.bf16.msra.mxu0 %v1552
        %2170 = vmatpush.bf16.msra.mxu0 %v1548
        %2171 = vmatpush.bf16.msra.mxu0 %v1544
        %2172 = vmatpush.bf16.msra.mxu0 %v1540
        %2173 = vmatpush.bf16.msra.mxu0 %v1536
        %2174 = vmatpush.bf16.msra.mxu0 %v1532
        %2175 = vmatmul.bf16.gmra.mxu0 %v554
        %v2176 = vpop.f32.mrf.mxu0
        %v2177 = vadd.f32 %v2164, %v2176
        %v2178 = vpop.f32.mrf.mxu0
        %2179 = vdwg.mxu0
        %2180 = vmatpush.bf16.msra.mxu0 %v1592
        %2181 = vmatpush.bf16.msra.mxu0 %v1588
        %2182 = vmatpush.bf16.msra.mxu0 %v1584
        %2183 = vmatpush.bf16.msra.mxu0 %v1580
        %2184 = vmatpush.bf16.msra.mxu0 %v1576
        %2185 = vmatpush.bf16.msra.mxu0 %v1572
        %2186 = vmatpush.bf16.msra.mxu0 %v1568
        %2187 = vmatpush.bf16.msra.mxu0 %v1564
        %2188 = vmatmul.bf16.gmra.mxu0 %v555
        %v2189 = vpop.f32.mrf.mxu0
        %v2190 = vadd.f32 %v2177, %v2189
        %v2191 = vpop.f32.mrf.mxu0
        %2192 = vdwg.mxu0
        %2193 = vmatpush.bf16.msra.mxu0 %v1624
        %2194 = vmatpush.bf16.msra.mxu0 %v1620
        %2195 = vmatpush.bf16.msra.mxu0 %v1616
        %2196 = vmatpush.bf16.msra.mxu0 %v1612
        %2197 = vmatpush.bf16.msra.mxu0 %v1608
        %2198 = vmatpush.bf16.msra.mxu0 %v1604
        %2199 = vmatpush.bf16.msra.mxu0 %v1600
        %2200 = vmatpush.bf16.msra.mxu0 %v1596
        %2201 = vmatmul.bf16.gmra.mxu0 %v556
        %v2202 = vpop.f32.mrf.mxu0
        %v2203 = vadd.f32 %v2190, %v2202
        %v2204 = vpop.f32.mrf.mxu0
        %2205 = vdwg.mxu0
        %2206 = vmatpush.bf16.msra.mxu0 %v1656
        %2207 = vmatpush.bf16.msra.mxu0 %v1652
        %2208 = vmatpush.bf16.msra.mxu0 %v1648
        %2209 = vmatpush.bf16.msra.mxu0 %v1644
        %2210 = vmatpush.bf16.msra.mxu0 %v1640
        %2211 = vmatpush.bf16.msra.mxu0 %v1636
        %2212 = vmatpush.bf16.msra.mxu0 %v1632
        %2213 = vmatpush.bf16.msra.mxu0 %v1628
        %2214 = vmatmul.bf16.gmra.mxu0 %v557
        %v2215 = vpop.f32.mrf.mxu0
        %v2216 = vadd.f32 %v2203, %v2215
        %v2217 = vpop.f32.mrf.mxu0
        %2218 = vdwg.mxu0
        %2219 = vmatpush.bf16.msra.mxu0 %v1688
        %2220 = vmatpush.bf16.msra.mxu0 %v1684
        %2221 = vmatpush.bf16.msra.mxu0 %v1680
        %2222 = vmatpush.bf16.msra.mxu0 %v1676
        %2223 = vmatpush.bf16.msra.mxu0 %v1672
        %2224 = vmatpush.bf16.msra.mxu0 %v1668
        %2225 = vmatpush.bf16.msra.mxu0 %v1664
        %2226 = vmatpush.bf16.msra.mxu0 %v1660
        %2227 = vmatmul.bf16.gmra.mxu0 %v558
        %v2228 = vpop.f32.mrf.mxu0
        %v2229 = vadd.f32 %v2216, %v2228
        %v2230 = vpop.f32.mrf.mxu0
        %2231 = vdwg.mxu0
        %2232 = vmatpush.bf16.msra.mxu0 %v1720
        %2233 = vmatpush.bf16.msra.mxu0 %v1716
        %2234 = vmatpush.bf16.msra.mxu0 %v1712
        %2235 = vmatpush.bf16.msra.mxu0 %v1708
        %2236 = vmatpush.bf16.msra.mxu0 %v1704
        %2237 = vmatpush.bf16.msra.mxu0 %v1700
        %2238 = vmatpush.bf16.msra.mxu0 %v1696
        %2239 = vmatpush.bf16.msra.mxu0 %v1692
        %2240 = vmatmul.bf16.gmra.mxu0 %v561
        %v2241 = vpop.f32.mrf.mxu0
        %v2242 = vadd.f32 %v2229, %v2241
        %v2243 = vpop.f32.mrf.mxu0
        %2244 = vdwg.mxu0
        %2245 = vmatpush.bf16.msra.mxu0 %v1465
        %2246 = vmatpush.bf16.msra.mxu0 %v1461
        %2247 = vmatpush.bf16.msra.mxu0 %v1457
        %2248 = vmatpush.bf16.msra.mxu0 %v1453
        %2249 = vmatpush.bf16.msra.mxu0 %v1449
        %2250 = vmatpush.bf16.msra.mxu0 %v1445
        %2251 = vmatpush.bf16.msra.mxu0 %v1441
        %2252 = vmatpush.bf16.msra.mxu0 %v1437
        %2253 = vmatmul.bf16.gmra.mxu0 %v551
        %v2254 = vpop.f32.mrf.mxu0
        %v2255 = vadd.f32 0.0, %v2254
        %v2256 = vpop.f32.mrf.mxu0
        %2257 = vdwg.mxu0
        %2258 = vmatpush.bf16.msra.mxu0 %v1497
        %2259 = vmatpush.bf16.msra.mxu0 %v1493
        %2260 = vmatpush.bf16.msra.mxu0 %v1489
        %2261 = vmatpush.bf16.msra.mxu0 %v1485
        %2262 = vmatpush.bf16.msra.mxu0 %v1481
        %2263 = vmatpush.bf16.msra.mxu0 %v1477
        %2264 = vmatpush.bf16.msra.mxu0 %v1473
        %2265 = vmatpush.bf16.msra.mxu0 %v1469
        %2266 = vmatmul.bf16.gmra.mxu0 %v552
        %v2267 = vpop.f32.mrf.mxu0
        %v2268 = vadd.f32 %v2255, %v2267
        %v2269 = vpop.f32.mrf.mxu0
        %2270 = vdwg.mxu0
        %2271 = vmatpush.bf16.msra.mxu0 %v1529
        %2272 = vmatpush.bf16.msra.mxu0 %v1525
        %2273 = vmatpush.bf16.msra.mxu0 %v1521
        %2274 = vmatpush.bf16.msra.mxu0 %v1517
        %2275 = vmatpush.bf16.msra.mxu0 %v1513
        %2276 = vmatpush.bf16.msra.mxu0 %v1509
        %2277 = vmatpush.bf16.msra.mxu0 %v1505
        %2278 = vmatpush.bf16.msra.mxu0 %v1501
        %2279 = vmatmul.bf16.gmra.mxu0 %v553
        %v2280 = vpop.f32.mrf.mxu0
        %v2281 = vadd.f32 %v2268, %v2280
        %v2282 = vpop.f32.mrf.mxu0
        %2283 = vdwg.mxu0
        %2284 = vmatpush.bf16.msra.mxu0 %v1561
        %2285 = vmatpush.bf16.msra.mxu0 %v1557
        %2286 = vmatpush.bf16.msra.mxu0 %v1553
        %2287 = vmatpush.bf16.msra.mxu0 %v1549
        %2288 = vmatpush.bf16.msra.mxu0 %v1545
        %2289 = vmatpush.bf16.msra.mxu0 %v1541
        %2290 = vmatpush.bf16.msra.mxu0 %v1537
        %2291 = vmatpush.bf16.msra.mxu0 %v1533
        %2292 = vmatmul.bf16.gmra.mxu0 %v554
        %v2293 = vpop.f32.mrf.mxu0
        %v2294 = vadd.f32 %v2281, %v2293
        %v2295 = vpop.f32.mrf.mxu0
        %2296 = vdwg.mxu0
        %2297 = vmatpush.bf16.msra.mxu0 %v1593
        %2298 = vmatpush.bf16.msra.mxu0 %v1589
        %2299 = vmatpush.bf16.msra.mxu0 %v1585
        %2300 = vmatpush.bf16.msra.mxu0 %v1581
        %2301 = vmatpush.bf16.msra.mxu0 %v1577
        %2302 = vmatpush.bf16.msra.mxu0 %v1573
        %2303 = vmatpush.bf16.msra.mxu0 %v1569
        %2304 = vmatpush.bf16.msra.mxu0 %v1565
        %2305 = vmatmul.bf16.gmra.mxu0 %v555
        %v2306 = vpop.f32.mrf.mxu0
        %v2307 = vadd.f32 %v2294, %v2306
        %v2308 = vpop.f32.mrf.mxu0
        %2309 = vdwg.mxu0
        %2310 = vmatpush.bf16.msra.mxu0 %v1625
        %2311 = vmatpush.bf16.msra.mxu0 %v1621
        %2312 = vmatpush.bf16.msra.mxu0 %v1617
        %2313 = vmatpush.bf16.msra.mxu0 %v1613
        %2314 = vmatpush.bf16.msra.mxu0 %v1609
        %2315 = vmatpush.bf16.msra.mxu0 %v1605
        %2316 = vmatpush.bf16.msra.mxu0 %v1601
        %2317 = vmatpush.bf16.msra.mxu0 %v1597
        %2318 = vmatmul.bf16.gmra.mxu0 %v556
        %v2319 = vpop.f32.mrf.mxu0
        %v2320 = vadd.f32 %v2307, %v2319
        %v2321 = vpop.f32.mrf.mxu0
        %2322 = vdwg.mxu0
        %2323 = vmatpush.bf16.msra.mxu0 %v1657
        %2324 = vmatpush.bf16.msra.mxu0 %v1653
        %2325 = vmatpush.bf16.msra.mxu0 %v1649
        %2326 = vmatpush.bf16.msra.mxu0 %v1645
        %2327 = vmatpush.bf16.msra.mxu0 %v1641
        %2328 = vmatpush.bf16.msra.mxu0 %v1637
        %2329 = vmatpush.bf16.msra.mxu0 %v1633
        %2330 = vmatpush.bf16.msra.mxu0 %v1629
        %2331 = vmatmul.bf16.gmra.mxu0 %v557
        %v2332 = vpop.f32.mrf.mxu0
        %v2333 = vadd.f32 %v2320, %v2332
        %v2334 = vpop.f32.mrf.mxu0
        %2335 = vdwg.mxu0
        %2336 = vmatpush.bf16.msra.mxu0 %v1689
        %2337 = vmatpush.bf16.msra.mxu0 %v1685
        %2338 = vmatpush.bf16.msra.mxu0 %v1681
        %2339 = vmatpush.bf16.msra.mxu0 %v1677
        %2340 = vmatpush.bf16.msra.mxu0 %v1673
        %2341 = vmatpush.bf16.msra.mxu0 %v1669
        %2342 = vmatpush.bf16.msra.mxu0 %v1665
        %2343 = vmatpush.bf16.msra.mxu0 %v1661
        %2344 = vmatmul.bf16.gmra.mxu0 %v558
        %v2345 = vpop.f32.mrf.mxu0
        %v2346 = vadd.f32 %v2333, %v2345
        %v2347 = vpop.f32.mrf.mxu0
        %2348 = vdwg.mxu0
        %2349 = vmatpush.bf16.msra.mxu0 %v1721
        %2350 = vmatpush.bf16.msra.mxu0 %v1717
        %2351 = vmatpush.bf16.msra.mxu0 %v1713
        %2352 = vmatpush.bf16.msra.mxu0 %v1709
        %2353 = vmatpush.bf16.msra.mxu0 %v1705
        %2354 = vmatpush.bf16.msra.mxu0 %v1701
        %2355 = vmatpush.bf16.msra.mxu0 %v1697
        %2356 = vmatpush.bf16.msra.mxu0 %v1693
        %2357 = vmatmul.bf16.gmra.mxu0 %v561
        %v2358 = vpop.f32.mrf.mxu0
        %v2359 = vadd.f32 %v2346, %v2358
        %v2360 = vpop.f32.mrf.mxu0
        %2361 = vdwg.mxu0
        %2362 = vmatpush.bf16.msra.mxu0 %v1466
        %2363 = vmatpush.bf16.msra.mxu0 %v1462
        %2364 = vmatpush.bf16.msra.mxu0 %v1458
        %2365 = vmatpush.bf16.msra.mxu0 %v1454
        %2366 = vmatpush.bf16.msra.mxu0 %v1450
        %2367 = vmatpush.bf16.msra.mxu0 %v1446
        %2368 = vmatpush.bf16.msra.mxu0 %v1442
        %2369 = vmatpush.bf16.msra.mxu0 %v1438
        %2370 = vmatmul.bf16.gmra.mxu0 %v551
        %v2371 = vpop.f32.mrf.mxu0
        %v2372 = vadd.f32 0.0, %v2371
        %v2373 = vpop.f32.mrf.mxu0
        %2374 = vdwg.mxu0
        %2375 = vmatpush.bf16.msra.mxu0 %v1498
        %2376 = vmatpush.bf16.msra.mxu0 %v1494
        %2377 = vmatpush.bf16.msra.mxu0 %v1490
        %2378 = vmatpush.bf16.msra.mxu0 %v1486
        %2379 = vmatpush.bf16.msra.mxu0 %v1482
        %2380 = vmatpush.bf16.msra.mxu0 %v1478
        %2381 = vmatpush.bf16.msra.mxu0 %v1474
        %2382 = vmatpush.bf16.msra.mxu0 %v1470
        %2383 = vmatmul.bf16.gmra.mxu0 %v552
        %v2384 = vpop.f32.mrf.mxu0
        %v2385 = vadd.f32 %v2372, %v2384
        %v2386 = vpop.f32.mrf.mxu0
        %2387 = vdwg.mxu0
        %2388 = vmatpush.bf16.msra.mxu0 %v1530
        %2389 = vmatpush.bf16.msra.mxu0 %v1526
        %2390 = vmatpush.bf16.msra.mxu0 %v1522
        %2391 = vmatpush.bf16.msra.mxu0 %v1518
        %2392 = vmatpush.bf16.msra.mxu0 %v1514
        %2393 = vmatpush.bf16.msra.mxu0 %v1510
        %2394 = vmatpush.bf16.msra.mxu0 %v1506
        %2395 = vmatpush.bf16.msra.mxu0 %v1502
        %2396 = vmatmul.bf16.gmra.mxu0 %v553
        %v2397 = vpop.f32.mrf.mxu0
        %v2398 = vadd.f32 %v2385, %v2397
        %v2399 = vpop.f32.mrf.mxu0
        %2400 = vdwg.mxu0
        %2401 = vmatpush.bf16.msra.mxu0 %v1562
        %2402 = vmatpush.bf16.msra.mxu0 %v1558
        %2403 = vmatpush.bf16.msra.mxu0 %v1554
        %2404 = vmatpush.bf16.msra.mxu0 %v1550
        %2405 = vmatpush.bf16.msra.mxu0 %v1546
        %2406 = vmatpush.bf16.msra.mxu0 %v1542
        %2407 = vmatpush.bf16.msra.mxu0 %v1538
        %2408 = vmatpush.bf16.msra.mxu0 %v1534
        %2409 = vmatmul.bf16.gmra.mxu0 %v554
        %v2410 = vpop.f32.mrf.mxu0
        %v2411 = vadd.f32 %v2398, %v2410
        %v2412 = vpop.f32.mrf.mxu0
        %2413 = vdwg.mxu0
        %2414 = vmatpush.bf16.msra.mxu0 %v1594
        %2415 = vmatpush.bf16.msra.mxu0 %v1590
        %2416 = vmatpush.bf16.msra.mxu0 %v1586
        %2417 = vmatpush.bf16.msra.mxu0 %v1582
        %2418 = vmatpush.bf16.msra.mxu0 %v1578
        %2419 = vmatpush.bf16.msra.mxu0 %v1574
        %2420 = vmatpush.bf16.msra.mxu0 %v1570
        %2421 = vmatpush.bf16.msra.mxu0 %v1566
        %2422 = vmatmul.bf16.gmra.mxu0 %v555
        %v2423 = vpop.f32.mrf.mxu0
        %v2424 = vadd.f32 %v2411, %v2423
        %v2425 = vpop.f32.mrf.mxu0
        %2426 = vdwg.mxu0
        %2427 = vmatpush.bf16.msra.mxu0 %v1626
        %2428 = vmatpush.bf16.msra.mxu0 %v1622
        %2429 = vmatpush.bf16.msra.mxu0 %v1618
        %2430 = vmatpush.bf16.msra.mxu0 %v1614
        %2431 = vmatpush.bf16.msra.mxu0 %v1610
        %2432 = vmatpush.bf16.msra.mxu0 %v1606
        %2433 = vmatpush.bf16.msra.mxu0 %v1602
        %2434 = vmatpush.bf16.msra.mxu0 %v1598
        %2435 = vmatmul.bf16.gmra.mxu0 %v556
        %v2436 = vpop.f32.mrf.mxu0
        %v2437 = vadd.f32 %v2424, %v2436
        %v2438 = vpop.f32.mrf.mxu0
        %2439 = vdwg.mxu0
        %2440 = vmatpush.bf16.msra.mxu0 %v1658
        %2441 = vmatpush.bf16.msra.mxu0 %v1654
        %2442 = vmatpush.bf16.msra.mxu0 %v1650
        %2443 = vmatpush.bf16.msra.mxu0 %v1646
        %2444 = vmatpush.bf16.msra.mxu0 %v1642
        %2445 = vmatpush.bf16.msra.mxu0 %v1638
        %2446 = vmatpush.bf16.msra.mxu0 %v1634
        %2447 = vmatpush.bf16.msra.mxu0 %v1630
        %2448 = vmatmul.bf16.gmra.mxu0 %v557
        %v2449 = vpop.f32.mrf.mxu0
        %v2450 = vadd.f32 %v2437, %v2449
        %v2451 = vpop.f32.mrf.mxu0
        %2452 = vdwg.mxu0
        %2453 = vmatpush.bf16.msra.mxu0 %v1690
        %2454 = vmatpush.bf16.msra.mxu0 %v1686
        %2455 = vmatpush.bf16.msra.mxu0 %v1682
        %2456 = vmatpush.bf16.msra.mxu0 %v1678
        %2457 = vmatpush.bf16.msra.mxu0 %v1674
        %2458 = vmatpush.bf16.msra.mxu0 %v1670
        %2459 = vmatpush.bf16.msra.mxu0 %v1666
        %2460 = vmatpush.bf16.msra.mxu0 %v1662
        %2461 = vmatmul.bf16.gmra.mxu0 %v558
        %v2462 = vpop.f32.mrf.mxu0
        %v2463 = vadd.f32 %v2450, %v2462
        %v2464 = vpop.f32.mrf.mxu0
        %2465 = vdwg.mxu0
        %2466 = vmatpush.bf16.msra.mxu0 %v1722
        %2467 = vmatpush.bf16.msra.mxu0 %v1718
        %2468 = vmatpush.bf16.msra.mxu0 %v1714
        %2469 = vmatpush.bf16.msra.mxu0 %v1710
        %2470 = vmatpush.bf16.msra.mxu0 %v1706
        %2471 = vmatpush.bf16.msra.mxu0 %v1702
        %2472 = vmatpush.bf16.msra.mxu0 %v1698
        %2473 = vmatpush.bf16.msra.mxu0 %v1694
        %2474 = vmatmul.bf16.gmra.mxu0 %v561
        %v2475 = vpop.f32.mrf.mxu0
        %v2476 = vadd.f32 %v2463, %v2475
        %v2477 = vpop.f32.mrf.mxu0
        %2478 = vdwg.mxu0
        %v2483 = vrot.slane %v2242, 6
        %v2484 = vrot.slane %v2359, 4
        %v2485 = vrot.slane %v2476, 2
        %vm2486 = vcmask 1041408
        %v2487 = vsel %vm2486, %v2125, %v2483
        %vm2488 = vcmask 1045508
        %v2489 = vsel %vm2488, %v2484, %v2485
        %vm2490 = vcmask 1043456
        %v2491 = vsel %vm2490, %v2487, %v2489
        %v2493 = vadd.f32 %v258, %v2491
        %2494 = vst [vmem:[#allocation2] sm:$0xff] %v2493
        %p2495 = scmp.eq.s32.totalorder %s23, 1
        // Predicated region
        $region45: #{vae_forward.4} parent=31 // pred_check
          %p2496 = pneg %p2495
        $region46: #{vae_forward.4} parent=31 // pred_check_branch
          %2498 = sbr.rel (%p2496) target = $region48
        $region47: #{vae_forward.4} parent=31 // pred_region
          %v2499 = vld [vmem:[#allocation2] sm:$0xff]
          %v2500 = vld [vmem:[#allocation5] sm:$0xf]
          %v2502 = vperm.slane %v2500, 0
          %v2503 = vperm.slane %v2500, 1
          %v2504 = vperm.slane %v2500, 2
          %v2505 = vperm.slane %v2500, 3
          %v2506 = vrot.slane %v2503, 6
          %v2507 = vrot.slane %v2504, 4
          %v2508 = vrot.slane %v2505, 2
          %v2509 = vsel %vm2486, %v2502, %v2506
          %v2510 = vsel %vm2488, %v2507, %v2508
          %v2511 = vsel %vm2490, %v2509, %v2510
          %v2513 = vadd.f32 %v2499, %v2511
          %v2514 = vmax.f32 %v2513, 0.0
          %2516 = vst [vmem:[#allocation1] ss:$4 sm:$0xff] %v2514
          %v2517 = vld.sshfl [vmem:[#allocation1] sm:$0xff pattern:$0x73625140]
          %v2518 = vld.sshfl [vmem:[#allocation1 + $0x8] sm:$0xff pattern:$0x73625140]
          %v2519 = vld.sshfl [vmem:[#allocation1 + $0x10] sm:$0xff pattern:$0x73625140]
          %v2520 = vld.sshfl [vmem:[#allocation1 + $0x18] sm:$0xff pattern:$0x73625140]
          %v2525 = vpack.c.bf16 %v2518, %v2517
          %v2526 = vpack.c.bf16 %v2520, %v2519
          %v2529 = vrot.slane %v2525, 3
          %v2530 = vrot.slane %v2526, 6
          %v2531 = vrot.slane %v2526, 1
          %vm2532 = vcmask 1040384
          %v2535 = vsel %vm2532, %v2525, %v2529
          %vm2536 = vcmask 1042434
          %v2539 = vsel %vm2536, %v2530, %v2531
          %v2540 = vsel %vm2486, %v2535, %v2539
          %2542 = vst [vmem:[%s251] sm:$0xf] %v2540
        $region48: #{vae_forward.4} parent=31 // pred_fallthru
          _
        %s2543 = smul.u32 4, %s22
        %p2544 = scmp.lt.s32.totalorder %s2543, 3
        %s2545 = scalar_select %p2544, %s2543, 3
        %s2546 = scalar_lea.vmem %s3, %s2545
        // Predicated region
        $region49: #{vae_forward.4} parent=31 // pred_check
          %p2547 = pneg %p128
        $region50: #{vae_forward.4} parent=31 // pred_check_branch
          %2549 = sbr.rel (%p2547) target = $region52
        $region51: #{vae_forward.4} parent=31 // pred_region
          %s2550 = smul.u32 4, %s22
        $region52: #{vae_forward.4} parent=31 // pred_fallthru
          _
        // Predicated region
        $region53: #{vae_forward.4} parent=31 // pred_check
          %p2551 = pneg %p128
        $region54: #{vae_forward.4} parent=31 // pred_check_branch
          %2553 = sbr.rel (%p2551) target = $region56
        $region55: #{vae_forward.4} parent=31 // pred_region
          %s2554 = smul.u32 4, %s22
          %p2555 = scmp.lt.s32.totalorder %s2554, 3
          %s2556 = scalar_select %p2555, %s2554, 3
          %s2557 = scalar_lea.vmem %s3, %s2556
        $region56: #{vae_forward.4} parent=31 // pred_fallthru
          _
      $region32: #{vae_forward.4} parent=5 // pred_fallthru
        _
      %p2558 = scmp.le.s32.totalorder 2, %s13
      // Predicated region
      $region57: #{vae_forward.4} parent=5 // pred_check
        %p2559 = pneg %p2558
      $region58: #{vae_forward.4} parent=5 // pred_check_branch
        %2561 = sbr.rel (%p2559) target = $region60
      $region59: #{vae_forward.4} parent=5 // pred_region
        %s2562 = ssub.s32 %s13, 2
      $region60: #{vae_forward.4} parent=5 // pred_fallthru
        _
    $region6: #{vae_forward.4} parent=1 // loop_footer
      %s17 = sadd.s32 1, %s13
    $region7: #{vae_forward.4} parent=1 // loop_footer_branch
      %12 = sbr.rel target = $region3
    $region8: #{vae_forward.4} parent=1 // loop_exit
      _
    %2563 = vsyncpa [#allocation4], 1
    %s2564 = scalar_lea.sflag [#allocation4], 1
    %2565 = vsyncpa %s2564, 1
    %2566 = vsyncpa [#allocation6], 1

// kernel: vae_forward.5
$region0: #{vae_forward.5}
  #allocation0 [shape = 'u32[]', space=smem, size = 0x4, offset = 0x4, fixed_abs, tag = 'smem constant byte address 0x4 - core index']
  #allocation1 [shape = 'u32[72,128]{1,0:T(1,128)}', space=vmem, size = 0x9000, scoped, tag = 'internal scratch']
  #allocation2 [shape = 'f32[2,1024]{1,0:T(2,128)}', space=vmem, size = 0x2000, scoped, tag = 'scratch operand']
  %s0 = inlined_call_operand.vmem [shape: bf16[2,512], index: 0, kind: input, shape index: {}]
  %s1 = inlined_call_operand.vmem [shape: bf16[512,1024], index: 1, kind: input, shape index: {}]
  %s2 = inlined_call_operand.vmem [shape: f32[1,1024], index: 2, kind: input, shape index: {}]
  %s3 = inlined_call_operand.vmem [shape: f32[2,1024], index: 3, kind: output, shape index: {}]
  %s4 = sld [smem:[#allocation0]]
  $region30: #{vae_forward.5} parent=0
    _
  %s6 = ssub.s32 1, %s4
  %s7 = scalar_select 0, %s6, %s4
  // Predicated region
  $region2: #{vae_forward.5} parent=0 // pred_check
    _
  $region3: #{vae_forward.5} parent=0 // pred_check_branch
    %9 = sbr.rel (0) target = $region5
  $region4: #{vae_forward.5} parent=0 // pred_region
    _
  $region5: #{vae_forward.5} parent=0 // pred_fallthru
    _
  // Predicated region
  $region6: #{vae_forward.5} parent=0 // pred_check
    _
  $region7: #{vae_forward.5} parent=0 // pred_check_branch
    %11 = sbr.rel (0) target = $region9
  $region8: #{vae_forward.5} parent=0 // pred_region
    _
  $region9: #{vae_forward.5} parent=0 // pred_fallthru
    _
  // Predicated region
  $region10: #{vae_forward.5} parent=0 // pred_check
    _
  $region11: #{vae_forward.5} parent=0 // pred_check_branch
    %13 = sbr.rel (0) target = $region13
  $region12: #{vae_forward.5} parent=0 // pred_region
    _
  $region13: #{vae_forward.5} parent=0 // pred_fallthru
    _
  %p14 = scmp.eq.s32.totalorder 0, 0
  // Predicated region
  $region14: #{vae_forward.5} parent=0 // pred_check
    %p15 = pneg %p14
  $region15: #{vae_forward.5} parent=0 // pred_check_branch
    %17 = sbr.rel (%p15) target = $region17
  $region16: #{vae_forward.5} parent=0 // pred_region
    %18 = vst [vmem:[#allocation2] sm:$0xff] 0.0
    %19 = vst [vmem:[#allocation2 + $0x8] sm:$0xff] 0.0
  $region17: #{vae_forward.5} parent=0 // pred_fallthru
    _
  %v20 = vld [vmem:[#allocation2] sm:$0xff]
  %v21 = vld [vmem:[#allocation2 + $0x8] sm:$0xff]
  %v22 = vld [vmem:[%s0] sm:$0xf]
  %v23 = vld [vmem:[%s1] sm:$0xff]
  %v24 = vld [vmem:[%s1 + $0x8] sm:$0xff]
  %v25 = vld [vmem:[%s1 + $0x10] sm:$0xff]
  %v26 = vld [vmem:[%s1 + $0x18] sm:$0xff]
  %v27 = vld [vmem:[%s1 + $0x20] sm:$0xff]
  %v28 = vld [vmem:[%s1 + $0x28] sm:$0xff]
  %v29 = vld [vmem:[%s1 + $0x30] sm:$0xff]
  %v30 = vld [vmem:[%s1 + $0x38] sm:$0xff]
  %v31 = vld [vmem:[%s1 + $0x40] sm:$0xff]
  %v32 = vld [vmem:[%s1 + $0x48] sm:$0xff]
  %v33 = vld [vmem:[%s1 + $0x50] sm:$0xff]
  %v34 = vld [vmem:[%s1 + $0x58] sm:$0xff]
  %v35 = vld [vmem:[%s1 + $0x60] sm:$0xff]
  %v36 = vld [vmem:[%s1 + $0x68] sm:$0xff]
  %v37 = vld [vmem:[%s1 + $0x70] sm:$0xff]
  %v38 = vld [vmem:[%s1 + $0x78] sm:$0xff]
  %v39 = vld [vmem:[%s1 + $0x80] sm:$0xff]
  %v40 = vld [vmem:[%s1 + $0x88] sm:$0xff]
  %v41 = vld [vmem:[%s1 + $0x90] sm:$0xff]
  %v42 = vld [vmem:[%s1 + $0x98] sm:$0xff]
  %v43 = vld [vmem:[%s1 + $0xa0] sm:$0xff]
  %v44 = vld [vmem:[%s1 + $0xa8] sm:$0xff]
  %v45 = vld [vmem:[%s1 + $0xb0] sm:$0xff]
  %v46 = vld [vmem:[%s1 + $0xb8] sm:$0xff]
  %v47 = vld [vmem:[%s1 + $0xc0] sm:$0xff]
  %v48 = vld [vmem:[%s1 + $0xc8] sm:$0xff]
  %v49 = vld [vmem:[%s1 + $0xd0] sm:$0xff]
  %v50 = vld [vmem:[%s1 + $0xd8] sm:$0xff]
  %v51 = vld [vmem:[%s1 + $0xe0] sm:$0xff]
  %v52 = vld [vmem:[%s1 + $0xe8] sm:$0xff]
  %v53 = vld [vmem:[%s1 + $0xf0] sm:$0xff]
  %v54 = vld [vmem:[%s1 + $0xf8] sm:$0xff]
  %v55 = vld [vmem:[%s1 + $0x100] sm:$0xff]
  %v56 = vld [vmem:[%s1 + $0x108] sm:$0xff]
  %v57 = vld [vmem:[%s1 + $0x110] sm:$0xff]
  %v58 = vld [vmem:[%s1 + $0x118] sm:$0xff]
  %v59 = vld [vmem:[%s1 + $0x120] sm:$0xff]
  %v60 = vld [vmem:[%s1 + $0x128] sm:$0xff]
  %v61 = vld [vmem:[%s1 + $0x130] sm:$0xff]
  %v62 = vld [vmem:[%s1 + $0x138] sm:$0xff]
  %v63 = vld [vmem:[%s1 + $0x140] sm:$0xff]
  %v64 = vld [vmem:[%s1 + $0x148] sm:$0xff]
  %v65 = vld [vmem:[%s1 + $0x150] sm:$0xff]
  %v66 = vld [vmem:[%s1 + $0x158] sm:$0xff]
  %v67 = vld [vmem:[%s1 + $0x160] sm:$0xff]
  %v68 = vld [vmem:[%s1 + $0x168] sm:$0xff]
  %v69 = vld [vmem:[%s1 + $0x170] sm:$0xff]
  %v70 = vld [vmem:[%s1 + $0x178] sm:$0xff]
  %v71 = vld [vmem:[%s1 + $0x180] sm:$0xff]
  %v72 = vld [vmem:[%s1 + $0x188] sm:$0xff]
  %v73 = vld [vmem:[%s1 + $0x190] sm:$0xff]
  %v74 = vld [vmem:[%s1 + $0x198] sm:$0xff]
  %v75 = vld [vmem:[%s1 + $0x1a0] sm:$0xff]
  %v76 = vld [vmem:[%s1 + $0x1a8] sm:$0xff]
  %v77 = vld [vmem:[%s1 + $0x1b0] sm:$0xff]
  %v78 = vld [vmem:[%s1 + $0x1b8] sm:$0xff]
  %v79 = vld [vmem:[%s1 + $0x1c0] sm:$0xff]
  %v80 = vld [vmem:[%s1 + $0x1c8] sm:$0xff]
  %v81 = vld [vmem:[%s1 + $0x1d0] sm:$0xff]
  %v82 = vld [vmem:[%s1 + $0x1d8] sm:$0xff]
  %v83 = vld [vmem:[%s1 + $0x1e0] sm:$0xff]
  %v84 = vld [vmem:[%s1 + $0x1e8] sm:$0xff]
  %v85 = vld [vmem:[%s1 + $0x1f0] sm:$0xff]
  %v86 = vld [vmem:[%s1 + $0x1f8] sm:$0xff]
  %v87 = vld [vmem:[%s1 + $0x200] sm:$0xff]
  %v88 = vld [vmem:[%s1 + $0x208] sm:$0xff]
  %v89 = vld [vmem:[%s1 + $0x210] sm:$0xff]
  %v90 = vld [vmem:[%s1 + $0x218] sm:$0xff]
  %v91 = vld [vmem:[%s1 + $0x220] sm:$0xff]
  %v92 = vld [vmem:[%s1 + $0x228] sm:$0xff]
  %v93 = vld [vmem:[%s1 + $0x230] sm:$0xff]
  %v94 = vld [vmem:[%s1 + $0x238] sm:$0xff]
  %v95 = vld [vmem:[%s1 + $0x240] sm:$0xff]
  %v96 = vld [vmem:[%s1 + $0x248] sm:$0xff]
  %v97 = vld [vmem:[%s1 + $0x250] sm:$0xff]
  %v98 = vld [vmem:[%s1 + $0x258] sm:$0xff]
  %v99 = vld [vmem:[%s1 + $0x260] sm:$0xff]
  %v100 = vld [vmem:[%s1 + $0x268] sm:$0xff]
  %v101 = vld [vmem:[%s1 + $0x270] sm:$0xff]
  %v102 = vld [vmem:[%s1 + $0x278] sm:$0xff]
  %v103 = vld [vmem:[%s1 + $0x280] sm:$0xff]
  %v104 = vld [vmem:[%s1 + $0x288] sm:$0xff]
  %v105 = vld [vmem:[%s1 + $0x290] sm:$0xff]
  %v106 = vld [vmem:[%s1 + $0x298] sm:$0xff]
  %v107 = vld [vmem:[%s1 + $0x2a0] sm:$0xff]
  %v108 = vld [vmem:[%s1 + $0x2a8] sm:$0xff]
  %v109 = vld [vmem:[%s1 + $0x2b0] sm:$0xff]
  %v110 = vld [vmem:[%s1 + $0x2b8] sm:$0xff]
  %v111 = vld [vmem:[%s1 + $0x2c0] sm:$0xff]
  %v112 = vld [vmem:[%s1 + $0x2c8] sm:$0xff]
  %v113 = vld [vmem:[%s1 + $0x2d0] sm:$0xff]
  %v114 = vld [vmem:[%s1 + $0x2d8] sm:$0xff]
  %v115 = vld [vmem:[%s1 + $0x2e0] sm:$0xff]
  %v116 = vld [vmem:[%s1 + $0x2e8] sm:$0xff]
  %v117 = vld [vmem:[%s1 + $0x2f0] sm:$0xff]
  %v118 = vld [vmem:[%s1 + $0x2f8] sm:$0xff]
  %v119 = vld [vmem:[%s1 + $0x300] sm:$0xff]
  %v120 = vld [vmem:[%s1 + $0x308] sm:$0xff]
  %v121 = vld [vmem:[%s1 + $0x310] sm:$0xff]
  %v122 = vld [vmem:[%s1 + $0x318] sm:$0xff]
  %v123 = vld [vmem:[%s1 + $0x320] sm:$0xff]
  %v124 = vld [vmem:[%s1 + $0x328] sm:$0xff]
  %v125 = vld [vmem:[%s1 + $0x330] sm:$0xff]
  %v126 = vld [vmem:[%s1 + $0x338] sm:$0xff]
  %v127 = vld [vmem:[%s1 + $0x340] sm:$0xff]
  %v128 = vld [vmem:[%s1 + $0x348] sm:$0xff]
  %v129 = vld [vmem:[%s1 + $0x350] sm:$0xff]
  %v130 = vld [vmem:[%s1 + $0x358] sm:$0xff]
  %v131 = vld [vmem:[%s1 + $0x360] sm:$0xff]
  %v132 = vld [vmem:[%s1 + $0x368] sm:$0xff]
  %v133 = vld [vmem:[%s1 + $0x370] sm:$0xff]
  %v134 = vld [vmem:[%s1 + $0x378] sm:$0xff]
  %v135 = vld [vmem:[%s1 + $0x380] sm:$0xff]
  %v136 = vld [vmem:[%s1 + $0x388] sm:$0xff]
  %v137 = vld [vmem:[%s1 + $0x390] sm:$0xff]
  %v138 = vld [vmem:[%s1 + $0x398] sm:$0xff]
  %v139 = vld [vmem:[%s1 + $0x3a0] sm:$0xff]
  %v140 = vld [vmem:[%s1 + $0x3a8] sm:$0xff]
  %v141 = vld [vmem:[%s1 + $0x3b0] sm:$0xff]
  %v142 = vld [vmem:[%s1 + $0x3b8] sm:$0xff]
  %v143 = vld [vmem:[%s1 + $0x3c0] sm:$0xff]
  %v144 = vld [vmem:[%s1 + $0x3c8] sm:$0xff]
  %v145 = vld [vmem:[%s1 + $0x3d0] sm:$0xff]
  %v146 = vld [vmem:[%s1 + $0x3d8] sm:$0xff]
  %v147 = vld [vmem:[%s1 + $0x3e0] sm:$0xff]
  %v148 = vld [vmem:[%s1 + $0x3e8] sm:$0xff]
  %v149 = vld [vmem:[%s1 + $0x3f0] sm:$0xff]
  %v150 = vld [vmem:[%s1 + $0x3f8] sm:$0xff]
  %v151 = vld [vmem:[%s1 + $0x400] sm:$0xff]
  %v152 = vld [vmem:[%s1 + $0x408] sm:$0xff]
  %v153 = vld [vmem:[%s1 + $0x410] sm:$0xff]
  %v154 = vld [vmem:[%s1 + $0x418] sm:$0xff]
  %v155 = vld [vmem:[%s1 + $0x420] sm:$0xff]
  %v156 = vld [vmem:[%s1 + $0x428] sm:$0xff]
  %v157 = vld [vmem:[%s1 + $0x430] sm:$0xff]
  %v158 = vld [vmem:[%s1 + $0x438] sm:$0xff]
  %v159 = vld [vmem:[%s1 + $0x440] sm:$0xff]
  %v160 = vld [vmem:[%s1 + $0x448] sm:$0xff]
  %v161 = vld [vmem:[%s1 + $0x450] sm:$0xff]
  %v162 = vld [vmem:[%s1 + $0x458] sm:$0xff]
  %v163 = vld [vmem:[%s1 + $0x460] sm:$0xff]
  %v164 = vld [vmem:[%s1 + $0x468] sm:$0xff]
  %v165 = vld [vmem:[%s1 + $0x470] sm:$0xff]
  %v166 = vld [vmem:[%s1 + $0x478] sm:$0xff]
  %v167 = vld [vmem:[%s1 + $0x480] sm:$0xff]
  %v168 = vld [vmem:[%s1 + $0x488] sm:$0xff]
  %v169 = vld [vmem:[%s1 + $0x490] sm:$0xff]
  %v170 = vld [vmem:[%s1 + $0x498] sm:$0xff]
  %v171 = vld [vmem:[%s1 + $0x4a0] sm:$0xff]
  %v172 = vld [vmem:[%s1 + $0x4a8] sm:$0xff]
  %v173 = vld [vmem:[%s1 + $0x4b0] sm:$0xff]
  %v174 = vld [vmem:[%s1 + $0x4b8] sm:$0xff]
  %v175 = vld [vmem:[%s1 + $0x4c0] sm:$0xff]
  %v176 = vld [vmem:[%s1 + $0x4c8] sm:$0xff]
  %v177 = vld [vmem:[%s1 + $0x4d0] sm:$0xff]
  %v178 = vld [vmem:[%s1 + $0x4d8] sm:$0xff]
  %v179 = vld [vmem:[%s1 + $0x4e0] sm:$0xff]
  %v180 = vld [vmem:[%s1 + $0x4e8] sm:$0xff]
  %v181 = vld [vmem:[%s1 + $0x4f0] sm:$0xff]
  %v182 = vld [vmem:[%s1 + $0x4f8] sm:$0xff]
  %v183 = vld [vmem:[%s1 + $0x500] sm:$0xff]
  %v184 = vld [vmem:[%s1 + $0x508] sm:$0xff]
  %v185 = vld [vmem:[%s1 + $0x510] sm:$0xff]
  %v186 = vld [vmem:[%s1 + $0x518] sm:$0xff]
  %v187 = vld [vmem:[%s1 + $0x520] sm:$0xff]
  %v188 = vld [vmem:[%s1 + $0x528] sm:$0xff]
  %v189 = vld [vmem:[%s1 + $0x530] sm:$0xff]
  %v190 = vld [vmem:[%s1 + $0x538] sm:$0xff]
  %v191 = vld [vmem:[%s1 + $0x540] sm:$0xff]
  %v192 = vld [vmem:[%s1 + $0x548] sm:$0xff]
  %v193 = vld [vmem:[%s1 + $0x550] sm:$0xff]
  %v194 = vld [vmem:[%s1 + $0x558] sm:$0xff]
  %v195 = vld [vmem:[%s1 + $0x560] sm:$0xff]
  %v196 = vld [vmem:[%s1 + $0x568] sm:$0xff]
  %v197 = vld [vmem:[%s1 + $0x570] sm:$0xff]
  %v198 = vld [vmem:[%s1 + $0x578] sm:$0xff]
  %v199 = vld [vmem:[%s1 + $0x580] sm:$0xff]
  %v200 = vld [vmem:[%s1 + $0x588] sm:$0xff]
  %v201 = vld [vmem:[%s1 + $0x590] sm:$0xff]
  %v202 = vld [vmem:[%s1 + $0x598] sm:$0xff]
  %v203 = vld [vmem:[%s1 + $0x5a0] sm:$0xff]
  %v204 = vld [vmem:[%s1 + $0x5a8] sm:$0xff]
  %v205 = vld [vmem:[%s1 + $0x5b0] sm:$0xff]
  %v206 = vld [vmem:[%s1 + $0x5b8] sm:$0xff]
  %v207 = vld [vmem:[%s1 + $0x5c0] sm:$0xff]
  %v208 = vld [vmem:[%s1 + $0x5c8] sm:$0xff]
  %v209 = vld [vmem:[%s1 + $0x5d0] sm:$0xff]
  %v210 = vld [vmem:[%s1 + $0x5d8] sm:$0xff]
  %v211 = vld [vmem:[%s1 + $0x5e0] sm:$0xff]
  %v212 = vld [vmem:[%s1 + $0x5e8] sm:$0xff]
  %v213 = vld [vmem:[%s1 + $0x5f0] sm:$0xff]
  %v214 = vld [vmem:[%s1 + $0x5f8] sm:$0xff]
  %v215 = vld [vmem:[%s1 + $0x600] sm:$0xff]
  %v216 = vld [vmem:[%s1 + $0x608] sm:$0xff]
  %v217 = vld [vmem:[%s1 + $0x610] sm:$0xff]
  %v218 = vld [vmem:[%s1 + $0x618] sm:$0xff]
  %v219 = vld [vmem:[%s1 + $0x620] sm:$0xff]
  %v220 = vld [vmem:[%s1 + $0x628] sm:$0xff]
  %v221 = vld [vmem:[%s1 + $0x630] sm:$0xff]
  %v222 = vld [vmem:[%s1 + $0x638] sm:$0xff]
  %v223 = vld [vmem:[%s1 + $0x640] sm:$0xff]
  %v224 = vld [vmem:[%s1 + $0x648] sm:$0xff]
  %v225 = vld [vmem:[%s1 + $0x650] sm:$0xff]
  %v226 = vld [vmem:[%s1 + $0x658] sm:$0xff]
  %v227 = vld [vmem:[%s1 + $0x660] sm:$0xff]
  %v228 = vld [vmem:[%s1 + $0x668] sm:$0xff]
  %v229 = vld [vmem:[%s1 + $0x670] sm:$0xff]
  %v230 = vld [vmem:[%s1 + $0x678] sm:$0xff]
  %v231 = vld [vmem:[%s1 + $0x680] sm:$0xff]
  %v232 = vld [vmem:[%s1 + $0x688] sm:$0xff]
  %v233 = vld [vmem:[%s1 + $0x690] sm:$0xff]
  %v234 = vld [vmem:[%s1 + $0x698] sm:$0xff]
  %v235 = vld [vmem:[%s1 + $0x6a0] sm:$0xff]
  %v236 = vld [vmem:[%s1 + $0x6a8] sm:$0xff]
  %v237 = vld [vmem:[%s1 + $0x6b0] sm:$0xff]
  %v238 = vld [vmem:[%s1 + $0x6b8] sm:$0xff]
  %v239 = vld [vmem:[%s1 + $0x6c0] sm:$0xff]
  %v240 = vld [vmem:[%s1 + $0x6c8] sm:$0xff]
  %v241 = vld [vmem:[%s1 + $0x6d0] sm:$0xff]
  %v242 = vld [vmem:[%s1 + $0x6d8] sm:$0xff]
  %v243 = vld [vmem:[%s1 + $0x6e0] sm:$0xff]
  %v244 = vld [vmem:[%s1 + $0x6e8] sm:$0xff]
  %v245 = vld [vmem:[%s1 + $0x6f0] sm:$0xff]
  %v246 = vld [vmem:[%s1 + $0x6f8] sm:$0xff]
  %v247 = vld [vmem:[%s1 + $0x700] sm:$0xff]
  %v248 = vld [vmem:[%s1 + $0x708] sm:$0xff]
  %v249 = vld [vmem:[%s1 + $0x710] sm:$0xff]
  %v250 = vld [vmem:[%s1 + $0x718] sm:$0xff]
  %v251 = vld [vmem:[%s1 + $0x720] sm:$0xff]
  %v252 = vld [vmem:[%s1 + $0x728] sm:$0xff]
  %v253 = vld [vmem:[%s1 + $0x730] sm:$0xff]
  %v254 = vld [vmem:[%s1 + $0x738] sm:$0xff]
  %v255 = vld [vmem:[%s1 + $0x740] sm:$0xff]
  %v256 = vld [vmem:[%s1 + $0x748] sm:$0xff]
  %v257 = vld [vmem:[%s1 + $0x750] sm:$0xff]
  %v258 = vld [vmem:[%s1 + $0x758] sm:$0xff]
  %v259 = vld [vmem:[%s1 + $0x760] sm:$0xff]
  %v260 = vld [vmem:[%s1 + $0x768] sm:$0xff]
  %v261 = vld [vmem:[%s1 + $0x770] sm:$0xff]
  %v262 = vld [vmem:[%s1 + $0x778] sm:$0xff]
  %v263 = vld [vmem:[%s1 + $0x780] sm:$0xff]
  %v264 = vld [vmem:[%s1 + $0x788] sm:$0xff]
  %v265 = vld [vmem:[%s1 + $0x790] sm:$0xff]
  %v266 = vld [vmem:[%s1 + $0x798] sm:$0xff]
  %v267 = vld [vmem:[%s1 + $0x7a0] sm:$0xff]
  %v268 = vld [vmem:[%s1 + $0x7a8] sm:$0xff]
  %v269 = vld [vmem:[%s1 + $0x7b0] sm:$0xff]
  %v270 = vld [vmem:[%s1 + $0x7b8] sm:$0xff]
  %v271 = vld [vmem:[%s1 + $0x7c0] sm:$0xff]
  %v272 = vld [vmem:[%s1 + $0x7c8] sm:$0xff]
  %v273 = vld [vmem:[%s1 + $0x7d0] sm:$0xff]
  %v274 = vld [vmem:[%s1 + $0x7d8] sm:$0xff]
  %v275 = vld [vmem:[%s1 + $0x7e0] sm:$0xff]
  %v276 = vld [vmem:[%s1 + $0x7e8] sm:$0xff]
  %v277 = vld [vmem:[%s1 + $0x7f0] sm:$0xff]
  %v278 = vld [vmem:[%s1 + $0x7f8] sm:$0xff]
  %280 = vst [vmem:[#allocation1] ss:$9 sm:$0xff] %v22
  %v281 = vld [vmem:[#allocation1] sm:$0xff]
  %v282 = vld [vmem:[#allocation1 + $0x9] sm:$0xff]
  %v283 = vld [vmem:[#allocation1 + $0x12] sm:$0xff]
  %v284 = vld [vmem:[#allocation1 + $0x1b] sm:$0xff]
  %v545 = vunpack.c.l.b16 %v23
  %v546 = vunpack.c.h.b16 %v23
  %v547 = vunpack.c.l.b16 %v24
  %v548 = vunpack.c.h.b16 %v24
  %v549 = vunpack.c.l.b16 %v25
  %v550 = vunpack.c.h.b16 %v25
  %v551 = vunpack.c.l.b16 %v26
  %v552 = vunpack.c.h.b16 %v26
  %v553 = vunpack.c.l.b16 %v27
  %v554 = vunpack.c.h.b16 %v27
  %v555 = vunpack.c.l.b16 %v28
  %v556 = vunpack.c.h.b16 %v28
  %v557 = vunpack.c.l.b16 %v29
  %v558 = vunpack.c.h.b16 %v29
  %v559 = vunpack.c.l.b16 %v30
  %v560 = vunpack.c.h.b16 %v30
  %v561 = vunpack.c.l.b16 %v31
  %v562 = vunpack.c.h.b16 %v31
  %v563 = vunpack.c.l.b16 %v32
  %v564 = vunpack.c.h.b16 %v32
  %v565 = vunpack.c.l.b16 %v33
  %v566 = vunpack.c.h.b16 %v33
  %v567 = vunpack.c.l.b16 %v34
  %v568 = vunpack.c.h.b16 %v34
  %v569 = vunpack.c.l.b16 %v35
  %v570 = vunpack.c.h.b16 %v35
  %v571 = vunpack.c.l.b16 %v36
  %v572 = vunpack.c.h.b16 %v36
  %v573 = vunpack.c.l.b16 %v37
  %v574 = vunpack.c.h.b16 %v37
  %v575 = vunpack.c.l.b16 %v38
  %v576 = vunpack.c.h.b16 %v38
  %v577 = vunpack.c.l.b16 %v39
  %v578 = vunpack.c.h.b16 %v39
  %v579 = vunpack.c.l.b16 %v40
  %v580 = vunpack.c.h.b16 %v40
  %v581 = vunpack.c.l.b16 %v41
  %v582 = vunpack.c.h.b16 %v41
  %v583 = vunpack.c.l.b16 %v42
  %v584 = vunpack.c.h.b16 %v42
  %v585 = vunpack.c.l.b16 %v43
  %v586 = vunpack.c.h.b16 %v43
  %v587 = vunpack.c.l.b16 %v44
  %v588 = vunpack.c.h.b16 %v44
  %v589 = vunpack.c.l.b16 %v45
  %v590 = vunpack.c.h.b16 %v45
  %v591 = vunpack.c.l.b16 %v46
  %v592 = vunpack.c.h.b16 %v46
  %v593 = vunpack.c.l.b16 %v47
  %v594 = vunpack.c.h.b16 %v47
  %v595 = vunpack.c.l.b16 %v48
  %v596 = vunpack.c.h.b16 %v48
  %v597 = vunpack.c.l.b16 %v49
  %v598 = vunpack.c.h.b16 %v49
  %v599 = vunpack.c.l.b16 %v50
  %v600 = vunpack.c.h.b16 %v50
  %v601 = vunpack.c.l.b16 %v51
  %v602 = vunpack.c.h.b16 %v51
  %v603 = vunpack.c.l.b16 %v52
  %v604 = vunpack.c.h.b16 %v52
  %v605 = vunpack.c.l.b16 %v53
  %v606 = vunpack.c.h.b16 %v53
  %v607 = vunpack.c.l.b16 %v54
  %v608 = vunpack.c.h.b16 %v54
  %v609 = vunpack.c.l.b16 %v55
  %v610 = vunpack.c.h.b16 %v55
  %v611 = vunpack.c.l.b16 %v56
  %v612 = vunpack.c.h.b16 %v56
  %v613 = vunpack.c.l.b16 %v57
  %v614 = vunpack.c.h.b16 %v57
  %v615 = vunpack.c.l.b16 %v58
  %v616 = vunpack.c.h.b16 %v58
  %v617 = vunpack.c.l.b16 %v59
  %v618 = vunpack.c.h.b16 %v59
  %v619 = vunpack.c.l.b16 %v60
  %v620 = vunpack.c.h.b16 %v60
  %v621 = vunpack.c.l.b16 %v61
  %v622 = vunpack.c.h.b16 %v61
  %v623 = vunpack.c.l.b16 %v62
  %v624 = vunpack.c.h.b16 %v62
  %v625 = vunpack.c.l.b16 %v63
  %v626 = vunpack.c.h.b16 %v63
  %v627 = vunpack.c.l.b16 %v64
  %v628 = vunpack.c.h.b16 %v64
  %v629 = vunpack.c.l.b16 %v65
  %v630 = vunpack.c.h.b16 %v65
  %v631 = vunpack.c.l.b16 %v66
  %v632 = vunpack.c.h.b16 %v66
  %v633 = vunpack.c.l.b16 %v67
  %v634 = vunpack.c.h.b16 %v67
  %v635 = vunpack.c.l.b16 %v68
  %v636 = vunpack.c.h.b16 %v68
  %v637 = vunpack.c.l.b16 %v69
  %v638 = vunpack.c.h.b16 %v69
  %v639 = vunpack.c.l.b16 %v70
  %v640 = vunpack.c.h.b16 %v70
  %v641 = vunpack.c.l.b16 %v71
  %v642 = vunpack.c.h.b16 %v71
  %v643 = vunpack.c.l.b16 %v72
  %v644 = vunpack.c.h.b16 %v72
  %v645 = vunpack.c.l.b16 %v73
  %v646 = vunpack.c.h.b16 %v73
  %v647 = vunpack.c.l.b16 %v74
  %v648 = vunpack.c.h.b16 %v74
  %v649 = vunpack.c.l.b16 %v75
  %v650 = vunpack.c.h.b16 %v75
  %v651 = vunpack.c.l.b16 %v76
  %v652 = vunpack.c.h.b16 %v76
  %v653 = vunpack.c.l.b16 %v77
  %v654 = vunpack.c.h.b16 %v77
  %v655 = vunpack.c.l.b16 %v78
  %v656 = vunpack.c.h.b16 %v78
  %v657 = vunpack.c.l.b16 %v79
  %v658 = vunpack.c.h.b16 %v79
  %v659 = vunpack.c.l.b16 %v80
  %v660 = vunpack.c.h.b16 %v80
  %v661 = vunpack.c.l.b16 %v81
  %v662 = vunpack.c.h.b16 %v81
  %v663 = vunpack.c.l.b16 %v82
  %v664 = vunpack.c.h.b16 %v82
  %v665 = vunpack.c.l.b16 %v83
  %v666 = vunpack.c.h.b16 %v83
  %v667 = vunpack.c.l.b16 %v84
  %v668 = vunpack.c.h.b16 %v84
  %v669 = vunpack.c.l.b16 %v85
  %v670 = vunpack.c.h.b16 %v85
  %v671 = vunpack.c.l.b16 %v86
  %v672 = vunpack.c.h.b16 %v86
  %v673 = vunpack.c.l.b16 %v87
  %v674 = vunpack.c.h.b16 %v87
  %v675 = vunpack.c.l.b16 %v88
  %v676 = vunpack.c.h.b16 %v88
  %v677 = vunpack.c.l.b16 %v89
  %v678 = vunpack.c.h.b16 %v89
  %v679 = vunpack.c.l.b16 %v90
  %v680 = vunpack.c.h.b16 %v90
  %v681 = vunpack.c.l.b16 %v91
  %v682 = vunpack.c.h.b16 %v91
  %v683 = vunpack.c.l.b16 %v92
  %v684 = vunpack.c.h.b16 %v92
  %v685 = vunpack.c.l.b16 %v93
  %v686 = vunpack.c.h.b16 %v93
  %v687 = vunpack.c.l.b16 %v94
  %v688 = vunpack.c.h.b16 %v94
  %v689 = vunpack.c.l.b16 %v95
  %v690 = vunpack.c.h.b16 %v95
  %v691 = vunpack.c.l.b16 %v96
  %v692 = vunpack.c.h.b16 %v96
  %v693 = vunpack.c.l.b16 %v97
  %v694 = vunpack.c.h.b16 %v97
  %v695 = vunpack.c.l.b16 %v98
  %v696 = vunpack.c.h.b16 %v98
  %v697 = vunpack.c.l.b16 %v99
  %v698 = vunpack.c.h.b16 %v99
  %v699 = vunpack.c.l.b16 %v100
  %v700 = vunpack.c.h.b16 %v100
  %v701 = vunpack.c.l.b16 %v101
  %v702 = vunpack.c.h.b16 %v101
  %v703 = vunpack.c.l.b16 %v102
  %v704 = vunpack.c.h.b16 %v102
  %v705 = vunpack.c.l.b16 %v103
  %v706 = vunpack.c.h.b16 %v103
  %v707 = vunpack.c.l.b16 %v104
  %v708 = vunpack.c.h.b16 %v104
  %v709 = vunpack.c.l.b16 %v105
  %v710 = vunpack.c.h.b16 %v105
  %v711 = vunpack.c.l.b16 %v106
  %v712 = vunpack.c.h.b16 %v106
  %v713 = vunpack.c.l.b16 %v107
  %v714 = vunpack.c.h.b16 %v107
  %v715 = vunpack.c.l.b16 %v108
  %v716 = vunpack.c.h.b16 %v108
  %v717 = vunpack.c.l.b16 %v109
  %v718 = vunpack.c.h.b16 %v109
  %v719 = vunpack.c.l.b16 %v110
  %v720 = vunpack.c.h.b16 %v110
  %v721 = vunpack.c.l.b16 %v111
  %v722 = vunpack.c.h.b16 %v111
  %v723 = vunpack.c.l.b16 %v112
  %v724 = vunpack.c.h.b16 %v112
  %v725 = vunpack.c.l.b16 %v113
  %v726 = vunpack.c.h.b16 %v113
  %v727 = vunpack.c.l.b16 %v114
  %v728 = vunpack.c.h.b16 %v114
  %v729 = vunpack.c.l.b16 %v115
  %v730 = vunpack.c.h.b16 %v115
  %v731 = vunpack.c.l.b16 %v116
  %v732 = vunpack.c.h.b16 %v116
  %v733 = vunpack.c.l.b16 %v117
  %v734 = vunpack.c.h.b16 %v117
  %v735 = vunpack.c.l.b16 %v118
  %v736 = vunpack.c.h.b16 %v118
  %v737 = vunpack.c.l.b16 %v119
  %v738 = vunpack.c.h.b16 %v119
  %v739 = vunpack.c.l.b16 %v120
  %v740 = vunpack.c.h.b16 %v120
  %v741 = vunpack.c.l.b16 %v121
  %v742 = vunpack.c.h.b16 %v121
  %v743 = vunpack.c.l.b16 %v122
  %v744 = vunpack.c.h.b16 %v122
  %v745 = vunpack.c.l.b16 %v123
  %v746 = vunpack.c.h.b16 %v123
  %v747 = vunpack.c.l.b16 %v124
  %v748 = vunpack.c.h.b16 %v124
  %v749 = vunpack.c.l.b16 %v125
  %v750 = vunpack.c.h.b16 %v125
  %v751 = vunpack.c.l.b16 %v126
  %v752 = vunpack.c.h.b16 %v126
  %v753 = vunpack.c.l.b16 %v127
  %v754 = vunpack.c.h.b16 %v127
  %v755 = vunpack.c.l.b16 %v128
  %v756 = vunpack.c.h.b16 %v128
  %v757 = vunpack.c.l.b16 %v129
  %v758 = vunpack.c.h.b16 %v129
  %v759 = vunpack.c.l.b16 %v130
  %v760 = vunpack.c.h.b16 %v130
  %v761 = vunpack.c.l.b16 %v131
  %v762 = vunpack.c.h.b16 %v131
  %v763 = vunpack.c.l.b16 %v132
  %v764 = vunpack.c.h.b16 %v132
  %v765 = vunpack.c.l.b16 %v133
  %v766 = vunpack.c.h.b16 %v133
  %v767 = vunpack.c.l.b16 %v134
  %v768 = vunpack.c.h.b16 %v134
  %v769 = vunpack.c.l.b16 %v135
  %v770 = vunpack.c.h.b16 %v135
  %v771 = vunpack.c.l.b16 %v136
  %v772 = vunpack.c.h.b16 %v136
  %v773 = vunpack.c.l.b16 %v137
  %v774 = vunpack.c.h.b16 %v137
  %v775 = vunpack.c.l.b16 %v138
  %v776 = vunpack.c.h.b16 %v138
  %v777 = vunpack.c.l.b16 %v139
  %v778 = vunpack.c.h.b16 %v139
  %v779 = vunpack.c.l.b16 %v140
  %v780 = vunpack.c.h.b16 %v140
  %v781 = vunpack.c.l.b16 %v141
  %v782 = vunpack.c.h.b16 %v141
  %v783 = vunpack.c.l.b16 %v142
  %v784 = vunpack.c.h.b16 %v142
  %v785 = vunpack.c.l.b16 %v143
  %v786 = vunpack.c.h.b16 %v143
  %v787 = vunpack.c.l.b16 %v144
  %v788 = vunpack.c.h.b16 %v144
  %v789 = vunpack.c.l.b16 %v145
  %v790 = vunpack.c.h.b16 %v145
  %v791 = vunpack.c.l.b16 %v146
  %v792 = vunpack.c.h.b16 %v146
  %v793 = vunpack.c.l.b16 %v147
  %v794 = vunpack.c.h.b16 %v147
  %v795 = vunpack.c.l.b16 %v148
  %v796 = vunpack.c.h.b16 %v148
  %v797 = vunpack.c.l.b16 %v149
  %v798 = vunpack.c.h.b16 %v149
  %v799 = vunpack.c.l.b16 %v150
  %v800 = vunpack.c.h.b16 %v150
  %v801 = vunpack.c.l.b16 %v151
  %v802 = vunpack.c.h.b16 %v151
  %v803 = vunpack.c.l.b16 %v152
  %v804 = vunpack.c.h.b16 %v152
  %v805 = vunpack.c.l.b16 %v153
  %v806 = vunpack.c.h.b16 %v153
  %v807 = vunpack.c.l.b16 %v154
  %v808 = vunpack.c.h.b16 %v154
  %v809 = vunpack.c.l.b16 %v155
  %v810 = vunpack.c.h.b16 %v155
  %v811 = vunpack.c.l.b16 %v156
  %v812 = vunpack.c.h.b16 %v156
  %v813 = vunpack.c.l.b16 %v157
  %v814 = vunpack.c.h.b16 %v157
  %v815 = vunpack.c.l.b16 %v158
  %v816 = vunpack.c.h.b16 %v158
  %v817 = vunpack.c.l.b16 %v159
  %v818 = vunpack.c.h.b16 %v159
  %v819 = vunpack.c.l.b16 %v160
  %v820 = vunpack.c.h.b16 %v160
  %v821 = vunpack.c.l.b16 %v161
  %v822 = vunpack.c.h.b16 %v161
  %v823 = vunpack.c.l.b16 %v162
  %v824 = vunpack.c.h.b16 %v162
  %v825 = vunpack.c.l.b16 %v163
  %v826 = vunpack.c.h.b16 %v163
  %v827 = vunpack.c.l.b16 %v164
  %v828 = vunpack.c.h.b16 %v164
  %v829 = vunpack.c.l.b16 %v165
  %v830 = vunpack.c.h.b16 %v165
  %v831 = vunpack.c.l.b16 %v166
  %v832 = vunpack.c.h.b16 %v166
  %v833 = vunpack.c.l.b16 %v167
  %v834 = vunpack.c.h.b16 %v167
  %v835 = vunpack.c.l.b16 %v168
  %v836 = vunpack.c.h.b16 %v168
  %v837 = vunpack.c.l.b16 %v169
  %v838 = vunpack.c.h.b16 %v169
  %v839 = vunpack.c.l.b16 %v170
  %v840 = vunpack.c.h.b16 %v170
  %v841 = vunpack.c.l.b16 %v171
  %v842 = vunpack.c.h.b16 %v171
  %v843 = vunpack.c.l.b16 %v172
  %v844 = vunpack.c.h.b16 %v172
  %v845 = vunpack.c.l.b16 %v173
  %v846 = vunpack.c.h.b16 %v173
  %v847 = vunpack.c.l.b16 %v174
  %v848 = vunpack.c.h.b16 %v174
  %v849 = vunpack.c.l.b16 %v175
  %v850 = vunpack.c.h.b16 %v175
  %v851 = vunpack.c.l.b16 %v176
  %v852 = vunpack.c.h.b16 %v176
  %v853 = vunpack.c.l.b16 %v177
  %v854 = vunpack.c.h.b16 %v177
  %v855 = vunpack.c.l.b16 %v178
  %v856 = vunpack.c.h.b16 %v178
  %v857 = vunpack.c.l.b16 %v179
  %v858 = vunpack.c.h.b16 %v179
  %v859 = vunpack.c.l.b16 %v180
  %v860 = vunpack.c.h.b16 %v180
  %v861 = vunpack.c.l.b16 %v181
  %v862 = vunpack.c.h.b16 %v181
  %v863 = vunpack.c.l.b16 %v182
  %v864 = vunpack.c.h.b16 %v182
  %v865 = vunpack.c.l.b16 %v183
  %v866 = vunpack.c.h.b16 %v183
  %v867 = vunpack.c.l.b16 %v184
  %v868 = vunpack.c.h.b16 %v184
  %v869 = vunpack.c.l.b16 %v185
  %v870 = vunpack.c.h.b16 %v185
  %v871 = vunpack.c.l.b16 %v186
  %v872 = vunpack.c.h.b16 %v186
  %v873 = vunpack.c.l.b16 %v187
  %v874 = vunpack.c.h.b16 %v187
  %v875 = vunpack.c.l.b16 %v188
  %v876 = vunpack.c.h.b16 %v188
  %v877 = vunpack.c.l.b16 %v189
  %v878 = vunpack.c.h.b16 %v189
  %v879 = vunpack.c.l.b16 %v190
  %v880 = vunpack.c.h.b16 %v190
  %v881 = vunpack.c.l.b16 %v191
  %v882 = vunpack.c.h.b16 %v191
  %v883 = vunpack.c.l.b16 %v192
  %v884 = vunpack.c.h.b16 %v192
  %v885 = vunpack.c.l.b16 %v193
  %v886 = vunpack.c.h.b16 %v193
  %v887 = vunpack.c.l.b16 %v194
  %v888 = vunpack.c.h.b16 %v194
  %v889 = vunpack.c.l.b16 %v195
  %v890 = vunpack.c.h.b16 %v195
  %v891 = vunpack.c.l.b16 %v196
  %v892 = vunpack.c.h.b16 %v196
  %v893 = vunpack.c.l.b16 %v197
  %v894 = vunpack.c.h.b16 %v197
  %v895 = vunpack.c.l.b16 %v198
  %v896 = vunpack.c.h.b16 %v198
  %v897 = vunpack.c.l.b16 %v199
  %v898 = vunpack.c.h.b16 %v199
  %v899 = vunpack.c.l.b16 %v200
  %v900 = vunpack.c.h.b16 %v200
  %v901 = vunpack.c.l.b16 %v201
  %v902 = vunpack.c.h.b16 %v201
  %v903 = vunpack.c.l.b16 %v202
  %v904 = vunpack.c.h.b16 %v202
  %v905 = vunpack.c.l.b16 %v203
  %v906 = vunpack.c.h.b16 %v203
  %v907 = vunpack.c.l.b16 %v204
  %v908 = vunpack.c.h.b16 %v204
  %v909 = vunpack.c.l.b16 %v205
  %v910 = vunpack.c.h.b16 %v205
  %v911 = vunpack.c.l.b16 %v206
  %v912 = vunpack.c.h.b16 %v206
  %v913 = vunpack.c.l.b16 %v207
  %v914 = vunpack.c.h.b16 %v207
  %v915 = vunpack.c.l.b16 %v208
  %v916 = vunpack.c.h.b16 %v208
  %v917 = vunpack.c.l.b16 %v209
  %v918 = vunpack.c.h.b16 %v209
  %v919 = vunpack.c.l.b16 %v210
  %v920 = vunpack.c.h.b16 %v210
  %v921 = vunpack.c.l.b16 %v211
  %v922 = vunpack.c.h.b16 %v211
  %v923 = vunpack.c.l.b16 %v212
  %v924 = vunpack.c.h.b16 %v212
  %v925 = vunpack.c.l.b16 %v213
  %v926 = vunpack.c.h.b16 %v213
  %v927 = vunpack.c.l.b16 %v214
  %v928 = vunpack.c.h.b16 %v214
  %v929 = vunpack.c.l.b16 %v215
  %v930 = vunpack.c.h.b16 %v215
  %v931 = vunpack.c.l.b16 %v216
  %v932 = vunpack.c.h.b16 %v216
  %v933 = vunpack.c.l.b16 %v217
  %v934 = vunpack.c.h.b16 %v217
  %v935 = vunpack.c.l.b16 %v218
  %v936 = vunpack.c.h.b16 %v218
  %v937 = vunpack.c.l.b16 %v219
  %v938 = vunpack.c.h.b16 %v219
  %v939 = vunpack.c.l.b16 %v220
  %v940 = vunpack.c.h.b16 %v220
  %v941 = vunpack.c.l.b16 %v221
  %v942 = vunpack.c.h.b16 %v221
  %v943 = vunpack.c.l.b16 %v222
  %v944 = vunpack.c.h.b16 %v222
  %v945 = vunpack.c.l.b16 %v223
  %v946 = vunpack.c.h.b16 %v223
  %v947 = vunpack.c.l.b16 %v224
  %v948 = vunpack.c.h.b16 %v224
  %v949 = vunpack.c.l.b16 %v225
  %v950 = vunpack.c.h.b16 %v225
  %v951 = vunpack.c.l.b16 %v226
  %v952 = vunpack.c.h.b16 %v226
  %v953 = vunpack.c.l.b16 %v227
  %v954 = vunpack.c.h.b16 %v227
  %v955 = vunpack.c.l.b16 %v228
  %v956 = vunpack.c.h.b16 %v228
  %v957 = vunpack.c.l.b16 %v229
  %v958 = vunpack.c.h.b16 %v229
  %v959 = vunpack.c.l.b16 %v230
  %v960 = vunpack.c.h.b16 %v230
  %v961 = vunpack.c.l.b16 %v231
  %v962 = vunpack.c.h.b16 %v231
  %v963 = vunpack.c.l.b16 %v232
  %v964 = vunpack.c.h.b16 %v232
  %v965 = vunpack.c.l.b16 %v233
  %v966 = vunpack.c.h.b16 %v233
  %v967 = vunpack.c.l.b16 %v234
  %v968 = vunpack.c.h.b16 %v234
  %v969 = vunpack.c.l.b16 %v235
  %v970 = vunpack.c.h.b16 %v235
  %v971 = vunpack.c.l.b16 %v236
  %v972 = vunpack.c.h.b16 %v236
  %v973 = vunpack.c.l.b16 %v237
  %v974 = vunpack.c.h.b16 %v237
  %v975 = vunpack.c.l.b16 %v238
  %v976 = vunpack.c.h.b16 %v238
  %v977 = vunpack.c.l.b16 %v239
  %v978 = vunpack.c.h.b16 %v239
  %v979 = vunpack.c.l.b16 %v240
  %v980 = vunpack.c.h.b16 %v240
  %v981 = vunpack.c.l.b16 %v241
  %v982 = vunpack.c.h.b16 %v241
  %v983 = vunpack.c.l.b16 %v242
  %v984 = vunpack.c.h.b16 %v242
  %v985 = vunpack.c.l.b16 %v243
  %v986 = vunpack.c.h.b16 %v243
  %v987 = vunpack.c.l.b16 %v244
  %v988 = vunpack.c.h.b16 %v244
  %v989 = vunpack.c.l.b16 %v245
  %v990 = vunpack.c.h.b16 %v245
  %v991 = vunpack.c.l.b16 %v246
  %v992 = vunpack.c.h.b16 %v246
  %v993 = vunpack.c.l.b16 %v247
  %v994 = vunpack.c.h.b16 %v247
  %v995 = vunpack.c.l.b16 %v248
  %v996 = vunpack.c.h.b16 %v248
  %v997 = vunpack.c.l.b16 %v249
  %v998 = vunpack.c.h.b16 %v249
  %v999 = vunpack.c.l.b16 %v250
  %v1000 = vunpack.c.h.b16 %v250
  %v1001 = vunpack.c.l.b16 %v251
  %v1002 = vunpack.c.h.b16 %v251
  %v1003 = vunpack.c.l.b16 %v252
  %v1004 = vunpack.c.h.b16 %v252
  %v1005 = vunpack.c.l.b16 %v253
  %v1006 = vunpack.c.h.b16 %v253
  %v1007 = vunpack.c.l.b16 %v254
  %v1008 = vunpack.c.h.b16 %v254
  %v1009 = vunpack.c.l.b16 %v255
  %v1010 = vunpack.c.h.b16 %v255
  %v1011 = vunpack.c.l.b16 %v256
  %v1012 = vunpack.c.h.b16 %v256
  %v1013 = vunpack.c.l.b16 %v257
  %v1014 = vunpack.c.h.b16 %v257
  %v1015 = vunpack.c.l.b16 %v258
  %v1016 = vunpack.c.h.b16 %v258
  %v1017 = vunpack.c.l.b16 %v259
  %v1018 = vunpack.c.h.b16 %v259
  %v1019 = vunpack.c.l.b16 %v260
  %v1020 = vunpack.c.h.b16 %v260
  %v1021 = vunpack.c.l.b16 %v261
  %v1022 = vunpack.c.h.b16 %v261
  %v1023 = vunpack.c.l.b16 %v262
  %v1024 = vunpack.c.h.b16 %v262
  %v1025 = vunpack.c.l.b16 %v263
  %v1026 = vunpack.c.h.b16 %v263
  %v1027 = vunpack.c.l.b16 %v264
  %v1028 = vunpack.c.h.b16 %v264
  %v1029 = vunpack.c.l.b16 %v265
  %v1030 = vunpack.c.h.b16 %v265
  %v1031 = vunpack.c.l.b16 %v266
  %v1032 = vunpack.c.h.b16 %v266
  %v1033 = vunpack.c.l.b16 %v267
  %v1034 = vunpack.c.h.b16 %v267
  %v1035 = vunpack.c.l.b16 %v268
  %v1036 = vunpack.c.h.b16 %v268
  %v1037 = vunpack.c.l.b16 %v269
  %v1038 = vunpack.c.h.b16 %v269
  %v1039 = vunpack.c.l.b16 %v270
  %v1040 = vunpack.c.h.b16 %v270
  %v1041 = vunpack.c.l.b16 %v271
  %v1042 = vunpack.c.h.b16 %v271
  %v1043 = vunpack.c.l.b16 %v272
  %v1044 = vunpack.c.h.b16 %v272
  %v1045 = vunpack.c.l.b16 %v273
  %v1046 = vunpack.c.h.b16 %v273
  %v1047 = vunpack.c.l.b16 %v274
  %v1048 = vunpack.c.h.b16 %v274
  %v1049 = vunpack.c.l.b16 %v275
  %v1050 = vunpack.c.h.b16 %v275
  %v1051 = vunpack.c.l.b16 %v276
  %v1052 = vunpack.c.h.b16 %v276
  %v1053 = vunpack.c.l.b16 %v277
  %v1054 = vunpack.c.h.b16 %v277
  %v1055 = vunpack.c.l.b16 %v278
  %v1056 = vunpack.c.h.b16 %v278
  %v1057 = vpack.c.b16 %v553, %v545
  %v1058 = vpack.c.b16 %v554, %v546
  %v1059 = vpack.c.b16 %v555, %v547
  %v1060 = vpack.c.b16 %v556, %v548
  %v1061 = vpack.c.b16 %v557, %v549
  %v1062 = vpack.c.b16 %v558, %v550
  %v1063 = vpack.c.b16 %v559, %v551
  %v1064 = vpack.c.b16 %v560, %v552
  %v1065 = vpack.c.b16 %v569, %v561
  %v1066 = vpack.c.b16 %v570, %v562
  %v1067 = vpack.c.b16 %v571, %v563
  %v1068 = vpack.c.b16 %v572, %v564
  %v1069 = vpack.c.b16 %v573, %v565
  %v1070 = vpack.c.b16 %v574, %v566
  %v1071 = vpack.c.b16 %v575, %v567
  %v1072 = vpack.c.b16 %v576, %v568
  %v1073 = vpack.c.b16 %v585, %v577
  %v1074 = vpack.c.b16 %v586, %v578
  %v1075 = vpack.c.b16 %v587, %v579
  %v1076 = vpack.c.b16 %v588, %v580
  %v1077 = vpack.c.b16 %v589, %v581
  %v1078 = vpack.c.b16 %v590, %v582
  %v1079 = vpack.c.b16 %v591, %v583
  %v1080 = vpack.c.b16 %v592, %v584
  %v1081 = vpack.c.b16 %v601, %v593
  %v1082 = vpack.c.b16 %v602, %v594
  %v1083 = vpack.c.b16 %v603, %v595
  %v1084 = vpack.c.b16 %v604, %v596
  %v1085 = vpack.c.b16 %v605, %v597
  %v1086 = vpack.c.b16 %v606, %v598
  %v1087 = vpack.c.b16 %v607, %v599
  %v1088 = vpack.c.b16 %v608, %v600
  %v1089 = vpack.c.b16 %v617, %v609
  %v1090 = vpack.c.b16 %v618, %v610
  %v1091 = vpack.c.b16 %v619, %v611
  %v1092 = vpack.c.b16 %v620, %v612
  %v1093 = vpack.c.b16 %v621, %v613
  %v1094 = vpack.c.b16 %v622, %v614
  %v1095 = vpack.c.b16 %v623, %v615
  %v1096 = vpack.c.b16 %v624, %v616
  %v1097 = vpack.c.b16 %v633, %v625
  %v1098 = vpack.c.b16 %v634, %v626
  %v1099 = vpack.c.b16 %v635, %v627
  %v1100 = vpack.c.b16 %v636, %v628
  %v1101 = vpack.c.b16 %v637, %v629
  %v1102 = vpack.c.b16 %v638, %v630
  %v1103 = vpack.c.b16 %v639, %v631
  %v1104 = vpack.c.b16 %v640, %v632
  %v1105 = vpack.c.b16 %v649, %v641
  %v1106 = vpack.c.b16 %v650, %v642
  %v1107 = vpack.c.b16 %v651, %v643
  %v1108 = vpack.c.b16 %v652, %v644
  %v1109 = vpack.c.b16 %v653, %v645
  %v1110 = vpack.c.b16 %v654, %v646
  %v1111 = vpack.c.b16 %v655, %v647
  %v1112 = vpack.c.b16 %v656, %v648
  %v1113 = vpack.c.b16 %v665, %v657
  %v1114 = vpack.c.b16 %v666, %v658
  %v1115 = vpack.c.b16 %v667, %v659
  %v1116 = vpack.c.b16 %v668, %v660
  %v1117 = vpack.c.b16 %v669, %v661
  %v1118 = vpack.c.b16 %v670, %v662
  %v1119 = vpack.c.b16 %v671, %v663
  %v1120 = vpack.c.b16 %v672, %v664
  %v1121 = vpack.c.b16 %v681, %v673
  %v1122 = vpack.c.b16 %v682, %v674
  %v1123 = vpack.c.b16 %v683, %v675
  %v1124 = vpack.c.b16 %v684, %v676
  %v1125 = vpack.c.b16 %v685, %v677
  %v1126 = vpack.c.b16 %v686, %v678
  %v1127 = vpack.c.b16 %v687, %v679
  %v1128 = vpack.c.b16 %v688, %v680
  %v1129 = vpack.c.b16 %v697, %v689
  %v1130 = vpack.c.b16 %v698, %v690
  %v1131 = vpack.c.b16 %v699, %v691
  %v1132 = vpack.c.b16 %v700, %v692
  %v1133 = vpack.c.b16 %v701, %v693
  %v1134 = vpack.c.b16 %v702, %v694
  %v1135 = vpack.c.b16 %v703, %v695
  %v1136 = vpack.c.b16 %v704, %v696
  %v1137 = vpack.c.b16 %v713, %v705
  %v1138 = vpack.c.b16 %v714, %v706
  %v1139 = vpack.c.b16 %v715, %v707
  %v1140 = vpack.c.b16 %v716, %v708
  %v1141 = vpack.c.b16 %v717, %v709
  %v1142 = vpack.c.b16 %v718, %v710
  %v1143 = vpack.c.b16 %v719, %v711
  %v1144 = vpack.c.b16 %v720, %v712
  %v1145 = vpack.c.b16 %v729, %v721
  %v1146 = vpack.c.b16 %v730, %v722
  %v1147 = vpack.c.b16 %v731, %v723
  %v1148 = vpack.c.b16 %v732, %v724
  %v1149 = vpack.c.b16 %v733, %v725
  %v1150 = vpack.c.b16 %v734, %v726
  %v1151 = vpack.c.b16 %v735, %v727
  %v1152 = vpack.c.b16 %v736, %v728
  %v1153 = vpack.c.b16 %v745, %v737
  %v1154 = vpack.c.b16 %v746, %v738
  %v1155 = vpack.c.b16 %v747, %v739
  %v1156 = vpack.c.b16 %v748, %v740
  %v1157 = vpack.c.b16 %v749, %v741
  %v1158 = vpack.c.b16 %v750, %v742
  %v1159 = vpack.c.b16 %v751, %v743
  %v1160 = vpack.c.b16 %v752, %v744
  %v1161 = vpack.c.b16 %v761, %v753
  %v1162 = vpack.c.b16 %v762, %v754
  %v1163 = vpack.c.b16 %v763, %v755
  %v1164 = vpack.c.b16 %v764, %v756
  %v1165 = vpack.c.b16 %v765, %v757
  %v1166 = vpack.c.b16 %v766, %v758
  %v1167 = vpack.c.b16 %v767, %v759
  %v1168 = vpack.c.b16 %v768, %v760
  %v1169 = vpack.c.b16 %v777, %v769
  %v1170 = vpack.c.b16 %v778, %v770
  %v1171 = vpack.c.b16 %v779, %v771
  %v1172 = vpack.c.b16 %v780, %v772
  %v1173 = vpack.c.b16 %v781, %v773
  %v1174 = vpack.c.b16 %v782, %v774
  %v1175 = vpack.c.b16 %v783, %v775
  %v1176 = vpack.c.b16 %v784, %v776
  %v1177 = vpack.c.b16 %v793, %v785
  %v1178 = vpack.c.b16 %v794, %v786
  %v1179 = vpack.c.b16 %v795, %v787
  %v1180 = vpack.c.b16 %v796, %v788
  %v1181 = vpack.c.b16 %v797, %v789
  %v1182 = vpack.c.b16 %v798, %v790
  %v1183 = vpack.c.b16 %v799, %v791
  %v1184 = vpack.c.b16 %v800, %v792
  %v1185 = vpack.c.b16 %v809, %v801
  %v1186 = vpack.c.b16 %v810, %v802
  %v1187 = vpack.c.b16 %v811, %v803
  %v1188 = vpack.c.b16 %v812, %v804
  %v1189 = vpack.c.b16 %v813, %v805
  %v1190 = vpack.c.b16 %v814, %v806
  %v1191 = vpack.c.b16 %v815, %v807
  %v1192 = vpack.c.b16 %v816, %v808
  %v1193 = vpack.c.b16 %v825, %v817
  %v1194 = vpack.c.b16 %v826, %v818
  %v1195 = vpack.c.b16 %v827, %v819
  %v1196 = vpack.c.b16 %v828, %v820
  %v1197 = vpack.c.b16 %v829, %v821
  %v1198 = vpack.c.b16 %v830, %v822
  %v1199 = vpack.c.b16 %v831, %v823
  %v1200 = vpack.c.b16 %v832, %v824
  %v1201 = vpack.c.b16 %v841, %v833
  %v1202 = vpack.c.b16 %v842, %v834
  %v1203 = vpack.c.b16 %v843, %v835
  %v1204 = vpack.c.b16 %v844, %v836
  %v1205 = vpack.c.b16 %v845, %v837
  %v1206 = vpack.c.b16 %v846, %v838
  %v1207 = vpack.c.b16 %v847, %v839
  %v1208 = vpack.c.b16 %v848, %v840
  %v1209 = vpack.c.b16 %v857, %v849
  %v1210 = vpack.c.b16 %v858, %v850
  %v1211 = vpack.c.b16 %v859, %v851
  %v1212 = vpack.c.b16 %v860, %v852
  %v1213 = vpack.c.b16 %v861, %v853
  %v1214 = vpack.c.b16 %v862, %v854
  %v1215 = vpack.c.b16 %v863, %v855
  %v1216 = vpack.c.b16 %v864, %v856
  %v1217 = vpack.c.b16 %v873, %v865
  %v1218 = vpack.c.b16 %v874, %v866
  %v1219 = vpack.c.b16 %v875, %v867
  %v1220 = vpack.c.b16 %v876, %v868
  %v1221 = vpack.c.b16 %v877, %v869
  %v1222 = vpack.c.b16 %v878, %v870
  %v1223 = vpack.c.b16 %v879, %v871
  %v1224 = vpack.c.b16 %v880, %v872
  %v1225 = vpack.c.b16 %v889, %v881
  %v1226 = vpack.c.b16 %v890, %v882
  %v1227 = vpack.c.b16 %v891, %v883
  %v1228 = vpack.c.b16 %v892, %v884
  %v1229 = vpack.c.b16 %v893, %v885
  %v1230 = vpack.c.b16 %v894, %v886
  %v1231 = vpack.c.b16 %v895, %v887
  %v1232 = vpack.c.b16 %v896, %v888
  %v1233 = vpack.c.b16 %v905, %v897
  %v1234 = vpack.c.b16 %v906, %v898
  %v1235 = vpack.c.b16 %v907, %v899
  %v1236 = vpack.c.b16 %v908, %v900
  %v1237 = vpack.c.b16 %v909, %v901
  %v1238 = vpack.c.b16 %v910, %v902
  %v1239 = vpack.c.b16 %v911, %v903
  %v1240 = vpack.c.b16 %v912, %v904
  %v1241 = vpack.c.b16 %v921, %v913
  %v1242 = vpack.c.b16 %v922, %v914
  %v1243 = vpack.c.b16 %v923, %v915
  %v1244 = vpack.c.b16 %v924, %v916
  %v1245 = vpack.c.b16 %v925, %v917
  %v1246 = vpack.c.b16 %v926, %v918
  %v1247 = vpack.c.b16 %v927, %v919
  %v1248 = vpack.c.b16 %v928, %v920
  %v1249 = vpack.c.b16 %v937, %v929
  %v1250 = vpack.c.b16 %v938, %v930
  %v1251 = vpack.c.b16 %v939, %v931
  %v1252 = vpack.c.b16 %v940, %v932
  %v1253 = vpack.c.b16 %v941, %v933
  %v1254 = vpack.c.b16 %v942, %v934
  %v1255 = vpack.c.b16 %v943, %v935
  %v1256 = vpack.c.b16 %v944, %v936
  %v1257 = vpack.c.b16 %v953, %v945
  %v1258 = vpack.c.b16 %v954, %v946
  %v1259 = vpack.c.b16 %v955, %v947
  %v1260 = vpack.c.b16 %v956, %v948
  %v1261 = vpack.c.b16 %v957, %v949
  %v1262 = vpack.c.b16 %v958, %v950
  %v1263 = vpack.c.b16 %v959, %v951
  %v1264 = vpack.c.b16 %v960, %v952
  %v1265 = vpack.c.b16 %v969, %v961
  %v1266 = vpack.c.b16 %v970, %v962
  %v1267 = vpack.c.b16 %v971, %v963
  %v1268 = vpack.c.b16 %v972, %v964
  %v1269 = vpack.c.b16 %v973, %v965
  %v1270 = vpack.c.b16 %v974, %v966
  %v1271 = vpack.c.b16 %v975, %v967
  %v1272 = vpack.c.b16 %v976, %v968
  %v1273 = vpack.c.b16 %v985, %v977
  %v1274 = vpack.c.b16 %v986, %v978
  %v1275 = vpack.c.b16 %v987, %v979
  %v1276 = vpack.c.b16 %v988, %v980
  %v1277 = vpack.c.b16 %v989, %v981
  %v1278 = vpack.c.b16 %v990, %v982
  %v1279 = vpack.c.b16 %v991, %v983
  %v1280 = vpack.c.b16 %v992, %v984
  %v1281 = vpack.c.b16 %v1001, %v993
  %v1282 = vpack.c.b16 %v1002, %v994
  %v1283 = vpack.c.b16 %v1003, %v995
  %v1284 = vpack.c.b16 %v1004, %v996
  %v1285 = vpack.c.b16 %v1005, %v997
  %v1286 = vpack.c.b16 %v1006, %v998
  %v1287 = vpack.c.b16 %v1007, %v999
  %v1288 = vpack.c.b16 %v1008, %v1000
  %v1289 = vpack.c.b16 %v1017, %v1009
  %v1290 = vpack.c.b16 %v1018, %v1010
  %v1291 = vpack.c.b16 %v1019, %v1011
  %v1292 = vpack.c.b16 %v1020, %v1012
  %v1293 = vpack.c.b16 %v1021, %v1013
  %v1294 = vpack.c.b16 %v1022, %v1014
  %v1295 = vpack.c.b16 %v1023, %v1015
  %v1296 = vpack.c.b16 %v1024, %v1016
  %v1297 = vpack.c.b16 %v1033, %v1025
  %v1298 = vpack.c.b16 %v1034, %v1026
  %v1299 = vpack.c.b16 %v1035, %v1027
  %v1300 = vpack.c.b16 %v1036, %v1028
  %v1301 = vpack.c.b16 %v1037, %v1029
  %v1302 = vpack.c.b16 %v1038, %v1030
  %v1303 = vpack.c.b16 %v1039, %v1031
  %v1304 = vpack.c.b16 %v1040, %v1032
  %v1305 = vpack.c.b16 %v1049, %v1041
  %v1306 = vpack.c.b16 %v1050, %v1042
  %v1307 = vpack.c.b16 %v1051, %v1043
  %v1308 = vpack.c.b16 %v1052, %v1044
  %v1309 = vpack.c.b16 %v1053, %v1045
  %v1310 = vpack.c.b16 %v1054, %v1046
  %v1311 = vpack.c.b16 %v1055, %v1047
  %v1312 = vpack.c.b16 %v1056, %v1048
  %1569 = vmatpush.bf16.msra.mxu0 %v1113
  %1570 = vmatpush.bf16.msra.mxu0 %v1105
  %1571 = vmatpush.bf16.msra.mxu0 %v1097
  %1572 = vmatpush.bf16.msra.mxu0 %v1089
  %1573 = vmatpush.bf16.msra.mxu0 %v1081
  %1574 = vmatpush.bf16.msra.mxu0 %v1073
  %1575 = vmatpush.bf16.msra.mxu0 %v1065
  %1576 = vmatpush.bf16.msra.mxu0 %v1057
  %1577 = vmatmul.bf16.gmra.mxu0 %v281
  %v1578 = vpop.f32.mrf.mxu0
  %v1579 = vadd.f32 0.0, %v1578
  %v1580 = vpop.f32.mrf.mxu0
  %1581 = vdwg.mxu0
  %1582 = vmatpush.bf16.msra.mxu0 %v1177
  %1583 = vmatpush.bf16.msra.mxu0 %v1169
  %1584 = vmatpush.bf16.msra.mxu0 %v1161
  %1585 = vmatpush.bf16.msra.mxu0 %v1153
  %1586 = vmatpush.bf16.msra.mxu0 %v1145
  %1587 = vmatpush.bf16.msra.mxu0 %v1137
  %1588 = vmatpush.bf16.msra.mxu0 %v1129
  %1589 = vmatpush.bf16.msra.mxu0 %v1121
  %1590 = vmatmul.bf16.gmra.mxu0 %v282
  %v1591 = vpop.f32.mrf.mxu0
  %v1592 = vadd.f32 %v1579, %v1591
  %v1593 = vpop.f32.mrf.mxu0
  %1594 = vdwg.mxu0
  %1595 = vmatpush.bf16.msra.mxu0 %v1241
  %1596 = vmatpush.bf16.msra.mxu0 %v1233
  %1597 = vmatpush.bf16.msra.mxu0 %v1225
  %1598 = vmatpush.bf16.msra.mxu0 %v1217
  %1599 = vmatpush.bf16.msra.mxu0 %v1209
  %1600 = vmatpush.bf16.msra.mxu0 %v1201
  %1601 = vmatpush.bf16.msra.mxu0 %v1193
  %1602 = vmatpush.bf16.msra.mxu0 %v1185
  %1603 = vmatmul.bf16.gmra.mxu0 %v283
  %v1604 = vpop.f32.mrf.mxu0
  %v1605 = vadd.f32 %v1592, %v1604
  %v1606 = vpop.f32.mrf.mxu0
  %1607 = vdwg.mxu0
  %1608 = vmatpush.bf16.msra.mxu0 %v1305
  %1609 = vmatpush.bf16.msra.mxu0 %v1297
  %1610 = vmatpush.bf16.msra.mxu0 %v1289
  %1611 = vmatpush.bf16.msra.mxu0 %v1281
  %1612 = vmatpush.bf16.msra.mxu0 %v1273
  %1613 = vmatpush.bf16.msra.mxu0 %v1265
  %1614 = vmatpush.bf16.msra.mxu0 %v1257
  %1615 = vmatpush.bf16.msra.mxu0 %v1249
  %1616 = vmatmul.bf16.gmra.mxu0 %v284
  %v1617 = vpop.f32.mrf.mxu0
  %v1618 = vadd.f32 %v1605, %v1617
  %v1619 = vpop.f32.mrf.mxu0
  %1620 = vdwg.mxu0
  %1621 = vmatpush.bf16.msra.mxu0 %v1114
  %1622 = vmatpush.bf16.msra.mxu0 %v1106
  %1623 = vmatpush.bf16.msra.mxu0 %v1098
  %1624 = vmatpush.bf16.msra.mxu0 %v1090
  %1625 = vmatpush.bf16.msra.mxu0 %v1082
  %1626 = vmatpush.bf16.msra.mxu0 %v1074
  %1627 = vmatpush.bf16.msra.mxu0 %v1066
  %1628 = vmatpush.bf16.msra.mxu0 %v1058
  %1629 = vmatmul.bf16.gmra.mxu0 %v281
  %v1630 = vpop.f32.mrf.mxu0
  %v1631 = vadd.f32 0.0, %v1630
  %v1632 = vpop.f32.mrf.mxu0
  %1633 = vdwg.mxu0
  %1634 = vmatpush.bf16.msra.mxu0 %v1178
  %1635 = vmatpush.bf16.msra.mxu0 %v1170
  %1636 = vmatpush.bf16.msra.mxu0 %v1162
  %1637 = vmatpush.bf16.msra.mxu0 %v1154
  %1638 = vmatpush.bf16.msra.mxu0 %v1146
  %1639 = vmatpush.bf16.msra.mxu0 %v1138
  %1640 = vmatpush.bf16.msra.mxu0 %v1130
  %1641 = vmatpush.bf16.msra.mxu0 %v1122
  %1642 = vmatmul.bf16.gmra.mxu0 %v282
  %v1643 = vpop.f32.mrf.mxu0
  %v1644 = vadd.f32 %v1631, %v1643
  %v1645 = vpop.f32.mrf.mxu0
  %1646 = vdwg.mxu0
  %1647 = vmatpush.bf16.msra.mxu0 %v1242
  %1648 = vmatpush.bf16.msra.mxu0 %v1234
  %1649 = vmatpush.bf16.msra.mxu0 %v1226
  %1650 = vmatpush.bf16.msra.mxu0 %v1218
  %1651 = vmatpush.bf16.msra.mxu0 %v1210
  %1652 = vmatpush.bf16.msra.mxu0 %v1202
  %1653 = vmatpush.bf16.msra.mxu0 %v1194
  %1654 = vmatpush.bf16.msra.mxu0 %v1186
  %1655 = vmatmul.bf16.gmra.mxu0 %v283
  %v1656 = vpop.f32.mrf.mxu0
  %v1657 = vadd.f32 %v1644, %v1656
  %v1658 = vpop.f32.mrf.mxu0
  %1659 = vdwg.mxu0
  %1660 = vmatpush.bf16.msra.mxu0 %v1306
  %1661 = vmatpush.bf16.msra.mxu0 %v1298
  %1662 = vmatpush.bf16.msra.mxu0 %v1290
  %1663 = vmatpush.bf16.msra.mxu0 %v1282
  %1664 = vmatpush.bf16.msra.mxu0 %v1274
  %1665 = vmatpush.bf16.msra.mxu0 %v1266
  %1666 = vmatpush.bf16.msra.mxu0 %v1258
  %1667 = vmatpush.bf16.msra.mxu0 %v1250
  %1668 = vmatmul.bf16.gmra.mxu0 %v284
  %v1669 = vpop.f32.mrf.mxu0
  %v1670 = vadd.f32 %v1657, %v1669
  %v1671 = vpop.f32.mrf.mxu0
  %1672 = vdwg.mxu0
  %1673 = vmatpush.bf16.msra.mxu0 %v1115
  %1674 = vmatpush.bf16.msra.mxu0 %v1107
  %1675 = vmatpush.bf16.msra.mxu0 %v1099
  %1676 = vmatpush.bf16.msra.mxu0 %v1091
  %1677 = vmatpush.bf16.msra.mxu0 %v1083
  %1678 = vmatpush.bf16.msra.mxu0 %v1075
  %1679 = vmatpush.bf16.msra.mxu0 %v1067
  %1680 = vmatpush.bf16.msra.mxu0 %v1059
  %1681 = vmatmul.bf16.gmra.mxu0 %v281
  %v1682 = vpop.f32.mrf.mxu0
  %v1683 = vadd.f32 0.0, %v1682
  %v1684 = vpop.f32.mrf.mxu0
  %1685 = vdwg.mxu0
  %1686 = vmatpush.bf16.msra.mxu0 %v1179
  %1687 = vmatpush.bf16.msra.mxu0 %v1171
  %1688 = vmatpush.bf16.msra.mxu0 %v1163
  %1689 = vmatpush.bf16.msra.mxu0 %v1155
  %1690 = vmatpush.bf16.msra.mxu0 %v1147
  %1691 = vmatpush.bf16.msra.mxu0 %v1139
  %1692 = vmatpush.bf16.msra.mxu0 %v1131
  %1693 = vmatpush.bf16.msra.mxu0 %v1123
  %1694 = vmatmul.bf16.gmra.mxu0 %v282
  %v1695 = vpop.f32.mrf.mxu0
  %v1696 = vadd.f32 %v1683, %v1695
  %v1697 = vpop.f32.mrf.mxu0
  %1698 = vdwg.mxu0
  %1699 = vmatpush.bf16.msra.mxu0 %v1243
  %1700 = vmatpush.bf16.msra.mxu0 %v1235
  %1701 = vmatpush.bf16.msra.mxu0 %v1227
  %1702 = vmatpush.bf16.msra.mxu0 %v1219
  %1703 = vmatpush.bf16.msra.mxu0 %v1211
  %1704 = vmatpush.bf16.msra.mxu0 %v1203
  %1705 = vmatpush.bf16.msra.mxu0 %v1195
  %1706 = vmatpush.bf16.msra.mxu0 %v1187
  %1707 = vmatmul.bf16.gmra.mxu0 %v283
  %v1708 = vpop.f32.mrf.mxu0
  %v1709 = vadd.f32 %v1696, %v1708
  %v1710 = vpop.f32.mrf.mxu0
  %1711 = vdwg.mxu0
  %1712 = vmatpush.bf16.msra.mxu0 %v1307
  %1713 = vmatpush.bf16.msra.mxu0 %v1299
  %1714 = vmatpush.bf16.msra.mxu0 %v1291
  %1715 = vmatpush.bf16.msra.mxu0 %v1283
  %1716 = vmatpush.bf16.msra.mxu0 %v1275
  %1717 = vmatpush.bf16.msra.mxu0 %v1267
  %1718 = vmatpush.bf16.msra.mxu0 %v1259
  %1719 = vmatpush.bf16.msra.mxu0 %v1251
  %1720 = vmatmul.bf16.gmra.mxu0 %v284
  %v1721 = vpop.f32.mrf.mxu0
  %v1722 = vadd.f32 %v1709, %v1721
  %v1723 = vpop.f32.mrf.mxu0
  %1724 = vdwg.mxu0
  %1725 = vmatpush.bf16.msra.mxu0 %v1116
  %1726 = vmatpush.bf16.msra.mxu0 %v1108
  %1727 = vmatpush.bf16.msra.mxu0 %v1100
  %1728 = vmatpush.bf16.msra.mxu0 %v1092
  %1729 = vmatpush.bf16.msra.mxu0 %v1084
  %1730 = vmatpush.bf16.msra.mxu0 %v1076
  %1731 = vmatpush.bf16.msra.mxu0 %v1068
  %1732 = vmatpush.bf16.msra.mxu0 %v1060
  %1733 = vmatmul.bf16.gmra.mxu0 %v281
  %v1734 = vpop.f32.mrf.mxu0
  %v1735 = vadd.f32 0.0, %v1734
  %v1736 = vpop.f32.mrf.mxu0
  %1737 = vdwg.mxu0
  %1738 = vmatpush.bf16.msra.mxu0 %v1180
  %1739 = vmatpush.bf16.msra.mxu0 %v1172
  %1740 = vmatpush.bf16.msra.mxu0 %v1164
  %1741 = vmatpush.bf16.msra.mxu0 %v1156
  %1742 = vmatpush.bf16.msra.mxu0 %v1148
  %1743 = vmatpush.bf16.msra.mxu0 %v1140
  %1744 = vmatpush.bf16.msra.mxu0 %v1132
  %1745 = vmatpush.bf16.msra.mxu0 %v1124
  %1746 = vmatmul.bf16.gmra.mxu0 %v282
  %v1747 = vpop.f32.mrf.mxu0
  %v1748 = vadd.f32 %v1735, %v1747
  %v1749 = vpop.f32.mrf.mxu0
  %1750 = vdwg.mxu0
  %1751 = vmatpush.bf16.msra.mxu0 %v1244
  %1752 = vmatpush.bf16.msra.mxu0 %v1236
  %1753 = vmatpush.bf16.msra.mxu0 %v1228
  %1754 = vmatpush.bf16.msra.mxu0 %v1220
  %1755 = vmatpush.bf16.msra.mxu0 %v1212
  %1756 = vmatpush.bf16.msra.mxu0 %v1204
  %1757 = vmatpush.bf16.msra.mxu0 %v1196
  %1758 = vmatpush.bf16.msra.mxu0 %v1188
  %1759 = vmatmul.bf16.gmra.mxu0 %v283
  %v1760 = vpop.f32.mrf.mxu0
  %v1761 = vadd.f32 %v1748, %v1760
  %v1762 = vpop.f32.mrf.mxu0
  %1763 = vdwg.mxu0
  %1764 = vmatpush.bf16.msra.mxu0 %v1308
  %1765 = vmatpush.bf16.msra.mxu0 %v1300
  %1766 = vmatpush.bf16.msra.mxu0 %v1292
  %1767 = vmatpush.bf16.msra.mxu0 %v1284
  %1768 = vmatpush.bf16.msra.mxu0 %v1276
  %1769 = vmatpush.bf16.msra.mxu0 %v1268
  %1770 = vmatpush.bf16.msra.mxu0 %v1260
  %1771 = vmatpush.bf16.msra.mxu0 %v1252
  %1772 = vmatmul.bf16.gmra.mxu0 %v284
  %v1773 = vpop.f32.mrf.mxu0
  %v1774 = vadd.f32 %v1761, %v1773
  %v1775 = vpop.f32.mrf.mxu0
  %1776 = vdwg.mxu0
  %1777 = vmatpush.bf16.msra.mxu0 %v1117
  %1778 = vmatpush.bf16.msra.mxu0 %v1109
  %1779 = vmatpush.bf16.msra.mxu0 %v1101
  %1780 = vmatpush.bf16.msra.mxu0 %v1093
  %1781 = vmatpush.bf16.msra.mxu0 %v1085
  %1782 = vmatpush.bf16.msra.mxu0 %v1077
  %1783 = vmatpush.bf16.msra.mxu0 %v1069
  %1784 = vmatpush.bf16.msra.mxu0 %v1061
  %1785 = vmatmul.bf16.gmra.mxu0 %v281
  %v1786 = vpop.f32.mrf.mxu0
  %v1787 = vadd.f32 0.0, %v1786
  %v1788 = vpop.f32.mrf.mxu0
  %1789 = vdwg.mxu0
  %1790 = vmatpush.bf16.msra.mxu0 %v1181
  %1791 = vmatpush.bf16.msra.mxu0 %v1173
  %1792 = vmatpush.bf16.msra.mxu0 %v1165
  %1793 = vmatpush.bf16.msra.mxu0 %v1157
  %1794 = vmatpush.bf16.msra.mxu0 %v1149
  %1795 = vmatpush.bf16.msra.mxu0 %v1141
  %1796 = vmatpush.bf16.msra.mxu0 %v1133
  %1797 = vmatpush.bf16.msra.mxu0 %v1125
  %1798 = vmatmul.bf16.gmra.mxu0 %v282
  %v1799 = vpop.f32.mrf.mxu0
  %v1800 = vadd.f32 %v1787, %v1799
  %v1801 = vpop.f32.mrf.mxu0
  %1802 = vdwg.mxu0
  %1803 = vmatpush.bf16.msra.mxu0 %v1245
  %1804 = vmatpush.bf16.msra.mxu0 %v1237
  %1805 = vmatpush.bf16.msra.mxu0 %v1229
  %1806 = vmatpush.bf16.msra.mxu0 %v1221
  %1807 = vmatpush.bf16.msra.mxu0 %v1213
  %1808 = vmatpush.bf16.msra.mxu0 %v1205
  %1809 = vmatpush.bf16.msra.mxu0 %v1197
  %1810 = vmatpush.bf16.msra.mxu0 %v1189
  %1811 = vmatmul.bf16.gmra.mxu0 %v283
  %v1812 = vpop.f32.mrf.mxu0
  %v1813 = vadd.f32 %v1800, %v1812
  %v1814 = vpop.f32.mrf.mxu0
  %1815 = vdwg.mxu0
  %1816 = vmatpush.bf16.msra.mxu0 %v1309
  %1817 = vmatpush.bf16.msra.mxu0 %v1301
  %1818 = vmatpush.bf16.msra.mxu0 %v1293
  %1819 = vmatpush.bf16.msra.mxu0 %v1285
  %1820 = vmatpush.bf16.msra.mxu0 %v1277
  %1821 = vmatpush.bf16.msra.mxu0 %v1269
  %1822 = vmatpush.bf16.msra.mxu0 %v1261
  %1823 = vmatpush.bf16.msra.mxu0 %v1253
  %1824 = vmatmul.bf16.gmra.mxu0 %v284
  %v1825 = vpop.f32.mrf.mxu0
  %v1826 = vadd.f32 %v1813, %v1825
  %v1827 = vpop.f32.mrf.mxu0
  %1828 = vdwg.mxu0
  %1829 = vmatpush.bf16.msra.mxu0 %v1118
  %1830 = vmatpush.bf16.msra.mxu0 %v1110
  %1831 = vmatpush.bf16.msra.mxu0 %v1102
  %1832 = vmatpush.bf16.msra.mxu0 %v1094
  %1833 = vmatpush.bf16.msra.mxu0 %v1086
  %1834 = vmatpush.bf16.msra.mxu0 %v1078
  %1835 = vmatpush.bf16.msra.mxu0 %v1070
  %1836 = vmatpush.bf16.msra.mxu0 %v1062
  %1837 = vmatmul.bf16.gmra.mxu0 %v281
  %v1838 = vpop.f32.mrf.mxu0
  %v1839 = vadd.f32 0.0, %v1838
  %v1840 = vpop.f32.mrf.mxu0
  %1841 = vdwg.mxu0
  %1842 = vmatpush.bf16.msra.mxu0 %v1182
  %1843 = vmatpush.bf16.msra.mxu0 %v1174
  %1844 = vmatpush.bf16.msra.mxu0 %v1166
  %1845 = vmatpush.bf16.msra.mxu0 %v1158
  %1846 = vmatpush.bf16.msra.mxu0 %v1150
  %1847 = vmatpush.bf16.msra.mxu0 %v1142
  %1848 = vmatpush.bf16.msra.mxu0 %v1134
  %1849 = vmatpush.bf16.msra.mxu0 %v1126
  %1850 = vmatmul.bf16.gmra.mxu0 %v282
  %v1851 = vpop.f32.mrf.mxu0
  %v1852 = vadd.f32 %v1839, %v1851
  %v1853 = vpop.f32.mrf.mxu0
  %1854 = vdwg.mxu0
  %1855 = vmatpush.bf16.msra.mxu0 %v1246
  %1856 = vmatpush.bf16.msra.mxu0 %v1238
  %1857 = vmatpush.bf16.msra.mxu0 %v1230
  %1858 = vmatpush.bf16.msra.mxu0 %v1222
  %1859 = vmatpush.bf16.msra.mxu0 %v1214
  %1860 = vmatpush.bf16.msra.mxu0 %v1206
  %1861 = vmatpush.bf16.msra.mxu0 %v1198
  %1862 = vmatpush.bf16.msra.mxu0 %v1190
  %1863 = vmatmul.bf16.gmra.mxu0 %v283
  %v1864 = vpop.f32.mrf.mxu0
  %v1865 = vadd.f32 %v1852, %v1864
  %v1866 = vpop.f32.mrf.mxu0
  %1867 = vdwg.mxu0
  %1868 = vmatpush.bf16.msra.mxu0 %v1310
  %1869 = vmatpush.bf16.msra.mxu0 %v1302
  %1870 = vmatpush.bf16.msra.mxu0 %v1294
  %1871 = vmatpush.bf16.msra.mxu0 %v1286
  %1872 = vmatpush.bf16.msra.mxu0 %v1278
  %1873 = vmatpush.bf16.msra.mxu0 %v1270
  %1874 = vmatpush.bf16.msra.mxu0 %v1262
  %1875 = vmatpush.bf16.msra.mxu0 %v1254
  %1876 = vmatmul.bf16.gmra.mxu0 %v284
  %v1877 = vpop.f32.mrf.mxu0
  %v1878 = vadd.f32 %v1865, %v1877
  %v1879 = vpop.f32.mrf.mxu0
  %1880 = vdwg.mxu0
  %1881 = vmatpush.bf16.msra.mxu0 %v1119
  %1882 = vmatpush.bf16.msra.mxu0 %v1111
  %1883 = vmatpush.bf16.msra.mxu0 %v1103
  %1884 = vmatpush.bf16.msra.mxu0 %v1095
  %1885 = vmatpush.bf16.msra.mxu0 %v1087
  %1886 = vmatpush.bf16.msra.mxu0 %v1079
  %1887 = vmatpush.bf16.msra.mxu0 %v1071
  %1888 = vmatpush.bf16.msra.mxu0 %v1063
  %1889 = vmatmul.bf16.gmra.mxu0 %v281
  %v1890 = vpop.f32.mrf.mxu0
  %v1891 = vadd.f32 0.0, %v1890
  %v1892 = vpop.f32.mrf.mxu0
  %1893 = vdwg.mxu0
  %1894 = vmatpush.bf16.msra.mxu0 %v1183
  %1895 = vmatpush.bf16.msra.mxu0 %v1175
  %1896 = vmatpush.bf16.msra.mxu0 %v1167
  %1897 = vmatpush.bf16.msra.mxu0 %v1159
  %1898 = vmatpush.bf16.msra.mxu0 %v1151
  %1899 = vmatpush.bf16.msra.mxu0 %v1143
  %1900 = vmatpush.bf16.msra.mxu0 %v1135
  %1901 = vmatpush.bf16.msra.mxu0 %v1127
  %1902 = vmatmul.bf16.gmra.mxu0 %v282
  %v1903 = vpop.f32.mrf.mxu0
  %v1904 = vadd.f32 %v1891, %v1903
  %v1905 = vpop.f32.mrf.mxu0
  %1906 = vdwg.mxu0
  %1907 = vmatpush.bf16.msra.mxu0 %v1247
  %1908 = vmatpush.bf16.msra.mxu0 %v1239
  %1909 = vmatpush.bf16.msra.mxu0 %v1231
  %1910 = vmatpush.bf16.msra.mxu0 %v1223
  %1911 = vmatpush.bf16.msra.mxu0 %v1215
  %1912 = vmatpush.bf16.msra.mxu0 %v1207
  %1913 = vmatpush.bf16.msra.mxu0 %v1199
  %1914 = vmatpush.bf16.msra.mxu0 %v1191
  %1915 = vmatmul.bf16.gmra.mxu0 %v283
  %v1916 = vpop.f32.mrf.mxu0
  %v1917 = vadd.f32 %v1904, %v1916
  %v1918 = vpop.f32.mrf.mxu0
  %1919 = vdwg.mxu0
  %1920 = vmatpush.bf16.msra.mxu0 %v1311
  %1921 = vmatpush.bf16.msra.mxu0 %v1303
  %1922 = vmatpush.bf16.msra.mxu0 %v1295
  %1923 = vmatpush.bf16.msra.mxu0 %v1287
  %1924 = vmatpush.bf16.msra.mxu0 %v1279
  %1925 = vmatpush.bf16.msra.mxu0 %v1271
  %1926 = vmatpush.bf16.msra.mxu0 %v1263
  %1927 = vmatpush.bf16.msra.mxu0 %v1255
  %1928 = vmatmul.bf16.gmra.mxu0 %v284
  %v1929 = vpop.f32.mrf.mxu0
  %v1930 = vadd.f32 %v1917, %v1929
  %v1931 = vpop.f32.mrf.mxu0
  %1932 = vdwg.mxu0
  %1933 = vmatpush.bf16.msra.mxu0 %v1120
  %1934 = vmatpush.bf16.msra.mxu0 %v1112
  %1935 = vmatpush.bf16.msra.mxu0 %v1104
  %1936 = vmatpush.bf16.msra.mxu0 %v1096
  %1937 = vmatpush.bf16.msra.mxu0 %v1088
  %1938 = vmatpush.bf16.msra.mxu0 %v1080
  %1939 = vmatpush.bf16.msra.mxu0 %v1072
  %1940 = vmatpush.bf16.msra.mxu0 %v1064
  %1941 = vmatmul.bf16.gmra.mxu0 %v281
  %v1942 = vpop.f32.mrf.mxu0
  %v1943 = vadd.f32 0.0, %v1942
  %v1944 = vpop.f32.mrf.mxu0
  %1945 = vdwg.mxu0
  %1946 = vmatpush.bf16.msra.mxu0 %v1184
  %1947 = vmatpush.bf16.msra.mxu0 %v1176
  %1948 = vmatpush.bf16.msra.mxu0 %v1168
  %1949 = vmatpush.bf16.msra.mxu0 %v1160
  %1950 = vmatpush.bf16.msra.mxu0 %v1152
  %1951 = vmatpush.bf16.msra.mxu0 %v1144
  %1952 = vmatpush.bf16.msra.mxu0 %v1136
  %1953 = vmatpush.bf16.msra.mxu0 %v1128
  %1954 = vmatmul.bf16.gmra.mxu0 %v282
  %v1955 = vpop.f32.mrf.mxu0
  %v1956 = vadd.f32 %v1943, %v1955
  %v1957 = vpop.f32.mrf.mxu0
  %1958 = vdwg.mxu0
  %1959 = vmatpush.bf16.msra.mxu0 %v1248
  %1960 = vmatpush.bf16.msra.mxu0 %v1240
  %1961 = vmatpush.bf16.msra.mxu0 %v1232
  %1962 = vmatpush.bf16.msra.mxu0 %v1224
  %1963 = vmatpush.bf16.msra.mxu0 %v1216
  %1964 = vmatpush.bf16.msra.mxu0 %v1208
  %1965 = vmatpush.bf16.msra.mxu0 %v1200
  %1966 = vmatpush.bf16.msra.mxu0 %v1192
  %1967 = vmatmul.bf16.gmra.mxu0 %v283
  %v1968 = vpop.f32.mrf.mxu0
  %v1969 = vadd.f32 %v1956, %v1968
  %v1970 = vpop.f32.mrf.mxu0
  %1971 = vdwg.mxu0
  %1972 = vmatpush.bf16.msra.mxu0 %v1312
  %1973 = vmatpush.bf16.msra.mxu0 %v1304
  %1974 = vmatpush.bf16.msra.mxu0 %v1296
  %1975 = vmatpush.bf16.msra.mxu0 %v1288
  %1976 = vmatpush.bf16.msra.mxu0 %v1280
  %1977 = vmatpush.bf16.msra.mxu0 %v1272
  %1978 = vmatpush.bf16.msra.mxu0 %v1264
  %1979 = vmatpush.bf16.msra.mxu0 %v1256
  %1980 = vmatmul.bf16.gmra.mxu0 %v284
  %v1981 = vpop.f32.mrf.mxu0
  %v1982 = vadd.f32 %v1969, %v1981
  %v1983 = vpop.f32.mrf.mxu0
  %1984 = vdwg.mxu0
  %v1993 = vrot.slane %v1670, 6
  %v1994 = vrot.slane %v1722, 4
  %v1995 = vrot.slane %v1774, 2
  %v1996 = vrot.slane %v1878, 6
  %v1997 = vrot.slane %v1930, 4
  %v1998 = vrot.slane %v1982, 2
  %vm1999 = vcmask 1041408
  %v2000 = vsel %vm1999, %v1618, %v1993
  %vm2001 = vcmask 1045508
  %v2002 = vsel %vm2001, %v1994, %v1995
  %vm2003 = vcmask 1043456
  %v2004 = vsel %vm2003, %v2000, %v2002
  %v2005 = vsel %vm1999, %v1826, %v1996
  %v2006 = vsel %vm2001, %v1997, %v1998
  %v2007 = vsel %vm2003, %v2005, %v2006
  %v2010 = vadd.f32 %v20, %v2004
  %v2011 = vadd.f32 %v21, %v2007
  %2012 = vst [vmem:[#allocation2] sm:$0xff] %v2010
  %2013 = vst [vmem:[#allocation2 + $0x8] sm:$0xff] %v2011
  // Predicated region
  $region18: #{vae_forward.5} parent=0 // pred_check
    %p2014 = pneg %p14
  $region19: #{vae_forward.5} parent=0 // pred_check_branch
    %2016 = sbr.rel (%p2014) target = $region21
  $region20: #{vae_forward.5} parent=0 // pred_region
    %v2017 = vld [vmem:[#allocation2] sm:$0xff]
    %v2018 = vld [vmem:[#allocation2 + $0x8] sm:$0xff]
    %v2019 = vld [vmem:[%s2] sm:$0xff]
    %v2021 = vperm.slane %v2019, 0
    %v2022 = vperm.slane %v2019, 1
    %v2023 = vperm.slane %v2019, 2
    %v2024 = vperm.slane %v2019, 3
    %v2025 = vperm.slane %v2019, 4
    %v2026 = vperm.slane %v2019, 5
    %v2027 = vperm.slane %v2019, 6
    %v2028 = vperm.slane %v2019, 7
    %v2029 = vrot.slane %v2022, 6
    %v2030 = vrot.slane %v2023, 4
    %v2031 = vrot.slane %v2024, 2
    %v2032 = vrot.slane %v2026, 6
    %v2033 = vrot.slane %v2027, 4
    %v2034 = vrot.slane %v2028, 2
    %v2035 = vsel %vm1999, %v2021, %v2029
    %v2036 = vsel %vm2001, %v2030, %v2031
    %v2037 = vsel %vm2003, %v2035, %v2036
    %v2038 = vsel %vm1999, %v2025, %v2032
    %v2039 = vsel %vm2001, %v2033, %v2034
    %v2040 = vsel %vm2003, %v2038, %v2039
    %v2043 = vadd.f32 %v2017, %v2037
    %v2044 = vadd.f32 %v2018, %v2040
    %2045 = vst [vmem:[%s3] sm:$0xff] %v2043
    %2046 = vst [vmem:[%s3 + $0x8] sm:$0xff] %v2044
  $region21: #{vae_forward.5} parent=0 // pred_fallthru
    _
  // Predicated region
  $region22: #{vae_forward.5} parent=0 // pred_check
    _
  $region23: #{vae_forward.5} parent=0 // pred_check_branch
    %2048 = sbr.rel (0) target = $region25
  $region24: #{vae_forward.5} parent=0 // pred_region
    _
  $region25: #{vae_forward.5} parent=0 // pred_fallthru
    _
  // Predicated region
  $region26: #{vae_forward.5} parent=0 // pred_check
    _
  $region27: #{vae_forward.5} parent=0 // pred_check_branch
    %2050 = sbr.rel (0) target = $region29
  $region28: #{vae_forward.5} parent=0 // pred_region
    _
  $region29: #{vae_forward.5} parent=0 // pred_fallthru
    _

// kernel: vae_forward.6
$region0: #{vae_forward.6}
  #allocation0 [shape = 'u32[]', space=smem, size = 0x4, offset = 0x4, fixed_abs, tag = 'smem constant byte address 0x4 - core index']
  #allocation1 [shape = 'u32[72,128]{1,0:T(1,128)}', space=vmem, size = 0x9000, scoped, tag = 'internal scratch']
  #allocation2 [shape = 'f32[2,1280]{1,0:T(2,128)}', space=vmem, size = 0x2800, scoped, tag = 'scratch operand']
  %s0 = inlined_call_operand.vmem [shape: bf16[2,512], index: 0, kind: input, shape index: {}]
  %s1 = inlined_call_operand.vmem [shape: bf16[512,1280], index: 1, kind: input, shape index: {}]
  %s2 = inlined_call_operand.vmem [shape: f32[1,1280], index: 2, kind: input, shape index: {}]
  %s3 = inlined_call_operand.vmem [shape: bf16[2,1280], index: 3, kind: output, shape index: {}]
  %s4 = sld [smem:[#allocation0]]
  $region30: #{vae_forward.6} parent=0
    _
  %s6 = ssub.s32 1, %s4
  %s7 = scalar_select 0, %s6, %s4
  // Predicated region
  $region2: #{vae_forward.6} parent=0 // pred_check
    _
  $region3: #{vae_forward.6} parent=0 // pred_check_branch
    %9 = sbr.rel (0) target = $region5
  $region4: #{vae_forward.6} parent=0 // pred_region
    _
  $region5: #{vae_forward.6} parent=0 // pred_fallthru
    _
  // Predicated region
  $region6: #{vae_forward.6} parent=0 // pred_check
    _
  $region7: #{vae_forward.6} parent=0 // pred_check_branch
    %11 = sbr.rel (0) target = $region9
  $region8: #{vae_forward.6} parent=0 // pred_region
    _
  $region9: #{vae_forward.6} parent=0 // pred_fallthru
    _
  // Predicated region
  $region10: #{vae_forward.6} parent=0 // pred_check
    _
  $region11: #{vae_forward.6} parent=0 // pred_check_branch
    %13 = sbr.rel (0) target = $region13
  $region12: #{vae_forward.6} parent=0 // pred_region
    _
  $region13: #{vae_forward.6} parent=0 // pred_fallthru
    _
  %p14 = scmp.eq.s32.totalorder 0, 0
  // Predicated region
  $region14: #{vae_forward.6} parent=0 // pred_check
    %p15 = pneg %p14
  $region15: #{vae_forward.6} parent=0 // pred_check_branch
    %17 = sbr.rel (%p15) target = $region17
  $region16: #{vae_forward.6} parent=0 // pred_region
    %18 = vst [vmem:[#allocation2] sm:$0xff] 0.0
    %19 = vst [vmem:[#allocation2 + $0x8] sm:$0xff] 0.0
    %20 = vst [vmem:[#allocation2 + $0x10] sm:$0xf] 0.0
  $region17: #{vae_forward.6} parent=0 // pred_fallthru
    _
  %v21 = vld [vmem:[#allocation2] sm:$0xff]
  %v22 = vld [vmem:[#allocation2 + $0x8] sm:$0xff]
  %v23 = vld [vmem:[#allocation2 + $0x10] sm:$0xf]
  %v24 = vld [vmem:[%s0] sm:$0xf]
  %v25 = vld [vmem:[%s1] sm:$0xff]
  %v26 = vld [vmem:[%s1 + $0x8] sm:$0xff]
  %v27 = vld [vmem:[%s1 + $0x10] sm:$0xff]
  %v28 = vld [vmem:[%s1 + $0x18] sm:$0xff]
  %v29 = vld [vmem:[%s1 + $0x20] sm:$0xff]
  %v30 = vld [vmem:[%s1 + $0x28] sm:$0xff]
  %v31 = vld [vmem:[%s1 + $0x30] sm:$0xff]
  %v32 = vld [vmem:[%s1 + $0x38] sm:$0xff]
  %v33 = vld [vmem:[%s1 + $0x40] sm:$0xff]
  %v34 = vld [vmem:[%s1 + $0x48] sm:$0xff]
  %v35 = vld [vmem:[%s1 + $0x50] sm:$0xff]
  %v36 = vld [vmem:[%s1 + $0x58] sm:$0xff]
  %v37 = vld [vmem:[%s1 + $0x60] sm:$0xff]
  %v38 = vld [vmem:[%s1 + $0x68] sm:$0xff]
  %v39 = vld [vmem:[%s1 + $0x70] sm:$0xff]
  %v40 = vld [vmem:[%s1 + $0x78] sm:$0xff]
  %v41 = vld [vmem:[%s1 + $0x80] sm:$0xff]
  %v42 = vld [vmem:[%s1 + $0x88] sm:$0xff]
  %v43 = vld [vmem:[%s1 + $0x90] sm:$0xff]
  %v44 = vld [vmem:[%s1 + $0x98] sm:$0xff]
  %v45 = vld [vmem:[%s1 + $0xa0] sm:$0xff]
  %v46 = vld [vmem:[%s1 + $0xa8] sm:$0xff]
  %v47 = vld [vmem:[%s1 + $0xb0] sm:$0xff]
  %v48 = vld [vmem:[%s1 + $0xb8] sm:$0xff]
  %v49 = vld [vmem:[%s1 + $0xc0] sm:$0xff]
  %v50 = vld [vmem:[%s1 + $0xc8] sm:$0xff]
  %v51 = vld [vmem:[%s1 + $0xd0] sm:$0xff]
  %v52 = vld [vmem:[%s1 + $0xd8] sm:$0xff]
  %v53 = vld [vmem:[%s1 + $0xe0] sm:$0xff]
  %v54 = vld [vmem:[%s1 + $0xe8] sm:$0xff]
  %v55 = vld [vmem:[%s1 + $0xf0] sm:$0xff]
  %v56 = vld [vmem:[%s1 + $0xf8] sm:$0xff]
  %v57 = vld [vmem:[%s1 + $0x100] sm:$0xff]
  %v58 = vld [vmem:[%s1 + $0x108] sm:$0xff]
  %v59 = vld [vmem:[%s1 + $0x110] sm:$0xff]
  %v60 = vld [vmem:[%s1 + $0x118] sm:$0xff]
  %v61 = vld [vmem:[%s1 + $0x120] sm:$0xff]
  %v62 = vld [vmem:[%s1 + $0x128] sm:$0xff]
  %v63 = vld [vmem:[%s1 + $0x130] sm:$0xff]
  %v64 = vld [vmem:[%s1 + $0x138] sm:$0xff]
  %v65 = vld [vmem:[%s1 + $0x140] sm:$0xff]
  %v66 = vld [vmem:[%s1 + $0x148] sm:$0xff]
  %v67 = vld [vmem:[%s1 + $0x150] sm:$0xff]
  %v68 = vld [vmem:[%s1 + $0x158] sm:$0xff]
  %v69 = vld [vmem:[%s1 + $0x160] sm:$0xff]
  %v70 = vld [vmem:[%s1 + $0x168] sm:$0xff]
  %v71 = vld [vmem:[%s1 + $0x170] sm:$0xff]
  %v72 = vld [vmem:[%s1 + $0x178] sm:$0xff]
  %v73 = vld [vmem:[%s1 + $0x180] sm:$0xff]
  %v74 = vld [vmem:[%s1 + $0x188] sm:$0xff]
  %v75 = vld [vmem:[%s1 + $0x190] sm:$0xff]
  %v76 = vld [vmem:[%s1 + $0x198] sm:$0xff]
  %v77 = vld [vmem:[%s1 + $0x1a0] sm:$0xff]
  %v78 = vld [vmem:[%s1 + $0x1a8] sm:$0xff]
  %v79 = vld [vmem:[%s1 + $0x1b0] sm:$0xff]
  %v80 = vld [vmem:[%s1 + $0x1b8] sm:$0xff]
  %v81 = vld [vmem:[%s1 + $0x1c0] sm:$0xff]
  %v82 = vld [vmem:[%s1 + $0x1c8] sm:$0xff]
  %v83 = vld [vmem:[%s1 + $0x1d0] sm:$0xff]
  %v84 = vld [vmem:[%s1 + $0x1d8] sm:$0xff]
  %v85 = vld [vmem:[%s1 + $0x1e0] sm:$0xff]
  %v86 = vld [vmem:[%s1 + $0x1e8] sm:$0xff]
  %v87 = vld [vmem:[%s1 + $0x1f0] sm:$0xff]
  %v88 = vld [vmem:[%s1 + $0x1f8] sm:$0xff]
  %v89 = vld [vmem:[%s1 + $0x200] sm:$0xff]
  %v90 = vld [vmem:[%s1 + $0x208] sm:$0xff]
  %v91 = vld [vmem:[%s1 + $0x210] sm:$0xff]
  %v92 = vld [vmem:[%s1 + $0x218] sm:$0xff]
  %v93 = vld [vmem:[%s1 + $0x220] sm:$0xff]
  %v94 = vld [vmem:[%s1 + $0x228] sm:$0xff]
  %v95 = vld [vmem:[%s1 + $0x230] sm:$0xff]
  %v96 = vld [vmem:[%s1 + $0x238] sm:$0xff]
  %v97 = vld [vmem:[%s1 + $0x240] sm:$0xff]
  %v98 = vld [vmem:[%s1 + $0x248] sm:$0xff]
  %v99 = vld [vmem:[%s1 + $0x250] sm:$0xff]
  %v100 = vld [vmem:[%s1 + $0x258] sm:$0xff]
  %v101 = vld [vmem:[%s1 + $0x260] sm:$0xff]
  %v102 = vld [vmem:[%s1 + $0x268] sm:$0xff]
  %v103 = vld [vmem:[%s1 + $0x270] sm:$0xff]
  %v104 = vld [vmem:[%s1 + $0x278] sm:$0xff]
  %v105 = vld [vmem:[%s1 + $0x280] sm:$0xff]
  %v106 = vld [vmem:[%s1 + $0x288] sm:$0xff]
  %v107 = vld [vmem:[%s1 + $0x290] sm:$0xff]
  %v108 = vld [vmem:[%s1 + $0x298] sm:$0xff]
  %v109 = vld [vmem:[%s1 + $0x2a0] sm:$0xff]
  %v110 = vld [vmem:[%s1 + $0x2a8] sm:$0xff]
  %v111 = vld [vmem:[%s1 + $0x2b0] sm:$0xff]
  %v112 = vld [vmem:[%s1 + $0x2b8] sm:$0xff]
  %v113 = vld [vmem:[%s1 + $0x2c0] sm:$0xff]
  %v114 = vld [vmem:[%s1 + $0x2c8] sm:$0xff]
  %v115 = vld [vmem:[%s1 + $0x2d0] sm:$0xff]
  %v116 = vld [vmem:[%s1 + $0x2d8] sm:$0xff]
  %v117 = vld [vmem:[%s1 + $0x2e0] sm:$0xff]
  %v118 = vld [vmem:[%s1 + $0x2e8] sm:$0xff]
  %v119 = vld [vmem:[%s1 + $0x2f0] sm:$0xff]
  %v120 = vld [vmem:[%s1 + $0x2f8] sm:$0xff]
  %v121 = vld [vmem:[%s1 + $0x300] sm:$0xff]
  %v122 = vld [vmem:[%s1 + $0x308] sm:$0xff]
  %v123 = vld [vmem:[%s1 + $0x310] sm:$0xff]
  %v124 = vld [vmem:[%s1 + $0x318] sm:$0xff]
  %v125 = vld [vmem:[%s1 + $0x320] sm:$0xff]
  %v126 = vld [vmem:[%s1 + $0x328] sm:$0xff]
  %v127 = vld [vmem:[%s1 + $0x330] sm:$0xff]
  %v128 = vld [vmem:[%s1 + $0x338] sm:$0xff]
  %v129 = vld [vmem:[%s1 + $0x340] sm:$0xff]
  %v130 = vld [vmem:[%s1 + $0x348] sm:$0xff]
  %v131 = vld [vmem:[%s1 + $0x350] sm:$0xff]
  %v132 = vld [vmem:[%s1 + $0x358] sm:$0xff]
  %v133 = vld [vmem:[%s1 + $0x360] sm:$0xff]
  %v134 = vld [vmem:[%s1 + $0x368] sm:$0xff]
  %v135 = vld [vmem:[%s1 + $0x370] sm:$0xff]
  %v136 = vld [vmem:[%s1 + $0x378] sm:$0xff]
  %v137 = vld [vmem:[%s1 + $0x380] sm:$0xff]
  %v138 = vld [vmem:[%s1 + $0x388] sm:$0xff]
  %v139 = vld [vmem:[%s1 + $0x390] sm:$0xff]
  %v140 = vld [vmem:[%s1 + $0x398] sm:$0xff]
  %v141 = vld [vmem:[%s1 + $0x3a0] sm:$0xff]
  %v142 = vld [vmem:[%s1 + $0x3a8] sm:$0xff]
  %v143 = vld [vmem:[%s1 + $0x3b0] sm:$0xff]
  %v144 = vld [vmem:[%s1 + $0x3b8] sm:$0xff]
  %v145 = vld [vmem:[%s1 + $0x3c0] sm:$0xff]
  %v146 = vld [vmem:[%s1 + $0x3c8] sm:$0xff]
  %v147 = vld [vmem:[%s1 + $0x3d0] sm:$0xff]
  %v148 = vld [vmem:[%s1 + $0x3d8] sm:$0xff]
  %v149 = vld [vmem:[%s1 + $0x3e0] sm:$0xff]
  %v150 = vld [vmem:[%s1 + $0x3e8] sm:$0xff]
  %v151 = vld [vmem:[%s1 + $0x3f0] sm:$0xff]
  %v152 = vld [vmem:[%s1 + $0x3f8] sm:$0xff]
  %v153 = vld [vmem:[%s1 + $0x400] sm:$0xff]
  %v154 = vld [vmem:[%s1 + $0x408] sm:$0xff]
  %v155 = vld [vmem:[%s1 + $0x410] sm:$0xff]
  %v156 = vld [vmem:[%s1 + $0x418] sm:$0xff]
  %v157 = vld [vmem:[%s1 + $0x420] sm:$0xff]
  %v158 = vld [vmem:[%s1 + $0x428] sm:$0xff]
  %v159 = vld [vmem:[%s1 + $0x430] sm:$0xff]
  %v160 = vld [vmem:[%s1 + $0x438] sm:$0xff]
  %v161 = vld [vmem:[%s1 + $0x440] sm:$0xff]
  %v162 = vld [vmem:[%s1 + $0x448] sm:$0xff]
  %v163 = vld [vmem:[%s1 + $0x450] sm:$0xff]
  %v164 = vld [vmem:[%s1 + $0x458] sm:$0xff]
  %v165 = vld [vmem:[%s1 + $0x460] sm:$0xff]
  %v166 = vld [vmem:[%s1 + $0x468] sm:$0xff]
  %v167 = vld [vmem:[%s1 + $0x470] sm:$0xff]
  %v168 = vld [vmem:[%s1 + $0x478] sm:$0xff]
  %v169 = vld [vmem:[%s1 + $0x480] sm:$0xff]
  %v170 = vld [vmem:[%s1 + $0x488] sm:$0xff]
  %v171 = vld [vmem:[%s1 + $0x490] sm:$0xff]
  %v172 = vld [vmem:[%s1 + $0x498] sm:$0xff]
  %v173 = vld [vmem:[%s1 + $0x4a0] sm:$0xff]
  %v174 = vld [vmem:[%s1 + $0x4a8] sm:$0xff]
  %v175 = vld [vmem:[%s1 + $0x4b0] sm:$0xff]
  %v176 = vld [vmem:[%s1 + $0x4b8] sm:$0xff]
  %v177 = vld [vmem:[%s1 + $0x4c0] sm:$0xff]
  %v178 = vld [vmem:[%s1 + $0x4c8] sm:$0xff]
  %v179 = vld [vmem:[%s1 + $0x4d0] sm:$0xff]
  %v180 = vld [vmem:[%s1 + $0x4d8] sm:$0xff]
  %v181 = vld [vmem:[%s1 + $0x4e0] sm:$0xff]
  %v182 = vld [vmem:[%s1 + $0x4e8] sm:$0xff]
  %v183 = vld [vmem:[%s1 + $0x4f0] sm:$0xff]
  %v184 = vld [vmem:[%s1 + $0x4f8] sm:$0xff]
  %v185 = vld [vmem:[%s1 + $0x500] sm:$0xff]
  %v186 = vld [vmem:[%s1 + $0x508] sm:$0xff]
  %v187 = vld [vmem:[%s1 + $0x510] sm:$0xff]
  %v188 = vld [vmem:[%s1 + $0x518] sm:$0xff]
  %v189 = vld [vmem:[%s1 + $0x520] sm:$0xff]
  %v190 = vld [vmem:[%s1 + $0x528] sm:$0xff]
  %v191 = vld [vmem:[%s1 + $0x530] sm:$0xff]
  %v192 = vld [vmem:[%s1 + $0x538] sm:$0xff]
  %v193 = vld [vmem:[%s1 + $0x540] sm:$0xff]
  %v194 = vld [vmem:[%s1 + $0x548] sm:$0xff]
  %v195 = vld [vmem:[%s1 + $0x550] sm:$0xff]
  %v196 = vld [vmem:[%s1 + $0x558] sm:$0xff]
  %v197 = vld [vmem:[%s1 + $0x560] sm:$0xff]
  %v198 = vld [vmem:[%s1 + $0x568] sm:$0xff]
  %v199 = vld [vmem:[%s1 + $0x570] sm:$0xff]
  %v200 = vld [vmem:[%s1 + $0x578] sm:$0xff]
  %v201 = vld [vmem:[%s1 + $0x580] sm:$0xff]
  %v202 = vld [vmem:[%s1 + $0x588] sm:$0xff]
  %v203 = vld [vmem:[%s1 + $0x590] sm:$0xff]
  %v204 = vld [vmem:[%s1 + $0x598] sm:$0xff]
  %v205 = vld [vmem:[%s1 + $0x5a0] sm:$0xff]
  %v206 = vld [vmem:[%s1 + $0x5a8] sm:$0xff]
  %v207 = vld [vmem:[%s1 + $0x5b0] sm:$0xff]
  %v208 = vld [vmem:[%s1 + $0x5b8] sm:$0xff]
  %v209 = vld [vmem:[%s1 + $0x5c0] sm:$0xff]
  %v210 = vld [vmem:[%s1 + $0x5c8] sm:$0xff]
  %v211 = vld [vmem:[%s1 + $0x5d0] sm:$0xff]
  %v212 = vld [vmem:[%s1 + $0x5d8] sm:$0xff]
  %v213 = vld [vmem:[%s1 + $0x5e0] sm:$0xff]
  %v214 = vld [vmem:[%s1 + $0x5e8] sm:$0xff]
  %v215 = vld [vmem:[%s1 + $0x5f0] sm:$0xff]
  %v216 = vld [vmem:[%s1 + $0x5f8] sm:$0xff]
  %v217 = vld [vmem:[%s1 + $0x600] sm:$0xff]
  %v218 = vld [vmem:[%s1 + $0x608] sm:$0xff]
  %v219 = vld [vmem:[%s1 + $0x610] sm:$0xff]
  %v220 = vld [vmem:[%s1 + $0x618] sm:$0xff]
  %v221 = vld [vmem:[%s1 + $0x620] sm:$0xff]
  %v222 = vld [vmem:[%s1 + $0x628] sm:$0xff]
  %v223 = vld [vmem:[%s1 + $0x630] sm:$0xff]
  %v224 = vld [vmem:[%s1 + $0x638] sm:$0xff]
  %v225 = vld [vmem:[%s1 + $0x640] sm:$0xff]
  %v226 = vld [vmem:[%s1 + $0x648] sm:$0xff]
  %v227 = vld [vmem:[%s1 + $0x650] sm:$0xff]
  %v228 = vld [vmem:[%s1 + $0x658] sm:$0xff]
  %v229 = vld [vmem:[%s1 + $0x660] sm:$0xff]
  %v230 = vld [vmem:[%s1 + $0x668] sm:$0xff]
  %v231 = vld [vmem:[%s1 + $0x670] sm:$0xff]
  %v232 = vld [vmem:[%s1 + $0x678] sm:$0xff]
  %v233 = vld [vmem:[%s1 + $0x680] sm:$0xff]
  %v234 = vld [vmem:[%s1 + $0x688] sm:$0xff]
  %v235 = vld [vmem:[%s1 + $0x690] sm:$0xff]
  %v236 = vld [vmem:[%s1 + $0x698] sm:$0xff]
  %v237 = vld [vmem:[%s1 + $0x6a0] sm:$0xff]
  %v238 = vld [vmem:[%s1 + $0x6a8] sm:$0xff]
  %v239 = vld [vmem:[%s1 + $0x6b0] sm:$0xff]
  %v240 = vld [vmem:[%s1 + $0x6b8] sm:$0xff]
  %v241 = vld [vmem:[%s1 + $0x6c0] sm:$0xff]
  %v242 = vld [vmem:[%s1 + $0x6c8] sm:$0xff]
  %v243 = vld [vmem:[%s1 + $0x6d0] sm:$0xff]
  %v244 = vld [vmem:[%s1 + $0x6d8] sm:$0xff]
  %v245 = vld [vmem:[%s1 + $0x6e0] sm:$0xff]
  %v246 = vld [vmem:[%s1 + $0x6e8] sm:$0xff]
  %v247 = vld [vmem:[%s1 + $0x6f0] sm:$0xff]
  %v248 = vld [vmem:[%s1 + $0x6f8] sm:$0xff]
  %v249 = vld [vmem:[%s1 + $0x700] sm:$0xff]
  %v250 = vld [vmem:[%s1 + $0x708] sm:$0xff]
  %v251 = vld [vmem:[%s1 + $0x710] sm:$0xff]
  %v252 = vld [vmem:[%s1 + $0x718] sm:$0xff]
  %v253 = vld [vmem:[%s1 + $0x720] sm:$0xff]
  %v254 = vld [vmem:[%s1 + $0x728] sm:$0xff]
  %v255 = vld [vmem:[%s1 + $0x730] sm:$0xff]
  %v256 = vld [vmem:[%s1 + $0x738] sm:$0xff]
  %v257 = vld [vmem:[%s1 + $0x740] sm:$0xff]
  %v258 = vld [vmem:[%s1 + $0x748] sm:$0xff]
  %v259 = vld [vmem:[%s1 + $0x750] sm:$0xff]
  %v260 = vld [vmem:[%s1 + $0x758] sm:$0xff]
  %v261 = vld [vmem:[%s1 + $0x760] sm:$0xff]
  %v262 = vld [vmem:[%s1 + $0x768] sm:$0xff]
  %v263 = vld [vmem:[%s1 + $0x770] sm:$0xff]
  %v264 = vld [vmem:[%s1 + $0x778] sm:$0xff]
  %v265 = vld [vmem:[%s1 + $0x780] sm:$0xff]
  %v266 = vld [vmem:[%s1 + $0x788] sm:$0xff]
  %v267 = vld [vmem:[%s1 + $0x790] sm:$0xff]
  %v268 = vld [vmem:[%s1 + $0x798] sm:$0xff]
  %v269 = vld [vmem:[%s1 + $0x7a0] sm:$0xff]
  %v270 = vld [vmem:[%s1 + $0x7a8] sm:$0xff]
  %v271 = vld [vmem:[%s1 + $0x7b0] sm:$0xff]
  %v272 = vld [vmem:[%s1 + $0x7b8] sm:$0xff]
  %v273 = vld [vmem:[%s1 + $0x7c0] sm:$0xff]
  %v274 = vld [vmem:[%s1 + $0x7c8] sm:$0xff]
  %v275 = vld [vmem:[%s1 + $0x7d0] sm:$0xff]
  %v276 = vld [vmem:[%s1 + $0x7d8] sm:$0xff]
  %v277 = vld [vmem:[%s1 + $0x7e0] sm:$0xff]
  %v278 = vld [vmem:[%s1 + $0x7e8] sm:$0xff]
  %v279 = vld [vmem:[%s1 + $0x7f0] sm:$0xff]
  %v280 = vld [vmem:[%s1 + $0x7f8] sm:$0xff]
  %v281 = vld [vmem:[%s1 + $0x800] sm:$0xff]
  %v282 = vld [vmem:[%s1 + $0x808] sm:$0xff]
  %v283 = vld [vmem:[%s1 + $0x810] sm:$0xff]
  %v284 = vld [vmem:[%s1 + $0x818] sm:$0xff]
  %v285 = vld [vmem:[%s1 + $0x820] sm:$0xff]
  %v286 = vld [vmem:[%s1 + $0x828] sm:$0xff]
  %v287 = vld [vmem:[%s1 + $0x830] sm:$0xff]
  %v288 = vld [vmem:[%s1 + $0x838] sm:$0xff]
  %v289 = vld [vmem:[%s1 + $0x840] sm:$0xff]
  %v290 = vld [vmem:[%s1 + $0x848] sm:$0xff]
  %v291 = vld [vmem:[%s1 + $0x850] sm:$0xff]
  %v292 = vld [vmem:[%s1 + $0x858] sm:$0xff]
  %v293 = vld [vmem:[%s1 + $0x860] sm:$0xff]
  %v294 = vld [vmem:[%s1 + $0x868] sm:$0xff]
  %v295 = vld [vmem:[%s1 + $0x870] sm:$0xff]
  %v296 = vld [vmem:[%s1 + $0x878] sm:$0xff]
  %v297 = vld [vmem:[%s1 + $0x880] sm:$0xff]
  %v298 = vld [vmem:[%s1 + $0x888] sm:$0xff]
  %v299 = vld [vmem:[%s1 + $0x890] sm:$0xff]
  %v300 = vld [vmem:[%s1 + $0x898] sm:$0xff]
  %v301 = vld [vmem:[%s1 + $0x8a0] sm:$0xff]
  %v302 = vld [vmem:[%s1 + $0x8a8] sm:$0xff]
  %v303 = vld [vmem:[%s1 + $0x8b0] sm:$0xff]
  %v304 = vld [vmem:[%s1 + $0x8b8] sm:$0xff]
  %v305 = vld [vmem:[%s1 + $0x8c0] sm:$0xff]
  %v306 = vld [vmem:[%s1 + $0x8c8] sm:$0xff]
  %v307 = vld [vmem:[%s1 + $0x8d0] sm:$0xff]
  %v308 = vld [vmem:[%s1 + $0x8d8] sm:$0xff]
  %v309 = vld [vmem:[%s1 + $0x8e0] sm:$0xff]
  %v310 = vld [vmem:[%s1 + $0x8e8] sm:$0xff]
  %v311 = vld [vmem:[%s1 + $0x8f0] sm:$0xff]
  %v312 = vld [vmem:[%s1 + $0x8f8] sm:$0xff]
  %v313 = vld [vmem:[%s1 + $0x900] sm:$0xff]
  %v314 = vld [vmem:[%s1 + $0x908] sm:$0xff]
  %v315 = vld [vmem:[%s1 + $0x910] sm:$0xff]
  %v316 = vld [vmem:[%s1 + $0x918] sm:$0xff]
  %v317 = vld [vmem:[%s1 + $0x920] sm:$0xff]
  %v318 = vld [vmem:[%s1 + $0x928] sm:$0xff]
  %v319 = vld [vmem:[%s1 + $0x930] sm:$0xff]
  %v320 = vld [vmem:[%s1 + $0x938] sm:$0xff]
  %v321 = vld [vmem:[%s1 + $0x940] sm:$0xff]
  %v322 = vld [vmem:[%s1 + $0x948] sm:$0xff]
  %v323 = vld [vmem:[%s1 + $0x950] sm:$0xff]
  %v324 = vld [vmem:[%s1 + $0x958] sm:$0xff]
  %v325 = vld [vmem:[%s1 + $0x960] sm:$0xff]
  %v326 = vld [vmem:[%s1 + $0x968] sm:$0xff]
  %v327 = vld [vmem:[%s1 + $0x970] sm:$0xff]
  %v328 = vld [vmem:[%s1 + $0x978] sm:$0xff]
  %v329 = vld [vmem:[%s1 + $0x980] sm:$0xff]
  %v330 = vld [vmem:[%s1 + $0x988] sm:$0xff]
  %v331 = vld [vmem:[%s1 + $0x990] sm:$0xff]
  %v332 = vld [vmem:[%s1 + $0x998] sm:$0xff]
  %v333 = vld [vmem:[%s1 + $0x9a0] sm:$0xff]
  %v334 = vld [vmem:[%s1 + $0x9a8] sm:$0xff]
  %v335 = vld [vmem:[%s1 + $0x9b0] sm:$0xff]
  %v336 = vld [vmem:[%s1 + $0x9b8] sm:$0xff]
  %v337 = vld [vmem:[%s1 + $0x9c0] sm:$0xff]
  %v338 = vld [vmem:[%s1 + $0x9c8] sm:$0xff]
  %v339 = vld [vmem:[%s1 + $0x9d0] sm:$0xff]
  %v340 = vld [vmem:[%s1 + $0x9d8] sm:$0xff]
  %v341 = vld [vmem:[%s1 + $0x9e0] sm:$0xff]
  %v342 = vld [vmem:[%s1 + $0x9e8] sm:$0xff]
  %v343 = vld [vmem:[%s1 + $0x9f0] sm:$0xff]
  %v344 = vld [vmem:[%s1 + $0x9f8] sm:$0xff]
  %346 = vst [vmem:[#allocation1] ss:$9 sm:$0xff] %v24
  %v347 = vld [vmem:[#allocation1] sm:$0xff]
  %v348 = vld [vmem:[#allocation1 + $0x9] sm:$0xff]
  %v349 = vld [vmem:[#allocation1 + $0x12] sm:$0xff]
  %v350 = vld [vmem:[#allocation1 + $0x1b] sm:$0xff]
  %v675 = vunpack.c.l.b16 %v25
  %v676 = vunpack.c.h.b16 %v25
  %v677 = vunpack.c.l.b16 %v26
  %v678 = vunpack.c.h.b16 %v26
  %v679 = vunpack.c.l.b16 %v27
  %v680 = vunpack.c.h.b16 %v27
  %v681 = vunpack.c.l.b16 %v28
  %v682 = vunpack.c.h.b16 %v28
  %v683 = vunpack.c.l.b16 %v29
  %v684 = vunpack.c.h.b16 %v29
  %v685 = vunpack.c.l.b16 %v30
  %v686 = vunpack.c.h.b16 %v30
  %v687 = vunpack.c.l.b16 %v31
  %v688 = vunpack.c.h.b16 %v31
  %v689 = vunpack.c.l.b16 %v32
  %v690 = vunpack.c.h.b16 %v32
  %v691 = vunpack.c.l.b16 %v33
  %v692 = vunpack.c.h.b16 %v33
  %v693 = vunpack.c.l.b16 %v34
  %v694 = vunpack.c.h.b16 %v34
  %v695 = vunpack.c.l.b16 %v35
  %v696 = vunpack.c.h.b16 %v35
  %v697 = vunpack.c.l.b16 %v36
  %v698 = vunpack.c.h.b16 %v36
  %v699 = vunpack.c.l.b16 %v37
  %v700 = vunpack.c.h.b16 %v37
  %v701 = vunpack.c.l.b16 %v38
  %v702 = vunpack.c.h.b16 %v38
  %v703 = vunpack.c.l.b16 %v39
  %v704 = vunpack.c.h.b16 %v39
  %v705 = vunpack.c.l.b16 %v40
  %v706 = vunpack.c.h.b16 %v40
  %v707 = vunpack.c.l.b16 %v41
  %v708 = vunpack.c.h.b16 %v41
  %v709 = vunpack.c.l.b16 %v42
  %v710 = vunpack.c.h.b16 %v42
  %v711 = vunpack.c.l.b16 %v43
  %v712 = vunpack.c.h.b16 %v43
  %v713 = vunpack.c.l.b16 %v44
  %v714 = vunpack.c.h.b16 %v44
  %v715 = vunpack.c.l.b16 %v45
  %v716 = vunpack.c.h.b16 %v45
  %v717 = vunpack.c.l.b16 %v46
  %v718 = vunpack.c.h.b16 %v46
  %v719 = vunpack.c.l.b16 %v47
  %v720 = vunpack.c.h.b16 %v47
  %v721 = vunpack.c.l.b16 %v48
  %v722 = vunpack.c.h.b16 %v48
  %v723 = vunpack.c.l.b16 %v49
  %v724 = vunpack.c.h.b16 %v49
  %v725 = vunpack.c.l.b16 %v50
  %v726 = vunpack.c.h.b16 %v50
  %v727 = vunpack.c.l.b16 %v51
  %v728 = vunpack.c.h.b16 %v51
  %v729 = vunpack.c.l.b16 %v52
  %v730 = vunpack.c.h.b16 %v52
  %v731 = vunpack.c.l.b16 %v53
  %v732 = vunpack.c.h.b16 %v53
  %v733 = vunpack.c.l.b16 %v54
  %v734 = vunpack.c.h.b16 %v54
  %v735 = vunpack.c.l.b16 %v55
  %v736 = vunpack.c.h.b16 %v55
  %v737 = vunpack.c.l.b16 %v56
  %v738 = vunpack.c.h.b16 %v56
  %v739 = vunpack.c.l.b16 %v57
  %v740 = vunpack.c.h.b16 %v57
  %v741 = vunpack.c.l.b16 %v58
  %v742 = vunpack.c.h.b16 %v58
  %v743 = vunpack.c.l.b16 %v59
  %v744 = vunpack.c.h.b16 %v59
  %v745 = vunpack.c.l.b16 %v60
  %v746 = vunpack.c.h.b16 %v60
  %v747 = vunpack.c.l.b16 %v61
  %v748 = vunpack.c.h.b16 %v61
  %v749 = vunpack.c.l.b16 %v62
  %v750 = vunpack.c.h.b16 %v62
  %v751 = vunpack.c.l.b16 %v63
  %v752 = vunpack.c.h.b16 %v63
  %v753 = vunpack.c.l.b16 %v64
  %v754 = vunpack.c.h.b16 %v64
  %v755 = vunpack.c.l.b16 %v65
  %v756 = vunpack.c.h.b16 %v65
  %v757 = vunpack.c.l.b16 %v66
  %v758 = vunpack.c.h.b16 %v66
  %v759 = vunpack.c.l.b16 %v67
  %v760 = vunpack.c.h.b16 %v67
  %v761 = vunpack.c.l.b16 %v68
  %v762 = vunpack.c.h.b16 %v68
  %v763 = vunpack.c.l.b16 %v69
  %v764 = vunpack.c.h.b16 %v69
  %v765 = vunpack.c.l.b16 %v70
  %v766 = vunpack.c.h.b16 %v70
  %v767 = vunpack.c.l.b16 %v71
  %v768 = vunpack.c.h.b16 %v71
  %v769 = vunpack.c.l.b16 %v72
  %v770 = vunpack.c.h.b16 %v72
  %v771 = vunpack.c.l.b16 %v73
  %v772 = vunpack.c.h.b16 %v73
  %v773 = vunpack.c.l.b16 %v74
  %v774 = vunpack.c.h.b16 %v74
  %v775 = vunpack.c.l.b16 %v75
  %v776 = vunpack.c.h.b16 %v75
  %v777 = vunpack.c.l.b16 %v76
  %v778 = vunpack.c.h.b16 %v76
  %v779 = vunpack.c.l.b16 %v77
  %v780 = vunpack.c.h.b16 %v77
  %v781 = vunpack.c.l.b16 %v78
  %v782 = vunpack.c.h.b16 %v78
  %v783 = vunpack.c.l.b16 %v79
  %v784 = vunpack.c.h.b16 %v79
  %v785 = vunpack.c.l.b16 %v80
  %v786 = vunpack.c.h.b16 %v80
  %v787 = vunpack.c.l.b16 %v81
  %v788 = vunpack.c.h.b16 %v81
  %v789 = vunpack.c.l.b16 %v82
  %v790 = vunpack.c.h.b16 %v82
  %v791 = vunpack.c.l.b16 %v83
  %v792 = vunpack.c.h.b16 %v83
  %v793 = vunpack.c.l.b16 %v84
  %v794 = vunpack.c.h.b16 %v84
  %v795 = vunpack.c.l.b16 %v85
  %v796 = vunpack.c.h.b16 %v85
  %v797 = vunpack.c.l.b16 %v86
  %v798 = vunpack.c.h.b16 %v86
  %v799 = vunpack.c.l.b16 %v87
  %v800 = vunpack.c.h.b16 %v87
  %v801 = vunpack.c.l.b16 %v88
  %v802 = vunpack.c.h.b16 %v88
  %v803 = vunpack.c.l.b16 %v89
  %v804 = vunpack.c.h.b16 %v89
  %v805 = vunpack.c.l.b16 %v90
  %v806 = vunpack.c.h.b16 %v90
  %v807 = vunpack.c.l.b16 %v91
  %v808 = vunpack.c.h.b16 %v91
  %v809 = vunpack.c.l.b16 %v92
  %v810 = vunpack.c.h.b16 %v92
  %v811 = vunpack.c.l.b16 %v93
  %v812 = vunpack.c.h.b16 %v93
  %v813 = vunpack.c.l.b16 %v94
  %v814 = vunpack.c.h.b16 %v94
  %v815 = vunpack.c.l.b16 %v95
  %v816 = vunpack.c.h.b16 %v95
  %v817 = vunpack.c.l.b16 %v96
  %v818 = vunpack.c.h.b16 %v96
  %v819 = vunpack.c.l.b16 %v97
  %v820 = vunpack.c.h.b16 %v97
  %v821 = vunpack.c.l.b16 %v98
  %v822 = vunpack.c.h.b16 %v98
  %v823 = vunpack.c.l.b16 %v99
  %v824 = vunpack.c.h.b16 %v99
  %v825 = vunpack.c.l.b16 %v100
  %v826 = vunpack.c.h.b16 %v100
  %v827 = vunpack.c.l.b16 %v101
  %v828 = vunpack.c.h.b16 %v101
  %v829 = vunpack.c.l.b16 %v102
  %v830 = vunpack.c.h.b16 %v102
  %v831 = vunpack.c.l.b16 %v103
  %v832 = vunpack.c.h.b16 %v103
  %v833 = vunpack.c.l.b16 %v104
  %v834 = vunpack.c.h.b16 %v104
  %v835 = vunpack.c.l.b16 %v105
  %v836 = vunpack.c.h.b16 %v105
  %v837 = vunpack.c.l.b16 %v106
  %v838 = vunpack.c.h.b16 %v106
  %v839 = vunpack.c.l.b16 %v107
  %v840 = vunpack.c.h.b16 %v107
  %v841 = vunpack.c.l.b16 %v108
  %v842 = vunpack.c.h.b16 %v108
  %v843 = vunpack.c.l.b16 %v109
  %v844 = vunpack.c.h.b16 %v109
  %v845 = vunpack.c.l.b16 %v110
  %v846 = vunpack.c.h.b16 %v110
  %v847 = vunpack.c.l.b16 %v111
  %v848 = vunpack.c.h.b16 %v111
  %v849 = vunpack.c.l.b16 %v112
  %v850 = vunpack.c.h.b16 %v112
  %v851 = vunpack.c.l.b16 %v113
  %v852 = vunpack.c.h.b16 %v113
  %v853 = vunpack.c.l.b16 %v114
  %v854 = vunpack.c.h.b16 %v114
  %v855 = vunpack.c.l.b16 %v115
  %v856 = vunpack.c.h.b16 %v115
  %v857 = vunpack.c.l.b16 %v116
  %v858 = vunpack.c.h.b16 %v116
  %v859 = vunpack.c.l.b16 %v117
  %v860 = vunpack.c.h.b16 %v117
  %v861 = vunpack.c.l.b16 %v118
  %v862 = vunpack.c.h.b16 %v118
  %v863 = vunpack.c.l.b16 %v119
  %v864 = vunpack.c.h.b16 %v119
  %v865 = vunpack.c.l.b16 %v120
  %v866 = vunpack.c.h.b16 %v120
  %v867 = vunpack.c.l.b16 %v121
  %v868 = vunpack.c.h.b16 %v121
  %v869 = vunpack.c.l.b16 %v122
  %v870 = vunpack.c.h.b16 %v122
  %v871 = vunpack.c.l.b16 %v123
  %v872 = vunpack.c.h.b16 %v123
  %v873 = vunpack.c.l.b16 %v124
  %v874 = vunpack.c.h.b16 %v124
  %v875 = vunpack.c.l.b16 %v125
  %v876 = vunpack.c.h.b16 %v125
  %v877 = vunpack.c.l.b16 %v126
  %v878 = vunpack.c.h.b16 %v126
  %v879 = vunpack.c.l.b16 %v127
  %v880 = vunpack.c.h.b16 %v127
  %v881 = vunpack.c.l.b16 %v128
  %v882 = vunpack.c.h.b16 %v128
  %v883 = vunpack.c.l.b16 %v129
  %v884 = vunpack.c.h.b16 %v129
  %v885 = vunpack.c.l.b16 %v130
  %v886 = vunpack.c.h.b16 %v130
  %v887 = vunpack.c.l.b16 %v131
  %v888 = vunpack.c.h.b16 %v131
  %v889 = vunpack.c.l.b16 %v132
  %v890 = vunpack.c.h.b16 %v132
  %v891 = vunpack.c.l.b16 %v133
  %v892 = vunpack.c.h.b16 %v133
  %v893 = vunpack.c.l.b16 %v134
  %v894 = vunpack.c.h.b16 %v134
  %v895 = vunpack.c.l.b16 %v135
  %v896 = vunpack.c.h.b16 %v135
  %v897 = vunpack.c.l.b16 %v136
  %v898 = vunpack.c.h.b16 %v136
  %v899 = vunpack.c.l.b16 %v137
  %v900 = vunpack.c.h.b16 %v137
  %v901 = vunpack.c.l.b16 %v138
  %v902 = vunpack.c.h.b16 %v138
  %v903 = vunpack.c.l.b16 %v139
  %v904 = vunpack.c.h.b16 %v139
  %v905 = vunpack.c.l.b16 %v140
  %v906 = vunpack.c.h.b16 %v140
  %v907 = vunpack.c.l.b16 %v141
  %v908 = vunpack.c.h.b16 %v141
  %v909 = vunpack.c.l.b16 %v142
  %v910 = vunpack.c.h.b16 %v142
  %v911 = vunpack.c.l.b16 %v143
  %v912 = vunpack.c.h.b16 %v143
  %v913 = vunpack.c.l.b16 %v144
  %v914 = vunpack.c.h.b16 %v144
  %v915 = vunpack.c.l.b16 %v145
  %v916 = vunpack.c.h.b16 %v145
  %v917 = vunpack.c.l.b16 %v146
  %v918 = vunpack.c.h.b16 %v146
  %v919 = vunpack.c.l.b16 %v147
  %v920 = vunpack.c.h.b16 %v147
  %v921 = vunpack.c.l.b16 %v148
  %v922 = vunpack.c.h.b16 %v148
  %v923 = vunpack.c.l.b16 %v149
  %v924 = vunpack.c.h.b16 %v149
  %v925 = vunpack.c.l.b16 %v150
  %v926 = vunpack.c.h.b16 %v150
  %v927 = vunpack.c.l.b16 %v151
  %v928 = vunpack.c.h.b16 %v151
  %v929 = vunpack.c.l.b16 %v152
  %v930 = vunpack.c.h.b16 %v152
  %v931 = vunpack.c.l.b16 %v153
  %v932 = vunpack.c.h.b16 %v153
  %v933 = vunpack.c.l.b16 %v154
  %v934 = vunpack.c.h.b16 %v154
  %v935 = vunpack.c.l.b16 %v155
  %v936 = vunpack.c.h.b16 %v155
  %v937 = vunpack.c.l.b16 %v156
  %v938 = vunpack.c.h.b16 %v156
  %v939 = vunpack.c.l.b16 %v157
  %v940 = vunpack.c.h.b16 %v157
  %v941 = vunpack.c.l.b16 %v158
  %v942 = vunpack.c.h.b16 %v158
  %v943 = vunpack.c.l.b16 %v159
  %v944 = vunpack.c.h.b16 %v159
  %v945 = vunpack.c.l.b16 %v160
  %v946 = vunpack.c.h.b16 %v160
  %v947 = vunpack.c.l.b16 %v161
  %v948 = vunpack.c.h.b16 %v161
  %v949 = vunpack.c.l.b16 %v162
  %v950 = vunpack.c.h.b16 %v162
  %v951 = vunpack.c.l.b16 %v163
  %v952 = vunpack.c.h.b16 %v163
  %v953 = vunpack.c.l.b16 %v164
  %v954 = vunpack.c.h.b16 %v164
  %v955 = vunpack.c.l.b16 %v165
  %v956 = vunpack.c.h.b16 %v165
  %v957 = vunpack.c.l.b16 %v166
  %v958 = vunpack.c.h.b16 %v166
  %v959 = vunpack.c.l.b16 %v167
  %v960 = vunpack.c.h.b16 %v167
  %v961 = vunpack.c.l.b16 %v168
  %v962 = vunpack.c.h.b16 %v168
  %v963 = vunpack.c.l.b16 %v169
  %v964 = vunpack.c.h.b16 %v169
  %v965 = vunpack.c.l.b16 %v170
  %v966 = vunpack.c.h.b16 %v170
  %v967 = vunpack.c.l.b16 %v171
  %v968 = vunpack.c.h.b16 %v171
  %v969 = vunpack.c.l.b16 %v172
  %v970 = vunpack.c.h.b16 %v172
  %v971 = vunpack.c.l.b16 %v173
  %v972 = vunpack.c.h.b16 %v173
  %v973 = vunpack.c.l.b16 %v174
  %v974 = vunpack.c.h.b16 %v174
  %v975 = vunpack.c.l.b16 %v175
  %v976 = vunpack.c.h.b16 %v175
  %v977 = vunpack.c.l.b16 %v176
  %v978 = vunpack.c.h.b16 %v176
  %v979 = vunpack.c.l.b16 %v177
  %v980 = vunpack.c.h.b16 %v177
  %v981 = vunpack.c.l.b16 %v178
  %v982 = vunpack.c.h.b16 %v178
  %v983 = vunpack.c.l.b16 %v179
  %v984 = vunpack.c.h.b16 %v179
  %v985 = vunpack.c.l.b16 %v180
  %v986 = vunpack.c.h.b16 %v180
  %v987 = vunpack.c.l.b16 %v181
  %v988 = vunpack.c.h.b16 %v181
  %v989 = vunpack.c.l.b16 %v182
  %v990 = vunpack.c.h.b16 %v182
  %v991 = vunpack.c.l.b16 %v183
  %v992 = vunpack.c.h.b16 %v183
  %v993 = vunpack.c.l.b16 %v184
  %v994 = vunpack.c.h.b16 %v184
  %v995 = vunpack.c.l.b16 %v185
  %v996 = vunpack.c.h.b16 %v185
  %v997 = vunpack.c.l.b16 %v186
  %v998 = vunpack.c.h.b16 %v186
  %v999 = vunpack.c.l.b16 %v187
  %v1000 = vunpack.c.h.b16 %v187
  %v1001 = vunpack.c.l.b16 %v188
  %v1002 = vunpack.c.h.b16 %v188
  %v1003 = vunpack.c.l.b16 %v189
  %v1004 = vunpack.c.h.b16 %v189
  %v1005 = vunpack.c.l.b16 %v190
  %v1006 = vunpack.c.h.b16 %v190
  %v1007 = vunpack.c.l.b16 %v191
  %v1008 = vunpack.c.h.b16 %v191
  %v1009 = vunpack.c.l.b16 %v192
  %v1010 = vunpack.c.h.b16 %v192
  %v1011 = vunpack.c.l.b16 %v193
  %v1012 = vunpack.c.h.b16 %v193
  %v1013 = vunpack.c.l.b16 %v194
  %v1014 = vunpack.c.h.b16 %v194
  %v1015 = vunpack.c.l.b16 %v195
  %v1016 = vunpack.c.h.b16 %v195
  %v1017 = vunpack.c.l.b16 %v196
  %v1018 = vunpack.c.h.b16 %v196
  %v1019 = vunpack.c.l.b16 %v197
  %v1020 = vunpack.c.h.b16 %v197
  %v1021 = vunpack.c.l.b16 %v198
  %v1022 = vunpack.c.h.b16 %v198
  %v1023 = vunpack.c.l.b16 %v199
  %v1024 = vunpack.c.h.b16 %v199
  %v1025 = vunpack.c.l.b16 %v200
  %v1026 = vunpack.c.h.b16 %v200
  %v1027 = vunpack.c.l.b16 %v201
  %v1028 = vunpack.c.h.b16 %v201
  %v1029 = vunpack.c.l.b16 %v202
  %v1030 = vunpack.c.h.b16 %v202
  %v1031 = vunpack.c.l.b16 %v203
  %v1032 = vunpack.c.h.b16 %v203
  %v1033 = vunpack.c.l.b16 %v204
  %v1034 = vunpack.c.h.b16 %v204
  %v1035 = vunpack.c.l.b16 %v205
  %v1036 = vunpack.c.h.b16 %v205
  %v1037 = vunpack.c.l.b16 %v206
  %v1038 = vunpack.c.h.b16 %v206
  %v1039 = vunpack.c.l.b16 %v207
  %v1040 = vunpack.c.h.b16 %v207
  %v1041 = vunpack.c.l.b16 %v208
  %v1042 = vunpack.c.h.b16 %v208
  %v1043 = vunpack.c.l.b16 %v209
  %v1044 = vunpack.c.h.b16 %v209
  %v1045 = vunpack.c.l.b16 %v210
  %v1046 = vunpack.c.h.b16 %v210
  %v1047 = vunpack.c.l.b16 %v211
  %v1048 = vunpack.c.h.b16 %v211
  %v1049 = vunpack.c.l.b16 %v212
  %v1050 = vunpack.c.h.b16 %v212
  %v1051 = vunpack.c.l.b16 %v213
  %v1052 = vunpack.c.h.b16 %v213
  %v1053 = vunpack.c.l.b16 %v214
  %v1054 = vunpack.c.h.b16 %v214
  %v1055 = vunpack.c.l.b16 %v215
  %v1056 = vunpack.c.h.b16 %v215
  %v1057 = vunpack.c.l.b16 %v216
  %v1058 = vunpack.c.h.b16 %v216
  %v1059 = vunpack.c.l.b16 %v217
  %v1060 = vunpack.c.h.b16 %v217
  %v1061 = vunpack.c.l.b16 %v218
  %v1062 = vunpack.c.h.b16 %v218
  %v1063 = vunpack.c.l.b16 %v219
  %v1064 = vunpack.c.h.b16 %v219
  %v1065 = vunpack.c.l.b16 %v220
  %v1066 = vunpack.c.h.b16 %v220
  %v1067 = vunpack.c.l.b16 %v221
  %v1068 = vunpack.c.h.b16 %v221
  %v1069 = vunpack.c.l.b16 %v222
  %v1070 = vunpack.c.h.b16 %v222
  %v1071 = vunpack.c.l.b16 %v223
  %v1072 = vunpack.c.h.b16 %v223
  %v1073 = vunpack.c.l.b16 %v224
  %v1074 = vunpack.c.h.b16 %v224
  %v1075 = vunpack.c.l.b16 %v225
  %v1076 = vunpack.c.h.b16 %v225
  %v1077 = vunpack.c.l.b16 %v226
  %v1078 = vunpack.c.h.b16 %v226
  %v1079 = vunpack.c.l.b16 %v227
  %v1080 = vunpack.c.h.b16 %v227
  %v1081 = vunpack.c.l.b16 %v228
  %v1082 = vunpack.c.h.b16 %v228
  %v1083 = vunpack.c.l.b16 %v229
  %v1084 = vunpack.c.h.b16 %v229
  %v1085 = vunpack.c.l.b16 %v230
  %v1086 = vunpack.c.h.b16 %v230
  %v1087 = vunpack.c.l.b16 %v231
  %v1088 = vunpack.c.h.b16 %v231
  %v1089 = vunpack.c.l.b16 %v232
  %v1090 = vunpack.c.h.b16 %v232
  %v1091 = vunpack.c.l.b16 %v233
  %v1092 = vunpack.c.h.b16 %v233
  %v1093 = vunpack.c.l.b16 %v234
  %v1094 = vunpack.c.h.b16 %v234
  %v1095 = vunpack.c.l.b16 %v235
  %v1096 = vunpack.c.h.b16 %v235
  %v1097 = vunpack.c.l.b16 %v236
  %v1098 = vunpack.c.h.b16 %v236
  %v1099 = vunpack.c.l.b16 %v237
  %v1100 = vunpack.c.h.b16 %v237
  %v1101 = vunpack.c.l.b16 %v238
  %v1102 = vunpack.c.h.b16 %v238
  %v1103 = vunpack.c.l.b16 %v239
  %v1104 = vunpack.c.h.b16 %v239
  %v1105 = vunpack.c.l.b16 %v240
  %v1106 = vunpack.c.h.b16 %v240
  %v1107 = vunpack.c.l.b16 %v241
  %v1108 = vunpack.c.h.b16 %v241
  %v1109 = vunpack.c.l.b16 %v242
  %v1110 = vunpack.c.h.b16 %v242
  %v1111 = vunpack.c.l.b16 %v243
  %v1112 = vunpack.c.h.b16 %v243
  %v1113 = vunpack.c.l.b16 %v244
  %v1114 = vunpack.c.h.b16 %v244
  %v1115 = vunpack.c.l.b16 %v245
  %v1116 = vunpack.c.h.b16 %v245
  %v1117 = vunpack.c.l.b16 %v246
  %v1118 = vunpack.c.h.b16 %v246
  %v1119 = vunpack.c.l.b16 %v247
  %v1120 = vunpack.c.h.b16 %v247
  %v1121 = vunpack.c.l.b16 %v248
  %v1122 = vunpack.c.h.b16 %v248
  %v1123 = vunpack.c.l.b16 %v249
  %v1124 = vunpack.c.h.b16 %v249
  %v1125 = vunpack.c.l.b16 %v250
  %v1126 = vunpack.c.h.b16 %v250
  %v1127 = vunpack.c.l.b16 %v251
  %v1128 = vunpack.c.h.b16 %v251
  %v1129 = vunpack.c.l.b16 %v252
  %v1130 = vunpack.c.h.b16 %v252
  %v1131 = vunpack.c.l.b16 %v253
  %v1132 = vunpack.c.h.b16 %v253
  %v1133 = vunpack.c.l.b16 %v254
  %v1134 = vunpack.c.h.b16 %v254
  %v1135 = vunpack.c.l.b16 %v255
  %v1136 = vunpack.c.h.b16 %v255
  %v1137 = vunpack.c.l.b16 %v256
  %v1138 = vunpack.c.h.b16 %v256
  %v1139 = vunpack.c.l.b16 %v257
  %v1140 = vunpack.c.h.b16 %v257
  %v1141 = vunpack.c.l.b16 %v258
  %v1142 = vunpack.c.h.b16 %v258
  %v1143 = vunpack.c.l.b16 %v259
  %v1144 = vunpack.c.h.b16 %v259
  %v1145 = vunpack.c.l.b16 %v260
  %v1146 = vunpack.c.h.b16 %v260
  %v1147 = vunpack.c.l.b16 %v261
  %v1148 = vunpack.c.h.b16 %v261
  %v1149 = vunpack.c.l.b16 %v262
  %v1150 = vunpack.c.h.b16 %v262
  %v1151 = vunpack.c.l.b16 %v263
  %v1152 = vunpack.c.h.b16 %v263
  %v1153 = vunpack.c.l.b16 %v264
  %v1154 = vunpack.c.h.b16 %v264
  %v1155 = vunpack.c.l.b16 %v265
  %v1156 = vunpack.c.h.b16 %v265
  %v1157 = vunpack.c.l.b16 %v266
  %v1158 = vunpack.c.h.b16 %v266
  %v1159 = vunpack.c.l.b16 %v267
  %v1160 = vunpack.c.h.b16 %v267
  %v1161 = vunpack.c.l.b16 %v268
  %v1162 = vunpack.c.h.b16 %v268
  %v1163 = vunpack.c.l.b16 %v269
  %v1164 = vunpack.c.h.b16 %v269
  %v1165 = vunpack.c.l.b16 %v270
  %v1166 = vunpack.c.h.b16 %v270
  %v1167 = vunpack.c.l.b16 %v271
  %v1168 = vunpack.c.h.b16 %v271
  %v1169 = vunpack.c.l.b16 %v272
  %v1170 = vunpack.c.h.b16 %v272
  %v1171 = vunpack.c.l.b16 %v273
  %v1172 = vunpack.c.h.b16 %v273
  %v1173 = vunpack.c.l.b16 %v274
  %v1174 = vunpack.c.h.b16 %v274
  %v1175 = vunpack.c.l.b16 %v275
  %v1176 = vunpack.c.h.b16 %v275
  %v1177 = vunpack.c.l.b16 %v276
  %v1178 = vunpack.c.h.b16 %v276
  %v1179 = vunpack.c.l.b16 %v277
  %v1180 = vunpack.c.h.b16 %v277
  %v1181 = vunpack.c.l.b16 %v278
  %v1182 = vunpack.c.h.b16 %v278
  %v1183 = vunpack.c.l.b16 %v279
  %v1184 = vunpack.c.h.b16 %v279
  %v1185 = vunpack.c.l.b16 %v280
  %v1186 = vunpack.c.h.b16 %v280
  %v1187 = vunpack.c.l.b16 %v281
  %v1188 = vunpack.c.h.b16 %v281
  %v1189 = vunpack.c.l.b16 %v282
  %v1190 = vunpack.c.h.b16 %v282
  %v1191 = vunpack.c.l.b16 %v283
  %v1192 = vunpack.c.h.b16 %v283
  %v1193 = vunpack.c.l.b16 %v284
  %v1194 = vunpack.c.h.b16 %v284
  %v1195 = vunpack.c.l.b16 %v285
  %v1196 = vunpack.c.h.b16 %v285
  %v1197 = vunpack.c.l.b16 %v286
  %v1198 = vunpack.c.h.b16 %v286
  %v1199 = vunpack.c.l.b16 %v287
  %v1200 = vunpack.c.h.b16 %v287
  %v1201 = vunpack.c.l.b16 %v288
  %v1202 = vunpack.c.h.b16 %v288
  %v1203 = vunpack.c.l.b16 %v289
  %v1204 = vunpack.c.h.b16 %v289
  %v1205 = vunpack.c.l.b16 %v290
  %v1206 = vunpack.c.h.b16 %v290
  %v1207 = vunpack.c.l.b16 %v291
  %v1208 = vunpack.c.h.b16 %v291
  %v1209 = vunpack.c.l.b16 %v292
  %v1210 = vunpack.c.h.b16 %v292
  %v1211 = vunpack.c.l.b16 %v293
  %v1212 = vunpack.c.h.b16 %v293
  %v1213 = vunpack.c.l.b16 %v294
  %v1214 = vunpack.c.h.b16 %v294
  %v1215 = vunpack.c.l.b16 %v295
  %v1216 = vunpack.c.h.b16 %v295
  %v1217 = vunpack.c.l.b16 %v296
  %v1218 = vunpack.c.h.b16 %v296
  %v1219 = vunpack.c.l.b16 %v297
  %v1220 = vunpack.c.h.b16 %v297
  %v1221 = vunpack.c.l.b16 %v298
  %v1222 = vunpack.c.h.b16 %v298
  %v1223 = vunpack.c.l.b16 %v299
  %v1224 = vunpack.c.h.b16 %v299
  %v1225 = vunpack.c.l.b16 %v300
  %v1226 = vunpack.c.h.b16 %v300
  %v1227 = vunpack.c.l.b16 %v301
  %v1228 = vunpack.c.h.b16 %v301
  %v1229 = vunpack.c.l.b16 %v302
  %v1230 = vunpack.c.h.b16 %v302
  %v1231 = vunpack.c.l.b16 %v303
  %v1232 = vunpack.c.h.b16 %v303
  %v1233 = vunpack.c.l.b16 %v304
  %v1234 = vunpack.c.h.b16 %v304
  %v1235 = vunpack.c.l.b16 %v305
  %v1236 = vunpack.c.h.b16 %v305
  %v1237 = vunpack.c.l.b16 %v306
  %v1238 = vunpack.c.h.b16 %v306
  %v1239 = vunpack.c.l.b16 %v307
  %v1240 = vunpack.c.h.b16 %v307
  %v1241 = vunpack.c.l.b16 %v308
  %v1242 = vunpack.c.h.b16 %v308
  %v1243 = vunpack.c.l.b16 %v309
  %v1244 = vunpack.c.h.b16 %v309
  %v1245 = vunpack.c.l.b16 %v310
  %v1246 = vunpack.c.h.b16 %v310
  %v1247 = vunpack.c.l.b16 %v311
  %v1248 = vunpack.c.h.b16 %v311
  %v1249 = vunpack.c.l.b16 %v312
  %v1250 = vunpack.c.h.b16 %v312
  %v1251 = vunpack.c.l.b16 %v313
  %v1252 = vunpack.c.h.b16 %v313
  %v1253 = vunpack.c.l.b16 %v314
  %v1254 = vunpack.c.h.b16 %v314
  %v1255 = vunpack.c.l.b16 %v315
  %v1256 = vunpack.c.h.b16 %v315
  %v1257 = vunpack.c.l.b16 %v316
  %v1258 = vunpack.c.h.b16 %v316
  %v1259 = vunpack.c.l.b16 %v317
  %v1260 = vunpack.c.h.b16 %v317
  %v1261 = vunpack.c.l.b16 %v318
  %v1262 = vunpack.c.h.b16 %v318
  %v1263 = vunpack.c.l.b16 %v319
  %v1264 = vunpack.c.h.b16 %v319
  %v1265 = vunpack.c.l.b16 %v320
  %v1266 = vunpack.c.h.b16 %v320
  %v1267 = vunpack.c.l.b16 %v321
  %v1268 = vunpack.c.h.b16 %v321
  %v1269 = vunpack.c.l.b16 %v322
  %v1270 = vunpack.c.h.b16 %v322
  %v1271 = vunpack.c.l.b16 %v323
  %v1272 = vunpack.c.h.b16 %v323
  %v1273 = vunpack.c.l.b16 %v324
  %v1274 = vunpack.c.h.b16 %v324
  %v1275 = vunpack.c.l.b16 %v325
  %v1276 = vunpack.c.h.b16 %v325
  %v1277 = vunpack.c.l.b16 %v326
  %v1278 = vunpack.c.h.b16 %v326
  %v1279 = vunpack.c.l.b16 %v327
  %v1280 = vunpack.c.h.b16 %v327
  %v1281 = vunpack.c.l.b16 %v328
  %v1282 = vunpack.c.h.b16 %v328
  %v1283 = vunpack.c.l.b16 %v329
  %v1284 = vunpack.c.h.b16 %v329
  %v1285 = vunpack.c.l.b16 %v330
  %v1286 = vunpack.c.h.b16 %v330
  %v1287 = vunpack.c.l.b16 %v331
  %v1288 = vunpack.c.h.b16 %v331
  %v1289 = vunpack.c.l.b16 %v332
  %v1290 = vunpack.c.h.b16 %v332
  %v1291 = vunpack.c.l.b16 %v333
  %v1292 = vunpack.c.h.b16 %v333
  %v1293 = vunpack.c.l.b16 %v334
  %v1294 = vunpack.c.h.b16 %v334
  %v1295 = vunpack.c.l.b16 %v335
  %v1296 = vunpack.c.h.b16 %v335
  %v1297 = vunpack.c.l.b16 %v336
  %v1298 = vunpack.c.h.b16 %v336
  %v1299 = vunpack.c.l.b16 %v337
  %v1300 = vunpack.c.h.b16 %v337
  %v1301 = vunpack.c.l.b16 %v338
  %v1302 = vunpack.c.h.b16 %v338
  %v1303 = vunpack.c.l.b16 %v339
  %v1304 = vunpack.c.h.b16 %v339
  %v1305 = vunpack.c.l.b16 %v340
  %v1306 = vunpack.c.h.b16 %v340
  %v1307 = vunpack.c.l.b16 %v341
  %v1308 = vunpack.c.h.b16 %v341
  %v1309 = vunpack.c.l.b16 %v342
  %v1310 = vunpack.c.h.b16 %v342
  %v1311 = vunpack.c.l.b16 %v343
  %v1312 = vunpack.c.h.b16 %v343
  %v1313 = vunpack.c.l.b16 %v344
  %v1314 = vunpack.c.h.b16 %v344
  %v1315 = vpack.c.b16 %v685, %v675
  %v1316 = vpack.c.b16 %v686, %v676
  %v1317 = vpack.c.b16 %v687, %v677
  %v1318 = vpack.c.b16 %v688, %v678
  %v1319 = vpack.c.b16 %v689, %v679
  %v1320 = vpack.c.b16 %v690, %v680
  %v1321 = vpack.c.b16 %v691, %v681
  %v1322 = vpack.c.b16 %v692, %v682
  %v1323 = vpack.c.b16 %v693, %v683
  %v1324 = vpack.c.b16 %v694, %v684
  %v1325 = vpack.c.b16 %v705, %v695
  %v1326 = vpack.c.b16 %v706, %v696
  %v1327 = vpack.c.b16 %v707, %v697
  %v1328 = vpack.c.b16 %v708, %v698
  %v1329 = vpack.c.b16 %v709, %v699
  %v1330 = vpack.c.b16 %v710, %v700
  %v1331 = vpack.c.b16 %v711, %v701
  %v1332 = vpack.c.b16 %v712, %v702
  %v1333 = vpack.c.b16 %v713, %v703
  %v1334 = vpack.c.b16 %v714, %v704
  %v1335 = vpack.c.b16 %v725, %v715
  %v1336 = vpack.c.b16 %v726, %v716
  %v1337 = vpack.c.b16 %v727, %v717
  %v1338 = vpack.c.b16 %v728, %v718
  %v1339 = vpack.c.b16 %v729, %v719
  %v1340 = vpack.c.b16 %v730, %v720
  %v1341 = vpack.c.b16 %v731, %v721
  %v1342 = vpack.c.b16 %v732, %v722
  %v1343 = vpack.c.b16 %v733, %v723
  %v1344 = vpack.c.b16 %v734, %v724
  %v1345 = vpack.c.b16 %v745, %v735
  %v1346 = vpack.c.b16 %v746, %v736
  %v1347 = vpack.c.b16 %v747, %v737
  %v1348 = vpack.c.b16 %v748, %v738
  %v1349 = vpack.c.b16 %v749, %v739
  %v1350 = vpack.c.b16 %v750, %v740
  %v1351 = vpack.c.b16 %v751, %v741
  %v1352 = vpack.c.b16 %v752, %v742
  %v1353 = vpack.c.b16 %v753, %v743
  %v1354 = vpack.c.b16 %v754, %v744
  %v1355 = vpack.c.b16 %v765, %v755
  %v1356 = vpack.c.b16 %v766, %v756
  %v1357 = vpack.c.b16 %v767, %v757
  %v1358 = vpack.c.b16 %v768, %v758
  %v1359 = vpack.c.b16 %v769, %v759
  %v1360 = vpack.c.b16 %v770, %v760
  %v1361 = vpack.c.b16 %v771, %v761
  %v1362 = vpack.c.b16 %v772, %v762
  %v1363 = vpack.c.b16 %v773, %v763
  %v1364 = vpack.c.b16 %v774, %v764
  %v1365 = vpack.c.b16 %v785, %v775
  %v1366 = vpack.c.b16 %v786, %v776
  %v1367 = vpack.c.b16 %v787, %v777
  %v1368 = vpack.c.b16 %v788, %v778
  %v1369 = vpack.c.b16 %v789, %v779
  %v1370 = vpack.c.b16 %v790, %v780
  %v1371 = vpack.c.b16 %v791, %v781
  %v1372 = vpack.c.b16 %v792, %v782
  %v1373 = vpack.c.b16 %v793, %v783
  %v1374 = vpack.c.b16 %v794, %v784
  %v1375 = vpack.c.b16 %v805, %v795
  %v1376 = vpack.c.b16 %v806, %v796
  %v1377 = vpack.c.b16 %v807, %v797
  %v1378 = vpack.c.b16 %v808, %v798
  %v1379 = vpack.c.b16 %v809, %v799
  %v1380 = vpack.c.b16 %v810, %v800
  %v1381 = vpack.c.b16 %v811, %v801
  %v1382 = vpack.c.b16 %v812, %v802
  %v1383 = vpack.c.b16 %v813, %v803
  %v1384 = vpack.c.b16 %v814, %v804
  %v1385 = vpack.c.b16 %v825, %v815
  %v1386 = vpack.c.b16 %v826, %v816
  %v1387 = vpack.c.b16 %v827, %v817
  %v1388 = vpack.c.b16 %v828, %v818
  %v1389 = vpack.c.b16 %v829, %v819
  %v1390 = vpack.c.b16 %v830, %v820
  %v1391 = vpack.c.b16 %v831, %v821
  %v1392 = vpack.c.b16 %v832, %v822
  %v1393 = vpack.c.b16 %v833, %v823
  %v1394 = vpack.c.b16 %v834, %v824
  %v1395 = vpack.c.b16 %v845, %v835
  %v1396 = vpack.c.b16 %v846, %v836
  %v1397 = vpack.c.b16 %v847, %v837
  %v1398 = vpack.c.b16 %v848, %v838
  %v1399 = vpack.c.b16 %v849, %v839
  %v1400 = vpack.c.b16 %v850, %v840
  %v1401 = vpack.c.b16 %v851, %v841
  %v1402 = vpack.c.b16 %v852, %v842
  %v1403 = vpack.c.b16 %v853, %v843
  %v1404 = vpack.c.b16 %v854, %v844
  %v1405 = vpack.c.b16 %v865, %v855
  %v1406 = vpack.c.b16 %v866, %v856
  %v1407 = vpack.c.b16 %v867, %v857
  %v1408 = vpack.c.b16 %v868, %v858
  %v1409 = vpack.c.b16 %v869, %v859
  %v1410 = vpack.c.b16 %v870, %v860
  %v1411 = vpack.c.b16 %v871, %v861
  %v1412 = vpack.c.b16 %v872, %v862
  %v1413 = vpack.c.b16 %v873, %v863
  %v1414 = vpack.c.b16 %v874, %v864
  %v1415 = vpack.c.b16 %v885, %v875
  %v1416 = vpack.c.b16 %v886, %v876
  %v1417 = vpack.c.b16 %v887, %v877
  %v1418 = vpack.c.b16 %v888, %v878
  %v1419 = vpack.c.b16 %v889, %v879
  %v1420 = vpack.c.b16 %v890, %v880
  %v1421 = vpack.c.b16 %v891, %v881
  %v1422 = vpack.c.b16 %v892, %v882
  %v1423 = vpack.c.b16 %v893, %v883
  %v1424 = vpack.c.b16 %v894, %v884
  %v1425 = vpack.c.b16 %v905, %v895
  %v1426 = vpack.c.b16 %v906, %v896
  %v1427 = vpack.c.b16 %v907, %v897
  %v1428 = vpack.c.b16 %v908, %v898
  %v1429 = vpack.c.b16 %v909, %v899
  %v1430 = vpack.c.b16 %v910, %v900
  %v1431 = vpack.c.b16 %v911, %v901
  %v1432 = vpack.c.b16 %v912, %v902
  %v1433 = vpack.c.b16 %v913, %v903
  %v1434 = vpack.c.b16 %v914, %v904
  %v1435 = vpack.c.b16 %v925, %v915
  %v1436 = vpack.c.b16 %v926, %v916
  %v1437 = vpack.c.b16 %v927, %v917
  %v1438 = vpack.c.b16 %v928, %v918
  %v1439 = vpack.c.b16 %v929, %v919
  %v1440 = vpack.c.b16 %v930, %v920
  %v1441 = vpack.c.b16 %v931, %v921
  %v1442 = vpack.c.b16 %v932, %v922
  %v1443 = vpack.c.b16 %v933, %v923
  %v1444 = vpack.c.b16 %v934, %v924
  %v1445 = vpack.c.b16 %v945, %v935
  %v1446 = vpack.c.b16 %v946, %v936
  %v1447 = vpack.c.b16 %v947, %v937
  %v1448 = vpack.c.b16 %v948, %v938
  %v1449 = vpack.c.b16 %v949, %v939
  %v1450 = vpack.c.b16 %v950, %v940
  %v1451 = vpack.c.b16 %v951, %v941
  %v1452 = vpack.c.b16 %v952, %v942
  %v1453 = vpack.c.b16 %v953, %v943
  %v1454 = vpack.c.b16 %v954, %v944
  %v1455 = vpack.c.b16 %v965, %v955
  %v1456 = vpack.c.b16 %v966, %v956
  %v1457 = vpack.c.b16 %v967, %v957
  %v1458 = vpack.c.b16 %v968, %v958
  %v1459 = vpack.c.b16 %v969, %v959
  %v1460 = vpack.c.b16 %v970, %v960
  %v1461 = vpack.c.b16 %v971, %v961
  %v1462 = vpack.c.b16 %v972, %v962
  %v1463 = vpack.c.b16 %v973, %v963
  %v1464 = vpack.c.b16 %v974, %v964
  %v1465 = vpack.c.b16 %v985, %v975
  %v1466 = vpack.c.b16 %v986, %v976
  %v1467 = vpack.c.b16 %v987, %v977
  %v1468 = vpack.c.b16 %v988, %v978
  %v1469 = vpack.c.b16 %v989, %v979
  %v1470 = vpack.c.b16 %v990, %v980
  %v1471 = vpack.c.b16 %v991, %v981
  %v1472 = vpack.c.b16 %v992, %v982
  %v1473 = vpack.c.b16 %v993, %v983
  %v1474 = vpack.c.b16 %v994, %v984
  %v1475 = vpack.c.b16 %v1005, %v995
  %v1476 = vpack.c.b16 %v1006, %v996
  %v1477 = vpack.c.b16 %v1007, %v997
  %v1478 = vpack.c.b16 %v1008, %v998
  %v1479 = vpack.c.b16 %v1009, %v999
  %v1480 = vpack.c.b16 %v1010, %v1000
  %v1481 = vpack.c.b16 %v1011, %v1001
  %v1482 = vpack.c.b16 %v1012, %v1002
  %v1483 = vpack.c.b16 %v1013, %v1003
  %v1484 = vpack.c.b16 %v1014, %v1004
  %v1485 = vpack.c.b16 %v1025, %v1015
  %v1486 = vpack.c.b16 %v1026, %v1016
  %v1487 = vpack.c.b16 %v1027, %v1017
  %v1488 = vpack.c.b16 %v1028, %v1018
  %v1489 = vpack.c.b16 %v1029, %v1019
  %v1490 = vpack.c.b16 %v1030, %v1020
  %v1491 = vpack.c.b16 %v1031, %v1021
  %v1492 = vpack.c.b16 %v1032, %v1022
  %v1493 = vpack.c.b16 %v1033, %v1023
  %v1494 = vpack.c.b16 %v1034, %v1024
  %v1495 = vpack.c.b16 %v1045, %v1035
  %v1496 = vpack.c.b16 %v1046, %v1036
  %v1497 = vpack.c.b16 %v1047, %v1037
  %v1498 = vpack.c.b16 %v1048, %v1038
  %v1499 = vpack.c.b16 %v1049, %v1039
  %v1500 = vpack.c.b16 %v1050, %v1040
  %v1501 = vpack.c.b16 %v1051, %v1041
  %v1502 = vpack.c.b16 %v1052, %v1042
  %v1503 = vpack.c.b16 %v1053, %v1043
  %v1504 = vpack.c.b16 %v1054, %v1044
  %v1505 = vpack.c.b16 %v1065, %v1055
  %v1506 = vpack.c.b16 %v1066, %v1056
  %v1507 = vpack.c.b16 %v1067, %v1057
  %v1508 = vpack.c.b16 %v1068, %v1058
  %v1509 = vpack.c.b16 %v1069, %v1059
  %v1510 = vpack.c.b16 %v1070, %v1060
  %v1511 = vpack.c.b16 %v1071, %v1061
  %v1512 = vpack.c.b16 %v1072, %v1062
  %v1513 = vpack.c.b16 %v1073, %v1063
  %v1514 = vpack.c.b16 %v1074, %v1064
  %v1515 = vpack.c.b16 %v1085, %v1075
  %v1516 = vpack.c.b16 %v1086, %v1076
  %v1517 = vpack.c.b16 %v1087, %v1077
  %v1518 = vpack.c.b16 %v1088, %v1078
  %v1519 = vpack.c.b16 %v1089, %v1079
  %v1520 = vpack.c.b16 %v1090, %v1080
  %v1521 = vpack.c.b16 %v1091, %v1081
  %v1522 = vpack.c.b16 %v1092, %v1082
  %v1523 = vpack.c.b16 %v1093, %v1083
  %v1524 = vpack.c.b16 %v1094, %v1084
  %v1525 = vpack.c.b16 %v1105, %v1095
  %v1526 = vpack.c.b16 %v1106, %v1096
  %v1527 = vpack.c.b16 %v1107, %v1097
  %v1528 = vpack.c.b16 %v1108, %v1098
  %v1529 = vpack.c.b16 %v1109, %v1099
  %v1530 = vpack.c.b16 %v1110, %v1100
  %v1531 = vpack.c.b16 %v1111, %v1101
  %v1532 = vpack.c.b16 %v1112, %v1102
  %v1533 = vpack.c.b16 %v1113, %v1103
  %v1534 = vpack.c.b16 %v1114, %v1104
  %v1535 = vpack.c.b16 %v1125, %v1115
  %v1536 = vpack.c.b16 %v1126, %v1116
  %v1537 = vpack.c.b16 %v1127, %v1117
  %v1538 = vpack.c.b16 %v1128, %v1118
  %v1539 = vpack.c.b16 %v1129, %v1119
  %v1540 = vpack.c.b16 %v1130, %v1120
  %v1541 = vpack.c.b16 %v1131, %v1121
  %v1542 = vpack.c.b16 %v1132, %v1122
  %v1543 = vpack.c.b16 %v1133, %v1123
  %v1544 = vpack.c.b16 %v1134, %v1124
  %v1545 = vpack.c.b16 %v1145, %v1135
  %v1546 = vpack.c.b16 %v1146, %v1136
  %v1547 = vpack.c.b16 %v1147, %v1137
  %v1548 = vpack.c.b16 %v1148, %v1138
  %v1549 = vpack.c.b16 %v1149, %v1139
  %v1550 = vpack.c.b16 %v1150, %v1140
  %v1551 = vpack.c.b16 %v1151, %v1141
  %v1552 = vpack.c.b16 %v1152, %v1142
  %v1553 = vpack.c.b16 %v1153, %v1143
  %v1554 = vpack.c.b16 %v1154, %v1144
  %v1555 = vpack.c.b16 %v1165, %v1155
  %v1556 = vpack.c.b16 %v1166, %v1156
  %v1557 = vpack.c.b16 %v1167, %v1157
  %v1558 = vpack.c.b16 %v1168, %v1158
  %v1559 = vpack.c.b16 %v1169, %v1159
  %v1560 = vpack.c.b16 %v1170, %v1160
  %v1561 = vpack.c.b16 %v1171, %v1161
  %v1562 = vpack.c.b16 %v1172, %v1162
  %v1563 = vpack.c.b16 %v1173, %v1163
  %v1564 = vpack.c.b16 %v1174, %v1164
  %v1565 = vpack.c.b16 %v1185, %v1175
  %v1566 = vpack.c.b16 %v1186, %v1176
  %v1567 = vpack.c.b16 %v1187, %v1177
  %v1568 = vpack.c.b16 %v1188, %v1178
  %v1569 = vpack.c.b16 %v1189, %v1179
  %v1570 = vpack.c.b16 %v1190, %v1180
  %v1571 = vpack.c.b16 %v1191, %v1181
  %v1572 = vpack.c.b16 %v1192, %v1182
  %v1573 = vpack.c.b16 %v1193, %v1183
  %v1574 = vpack.c.b16 %v1194, %v1184
  %v1575 = vpack.c.b16 %v1205, %v1195
  %v1576 = vpack.c.b16 %v1206, %v1196
  %v1577 = vpack.c.b16 %v1207, %v1197
  %v1578 = vpack.c.b16 %v1208, %v1198
  %v1579 = vpack.c.b16 %v1209, %v1199
  %v1580 = vpack.c.b16 %v1210, %v1200
  %v1581 = vpack.c.b16 %v1211, %v1201
  %v1582 = vpack.c.b16 %v1212, %v1202
  %v1583 = vpack.c.b16 %v1213, %v1203
  %v1584 = vpack.c.b16 %v1214, %v1204
  %v1585 = vpack.c.b16 %v1225, %v1215
  %v1586 = vpack.c.b16 %v1226, %v1216
  %v1587 = vpack.c.b16 %v1227, %v1217
  %v1588 = vpack.c.b16 %v1228, %v1218
  %v1589 = vpack.c.b16 %v1229, %v1219
  %v1590 = vpack.c.b16 %v1230, %v1220
  %v1591 = vpack.c.b16 %v1231, %v1221
  %v1592 = vpack.c.b16 %v1232, %v1222
  %v1593 = vpack.c.b16 %v1233, %v1223
  %v1594 = vpack.c.b16 %v1234, %v1224
  %v1595 = vpack.c.b16 %v1245, %v1235
  %v1596 = vpack.c.b16 %v1246, %v1236
  %v1597 = vpack.c.b16 %v1247, %v1237
  %v1598 = vpack.c.b16 %v1248, %v1238
  %v1599 = vpack.c.b16 %v1249, %v1239
  %v1600 = vpack.c.b16 %v1250, %v1240
  %v1601 = vpack.c.b16 %v1251, %v1241
  %v1602 = vpack.c.b16 %v1252, %v1242
  %v1603 = vpack.c.b16 %v1253, %v1243
  %v1604 = vpack.c.b16 %v1254, %v1244
  %v1605 = vpack.c.b16 %v1265, %v1255
  %v1606 = vpack.c.b16 %v1266, %v1256
  %v1607 = vpack.c.b16 %v1267, %v1257
  %v1608 = vpack.c.b16 %v1268, %v1258
  %v1609 = vpack.c.b16 %v1269, %v1259
  %v1610 = vpack.c.b16 %v1270, %v1260
  %v1611 = vpack.c.b16 %v1271, %v1261
  %v1612 = vpack.c.b16 %v1272, %v1262
  %v1613 = vpack.c.b16 %v1273, %v1263
  %v1614 = vpack.c.b16 %v1274, %v1264
  %v1615 = vpack.c.b16 %v1285, %v1275
  %v1616 = vpack.c.b16 %v1286, %v1276
  %v1617 = vpack.c.b16 %v1287, %v1277
  %v1618 = vpack.c.b16 %v1288, %v1278
  %v1619 = vpack.c.b16 %v1289, %v1279
  %v1620 = vpack.c.b16 %v1290, %v1280
  %v1621 = vpack.c.b16 %v1291, %v1281
  %v1622 = vpack.c.b16 %v1292, %v1282
  %v1623 = vpack.c.b16 %v1293, %v1283
  %v1624 = vpack.c.b16 %v1294, %v1284
  %v1625 = vpack.c.b16 %v1305, %v1295
  %v1626 = vpack.c.b16 %v1306, %v1296
  %v1627 = vpack.c.b16 %v1307, %v1297
  %v1628 = vpack.c.b16 %v1308, %v1298
  %v1629 = vpack.c.b16 %v1309, %v1299
  %v1630 = vpack.c.b16 %v1310, %v1300
  %v1631 = vpack.c.b16 %v1311, %v1301
  %v1632 = vpack.c.b16 %v1312, %v1302
  %v1633 = vpack.c.b16 %v1313, %v1303
  %v1634 = vpack.c.b16 %v1314, %v1304
  %1955 = vmatpush.bf16.msra.mxu0 %v1385
  %1956 = vmatpush.bf16.msra.mxu0 %v1375
  %1957 = vmatpush.bf16.msra.mxu0 %v1365
  %1958 = vmatpush.bf16.msra.mxu0 %v1355
  %1959 = vmatpush.bf16.msra.mxu0 %v1345
  %1960 = vmatpush.bf16.msra.mxu0 %v1335
  %1961 = vmatpush.bf16.msra.mxu0 %v1325
  %1962 = vmatpush.bf16.msra.mxu0 %v1315
  %1963 = vmatmul.bf16.gmra.mxu0 %v347
  %v1964 = vpop.f32.mrf.mxu0
  %v1965 = vadd.f32 0.0, %v1964
  %v1966 = vpop.f32.mrf.mxu0
  %1967 = vdwg.mxu0
  %1968 = vmatpush.bf16.msra.mxu0 %v1465
  %1969 = vmatpush.bf16.msra.mxu0 %v1455
  %1970 = vmatpush.bf16.msra.mxu0 %v1445
  %1971 = vmatpush.bf16.msra.mxu0 %v1435
  %1972 = vmatpush.bf16.msra.mxu0 %v1425
  %1973 = vmatpush.bf16.msra.mxu0 %v1415
  %1974 = vmatpush.bf16.msra.mxu0 %v1405
  %1975 = vmatpush.bf16.msra.mxu0 %v1395
  %1976 = vmatmul.bf16.gmra.mxu0 %v348
  %v1977 = vpop.f32.mrf.mxu0
  %v1978 = vadd.f32 %v1965, %v1977
  %v1979 = vpop.f32.mrf.mxu0
  %1980 = vdwg.mxu0
  %1981 = vmatpush.bf16.msra.mxu0 %v1545
  %1982 = vmatpush.bf16.msra.mxu0 %v1535
  %1983 = vmatpush.bf16.msra.mxu0 %v1525
  %1984 = vmatpush.bf16.msra.mxu0 %v1515
  %1985 = vmatpush.bf16.msra.mxu0 %v1505
  %1986 = vmatpush.bf16.msra.mxu0 %v1495
  %1987 = vmatpush.bf16.msra.mxu0 %v1485
  %1988 = vmatpush.bf16.msra.mxu0 %v1475
  %1989 = vmatmul.bf16.gmra.mxu0 %v349
  %v1990 = vpop.f32.mrf.mxu0
  %v1991 = vadd.f32 %v1978, %v1990
  %v1992 = vpop.f32.mrf.mxu0
  %1993 = vdwg.mxu0
  %1994 = vmatpush.bf16.msra.mxu0 %v1625
  %1995 = vmatpush.bf16.msra.mxu0 %v1615
  %1996 = vmatpush.bf16.msra.mxu0 %v1605
  %1997 = vmatpush.bf16.msra.mxu0 %v1595
  %1998 = vmatpush.bf16.msra.mxu0 %v1585
  %1999 = vmatpush.bf16.msra.mxu0 %v1575
  %2000 = vmatpush.bf16.msra.mxu0 %v1565
  %2001 = vmatpush.bf16.msra.mxu0 %v1555
  %2002 = vmatmul.bf16.gmra.mxu0 %v350
  %v2003 = vpop.f32.mrf.mxu0
  %v2004 = vadd.f32 %v1991, %v2003
  %v2005 = vpop.f32.mrf.mxu0
  %2006 = vdwg.mxu0
  %2007 = vmatpush.bf16.msra.mxu0 %v1386
  %2008 = vmatpush.bf16.msra.mxu0 %v1376
  %2009 = vmatpush.bf16.msra.mxu0 %v1366
  %2010 = vmatpush.bf16.msra.mxu0 %v1356
  %2011 = vmatpush.bf16.msra.mxu0 %v1346
  %2012 = vmatpush.bf16.msra.mxu0 %v1336
  %2013 = vmatpush.bf16.msra.mxu0 %v1326
  %2014 = vmatpush.bf16.msra.mxu0 %v1316
  %2015 = vmatmul.bf16.gmra.mxu0 %v347
  %v2016 = vpop.f32.mrf.mxu0
  %v2017 = vadd.f32 0.0, %v2016
  %v2018 = vpop.f32.mrf.mxu0
  %2019 = vdwg.mxu0
  %2020 = vmatpush.bf16.msra.mxu0 %v1466
  %2021 = vmatpush.bf16.msra.mxu0 %v1456
  %2022 = vmatpush.bf16.msra.mxu0 %v1446
  %2023 = vmatpush.bf16.msra.mxu0 %v1436
  %2024 = vmatpush.bf16.msra.mxu0 %v1426
  %2025 = vmatpush.bf16.msra.mxu0 %v1416
  %2026 = vmatpush.bf16.msra.mxu0 %v1406
  %2027 = vmatpush.bf16.msra.mxu0 %v1396
  %2028 = vmatmul.bf16.gmra.mxu0 %v348
  %v2029 = vpop.f32.mrf.mxu0
  %v2030 = vadd.f32 %v2017, %v2029
  %v2031 = vpop.f32.mrf.mxu0
  %2032 = vdwg.mxu0
  %2033 = vmatpush.bf16.msra.mxu0 %v1546
  %2034 = vmatpush.bf16.msra.mxu0 %v1536
  %2035 = vmatpush.bf16.msra.mxu0 %v1526
  %2036 = vmatpush.bf16.msra.mxu0 %v1516
  %2037 = vmatpush.bf16.msra.mxu0 %v1506
  %2038 = vmatpush.bf16.msra.mxu0 %v1496
  %2039 = vmatpush.bf16.msra.mxu0 %v1486
  %2040 = vmatpush.bf16.msra.mxu0 %v1476
  %2041 = vmatmul.bf16.gmra.mxu0 %v349
  %v2042 = vpop.f32.mrf.mxu0
  %v2043 = vadd.f32 %v2030, %v2042
  %v2044 = vpop.f32.mrf.mxu0
  %2045 = vdwg.mxu0
  %2046 = vmatpush.bf16.msra.mxu0 %v1626
  %2047 = vmatpush.bf16.msra.mxu0 %v1616
  %2048 = vmatpush.bf16.msra.mxu0 %v1606
  %2049 = vmatpush.bf16.msra.mxu0 %v1596
  %2050 = vmatpush.bf16.msra.mxu0 %v1586
  %2051 = vmatpush.bf16.msra.mxu0 %v1576
  %2052 = vmatpush.bf16.msra.mxu0 %v1566
  %2053 = vmatpush.bf16.msra.mxu0 %v1556
  %2054 = vmatmul.bf16.gmra.mxu0 %v350
  %v2055 = vpop.f32.mrf.mxu0
  %v2056 = vadd.f32 %v2043, %v2055
  %v2057 = vpop.f32.mrf.mxu0
  %2058 = vdwg.mxu0
  %2059 = vmatpush.bf16.msra.mxu0 %v1387
  %2060 = vmatpush.bf16.msra.mxu0 %v1377
  %2061 = vmatpush.bf16.msra.mxu0 %v1367
  %2062 = vmatpush.bf16.msra.mxu0 %v1357
  %2063 = vmatpush.bf16.msra.mxu0 %v1347
  %2064 = vmatpush.bf16.msra.mxu0 %v1337
  %2065 = vmatpush.bf16.msra.mxu0 %v1327
  %2066 = vmatpush.bf16.msra.mxu0 %v1317
  %2067 = vmatmul.bf16.gmra.mxu0 %v347
  %v2068 = vpop.f32.mrf.mxu0
  %v2069 = vadd.f32 0.0, %v2068
  %v2070 = vpop.f32.mrf.mxu0
  %2071 = vdwg.mxu0
  %2072 = vmatpush.bf16.msra.mxu0 %v1467
  %2073 = vmatpush.bf16.msra.mxu0 %v1457
  %2074 = vmatpush.bf16.msra.mxu0 %v1447
  %2075 = vmatpush.bf16.msra.mxu0 %v1437
  %2076 = vmatpush.bf16.msra.mxu0 %v1427
  %2077 = vmatpush.bf16.msra.mxu0 %v1417
  %2078 = vmatpush.bf16.msra.mxu0 %v1407
  %2079 = vmatpush.bf16.msra.mxu0 %v1397
  %2080 = vmatmul.bf16.gmra.mxu0 %v348
  %v2081 = vpop.f32.mrf.mxu0
  %v2082 = vadd.f32 %v2069, %v2081
  %v2083 = vpop.f32.mrf.mxu0
  %2084 = vdwg.mxu0
  %2085 = vmatpush.bf16.msra.mxu0 %v1547
  %2086 = vmatpush.bf16.msra.mxu0 %v1537
  %2087 = vmatpush.bf16.msra.mxu0 %v1527
  %2088 = vmatpush.bf16.msra.mxu0 %v1517
  %2089 = vmatpush.bf16.msra.mxu0 %v1507
  %2090 = vmatpush.bf16.msra.mxu0 %v1497
  %2091 = vmatpush.bf16.msra.mxu0 %v1487
  %2092 = vmatpush.bf16.msra.mxu0 %v1477
  %2093 = vmatmul.bf16.gmra.mxu0 %v349
  %v2094 = vpop.f32.mrf.mxu0
  %v2095 = vadd.f32 %v2082, %v2094
  %v2096 = vpop.f32.mrf.mxu0
  %2097 = vdwg.mxu0
  %2098 = vmatpush.bf16.msra.mxu0 %v1627
  %2099 = vmatpush.bf16.msra.mxu0 %v1617
  %2100 = vmatpush.bf16.msra.mxu0 %v1607
  %2101 = vmatpush.bf16.msra.mxu0 %v1597
  %2102 = vmatpush.bf16.msra.mxu0 %v1587
  %2103 = vmatpush.bf16.msra.mxu0 %v1577
  %2104 = vmatpush.bf16.msra.mxu0 %v1567
  %2105 = vmatpush.bf16.msra.mxu0 %v1557
  %2106 = vmatmul.bf16.gmra.mxu0 %v350
  %v2107 = vpop.f32.mrf.mxu0
  %v2108 = vadd.f32 %v2095, %v2107
  %v2109 = vpop.f32.mrf.mxu0
  %2110 = vdwg.mxu0
  %2111 = vmatpush.bf16.msra.mxu0 %v1388
  %2112 = vmatpush.bf16.msra.mxu0 %v1378
  %2113 = vmatpush.bf16.msra.mxu0 %v1368
  %2114 = vmatpush.bf16.msra.mxu0 %v1358
  %2115 = vmatpush.bf16.msra.mxu0 %v1348
  %2116 = vmatpush.bf16.msra.mxu0 %v1338
  %2117 = vmatpush.bf16.msra.mxu0 %v1328
  %2118 = vmatpush.bf16.msra.mxu0 %v1318
  %2119 = vmatmul.bf16.gmra.mxu0 %v347
  %v2120 = vpop.f32.mrf.mxu0
  %v2121 = vadd.f32 0.0, %v2120
  %v2122 = vpop.f32.mrf.mxu0
  %2123 = vdwg.mxu0
  %2124 = vmatpush.bf16.msra.mxu0 %v1468
  %2125 = vmatpush.bf16.msra.mxu0 %v1458
  %2126 = vmatpush.bf16.msra.mxu0 %v1448
  %2127 = vmatpush.bf16.msra.mxu0 %v1438
  %2128 = vmatpush.bf16.msra.mxu0 %v1428
  %2129 = vmatpush.bf16.msra.mxu0 %v1418
  %2130 = vmatpush.bf16.msra.mxu0 %v1408
  %2131 = vmatpush.bf16.msra.mxu0 %v1398
  %2132 = vmatmul.bf16.gmra.mxu0 %v348
  %v2133 = vpop.f32.mrf.mxu0
  %v2134 = vadd.f32 %v2121, %v2133
  %v2135 = vpop.f32.mrf.mxu0
  %2136 = vdwg.mxu0
  %2137 = vmatpush.bf16.msra.mxu0 %v1548
  %2138 = vmatpush.bf16.msra.mxu0 %v1538
  %2139 = vmatpush.bf16.msra.mxu0 %v1528
  %2140 = vmatpush.bf16.msra.mxu0 %v1518
  %2141 = vmatpush.bf16.msra.mxu0 %v1508
  %2142 = vmatpush.bf16.msra.mxu0 %v1498
  %2143 = vmatpush.bf16.msra.mxu0 %v1488
  %2144 = vmatpush.bf16.msra.mxu0 %v1478
  %2145 = vmatmul.bf16.gmra.mxu0 %v349
  %v2146 = vpop.f32.mrf.mxu0
  %v2147 = vadd.f32 %v2134, %v2146
  %v2148 = vpop.f32.mrf.mxu0
  %2149 = vdwg.mxu0
  %2150 = vmatpush.bf16.msra.mxu0 %v1628
  %2151 = vmatpush.bf16.msra.mxu0 %v1618
  %2152 = vmatpush.bf16.msra.mxu0 %v1608
  %2153 = vmatpush.bf16.msra.mxu0 %v1598
  %2154 = vmatpush.bf16.msra.mxu0 %v1588
  %2155 = vmatpush.bf16.msra.mxu0 %v1578
  %2156 = vmatpush.bf16.msra.mxu0 %v1568
  %2157 = vmatpush.bf16.msra.mxu0 %v1558
  %2158 = vmatmul.bf16.gmra.mxu0 %v350
  %v2159 = vpop.f32.mrf.mxu0
  %v2160 = vadd.f32 %v2147, %v2159
  %v2161 = vpop.f32.mrf.mxu0
  %2162 = vdwg.mxu0
  %2163 = vmatpush.bf16.msra.mxu0 %v1389
  %2164 = vmatpush.bf16.msra.mxu0 %v1379
  %2165 = vmatpush.bf16.msra.mxu0 %v1369
  %2166 = vmatpush.bf16.msra.mxu0 %v1359
  %2167 = vmatpush.bf16.msra.mxu0 %v1349
  %2168 = vmatpush.bf16.msra.mxu0 %v1339
  %2169 = vmatpush.bf16.msra.mxu0 %v1329
  %2170 = vmatpush.bf16.msra.mxu0 %v1319
  %2171 = vmatmul.bf16.gmra.mxu0 %v347
  %v2172 = vpop.f32.mrf.mxu0
  %v2173 = vadd.f32 0.0, %v2172
  %v2174 = vpop.f32.mrf.mxu0
  %2175 = vdwg.mxu0
  %2176 = vmatpush.bf16.msra.mxu0 %v1469
  %2177 = vmatpush.bf16.msra.mxu0 %v1459
  %2178 = vmatpush.bf16.msra.mxu0 %v1449
  %2179 = vmatpush.bf16.msra.mxu0 %v1439
  %2180 = vmatpush.bf16.msra.mxu0 %v1429
  %2181 = vmatpush.bf16.msra.mxu0 %v1419
  %2182 = vmatpush.bf16.msra.mxu0 %v1409
  %2183 = vmatpush.bf16.msra.mxu0 %v1399
  %2184 = vmatmul.bf16.gmra.mxu0 %v348
  %v2185 = vpop.f32.mrf.mxu0
  %v2186 = vadd.f32 %v2173, %v2185
  %v2187 = vpop.f32.mrf.mxu0
  %2188 = vdwg.mxu0
  %2189 = vmatpush.bf16.msra.mxu0 %v1549
  %2190 = vmatpush.bf16.msra.mxu0 %v1539
  %2191 = vmatpush.bf16.msra.mxu0 %v1529
  %2192 = vmatpush.bf16.msra.mxu0 %v1519
  %2193 = vmatpush.bf16.msra.mxu0 %v1509
  %2194 = vmatpush.bf16.msra.mxu0 %v1499
  %2195 = vmatpush.bf16.msra.mxu0 %v1489
  %2196 = vmatpush.bf16.msra.mxu0 %v1479
  %2197 = vmatmul.bf16.gmra.mxu0 %v349
  %v2198 = vpop.f32.mrf.mxu0
  %v2199 = vadd.f32 %v2186, %v2198
  %v2200 = vpop.f32.mrf.mxu0
  %2201 = vdwg.mxu0
  %2202 = vmatpush.bf16.msra.mxu0 %v1629
  %2203 = vmatpush.bf16.msra.mxu0 %v1619
  %2204 = vmatpush.bf16.msra.mxu0 %v1609
  %2205 = vmatpush.bf16.msra.mxu0 %v1599
  %2206 = vmatpush.bf16.msra.mxu0 %v1589
  %2207 = vmatpush.bf16.msra.mxu0 %v1579
  %2208 = vmatpush.bf16.msra.mxu0 %v1569
  %2209 = vmatpush.bf16.msra.mxu0 %v1559
  %2210 = vmatmul.bf16.gmra.mxu0 %v350
  %v2211 = vpop.f32.mrf.mxu0
  %v2212 = vadd.f32 %v2199, %v2211
  %v2213 = vpop.f32.mrf.mxu0
  %2214 = vdwg.mxu0
  %2215 = vmatpush.bf16.msra.mxu0 %v1390
  %2216 = vmatpush.bf16.msra.mxu0 %v1380
  %2217 = vmatpush.bf16.msra.mxu0 %v1370
  %2218 = vmatpush.bf16.msra.mxu0 %v1360
  %2219 = vmatpush.bf16.msra.mxu0 %v1350
  %2220 = vmatpush.bf16.msra.mxu0 %v1340
  %2221 = vmatpush.bf16.msra.mxu0 %v1330
  %2222 = vmatpush.bf16.msra.mxu0 %v1320
  %2223 = vmatmul.bf16.gmra.mxu0 %v347
  %v2224 = vpop.f32.mrf.mxu0
  %v2225 = vadd.f32 0.0, %v2224
  %v2226 = vpop.f32.mrf.mxu0
  %2227 = vdwg.mxu0
  %2228 = vmatpush.bf16.msra.mxu0 %v1470
  %2229 = vmatpush.bf16.msra.mxu0 %v1460
  %2230 = vmatpush.bf16.msra.mxu0 %v1450
  %2231 = vmatpush.bf16.msra.mxu0 %v1440
  %2232 = vmatpush.bf16.msra.mxu0 %v1430
  %2233 = vmatpush.bf16.msra.mxu0 %v1420
  %2234 = vmatpush.bf16.msra.mxu0 %v1410
  %2235 = vmatpush.bf16.msra.mxu0 %v1400
  %2236 = vmatmul.bf16.gmra.mxu0 %v348
  %v2237 = vpop.f32.mrf.mxu0
  %v2238 = vadd.f32 %v2225, %v2237
  %v2239 = vpop.f32.mrf.mxu0
  %2240 = vdwg.mxu0
  %2241 = vmatpush.bf16.msra.mxu0 %v1550
  %2242 = vmatpush.bf16.msra.mxu0 %v1540
  %2243 = vmatpush.bf16.msra.mxu0 %v1530
  %2244 = vmatpush.bf16.msra.mxu0 %v1520
  %2245 = vmatpush.bf16.msra.mxu0 %v1510
  %2246 = vmatpush.bf16.msra.mxu0 %v1500
  %2247 = vmatpush.bf16.msra.mxu0 %v1490
  %2248 = vmatpush.bf16.msra.mxu0 %v1480
  %2249 = vmatmul.bf16.gmra.mxu0 %v349
  %v2250 = vpop.f32.mrf.mxu0
  %v2251 = vadd.f32 %v2238, %v2250
  %v2252 = vpop.f32.mrf.mxu0
  %2253 = vdwg.mxu0
  %2254 = vmatpush.bf16.msra.mxu0 %v1630
  %2255 = vmatpush.bf16.msra.mxu0 %v1620
  %2256 = vmatpush.bf16.msra.mxu0 %v1610
  %2257 = vmatpush.bf16.msra.mxu0 %v1600
  %2258 = vmatpush.bf16.msra.mxu0 %v1590
  %2259 = vmatpush.bf16.msra.mxu0 %v1580
  %2260 = vmatpush.bf16.msra.mxu0 %v1570
  %2261 = vmatpush.bf16.msra.mxu0 %v1560
  %2262 = vmatmul.bf16.gmra.mxu0 %v350
  %v2263 = vpop.f32.mrf.mxu0
  %v2264 = vadd.f32 %v2251, %v2263
  %v2265 = vpop.f32.mrf.mxu0
  %2266 = vdwg.mxu0
  %2267 = vmatpush.bf16.msra.mxu0 %v1391
  %2268 = vmatpush.bf16.msra.mxu0 %v1381
  %2269 = vmatpush.bf16.msra.mxu0 %v1371
  %2270 = vmatpush.bf16.msra.mxu0 %v1361
  %2271 = vmatpush.bf16.msra.mxu0 %v1351
  %2272 = vmatpush.bf16.msra.mxu0 %v1341
  %2273 = vmatpush.bf16.msra.mxu0 %v1331
  %2274 = vmatpush.bf16.msra.mxu0 %v1321
  %2275 = vmatmul.bf16.gmra.mxu0 %v347
  %v2276 = vpop.f32.mrf.mxu0
  %v2277 = vadd.f32 0.0, %v2276
  %v2278 = vpop.f32.mrf.mxu0
  %2279 = vdwg.mxu0
  %2280 = vmatpush.bf16.msra.mxu0 %v1471
  %2281 = vmatpush.bf16.msra.mxu0 %v1461
  %2282 = vmatpush.bf16.msra.mxu0 %v1451
  %2283 = vmatpush.bf16.msra.mxu0 %v1441
  %2284 = vmatpush.bf16.msra.mxu0 %v1431
  %2285 = vmatpush.bf16.msra.mxu0 %v1421
  %2286 = vmatpush.bf16.msra.mxu0 %v1411
  %2287 = vmatpush.bf16.msra.mxu0 %v1401
  %2288 = vmatmul.bf16.gmra.mxu0 %v348
  %v2289 = vpop.f32.mrf.mxu0
  %v2290 = vadd.f32 %v2277, %v2289
  %v2291 = vpop.f32.mrf.mxu0
  %2292 = vdwg.mxu0
  %2293 = vmatpush.bf16.msra.mxu0 %v1551
  %2294 = vmatpush.bf16.msra.mxu0 %v1541
  %2295 = vmatpush.bf16.msra.mxu0 %v1531
  %2296 = vmatpush.bf16.msra.mxu0 %v1521
  %2297 = vmatpush.bf16.msra.mxu0 %v1511
  %2298 = vmatpush.bf16.msra.mxu0 %v1501
  %2299 = vmatpush.bf16.msra.mxu0 %v1491
  %2300 = vmatpush.bf16.msra.mxu0 %v1481
  %2301 = vmatmul.bf16.gmra.mxu0 %v349
  %v2302 = vpop.f32.mrf.mxu0
  %v2303 = vadd.f32 %v2290, %v2302
  %v2304 = vpop.f32.mrf.mxu0
  %2305 = vdwg.mxu0
  %2306 = vmatpush.bf16.msra.mxu0 %v1631
  %2307 = vmatpush.bf16.msra.mxu0 %v1621
  %2308 = vmatpush.bf16.msra.mxu0 %v1611
  %2309 = vmatpush.bf16.msra.mxu0 %v1601
  %2310 = vmatpush.bf16.msra.mxu0 %v1591
  %2311 = vmatpush.bf16.msra.mxu0 %v1581
  %2312 = vmatpush.bf16.msra.mxu0 %v1571
  %2313 = vmatpush.bf16.msra.mxu0 %v1561
  %2314 = vmatmul.bf16.gmra.mxu0 %v350
  %v2315 = vpop.f32.mrf.mxu0
  %v2316 = vadd.f32 %v2303, %v2315
  %v2317 = vpop.f32.mrf.mxu0
  %2318 = vdwg.mxu0
  %2319 = vmatpush.bf16.msra.mxu0 %v1392
  %2320 = vmatpush.bf16.msra.mxu0 %v1382
  %2321 = vmatpush.bf16.msra.mxu0 %v1372
  %2322 = vmatpush.bf16.msra.mxu0 %v1362
  %2323 = vmatpush.bf16.msra.mxu0 %v1352
  %2324 = vmatpush.bf16.msra.mxu0 %v1342
  %2325 = vmatpush.bf16.msra.mxu0 %v1332
  %2326 = vmatpush.bf16.msra.mxu0 %v1322
  %2327 = vmatmul.bf16.gmra.mxu0 %v347
  %v2328 = vpop.f32.mrf.mxu0
  %v2329 = vadd.f32 0.0, %v2328
  %v2330 = vpop.f32.mrf.mxu0
  %2331 = vdwg.mxu0
  %2332 = vmatpush.bf16.msra.mxu0 %v1472
  %2333 = vmatpush.bf16.msra.mxu0 %v1462
  %2334 = vmatpush.bf16.msra.mxu0 %v1452
  %2335 = vmatpush.bf16.msra.mxu0 %v1442
  %2336 = vmatpush.bf16.msra.mxu0 %v1432
  %2337 = vmatpush.bf16.msra.mxu0 %v1422
  %2338 = vmatpush.bf16.msra.mxu0 %v1412
  %2339 = vmatpush.bf16.msra.mxu0 %v1402
  %2340 = vmatmul.bf16.gmra.mxu0 %v348
  %v2341 = vpop.f32.mrf.mxu0
  %v2342 = vadd.f32 %v2329, %v2341
  %v2343 = vpop.f32.mrf.mxu0
  %2344 = vdwg.mxu0
  %2345 = vmatpush.bf16.msra.mxu0 %v1552
  %2346 = vmatpush.bf16.msra.mxu0 %v1542
  %2347 = vmatpush.bf16.msra.mxu0 %v1532
  %2348 = vmatpush.bf16.msra.mxu0 %v1522
  %2349 = vmatpush.bf16.msra.mxu0 %v1512
  %2350 = vmatpush.bf16.msra.mxu0 %v1502
  %2351 = vmatpush.bf16.msra.mxu0 %v1492
  %2352 = vmatpush.bf16.msra.mxu0 %v1482
  %2353 = vmatmul.bf16.gmra.mxu0 %v349
  %v2354 = vpop.f32.mrf.mxu0
  %v2355 = vadd.f32 %v2342, %v2354
  %v2356 = vpop.f32.mrf.mxu0
  %2357 = vdwg.mxu0
  %2358 = vmatpush.bf16.msra.mxu0 %v1632
  %2359 = vmatpush.bf16.msra.mxu0 %v1622
  %2360 = vmatpush.bf16.msra.mxu0 %v1612
  %2361 = vmatpush.bf16.msra.mxu0 %v1602
  %2362 = vmatpush.bf16.msra.mxu0 %v1592
  %2363 = vmatpush.bf16.msra.mxu0 %v1582
  %2364 = vmatpush.bf16.msra.mxu0 %v1572
  %2365 = vmatpush.bf16.msra.mxu0 %v1562
  %2366 = vmatmul.bf16.gmra.mxu0 %v350
  %v2367 = vpop.f32.mrf.mxu0
  %v2368 = vadd.f32 %v2355, %v2367
  %v2369 = vpop.f32.mrf.mxu0
  %2370 = vdwg.mxu0
  %2371 = vmatpush.bf16.msra.mxu0 %v1393
  %2372 = vmatpush.bf16.msra.mxu0 %v1383
  %2373 = vmatpush.bf16.msra.mxu0 %v1373
  %2374 = vmatpush.bf16.msra.mxu0 %v1363
  %2375 = vmatpush.bf16.msra.mxu0 %v1353
  %2376 = vmatpush.bf16.msra.mxu0 %v1343
  %2377 = vmatpush.bf16.msra.mxu0 %v1333
  %2378 = vmatpush.bf16.msra.mxu0 %v1323
  %2379 = vmatmul.bf16.gmra.mxu0 %v347
  %v2380 = vpop.f32.mrf.mxu0
  %v2381 = vadd.f32 0.0, %v2380
  %v2382 = vpop.f32.mrf.mxu0
  %2383 = vdwg.mxu0
  %2384 = vmatpush.bf16.msra.mxu0 %v1473
  %2385 = vmatpush.bf16.msra.mxu0 %v1463
  %2386 = vmatpush.bf16.msra.mxu0 %v1453
  %2387 = vmatpush.bf16.msra.mxu0 %v1443
  %2388 = vmatpush.bf16.msra.mxu0 %v1433
  %2389 = vmatpush.bf16.msra.mxu0 %v1423
  %2390 = vmatpush.bf16.msra.mxu0 %v1413
  %2391 = vmatpush.bf16.msra.mxu0 %v1403
  %2392 = vmatmul.bf16.gmra.mxu0 %v348
  %v2393 = vpop.f32.mrf.mxu0
  %v2394 = vadd.f32 %v2381, %v2393
  %v2395 = vpop.f32.mrf.mxu0
  %2396 = vdwg.mxu0
  %2397 = vmatpush.bf16.msra.mxu0 %v1553
  %2398 = vmatpush.bf16.msra.mxu0 %v1543
  %2399 = vmatpush.bf16.msra.mxu0 %v1533
  %2400 = vmatpush.bf16.msra.mxu0 %v1523
  %2401 = vmatpush.bf16.msra.mxu0 %v1513
  %2402 = vmatpush.bf16.msra.mxu0 %v1503
  %2403 = vmatpush.bf16.msra.mxu0 %v1493
  %2404 = vmatpush.bf16.msra.mxu0 %v1483
  %2405 = vmatmul.bf16.gmra.mxu0 %v349
  %v2406 = vpop.f32.mrf.mxu0
  %v2407 = vadd.f32 %v2394, %v2406
  %v2408 = vpop.f32.mrf.mxu0
  %2409 = vdwg.mxu0
  %2410 = vmatpush.bf16.msra.mxu0 %v1633
  %2411 = vmatpush.bf16.msra.mxu0 %v1623
  %2412 = vmatpush.bf16.msra.mxu0 %v1613
  %2413 = vmatpush.bf16.msra.mxu0 %v1603
  %2414 = vmatpush.bf16.msra.mxu0 %v1593
  %2415 = vmatpush.bf16.msra.mxu0 %v1583
  %2416 = vmatpush.bf16.msra.mxu0 %v1573
  %2417 = vmatpush.bf16.msra.mxu0 %v1563
  %2418 = vmatmul.bf16.gmra.mxu0 %v350
  %v2419 = vpop.f32.mrf.mxu0
  %v2420 = vadd.f32 %v2407, %v2419
  %v2421 = vpop.f32.mrf.mxu0
  %2422 = vdwg.mxu0
  %2423 = vmatpush.bf16.msra.mxu0 %v1394
  %2424 = vmatpush.bf16.msra.mxu0 %v1384
  %2425 = vmatpush.bf16.msra.mxu0 %v1374
  %2426 = vmatpush.bf16.msra.mxu0 %v1364
  %2427 = vmatpush.bf16.msra.mxu0 %v1354
  %2428 = vmatpush.bf16.msra.mxu0 %v1344
  %2429 = vmatpush.bf16.msra.mxu0 %v1334
  %2430 = vmatpush.bf16.msra.mxu0 %v1324
  %2431 = vmatmul.bf16.gmra.mxu0 %v347
  %v2432 = vpop.f32.mrf.mxu0
  %v2433 = vadd.f32 0.0, %v2432
  %v2434 = vpop.f32.mrf.mxu0
  %2435 = vdwg.mxu0
  %2436 = vmatpush.bf16.msra.mxu0 %v1474
  %2437 = vmatpush.bf16.msra.mxu0 %v1464
  %2438 = vmatpush.bf16.msra.mxu0 %v1454
  %2439 = vmatpush.bf16.msra.mxu0 %v1444
  %2440 = vmatpush.bf16.msra.mxu0 %v1434
  %2441 = vmatpush.bf16.msra.mxu0 %v1424
  %2442 = vmatpush.bf16.msra.mxu0 %v1414
  %2443 = vmatpush.bf16.msra.mxu0 %v1404
  %2444 = vmatmul.bf16.gmra.mxu0 %v348
  %v2445 = vpop.f32.mrf.mxu0
  %v2446 = vadd.f32 %v2433, %v2445
  %v2447 = vpop.f32.mrf.mxu0
  %2448 = vdwg.mxu0
  %2449 = vmatpush.bf16.msra.mxu0 %v1554
  %2450 = vmatpush.bf16.msra.mxu0 %v1544
  %2451 = vmatpush.bf16.msra.mxu0 %v1534
  %2452 = vmatpush.bf16.msra.mxu0 %v1524
  %2453 = vmatpush.bf16.msra.mxu0 %v1514
  %2454 = vmatpush.bf16.msra.mxu0 %v1504
  %2455 = vmatpush.bf16.msra.mxu0 %v1494
  %2456 = vmatpush.bf16.msra.mxu0 %v1484
  %2457 = vmatmul.bf16.gmra.mxu0 %v349
  %v2458 = vpop.f32.mrf.mxu0
  %v2459 = vadd.f32 %v2446, %v2458
  %v2460 = vpop.f32.mrf.mxu0
  %2461 = vdwg.mxu0
  %2462 = vmatpush.bf16.msra.mxu0 %v1634
  %2463 = vmatpush.bf16.msra.mxu0 %v1624
  %2464 = vmatpush.bf16.msra.mxu0 %v1614
  %2465 = vmatpush.bf16.msra.mxu0 %v1604
  %2466 = vmatpush.bf16.msra.mxu0 %v1594
  %2467 = vmatpush.bf16.msra.mxu0 %v1584
  %2468 = vmatpush.bf16.msra.mxu0 %v1574
  %2469 = vmatpush.bf16.msra.mxu0 %v1564
  %2470 = vmatmul.bf16.gmra.mxu0 %v350
  %v2471 = vpop.f32.mrf.mxu0
  %v2472 = vadd.f32 %v2459, %v2471
  %v2473 = vpop.f32.mrf.mxu0
  %2474 = vdwg.mxu0
  %v2485 = vrot.slane %v2056, 6
  %v2486 = vrot.slane %v2108, 4
  %v2487 = vrot.slane %v2160, 2
  %v2488 = vrot.slane %v2264, 6
  %v2489 = vrot.slane %v2316, 4
  %v2490 = vrot.slane %v2368, 2
  %v2491 = vrot.slane %v2472, 6
  %vm2492 = vcmask 1041408
  %v2493 = vsel %vm2492, %v2004, %v2485
  %vm2494 = vcmask 1045508
  %v2495 = vsel %vm2494, %v2486, %v2487
  %vm2496 = vcmask 1043456
  %v2497 = vsel %vm2496, %v2493, %v2495
  %v2498 = vsel %vm2492, %v2212, %v2488
  %v2499 = vsel %vm2494, %v2489, %v2490
  %v2500 = vsel %vm2496, %v2498, %v2499
  %v2501 = vsel %vm2492, %v2420, %v2491
  %v2505 = vadd.f32 %v21, %v2497
  %v2506 = vadd.f32 %v22, %v2500
  %v2507 = vadd.f32 %v23, %v2501
  %2508 = vst [vmem:[#allocation2] sm:$0xff] %v2505
  %2509 = vst [vmem:[#allocation2 + $0x8] sm:$0xff] %v2506
  %2510 = vst [vmem:[#allocation2 + $0x10] sm:$0xf] %v2507
  // Predicated region
  $region18: #{vae_forward.6} parent=0 // pred_check
    %p2511 = pneg %p14
  $region19: #{vae_forward.6} parent=0 // pred_check_branch
    %2513 = sbr.rel (%p2511) target = $region21
  $region20: #{vae_forward.6} parent=0 // pred_region
    %v2514 = vld [vmem:[#allocation2] sm:$0xff]
    %v2515 = vld [vmem:[#allocation2 + $0x8] sm:$0xff]
    %v2516 = vld [vmem:[#allocation2 + $0x10] sm:$0xf]
    %v2517 = vld [vmem:[%s2] sm:$0xff]
    %v2518 = vld [vmem:[%s2 + $0x8] sm:$0x3]
    %v2521 = vperm.slane %v2517, 0
    %v2522 = vperm.slane %v2517, 1
    %v2523 = vperm.slane %v2517, 2
    %v2524 = vperm.slane %v2517, 3
    %v2525 = vperm.slane %v2517, 4
    %v2526 = vperm.slane %v2517, 5
    %v2527 = vperm.slane %v2517, 6
    %v2528 = vperm.slane %v2517, 7
    %v2529 = vperm.slane %v2518, 0
    %v2530 = vperm.slane %v2518, 1
    %v2531 = vrot.slane %v2522, 6
    %v2532 = vrot.slane %v2523, 4
    %v2533 = vrot.slane %v2524, 2
    %v2534 = vrot.slane %v2526, 6
    %v2535 = vrot.slane %v2527, 4
    %v2536 = vrot.slane %v2528, 2
    %v2537 = vrot.slane %v2530, 6
    %v2538 = vsel %vm2492, %v2521, %v2531
    %v2539 = vsel %vm2494, %v2532, %v2533
    %v2540 = vsel %vm2496, %v2538, %v2539
    %v2541 = vsel %vm2492, %v2525, %v2534
    %v2542 = vsel %vm2494, %v2535, %v2536
    %v2543 = vsel %vm2496, %v2541, %v2542
    %v2544 = vsel %vm2492, %v2529, %v2537
    %v2548 = vadd.f32 %v2514, %v2540
    %v2549 = vadd.f32 %v2515, %v2543
    %v2550 = vadd.f32 %v2516, %v2544
    %v2551 = vmax.f32 %v2548, 0.0
    %v2552 = vmax.f32 %v2549, 0.0
    %v2553 = vmax.f32 %v2550, 0.0
    %2557 = vst [vmem:[#allocation1] ss:$4 sm:$0xff] %v2551
    %s2558 = scalar_lea.vmem [#allocation1], 32
    %2559 = vst [vmem:[%s2558] ss:$4 sm:$0xff] %v2552
    %v2560 = vld.sshfl [vmem:[#allocation1] sm:$0xff pattern:$0x73625140]
    %v2561 = vld.sshfl [vmem:[#allocation1 + $0x8] sm:$0xff pattern:$0x73625140]
    %v2562 = vld.sshfl [vmem:[#allocation1 + $0x10] sm:$0xff pattern:$0x73625140]
    %v2563 = vld.sshfl [vmem:[#allocation1 + $0x18] sm:$0xff pattern:$0x73625140]
    %v2564 = vld.sshfl [vmem:[#allocation1 + $0x20] sm:$0xff pattern:$0x73625140]
    %v2565 = vld.sshfl [vmem:[#allocation1 + $0x28] sm:$0xff pattern:$0x73625140]
    %v2566 = vld.sshfl [vmem:[#allocation1 + $0x30] sm:$0xff pattern:$0x73625140]
    %v2567 = vld.sshfl [vmem:[#allocation1 + $0x38] sm:$0xff pattern:$0x73625140]
    %2568 = vst [vmem:[#allocation1] ss:$4 sm:$0xff] %v2553
    %v2569 = vld.sshfl [vmem:[#allocation1] sm:$0xff pattern:$0x73625140]
    %v2570 = vld.sshfl [vmem:[#allocation1 + $0x8] sm:$0xff pattern:$0x73625140]
    %v2581 = vpack.c.bf16 %v2561, %v2560
    %v2582 = vpack.c.bf16 %v2563, %v2562
    %v2583 = vpack.c.bf16 %v2565, %v2564
    %v2584 = vpack.c.bf16 %v2567, %v2566
    %v2585 = vpack.c.bf16 %v2570, %v2569
    %v2591 = vrot.slane %v2581, 3
    %v2592 = vrot.slane %v2582, 6
    %v2593 = vrot.slane %v2582, 1
    %v2594 = vrot.slane %v2583, 4
    %v2595 = vrot.slane %v2583, 7
    %v2596 = vrot.slane %v2584, 2
    %v2597 = vrot.slane %v2584, 5
    %v2598 = vrot.slane %v2585, 3
    %vm2599 = vcmask 1040384
    %v2602 = vsel %vm2599, %v2581, %v2591
    %vm2603 = vcmask 1042434
    %v2606 = vsel %vm2603, %v2592, %v2593
    %v2607 = vsel %vm2492, %v2602, %v2606
    %vm2608 = vcmask 1044484
    %v2611 = vsel %vm2608, %v2594, %v2595
    %vm2612 = vcmask 1046534
    %v2615 = vsel %vm2612, %v2596, %v2597
    %v2616 = vsel %vm2494, %v2611, %v2615
    %v2617 = vsel %vm2496, %v2607, %v2616
    %v2620 = vsel %vm2599, %v2585, %v2598
    %2623 = vst [vmem:[%s3] sm:$0xff] %v2617
    %2624 = vst [vmem:[%s3 + $0x8] sm:$0x3] %v2620
  $region21: #{vae_forward.6} parent=0 // pred_fallthru
    _
  // Predicated region
  $region22: #{vae_forward.6} parent=0 // pred_check
    _
  $region23: #{vae_forward.6} parent=0 // pred_check_branch
    %2626 = sbr.rel (0) target = $region25
  $region24: #{vae_forward.6} parent=0 // pred_region
    _
  $region25: #{vae_forward.6} parent=0 // pred_fallthru
    _
  // Predicated region
  $region26: #{vae_forward.6} parent=0 // pred_check
    _
  $region27: #{vae_forward.6} parent=0 // pred_check_branch
    %2628 = sbr.rel (0) target = $region29
  $region28: #{vae_forward.6} parent=0 // pred_region
    _
  $region29: #{vae_forward.6} parent=0 // pred_fallthru
    _

// kernel: vae_forward.7
$region0: #{vae_forward.7}
  #allocation0 [shape = 'u32[]', space=smem, size = 0x4, offset = 0x4, fixed_abs, tag = 'smem constant byte address 0x4 - core index']
  #allocation1 [shape = 'u32[72,128]{1,0:T(1,128)}', space=vmem, size = 0x9000, scoped, tag = 'internal scratch']
  #allocation2 [shape = 'f32[2,1152]{1,0:T(2,128)}', space=vmem, size = 0x2400, scoped, tag = 'scratch operand']
  %s0 = inlined_call_operand.vmem [shape: bf16[2,1280], index: 0, kind: input, shape index: {}]
  %s1 = inlined_call_operand.hbm [shape: bf16[1280,2304], index: 1, kind: input, shape index: {}]
  %s2 = inlined_call_operand.vmem [shape: f32[1,2304], index: 2, kind: input, shape index: {}]
  %s3 = inlined_call_operand.vmem [shape: f32[2,2304], index: 3, kind: output, shape index: {}]
  %s4 = sld [smem:[#allocation0]]
  $region57: #{vae_forward.7} parent=0
    _
  %s6 = ssub.s32 1, %s4
  %s7 = scalar_select 0, %s6, %s4
  $region1: #{vae_forward.7} parent=0
    #allocation3 [shape = 'u8[5898240]{0}', space=vmem, size = 0x5a0000, scoped, tag = 'input window, operand 1']
    #allocation4 [shape = 's32[2]{0}', space=sflag, size = 0x8, scoped, tag = 'scoped memory for vae_forward.7']
    %8 = vsyncpa [#allocation4], 0
    %s9 = scalar_lea.sflag [#allocation4], 1
    %10 = vsyncpa %s9, 0
    loop: start=0, step=1, limit=4
    $region2: #{vae_forward.7} parent=1 // loop_pre_header
      _
    $region3: #{vae_forward.7} parent=1 // loop_header
      %s12 = sphi 0, %s16
      %p13 = scmp.ge.s32.totalorder %s12, 4
      %s19 = sphi 0, %s31
      %s20 = sphi 0, %s27
      %s21 = sphi 0, %s19
      %s22 = sphi 0, %s20
      %s23 = sphi 0, %s21
      %s24 = sphi 0, %s22
      %s34 = sphi 0, %s36
      %s37 = sphi 0, %s34
      %s38 = sphi 0, %s37
      %s54 = sphi 0, %s38
      %s62 = sphi 0, %s64
      %s65 = sphi 0, %s62
      %s66 = sphi 0, %s65
      %s82 = sphi 0, %s66
      %s88 = sphi 0, %s90
      %s91 = sphi 0, %s88
      %s92 = sphi 0, %s91
      %s108 = sphi 0, %s92
      %s114 = sphi 0, %s116
      %s117 = sphi 0, %s114
      %s118 = sphi 0, %s117
      %s134 = sphi 0, %s118
    $region4: #{vae_forward.7} parent=1 // loop_header_branch
      %15 = sbr.rel (%p13) target = $region8
    $region5: #{vae_forward.7} parent=1 // loop_body
      %s17 = ssub.s32 %s12, 1
      %s18 = ssub.s32 %s12, 2
      %s25 = sadd.s32 1, %s20
      %p26 = scmp.ge.s32.totalorder %s25, 1
      %s27 = scalar_select %p26, 0, %s25
      %s28 = sadd.s32 1, %s19
      %s29 = scalar_select %p26, %s28, %s19
      %p30 = scmp.ge.s32.totalorder %s29, 2
      %s31 = scalar_select %p30, 0, %s29
      %s32 = ssub.s32 %s20, %s27
      %p33 = scmp.eq.s32.totalorder %s32, 0
      %s35 = sadd.s32 %s34, 1
      %s36 = scalar_select %p33, %s34, %s35
      %p39 = pneg %p33
      %p40 = scmp.eq.s32.totalorder %s12, 1
      %p41 = por %p39, %p40
      %p42 = scmp.ne.s32.totalorder %s34, %s37
      %p43 = scmp.eq.s32.totalorder %s12, 0
      %p44 = por %p42, %p43
      %p45 = scmp.ne.s32.totalorder %s34, %s37
      %p46 = scmp.eq.s32.totalorder %s17, 1
      %p47 = por %p45, %p46
      %p48 = scmp.ne.s32.totalorder %s37, %s38
      %p49 = scmp.eq.s32.totalorder %s17, 0
      %p50 = por %p48, %p49
      %p51 = scmp.ne.s32.totalorder %s37, %s38
      %p52 = scmp.eq.s32.totalorder %s18, 1
      %p53 = por %p51, %p52
      %p55 = scmp.ne.s32.totalorder %s38, %s54
      %p56 = scmp.eq.s32.totalorder %s18, 0
      %p57 = por %p55, %p56
      %s58 = ssub.s32 %s20, %s27
      %s59 = ssub.s32 %s19, %s31
      %s60 = sor.u32 %s58, %s59
      %p61 = scmp.eq.s32.totalorder %s60, 0
      %s63 = sadd.s32 %s62, 1
      %s64 = scalar_select %p61, %s62, %s63
      %p67 = pneg %p61
      %p68 = scmp.eq.s32.totalorder %s12, 1
      %p69 = por %p67, %p68
      %p70 = scmp.ne.s32.totalorder %s62, %s65
      %p71 = scmp.eq.s32.totalorder %s12, 0
      %p72 = por %p70, %p71
      %p73 = scmp.ne.s32.totalorder %s62, %s65
      %p74 = scmp.eq.s32.totalorder %s17, 1
      %p75 = por %p73, %p74
      %p76 = scmp.ne.s32.totalorder %s65, %s66
      %p77 = scmp.eq.s32.totalorder %s17, 0
      %p78 = por %p76, %p77
      %p79 = scmp.ne.s32.totalorder %s65, %s66
      %p80 = scmp.eq.s32.totalorder %s18, 1
      %p81 = por %p79, %p80
      %p83 = scmp.ne.s32.totalorder %s66, %s82
      %p84 = scmp.eq.s32.totalorder %s18, 0
      %p85 = por %p83, %p84
      %s86 = ssub.s32 %s19, %s31
      %p87 = scmp.eq.s32.totalorder %s86, 0
      %s89 = sadd.s32 %s88, 1
      %s90 = scalar_select %p87, %s88, %s89
      %p93 = pneg %p87
      %p94 = scmp.eq.s32.totalorder %s12, 1
      %p95 = por %p93, %p94
      %p96 = scmp.ne.s32.totalorder %s88, %s91
      %p97 = scmp.eq.s32.totalorder %s12, 0
      %p98 = por %p96, %p97
      %p99 = scmp.ne.s32.totalorder %s88, %s91
      %p100 = scmp.eq.s32.totalorder %s17, 1
      %p101 = por %p99, %p100
      %p102 = scmp.ne.s32.totalorder %s91, %s92
      %p103 = scmp.eq.s32.totalorder %s17, 0
      %p104 = por %p102, %p103
      %p105 = scmp.ne.s32.totalorder %s91, %s92
      %p106 = scmp.eq.s32.totalorder %s18, 1
      %p107 = por %p105, %p106
      %p109 = scmp.ne.s32.totalorder %s92, %s108
      %p110 = scmp.eq.s32.totalorder %s18, 0
      %p111 = por %p109, %p110
      %s112 = ssub.s32 %s19, %s31
      %p113 = scmp.eq.s32.totalorder %s112, 0
      %s115 = sadd.s32 %s114, 1
      %s116 = scalar_select %p113, %s114, %s115
      %p119 = pneg %p113
      %p120 = scmp.eq.s32.totalorder %s12, 1
      %p121 = por %p119, %p120
      %p122 = scmp.ne.s32.totalorder %s114, %s117
      %p123 = scmp.eq.s32.totalorder %s12, 0
      %p124 = por %p122, %p123
      %p125 = scmp.ne.s32.totalorder %s114, %s117
      %p126 = scmp.eq.s32.totalorder %s17, 1
      %p127 = por %p125, %p126
      %p128 = scmp.ne.s32.totalorder %s117, %s118
      %p129 = scmp.eq.s32.totalorder %s17, 0
      %p130 = por %p128, %p129
      %p131 = scmp.ne.s32.totalorder %s117, %s118
      %p132 = scmp.eq.s32.totalorder %s18, 1
      %p133 = por %p131, %p132
      %p135 = scmp.ne.s32.totalorder %s118, %s134
      %p136 = scmp.eq.s32.totalorder %s18, 0
      %p137 = por %p135, %p136
      %p138 = scmp.le.s32.totalorder 1, %s12
      %p139 = scmp.lt.s32.totalorder %s12, 3
      %p140 = pnand %p138, %p139
      %p141 = pneg %p140
      // Predicated region
      $region9: #{vae_forward.7} parent=5 // pred_check
        _
      $region10: #{vae_forward.7} parent=5 // pred_check_branch
        %143 = sbr.rel (%p140) target = $region12
      $region11: #{vae_forward.7} parent=5 // pred_region
        %s144 = ssub.s32 %s12, 1
        // Predicated region
        $region13: #{vae_forward.7} parent=11 // pred_check
          %p145 = pneg %p50
        $region14: #{vae_forward.7} parent=11 // pred_check_branch
          %147 = sbr.rel (%p145) target = $region16
        $region15: #{vae_forward.7} parent=11 // pred_region
          %s148 = smul.u32 10, %s22
          %p149 = scmp.lt.s32.totalorder %s148, 9
          %s150 = scalar_select %p149, %s148, 9
          %s151 = scalar_lea.vmem %s0, %s150
          %s152 = smul.u32 10, %s22
        $region16: #{vae_forward.7} parent=11 // pred_fallthru
          _
      $region12: #{vae_forward.7} parent=5 // pred_fallthru
        _
      %p153 = scmp.lt.s32.totalorder %s12, 2
      // Predicated region
      $region17: #{vae_forward.7} parent=5 // pred_check
        %p154 = pneg %p153
      $region18: #{vae_forward.7} parent=5 // pred_check_branch
        %156 = sbr.rel (%p154) target = $region20
      $region19: #{vae_forward.7} parent=5 // pred_region
        // Predicated region
        $region21: #{vae_forward.7} parent=19 // pred_check
          %p157 = pneg %p72
        $region22: #{vae_forward.7} parent=19 // pred_check_branch
          %159 = sbr.rel (%p157) target = $region24
        $region23: #{vae_forward.7} parent=19 // pred_region
          %s160 = sand.u32 %s62, 1
          %s161 = scalar_lea.sflag [#allocation4], %s160
          %s162 = sand.u32 %s62, 1
          %s163 = smul.addr %s162, 5760
          %s164 = scalar_lea.vmem [#allocation3], %s163
          %s165 = smul.u32 160, %s20
          %s166 = smul.u32 9, %s19
          %168 = vsyncadd %s161, 0
          %s169 = smul.addr %s165, 18
          %s170 = sadd.s32 %s166, %s169
          %s171 = smul.addr %s170, 4
          %s172 = scalar_lea.hbm %s1, %s171
          %s173 = sshll.u32 %s172, 4
          %s174 = int_to_ptr.hbm [resolvable:$true] %s173
          %s175 = sshll.u32 %s164, 4
          %s176 = int_to_ptr.vmem [resolvable:$true] %s175
          %181 = dma.hbm_to_vmem [thread:$0]  %s174, 92160, %s176, %s161, 1152, 576, 36
        $region24: #{vae_forward.7} parent=19 // pred_fallthru
          _
        // Predicated region
        $region25: #{vae_forward.7} parent=19 // pred_check
          %p182 = pneg %p98
        $region26: #{vae_forward.7} parent=19 // pred_check_branch
          %184 = sbr.rel (%p182) target = $region28
        $region27: #{vae_forward.7} parent=19 // pred_region
          %s185 = smul.u32 9, %s19
          %p186 = scmp.lt.s32.totalorder %s185, 17
          %s187 = scalar_select %p186, %s185, 17
          %s188 = scalar_lea.vmem %s2, %s187
          %s189 = smul.u32 9, %s19
        $region28: #{vae_forward.7} parent=19 // pred_fallthru
          _
      $region20: #{vae_forward.7} parent=5 // pred_fallthru
        _
      %p190 = scmp.le.s32.totalorder 1, %s12
      %p191 = scmp.lt.s32.totalorder %s12, 3
      %p192 = pnand %p190, %p191
      %p193 = pneg %p192
      // Predicated region
      $region29: #{vae_forward.7} parent=5 // pred_check
        _
      $region30: #{vae_forward.7} parent=5 // pred_check_branch
        %195 = sbr.rel (%p192) target = $region32
      $region31: #{vae_forward.7} parent=5 // pred_region
        %s196 = ssub.s32 %s12, 1
        %s197 = sand.u32 %s65, 1
        %s198 = scalar_lea.sflag [#allocation4], %s197
        %s199 = sand.u32 %s65, 1
        %s200 = smul.addr %s199, 5760
        %s201 = scalar_lea.vmem [#allocation3], %s200
        // Predicated region
        $region33: #{vae_forward.7} parent=31 // pred_check
          %p202 = pneg %p78
        $region34: #{vae_forward.7} parent=31 // pred_check_branch
          %204 = sbr.rel (%p202) target = $region36
        $region35: #{vae_forward.7} parent=31 // pred_region
          %206 = dma.done %s198, 92160
        $region36: #{vae_forward.7} parent=31 // pred_fallthru
          _
        %s207 = smul.u32 10, %s22
        %p208 = scmp.lt.s32.totalorder %s207, 9
        %s209 = scalar_select %p208, %s207, 9
        %s210 = scalar_lea.vmem %s0, %s209
        %p211 = pneg %p50
        %p212 = pneg %p47
        %s213 = sand.u32 %s65, 1
        %s214 = scalar_lea.sflag [#allocation4], %s213
        %s215 = sand.u32 %s65, 1
        %s216 = smul.addr %s215, 5760
        %s217 = scalar_lea.vmem [#allocation3], %s216
        %p218 = pneg %p78
        %p219 = pneg %p75
        %s220 = smul.u32 9, %s21
        %p221 = scmp.lt.s32.totalorder %s220, 17
        %s222 = scalar_select %p221, %s220, 17
        %s223 = scalar_lea.vmem %s2, %s222
        %p224 = pneg %p104
        %p225 = pneg %p101
        %p226 = pneg %p130
        %p227 = pneg %p127
        %s228 = smul.u32 9, %s21
        %p229 = scmp.lt.s32.totalorder %s228, 17
        %s230 = scalar_select %p229, %s228, 17
        %s231 = smul.addr %s230, 2
        %s232 = scalar_lea.vmem %s3, %s231
        %s233 = smul.u32 10, %s22
        %p234 = scmp.lt.s32.totalorder %s233, 9
        %s235 = scalar_select %p234, %s233, 9
        %s236 = scalar_lea.vmem %s0, %s235
        %s237 = smul.u32 10, %s22
        %s238 = smul.u32 160, %s22
        %s239 = smul.u32 9, %s21
        %s240 = smul.u32 9, %s21
        %p241 = scmp.lt.s32.totalorder %s240, 17
        %s242 = scalar_select %p241, %s240, 17
        %s243 = scalar_lea.vmem %s2, %s242
        %s244 = smul.u32 9, %s21
        %s245 = smul.u32 9, %s21
        %p246 = scmp.lt.s32.totalorder %s245, 17
        %s247 = scalar_select %p246, %s245, 17
        %s248 = smul.addr %s247, 2
        %s249 = scalar_lea.vmem %s3, %s248
        %s250 = smul.u32 9, %s21
        %p251 = scmp.eq.s32.totalorder %s22, 0
        // Predicated region
        $region37: #{vae_forward.7} parent=31 // pred_check
          %p252 = pneg %p251
        $region38: #{vae_forward.7} parent=31 // pred_check_branch
          %254 = sbr.rel (%p252) target = $region40
        $region39: #{vae_forward.7} parent=31 // pred_region
          %255 = vst [vmem:[#allocation2] sm:$0xff] 0.0
          %256 = vst [vmem:[#allocation2 + $0x8] sm:$0xff] 0.0
          %257 = vst [vmem:[#allocation2 + $0x10] sm:$0x3] 0.0
        $region40: #{vae_forward.7} parent=31 // pred_fallthru
          _
        %v258 = vld [vmem:[#allocation2] sm:$0xff]
        %v259 = vld [vmem:[#allocation2 + $0x8] sm:$0xff]
        %v260 = vld [vmem:[#allocation2 + $0x10] sm:$0x3]
        %v261 = vld [vmem:[%s236] sm:$0xff]
        %v262 = vld [vmem:[%s236 + $0x8] sm:$0x3]
        %v263 = vld [vmem:[%s201] sm:$0xff]
        %v264 = vld [vmem:[%s201 + $0x8] sm:$0xff]
        %v265 = vld [vmem:[%s201 + $0x10] sm:$0xff]
        %v266 = vld [vmem:[%s201 + $0x18] sm:$0xff]
        %v267 = vld [vmem:[%s201 + $0x20] sm:$0xf]
        %v268 = vld [vmem:[%s201 + $0x24] sm:$0xff]
        %v269 = vld [vmem:[%s201 + $0x2c] sm:$0xff]
        %v270 = vld [vmem:[%s201 + $0x34] sm:$0xff]
        %v271 = vld [vmem:[%s201 + $0x3c] sm:$0xff]
        %v272 = vld [vmem:[%s201 + $0x44] sm:$0xf]
        %v273 = vld [vmem:[%s201 + $0x48] sm:$0xff]
        %v274 = vld [vmem:[%s201 + $0x50] sm:$0xff]
        %v275 = vld [vmem:[%s201 + $0x58] sm:$0xff]
        %v276 = vld [vmem:[%s201 + $0x60] sm:$0xff]
        %v277 = vld [vmem:[%s201 + $0x68] sm:$0xf]
        %v278 = vld [vmem:[%s201 + $0x6c] sm:$0xff]
        %v279 = vld [vmem:[%s201 + $0x74] sm:$0xff]
        %v280 = vld [vmem:[%s201 + $0x7c] sm:$0xff]
        %v281 = vld [vmem:[%s201 + $0x84] sm:$0xff]
        %v282 = vld [vmem:[%s201 + $0x8c] sm:$0xf]
        %v283 = vld [vmem:[%s201 + $0x90] sm:$0xff]
        %v284 = vld [vmem:[%s201 + $0x98] sm:$0xff]
        %v285 = vld [vmem:[%s201 + $0xa0] sm:$0xff]
        %v286 = vld [vmem:[%s201 + $0xa8] sm:$0xff]
        %v287 = vld [vmem:[%s201 + $0xb0] sm:$0xf]
        %v288 = vld [vmem:[%s201 + $0xb4] sm:$0xff]
        %v289 = vld [vmem:[%s201 + $0xbc] sm:$0xff]
        %v290 = vld [vmem:[%s201 + $0xc4] sm:$0xff]
        %v291 = vld [vmem:[%s201 + $0xcc] sm:$0xff]
        %v292 = vld [vmem:[%s201 + $0xd4] sm:$0xf]
        %v293 = vld [vmem:[%s201 + $0xd8] sm:$0xff]
        %v294 = vld [vmem:[%s201 + $0xe0] sm:$0xff]
        %v295 = vld [vmem:[%s201 + $0xe8] sm:$0xff]
        %v296 = vld [vmem:[%s201 + $0xf0] sm:$0xff]
        %v297 = vld [vmem:[%s201 + $0xf8] sm:$0xf]
        %v298 = vld [vmem:[%s201 + $0xfc] sm:$0xff]
        %v299 = vld [vmem:[%s201 + $0x104] sm:$0xff]
        %v300 = vld [vmem:[%s201 + $0x10c] sm:$0xff]
        %v301 = vld [vmem:[%s201 + $0x114] sm:$0xff]
        %v302 = vld [vmem:[%s201 + $0x11c] sm:$0xf]
        %v303 = vld [vmem:[%s201 + $0x120] sm:$0xff]
        %v304 = vld [vmem:[%s201 + $0x128] sm:$0xff]
        %v305 = vld [vmem:[%s201 + $0x130] sm:$0xff]
        %v306 = vld [vmem:[%s201 + $0x138] sm:$0xff]
        %v307 = vld [vmem:[%s201 + $0x140] sm:$0xf]
        %v308 = vld [vmem:[%s201 + $0x144] sm:$0xff]
        %v309 = vld [vmem:[%s201 + $0x14c] sm:$0xff]
        %v310 = vld [vmem:[%s201 + $0x154] sm:$0xff]
        %v311 = vld [vmem:[%s201 + $0x15c] sm:$0xff]
        %v312 = vld [vmem:[%s201 + $0x164] sm:$0xf]
        %v313 = vld [vmem:[%s201 + $0x168] sm:$0xff]
        %v314 = vld [vmem:[%s201 + $0x170] sm:$0xff]
        %v315 = vld [vmem:[%s201 + $0x178] sm:$0xff]
        %v316 = vld [vmem:[%s201 + $0x180] sm:$0xff]
        %v317 = vld [vmem:[%s201 + $0x188] sm:$0xf]
        %v318 = vld [vmem:[%s201 + $0x18c] sm:$0xff]
        %v319 = vld [vmem:[%s201 + $0x194] sm:$0xff]
        %v320 = vld [vmem:[%s201 + $0x19c] sm:$0xff]
        %v321 = vld [vmem:[%s201 + $0x1a4] sm:$0xff]
        %v322 = vld [vmem:[%s201 + $0x1ac] sm:$0xf]
        %v323 = vld [vmem:[%s201 + $0x1b0] sm:$0xff]
        %v324 = vld [vmem:[%s201 + $0x1b8] sm:$0xff]
        %v325 = vld [vmem:[%s201 + $0x1c0] sm:$0xff]
        %v326 = vld [vmem:[%s201 + $0x1c8] sm:$0xff]
        %v327 = vld [vmem:[%s201 + $0x1d0] sm:$0xf]
        %v328 = vld [vmem:[%s201 + $0x1d4] sm:$0xff]
        %v329 = vld [vmem:[%s201 + $0x1dc] sm:$0xff]
        %v330 = vld [vmem:[%s201 + $0x1e4] sm:$0xff]
        %v331 = vld [vmem:[%s201 + $0x1ec] sm:$0xff]
        %v332 = vld [vmem:[%s201 + $0x1f4] sm:$0xf]
        %v333 = vld [vmem:[%s201 + $0x1f8] sm:$0xff]
        %v334 = vld [vmem:[%s201 + $0x200] sm:$0xff]
        %v335 = vld [vmem:[%s201 + $0x208] sm:$0xff]
        %v336 = vld [vmem:[%s201 + $0x210] sm:$0xff]
        %v337 = vld [vmem:[%s201 + $0x218] sm:$0xf]
        %v338 = vld [vmem:[%s201 + $0x21c] sm:$0xff]
        %v339 = vld [vmem:[%s201 + $0x224] sm:$0xff]
        %v340 = vld [vmem:[%s201 + $0x22c] sm:$0xff]
        %v341 = vld [vmem:[%s201 + $0x234] sm:$0xff]
        %v342 = vld [vmem:[%s201 + $0x23c] sm:$0xf]
        %v343 = vld [vmem:[%s201 + $0x240] sm:$0xff]
        %v344 = vld [vmem:[%s201 + $0x248] sm:$0xff]
        %v345 = vld [vmem:[%s201 + $0x250] sm:$0xff]
        %v346 = vld [vmem:[%s201 + $0x258] sm:$0xff]
        %v347 = vld [vmem:[%s201 + $0x260] sm:$0xf]
        %v348 = vld [vmem:[%s201 + $0x264] sm:$0xff]
        %v349 = vld [vmem:[%s201 + $0x26c] sm:$0xff]
        %v350 = vld [vmem:[%s201 + $0x274] sm:$0xff]
        %v351 = vld [vmem:[%s201 + $0x27c] sm:$0xff]
        %v352 = vld [vmem:[%s201 + $0x284] sm:$0xf]
        %v353 = vld [vmem:[%s201 + $0x288] sm:$0xff]
        %v354 = vld [vmem:[%s201 + $0x290] sm:$0xff]
        %v355 = vld [vmem:[%s201 + $0x298] sm:$0xff]
        %v356 = vld [vmem:[%s201 + $0x2a0] sm:$0xff]
        %v357 = vld [vmem:[%s201 + $0x2a8] sm:$0xf]
        %v358 = vld [vmem:[%s201 + $0x2ac] sm:$0xff]
        %v359 = vld [vmem:[%s201 + $0x2b4] sm:$0xff]
        %v360 = vld [vmem:[%s201 + $0x2bc] sm:$0xff]
        %v361 = vld [vmem:[%s201 + $0x2c4] sm:$0xff]
        %v362 = vld [vmem:[%s201 + $0x2cc] sm:$0xf]
        %v363 = vld [vmem:[%s201 + $0x2d0] sm:$0xff]
        %v364 = vld [vmem:[%s201 + $0x2d8] sm:$0xff]
        %v365 = vld [vmem:[%s201 + $0x2e0] sm:$0xff]
        %v366 = vld [vmem:[%s201 + $0x2e8] sm:$0xff]
        %v367 = vld [vmem:[%s201 + $0x2f0] sm:$0xf]
        %v368 = vld [vmem:[%s201 + $0x2f4] sm:$0xff]
        %v369 = vld [vmem:[%s201 + $0x2fc] sm:$0xff]
        %v370 = vld [vmem:[%s201 + $0x304] sm:$0xff]
        %v371 = vld [vmem:[%s201 + $0x30c] sm:$0xff]
        %v372 = vld [vmem:[%s201 + $0x314] sm:$0xf]
        %v373 = vld [vmem:[%s201 + $0x318] sm:$0xff]
        %v374 = vld [vmem:[%s201 + $0x320] sm:$0xff]
        %v375 = vld [vmem:[%s201 + $0x328] sm:$0xff]
        %v376 = vld [vmem:[%s201 + $0x330] sm:$0xff]
        %v377 = vld [vmem:[%s201 + $0x338] sm:$0xf]
        %v378 = vld [vmem:[%s201 + $0x33c] sm:$0xff]
        %v379 = vld [vmem:[%s201 + $0x344] sm:$0xff]
        %v380 = vld [vmem:[%s201 + $0x34c] sm:$0xff]
        %v381 = vld [vmem:[%s201 + $0x354] sm:$0xff]
        %v382 = vld [vmem:[%s201 + $0x35c] sm:$0xf]
        %v383 = vld [vmem:[%s201 + $0x360] sm:$0xff]
        %v384 = vld [vmem:[%s201 + $0x368] sm:$0xff]
        %v385 = vld [vmem:[%s201 + $0x370] sm:$0xff]
        %v386 = vld [vmem:[%s201 + $0x378] sm:$0xff]
        %v387 = vld [vmem:[%s201 + $0x380] sm:$0xf]
        %v388 = vld [vmem:[%s201 + $0x384] sm:$0xff]
        %v389 = vld [vmem:[%s201 + $0x38c] sm:$0xff]
        %v390 = vld [vmem:[%s201 + $0x394] sm:$0xff]
        %v391 = vld [vmem:[%s201 + $0x39c] sm:$0xff]
        %v392 = vld [vmem:[%s201 + $0x3a4] sm:$0xf]
        %v393 = vld [vmem:[%s201 + $0x3a8] sm:$0xff]
        %v394 = vld [vmem:[%s201 + $0x3b0] sm:$0xff]
        %v395 = vld [vmem:[%s201 + $0x3b8] sm:$0xff]
        %v396 = vld [vmem:[%s201 + $0x3c0] sm:$0xff]
        %v397 = vld [vmem:[%s201 + $0x3c8] sm:$0xf]
        %v398 = vld [vmem:[%s201 + $0x3cc] sm:$0xff]
        %v399 = vld [vmem:[%s201 + $0x3d4] sm:$0xff]
        %v400 = vld [vmem:[%s201 + $0x3dc] sm:$0xff]
        %v401 = vld [vmem:[%s201 + $0x3e4] sm:$0xff]
        %v402 = vld [vmem:[%s201 + $0x3ec] sm:$0xf]
        %v403 = vld [vmem:[%s201 + $0x3f0] sm:$0xff]
        %v404 = vld [vmem:[%s201 + $0x3f8] sm:$0xff]
        %v405 = vld [vmem:[%s201 + $0x400] sm:$0xff]
        %v406 = vld [vmem:[%s201 + $0x408] sm:$0xff]
        %v407 = vld [vmem:[%s201 + $0x410] sm:$0xf]
        %v408 = vld [vmem:[%s201 + $0x414] sm:$0xff]
        %v409 = vld [vmem:[%s201 + $0x41c] sm:$0xff]
        %v410 = vld [vmem:[%s201 + $0x424] sm:$0xff]
        %v411 = vld [vmem:[%s201 + $0x42c] sm:$0xff]
        %v412 = vld [vmem:[%s201 + $0x434] sm:$0xf]
        %v413 = vld [vmem:[%s201 + $0x438] sm:$0xff]
        %v414 = vld [vmem:[%s201 + $0x440] sm:$0xff]
        %v415 = vld [vmem:[%s201 + $0x448] sm:$0xff]
        %v416 = vld [vmem:[%s201 + $0x450] sm:$0xff]
        %v417 = vld [vmem:[%s201 + $0x458] sm:$0xf]
        %v418 = vld [vmem:[%s201 + $0x45c] sm:$0xff]
        %v419 = vld [vmem:[%s201 + $0x464] sm:$0xff]
        %v420 = vld [vmem:[%s201 + $0x46c] sm:$0xff]
        %v421 = vld [vmem:[%s201 + $0x474] sm:$0xff]
        %v422 = vld [vmem:[%s201 + $0x47c] sm:$0xf]
        %v423 = vld [vmem:[%s201 + $0x480] sm:$0xff]
        %v424 = vld [vmem:[%s201 + $0x488] sm:$0xff]
        %v425 = vld [vmem:[%s201 + $0x490] sm:$0xff]
        %v426 = vld [vmem:[%s201 + $0x498] sm:$0xff]
        %v427 = vld [vmem:[%s201 + $0x4a0] sm:$0xf]
        %v428 = vld [vmem:[%s201 + $0x4a4] sm:$0xff]
        %v429 = vld [vmem:[%s201 + $0x4ac] sm:$0xff]
        %v430 = vld [vmem:[%s201 + $0x4b4] sm:$0xff]
        %v431 = vld [vmem:[%s201 + $0x4bc] sm:$0xff]
        %v432 = vld [vmem:[%s201 + $0x4c4] sm:$0xf]
        %v433 = vld [vmem:[%s201 + $0x4c8] sm:$0xff]
        %v434 = vld [vmem:[%s201 + $0x4d0] sm:$0xff]
        %v435 = vld [vmem:[%s201 + $0x4d8] sm:$0xff]
        %v436 = vld [vmem:[%s201 + $0x4e0] sm:$0xff]
        %v437 = vld [vmem:[%s201 + $0x4e8] sm:$0xf]
        %v438 = vld [vmem:[%s201 + $0x4ec] sm:$0xff]
        %v439 = vld [vmem:[%s201 + $0x4f4] sm:$0xff]
        %v440 = vld [vmem:[%s201 + $0x4fc] sm:$0xff]
        %v441 = vld [vmem:[%s201 + $0x504] sm:$0xff]
        %v442 = vld [vmem:[%s201 + $0x50c] sm:$0xf]
        %v443 = vld [vmem:[%s201 + $0x510] sm:$0xff]
        %v444 = vld [vmem:[%s201 + $0x518] sm:$0xff]
        %v445 = vld [vmem:[%s201 + $0x520] sm:$0xff]
        %v446 = vld [vmem:[%s201 + $0x528] sm:$0xff]
        %v447 = vld [vmem:[%s201 + $0x530] sm:$0xf]
        %v448 = vld [vmem:[%s201 + $0x534] sm:$0xff]
        %v449 = vld [vmem:[%s201 + $0x53c] sm:$0xff]
        %v450 = vld [vmem:[%s201 + $0x544] sm:$0xff]
        %v451 = vld [vmem:[%s201 + $0x54c] sm:$0xff]
        %v452 = vld [vmem:[%s201 + $0x554] sm:$0xf]
        %v453 = vld [vmem:[%s201 + $0x558] sm:$0xff]
        %v454 = vld [vmem:[%s201 + $0x560] sm:$0xff]
        %v455 = vld [vmem:[%s201 + $0x568] sm:$0xff]
        %v456 = vld [vmem:[%s201 + $0x570] sm:$0xff]
        %v457 = vld [vmem:[%s201 + $0x578] sm:$0xf]
        %v458 = vld [vmem:[%s201 + $0x57c] sm:$0xff]
        %v459 = vld [vmem:[%s201 + $0x584] sm:$0xff]
        %v460 = vld [vmem:[%s201 + $0x58c] sm:$0xff]
        %v461 = vld [vmem:[%s201 + $0x594] sm:$0xff]
        %v462 = vld [vmem:[%s201 + $0x59c] sm:$0xf]
        %v463 = vld [vmem:[%s201 + $0x5a0] sm:$0xff]
        %v464 = vld [vmem:[%s201 + $0x5a8] sm:$0xff]
        %v465 = vld [vmem:[%s201 + $0x5b0] sm:$0xff]
        %v466 = vld [vmem:[%s201 + $0x5b8] sm:$0xff]
        %v467 = vld [vmem:[%s201 + $0x5c0] sm:$0xf]
        %v468 = vld [vmem:[%s201 + $0x5c4] sm:$0xff]
        %v469 = vld [vmem:[%s201 + $0x5cc] sm:$0xff]
        %v470 = vld [vmem:[%s201 + $0x5d4] sm:$0xff]
        %v471 = vld [vmem:[%s201 + $0x5dc] sm:$0xff]
        %v472 = vld [vmem:[%s201 + $0x5e4] sm:$0xf]
        %v473 = vld [vmem:[%s201 + $0x5e8] sm:$0xff]
        %v474 = vld [vmem:[%s201 + $0x5f0] sm:$0xff]
        %v475 = vld [vmem:[%s201 + $0x5f8] sm:$0xff]
        %v476 = vld [vmem:[%s201 + $0x600] sm:$0xff]
        %v477 = vld [vmem:[%s201 + $0x608] sm:$0xf]
        %v478 = vld [vmem:[%s201 + $0x60c] sm:$0xff]
        %v479 = vld [vmem:[%s201 + $0x614] sm:$0xff]
        %v480 = vld [vmem:[%s201 + $0x61c] sm:$0xff]
        %v481 = vld [vmem:[%s201 + $0x624] sm:$0xff]
        %v482 = vld [vmem:[%s201 + $0x62c] sm:$0xf]
        %v483 = vld [vmem:[%s201 + $0x630] sm:$0xff]
        %v484 = vld [vmem:[%s201 + $0x638] sm:$0xff]
        %v485 = vld [vmem:[%s201 + $0x640] sm:$0xff]
        %v486 = vld [vmem:[%s201 + $0x648] sm:$0xff]
        %v487 = vld [vmem:[%s201 + $0x650] sm:$0xf]
        %v488 = vld [vmem:[%s201 + $0x654] sm:$0xff]
        %v489 = vld [vmem:[%s201 + $0x65c] sm:$0xff]
        %v490 = vld [vmem:[%s201 + $0x664] sm:$0xff]
        %v491 = vld [vmem:[%s201 + $0x66c] sm:$0xff]
        %v492 = vld [vmem:[%s201 + $0x674] sm:$0xf]
        %v493 = vld [vmem:[%s201 + $0x678] sm:$0xff]
        %v494 = vld [vmem:[%s201 + $0x680] sm:$0xff]
        %v495 = vld [vmem:[%s201 + $0x688] sm:$0xff]
        %v496 = vld [vmem:[%s201 + $0x690] sm:$0xff]
        %v497 = vld [vmem:[%s201 + $0x698] sm:$0xf]
        %v498 = vld [vmem:[%s201 + $0x69c] sm:$0xff]
        %v499 = vld [vmem:[%s201 + $0x6a4] sm:$0xff]
        %v500 = vld [vmem:[%s201 + $0x6ac] sm:$0xff]
        %v501 = vld [vmem:[%s201 + $0x6b4] sm:$0xff]
        %v502 = vld [vmem:[%s201 + $0x6bc] sm:$0xf]
        %v503 = vld [vmem:[%s201 + $0x6c0] sm:$0xff]
        %v504 = vld [vmem:[%s201 + $0x6c8] sm:$0xff]
        %v505 = vld [vmem:[%s201 + $0x6d0] sm:$0xff]
        %v506 = vld [vmem:[%s201 + $0x6d8] sm:$0xff]
        %v507 = vld [vmem:[%s201 + $0x6e0] sm:$0xf]
        %v508 = vld [vmem:[%s201 + $0x6e4] sm:$0xff]
        %v509 = vld [vmem:[%s201 + $0x6ec] sm:$0xff]
        %v510 = vld [vmem:[%s201 + $0x6f4] sm:$0xff]
        %v511 = vld [vmem:[%s201 + $0x6fc] sm:$0xff]
        %v512 = vld [vmem:[%s201 + $0x704] sm:$0xf]
        %v513 = vld [vmem:[%s201 + $0x708] sm:$0xff]
        %v514 = vld [vmem:[%s201 + $0x710] sm:$0xff]
        %v515 = vld [vmem:[%s201 + $0x718] sm:$0xff]
        %v516 = vld [vmem:[%s201 + $0x720] sm:$0xff]
        %v517 = vld [vmem:[%s201 + $0x728] sm:$0xf]
        %v518 = vld [vmem:[%s201 + $0x72c] sm:$0xff]
        %v519 = vld [vmem:[%s201 + $0x734] sm:$0xff]
        %v520 = vld [vmem:[%s201 + $0x73c] sm:$0xff]
        %v521 = vld [vmem:[%s201 + $0x744] sm:$0xff]
        %v522 = vld [vmem:[%s201 + $0x74c] sm:$0xf]
        %v523 = vld [vmem:[%s201 + $0x750] sm:$0xff]
        %v524 = vld [vmem:[%s201 + $0x758] sm:$0xff]
        %v525 = vld [vmem:[%s201 + $0x760] sm:$0xff]
        %v526 = vld [vmem:[%s201 + $0x768] sm:$0xff]
        %v527 = vld [vmem:[%s201 + $0x770] sm:$0xf]
        %v528 = vld [vmem:[%s201 + $0x774] sm:$0xff]
        %v529 = vld [vmem:[%s201 + $0x77c] sm:$0xff]
        %v530 = vld [vmem:[%s201 + $0x784] sm:$0xff]
        %v531 = vld [vmem:[%s201 + $0x78c] sm:$0xff]
        %v532 = vld [vmem:[%s201 + $0x794] sm:$0xf]
        %v533 = vld [vmem:[%s201 + $0x798] sm:$0xff]
        %v534 = vld [vmem:[%s201 + $0x7a0] sm:$0xff]
        %v535 = vld [vmem:[%s201 + $0x7a8] sm:$0xff]
        %v536 = vld [vmem:[%s201 + $0x7b0] sm:$0xff]
        %v537 = vld [vmem:[%s201 + $0x7b8] sm:$0xf]
        %v538 = vld [vmem:[%s201 + $0x7bc] sm:$0xff]
        %v539 = vld [vmem:[%s201 + $0x7c4] sm:$0xff]
        %v540 = vld [vmem:[%s201 + $0x7cc] sm:$0xff]
        %v541 = vld [vmem:[%s201 + $0x7d4] sm:$0xff]
        %v542 = vld [vmem:[%s201 + $0x7dc] sm:$0xf]
        %v543 = vld [vmem:[%s201 + $0x7e0] sm:$0xff]
        %v544 = vld [vmem:[%s201 + $0x7e8] sm:$0xff]
        %v545 = vld [vmem:[%s201 + $0x7f0] sm:$0xff]
        %v546 = vld [vmem:[%s201 + $0x7f8] sm:$0xff]
        %v547 = vld [vmem:[%s201 + $0x800] sm:$0xf]
        %v548 = vld [vmem:[%s201 + $0x804] sm:$0xff]
        %v549 = vld [vmem:[%s201 + $0x80c] sm:$0xff]
        %v550 = vld [vmem:[%s201 + $0x814] sm:$0xff]
        %v551 = vld [vmem:[%s201 + $0x81c] sm:$0xff]
        %v552 = vld [vmem:[%s201 + $0x824] sm:$0xf]
        %v553 = vld [vmem:[%s201 + $0x828] sm:$0xff]
        %v554 = vld [vmem:[%s201 + $0x830] sm:$0xff]
        %v555 = vld [vmem:[%s201 + $0x838] sm:$0xff]
        %v556 = vld [vmem:[%s201 + $0x840] sm:$0xff]
        %v557 = vld [vmem:[%s201 + $0x848] sm:$0xf]
        %v558 = vld [vmem:[%s201 + $0x84c] sm:$0xff]
        %v559 = vld [vmem:[%s201 + $0x854] sm:$0xff]
        %v560 = vld [vmem:[%s201 + $0x85c] sm:$0xff]
        %v561 = vld [vmem:[%s201 + $0x864] sm:$0xff]
        %v562 = vld [vmem:[%s201 + $0x86c] sm:$0xf]
        %v563 = vld [vmem:[%s201 + $0x870] sm:$0xff]
        %v564 = vld [vmem:[%s201 + $0x878] sm:$0xff]
        %v565 = vld [vmem:[%s201 + $0x880] sm:$0xff]
        %v566 = vld [vmem:[%s201 + $0x888] sm:$0xff]
        %v567 = vld [vmem:[%s201 + $0x890] sm:$0xf]
        %v568 = vld [vmem:[%s201 + $0x894] sm:$0xff]
        %v569 = vld [vmem:[%s201 + $0x89c] sm:$0xff]
        %v570 = vld [vmem:[%s201 + $0x8a4] sm:$0xff]
        %v571 = vld [vmem:[%s201 + $0x8ac] sm:$0xff]
        %v572 = vld [vmem:[%s201 + $0x8b4] sm:$0xf]
        %v573 = vld [vmem:[%s201 + $0x8b8] sm:$0xff]
        %v574 = vld [vmem:[%s201 + $0x8c0] sm:$0xff]
        %v575 = vld [vmem:[%s201 + $0x8c8] sm:$0xff]
        %v576 = vld [vmem:[%s201 + $0x8d0] sm:$0xff]
        %v577 = vld [vmem:[%s201 + $0x8d8] sm:$0xf]
        %v578 = vld [vmem:[%s201 + $0x8dc] sm:$0xff]
        %v579 = vld [vmem:[%s201 + $0x8e4] sm:$0xff]
        %v580 = vld [vmem:[%s201 + $0x8ec] sm:$0xff]
        %v581 = vld [vmem:[%s201 + $0x8f4] sm:$0xff]
        %v582 = vld [vmem:[%s201 + $0x8fc] sm:$0xf]
        %v583 = vld [vmem:[%s201 + $0x900] sm:$0xff]
        %v584 = vld [vmem:[%s201 + $0x908] sm:$0xff]
        %v585 = vld [vmem:[%s201 + $0x910] sm:$0xff]
        %v586 = vld [vmem:[%s201 + $0x918] sm:$0xff]
        %v587 = vld [vmem:[%s201 + $0x920] sm:$0xf]
        %v588 = vld [vmem:[%s201 + $0x924] sm:$0xff]
        %v589 = vld [vmem:[%s201 + $0x92c] sm:$0xff]
        %v590 = vld [vmem:[%s201 + $0x934] sm:$0xff]
        %v591 = vld [vmem:[%s201 + $0x93c] sm:$0xff]
        %v592 = vld [vmem:[%s201 + $0x944] sm:$0xf]
        %v593 = vld [vmem:[%s201 + $0x948] sm:$0xff]
        %v594 = vld [vmem:[%s201 + $0x950] sm:$0xff]
        %v595 = vld [vmem:[%s201 + $0x958] sm:$0xff]
        %v596 = vld [vmem:[%s201 + $0x960] sm:$0xff]
        %v597 = vld [vmem:[%s201 + $0x968] sm:$0xf]
        %v598 = vld [vmem:[%s201 + $0x96c] sm:$0xff]
        %v599 = vld [vmem:[%s201 + $0x974] sm:$0xff]
        %v600 = vld [vmem:[%s201 + $0x97c] sm:$0xff]
        %v601 = vld [vmem:[%s201 + $0x984] sm:$0xff]
        %v602 = vld [vmem:[%s201 + $0x98c] sm:$0xf]
        %v603 = vld [vmem:[%s201 + $0x990] sm:$0xff]
        %v604 = vld [vmem:[%s201 + $0x998] sm:$0xff]
        %v605 = vld [vmem:[%s201 + $0x9a0] sm:$0xff]
        %v606 = vld [vmem:[%s201 + $0x9a8] sm:$0xff]
        %v607 = vld [vmem:[%s201 + $0x9b0] sm:$0xf]
        %v608 = vld [vmem:[%s201 + $0x9b4] sm:$0xff]
        %v609 = vld [vmem:[%s201 + $0x9bc] sm:$0xff]
        %v610 = vld [vmem:[%s201 + $0x9c4] sm:$0xff]
        %v611 = vld [vmem:[%s201 + $0x9cc] sm:$0xff]
        %v612 = vld [vmem:[%s201 + $0x9d4] sm:$0xf]
        %v613 = vld [vmem:[%s201 + $0x9d8] sm:$0xff]
        %v614 = vld [vmem:[%s201 + $0x9e0] sm:$0xff]
        %v615 = vld [vmem:[%s201 + $0x9e8] sm:$0xff]
        %v616 = vld [vmem:[%s201 + $0x9f0] sm:$0xff]
        %v617 = vld [vmem:[%s201 + $0x9f8] sm:$0xf]
        %v618 = vld [vmem:[%s201 + $0x9fc] sm:$0xff]
        %v619 = vld [vmem:[%s201 + $0xa04] sm:$0xff]
        %v620 = vld [vmem:[%s201 + $0xa0c] sm:$0xff]
        %v621 = vld [vmem:[%s201 + $0xa14] sm:$0xff]
        %v622 = vld [vmem:[%s201 + $0xa1c] sm:$0xf]
        %v623 = vld [vmem:[%s201 + $0xa20] sm:$0xff]
        %v624 = vld [vmem:[%s201 + $0xa28] sm:$0xff]
        %v625 = vld [vmem:[%s201 + $0xa30] sm:$0xff]
        %v626 = vld [vmem:[%s201 + $0xa38] sm:$0xff]
        %v627 = vld [vmem:[%s201 + $0xa40] sm:$0xf]
        %v628 = vld [vmem:[%s201 + $0xa44] sm:$0xff]
        %v629 = vld [vmem:[%s201 + $0xa4c] sm:$0xff]
        %v630 = vld [vmem:[%s201 + $0xa54] sm:$0xff]
        %v631 = vld [vmem:[%s201 + $0xa5c] sm:$0xff]
        %v632 = vld [vmem:[%s201 + $0xa64] sm:$0xf]
        %v633 = vld [vmem:[%s201 + $0xa68] sm:$0xff]
        %v634 = vld [vmem:[%s201 + $0xa70] sm:$0xff]
        %v635 = vld [vmem:[%s201 + $0xa78] sm:$0xff]
        %v636 = vld [vmem:[%s201 + $0xa80] sm:$0xff]
        %v637 = vld [vmem:[%s201 + $0xa88] sm:$0xf]
        %v638 = vld [vmem:[%s201 + $0xa8c] sm:$0xff]
        %v639 = vld [vmem:[%s201 + $0xa94] sm:$0xff]
        %v640 = vld [vmem:[%s201 + $0xa9c] sm:$0xff]
        %v641 = vld [vmem:[%s201 + $0xaa4] sm:$0xff]
        %v642 = vld [vmem:[%s201 + $0xaac] sm:$0xf]
        %v643 = vld [vmem:[%s201 + $0xab0] sm:$0xff]
        %v644 = vld [vmem:[%s201 + $0xab8] sm:$0xff]
        %v645 = vld [vmem:[%s201 + $0xac0] sm:$0xff]
        %v646 = vld [vmem:[%s201 + $0xac8] sm:$0xff]
        %v647 = vld [vmem:[%s201 + $0xad0] sm:$0xf]
        %v648 = vld [vmem:[%s201 + $0xad4] sm:$0xff]
        %v649 = vld [vmem:[%s201 + $0xadc] sm:$0xff]
        %v650 = vld [vmem:[%s201 + $0xae4] sm:$0xff]
        %v651 = vld [vmem:[%s201 + $0xaec] sm:$0xff]
        %v652 = vld [vmem:[%s201 + $0xaf4] sm:$0xf]
        %v653 = vld [vmem:[%s201 + $0xaf8] sm:$0xff]
        %v654 = vld [vmem:[%s201 + $0xb00] sm:$0xff]
        %v655 = vld [vmem:[%s201 + $0xb08] sm:$0xff]
        %v656 = vld [vmem:[%s201 + $0xb10] sm:$0xff]
        %v657 = vld [vmem:[%s201 + $0xb18] sm:$0xf]
        %v658 = vld [vmem:[%s201 + $0xb1c] sm:$0xff]
        %v659 = vld [vmem:[%s201 + $0xb24] sm:$0xff]
        %v660 = vld [vmem:[%s201 + $0xb2c] sm:$0xff]
        %v661 = vld [vmem:[%s201 + $0xb34] sm:$0xff]
        %v662 = vld [vmem:[%s201 + $0xb3c] sm:$0xf]
        %v663 = vld [vmem:[%s201 + $0xb40] sm:$0xff]
        %v664 = vld [vmem:[%s201 + $0xb48] sm:$0xff]
        %v665 = vld [vmem:[%s201 + $0xb50] sm:$0xff]
        %v666 = vld [vmem:[%s201 + $0xb58] sm:$0xff]
        %v667 = vld [vmem:[%s201 + $0xb60] sm:$0xf]
        %v668 = vld [vmem:[%s201 + $0xb64] sm:$0xff]
        %v669 = vld [vmem:[%s201 + $0xb6c] sm:$0xff]
        %v670 = vld [vmem:[%s201 + $0xb74] sm:$0xff]
        %v671 = vld [vmem:[%s201 + $0xb7c] sm:$0xff]
        %v672 = vld [vmem:[%s201 + $0xb84] sm:$0xf]
        %v673 = vld [vmem:[%s201 + $0xb88] sm:$0xff]
        %v674 = vld [vmem:[%s201 + $0xb90] sm:$0xff]
        %v675 = vld [vmem:[%s201 + $0xb98] sm:$0xff]
        %v676 = vld [vmem:[%s201 + $0xba0] sm:$0xff]
        %v677 = vld [vmem:[%s201 + $0xba8] sm:$0xf]
        %v678 = vld [vmem:[%s201 + $0xbac] sm:$0xff]
        %v679 = vld [vmem:[%s201 + $0xbb4] sm:$0xff]
        %v680 = vld [vmem:[%s201 + $0xbbc] sm:$0xff]
        %v681 = vld [vmem:[%s201 + $0xbc4] sm:$0xff]
        %v682 = vld [vmem:[%s201 + $0xbcc] sm:$0xf]
        %v683 = vld [vmem:[%s201 + $0xbd0] sm:$0xff]
        %v684 = vld [vmem:[%s201 + $0xbd8] sm:$0xff]
        %v685 = vld [vmem:[%s201 + $0xbe0] sm:$0xff]
        %v686 = vld [vmem:[%s201 + $0xbe8] sm:$0xff]
        %v687 = vld [vmem:[%s201 + $0xbf0] sm:$0xf]
        %v688 = vld [vmem:[%s201 + $0xbf4] sm:$0xff]
        %v689 = vld [vmem:[%s201 + $0xbfc] sm:$0xff]
        %v690 = vld [vmem:[%s201 + $0xc04] sm:$0xff]
        %v691 = vld [vmem:[%s201 + $0xc0c] sm:$0xff]
        %v692 = vld [vmem:[%s201 + $0xc14] sm:$0xf]
        %v693 = vld [vmem:[%s201 + $0xc18] sm:$0xff]
        %v694 = vld [vmem:[%s201 + $0xc20] sm:$0xff]
        %v695 = vld [vmem:[%s201 + $0xc28] sm:$0xff]
        %v696 = vld [vmem:[%s201 + $0xc30] sm:$0xff]
        %v697 = vld [vmem:[%s201 + $0xc38] sm:$0xf]
        %v698 = vld [vmem:[%s201 + $0xc3c] sm:$0xff]
        %v699 = vld [vmem:[%s201 + $0xc44] sm:$0xff]
        %v700 = vld [vmem:[%s201 + $0xc4c] sm:$0xff]
        %v701 = vld [vmem:[%s201 + $0xc54] sm:$0xff]
        %v702 = vld [vmem:[%s201 + $0xc5c] sm:$0xf]
        %v703 = vld [vmem:[%s201 + $0xc60] sm:$0xff]
        %v704 = vld [vmem:[%s201 + $0xc68] sm:$0xff]
        %v705 = vld [vmem:[%s201 + $0xc70] sm:$0xff]
        %v706 = vld [vmem:[%s201 + $0xc78] sm:$0xff]
        %v707 = vld [vmem:[%s201 + $0xc80] sm:$0xf]
        %v708 = vld [vmem:[%s201 + $0xc84] sm:$0xff]
        %v709 = vld [vmem:[%s201 + $0xc8c] sm:$0xff]
        %v710 = vld [vmem:[%s201 + $0xc94] sm:$0xff]
        %v711 = vld [vmem:[%s201 + $0xc9c] sm:$0xff]
        %v712 = vld [vmem:[%s201 + $0xca4] sm:$0xf]
        %v713 = vld [vmem:[%s201 + $0xca8] sm:$0xff]
        %v714 = vld [vmem:[%s201 + $0xcb0] sm:$0xff]
        %v715 = vld [vmem:[%s201 + $0xcb8] sm:$0xff]
        %v716 = vld [vmem:[%s201 + $0xcc0] sm:$0xff]
        %v717 = vld [vmem:[%s201 + $0xcc8] sm:$0xf]
        %v718 = vld [vmem:[%s201 + $0xccc] sm:$0xff]
        %v719 = vld [vmem:[%s201 + $0xcd4] sm:$0xff]
        %v720 = vld [vmem:[%s201 + $0xcdc] sm:$0xff]
        %v721 = vld [vmem:[%s201 + $0xce4] sm:$0xff]
        %v722 = vld [vmem:[%s201 + $0xcec] sm:$0xf]
        %v723 = vld [vmem:[%s201 + $0xcf0] sm:$0xff]
        %v724 = vld [vmem:[%s201 + $0xcf8] sm:$0xff]
        %v725 = vld [vmem:[%s201 + $0xd00] sm:$0xff]
        %v726 = vld [vmem:[%s201 + $0xd08] sm:$0xff]
        %v727 = vld [vmem:[%s201 + $0xd10] sm:$0xf]
        %v728 = vld [vmem:[%s201 + $0xd14] sm:$0xff]
        %v729 = vld [vmem:[%s201 + $0xd1c] sm:$0xff]
        %v730 = vld [vmem:[%s201 + $0xd24] sm:$0xff]
        %v731 = vld [vmem:[%s201 + $0xd2c] sm:$0xff]
        %v732 = vld [vmem:[%s201 + $0xd34] sm:$0xf]
        %v733 = vld [vmem:[%s201 + $0xd38] sm:$0xff]
        %v734 = vld [vmem:[%s201 + $0xd40] sm:$0xff]
        %v735 = vld [vmem:[%s201 + $0xd48] sm:$0xff]
        %v736 = vld [vmem:[%s201 + $0xd50] sm:$0xff]
        %v737 = vld [vmem:[%s201 + $0xd58] sm:$0xf]
        %v738 = vld [vmem:[%s201 + $0xd5c] sm:$0xff]
        %v739 = vld [vmem:[%s201 + $0xd64] sm:$0xff]
        %v740 = vld [vmem:[%s201 + $0xd6c] sm:$0xff]
        %v741 = vld [vmem:[%s201 + $0xd74] sm:$0xff]
        %v742 = vld [vmem:[%s201 + $0xd7c] sm:$0xf]
        %v743 = vld [vmem:[%s201 + $0xd80] sm:$0xff]
        %v744 = vld [vmem:[%s201 + $0xd88] sm:$0xff]
        %v745 = vld [vmem:[%s201 + $0xd90] sm:$0xff]
        %v746 = vld [vmem:[%s201 + $0xd98] sm:$0xff]
        %v747 = vld [vmem:[%s201 + $0xda0] sm:$0xf]
        %v748 = vld [vmem:[%s201 + $0xda4] sm:$0xff]
        %v749 = vld [vmem:[%s201 + $0xdac] sm:$0xff]
        %v750 = vld [vmem:[%s201 + $0xdb4] sm:$0xff]
        %v751 = vld [vmem:[%s201 + $0xdbc] sm:$0xff]
        %v752 = vld [vmem:[%s201 + $0xdc4] sm:$0xf]
        %v753 = vld [vmem:[%s201 + $0xdc8] sm:$0xff]
        %v754 = vld [vmem:[%s201 + $0xdd0] sm:$0xff]
        %v755 = vld [vmem:[%s201 + $0xdd8] sm:$0xff]
        %v756 = vld [vmem:[%s201 + $0xde0] sm:$0xff]
        %v757 = vld [vmem:[%s201 + $0xde8] sm:$0xf]
        %v758 = vld [vmem:[%s201 + $0xdec] sm:$0xff]
        %v759 = vld [vmem:[%s201 + $0xdf4] sm:$0xff]
        %v760 = vld [vmem:[%s201 + $0xdfc] sm:$0xff]
        %v761 = vld [vmem:[%s201 + $0xe04] sm:$0xff]
        %v762 = vld [vmem:[%s201 + $0xe0c] sm:$0xf]
        %v763 = vld [vmem:[%s201 + $0xe10] sm:$0xff]
        %v764 = vld [vmem:[%s201 + $0xe18] sm:$0xff]
        %v765 = vld [vmem:[%s201 + $0xe20] sm:$0xff]
        %v766 = vld [vmem:[%s201 + $0xe28] sm:$0xff]
        %v767 = vld [vmem:[%s201 + $0xe30] sm:$0xf]
        %v768 = vld [vmem:[%s201 + $0xe34] sm:$0xff]
        %v769 = vld [vmem:[%s201 + $0xe3c] sm:$0xff]
        %v770 = vld [vmem:[%s201 + $0xe44] sm:$0xff]
        %v771 = vld [vmem:[%s201 + $0xe4c] sm:$0xff]
        %v772 = vld [vmem:[%s201 + $0xe54] sm:$0xf]
        %v773 = vld [vmem:[%s201 + $0xe58] sm:$0xff]
        %v774 = vld [vmem:[%s201 + $0xe60] sm:$0xff]
        %v775 = vld [vmem:[%s201 + $0xe68] sm:$0xff]
        %v776 = vld [vmem:[%s201 + $0xe70] sm:$0xff]
        %v777 = vld [vmem:[%s201 + $0xe78] sm:$0xf]
        %v778 = vld [vmem:[%s201 + $0xe7c] sm:$0xff]
        %v779 = vld [vmem:[%s201 + $0xe84] sm:$0xff]
        %v780 = vld [vmem:[%s201 + $0xe8c] sm:$0xff]
        %v781 = vld [vmem:[%s201 + $0xe94] sm:$0xff]
        %v782 = vld [vmem:[%s201 + $0xe9c] sm:$0xf]
        %v783 = vld [vmem:[%s201 + $0xea0] sm:$0xff]
        %v784 = vld [vmem:[%s201 + $0xea8] sm:$0xff]
        %v785 = vld [vmem:[%s201 + $0xeb0] sm:$0xff]
        %v786 = vld [vmem:[%s201 + $0xeb8] sm:$0xff]
        %v787 = vld [vmem:[%s201 + $0xec0] sm:$0xf]
        %v788 = vld [vmem:[%s201 + $0xec4] sm:$0xff]
        %v789 = vld [vmem:[%s201 + $0xecc] sm:$0xff]
        %v790 = vld [vmem:[%s201 + $0xed4] sm:$0xff]
        %v791 = vld [vmem:[%s201 + $0xedc] sm:$0xff]
        %v792 = vld [vmem:[%s201 + $0xee4] sm:$0xf]
        %v793 = vld [vmem:[%s201 + $0xee8] sm:$0xff]
        %v794 = vld [vmem:[%s201 + $0xef0] sm:$0xff]
        %v795 = vld [vmem:[%s201 + $0xef8] sm:$0xff]
        %v796 = vld [vmem:[%s201 + $0xf00] sm:$0xff]
        %v797 = vld [vmem:[%s201 + $0xf08] sm:$0xf]
        %v798 = vld [vmem:[%s201 + $0xf0c] sm:$0xff]
        %v799 = vld [vmem:[%s201 + $0xf14] sm:$0xff]
        %v800 = vld [vmem:[%s201 + $0xf1c] sm:$0xff]
        %v801 = vld [vmem:[%s201 + $0xf24] sm:$0xff]
        %v802 = vld [vmem:[%s201 + $0xf2c] sm:$0xf]
        %v803 = vld [vmem:[%s201 + $0xf30] sm:$0xff]
        %v804 = vld [vmem:[%s201 + $0xf38] sm:$0xff]
        %v805 = vld [vmem:[%s201 + $0xf40] sm:$0xff]
        %v806 = vld [vmem:[%s201 + $0xf48] sm:$0xff]
        %v807 = vld [vmem:[%s201 + $0xf50] sm:$0xf]
        %v808 = vld [vmem:[%s201 + $0xf54] sm:$0xff]
        %v809 = vld [vmem:[%s201 + $0xf5c] sm:$0xff]
        %v810 = vld [vmem:[%s201 + $0xf64] sm:$0xff]
        %v811 = vld [vmem:[%s201 + $0xf6c] sm:$0xff]
        %v812 = vld [vmem:[%s201 + $0xf74] sm:$0xf]
        %v813 = vld [vmem:[%s201 + $0xf78] sm:$0xff]
        %v814 = vld [vmem:[%s201 + $0xf80] sm:$0xff]
        %v815 = vld [vmem:[%s201 + $0xf88] sm:$0xff]
        %v816 = vld [vmem:[%s201 + $0xf90] sm:$0xff]
        %v817 = vld [vmem:[%s201 + $0xf98] sm:$0xf]
        %v818 = vld [vmem:[%s201 + $0xf9c] sm:$0xff]
        %v819 = vld [vmem:[%s201 + $0xfa4] sm:$0xff]
        %v820 = vld [vmem:[%s201 + $0xfac] sm:$0xff]
        %v821 = vld [vmem:[%s201 + $0xfb4] sm:$0xff]
        %v822 = vld [vmem:[%s201 + $0xfbc] sm:$0xf]
        %v823 = vld [vmem:[%s201 + $0xfc0] sm:$0xff]
        %v824 = vld [vmem:[%s201 + $0xfc8] sm:$0xff]
        %v825 = vld [vmem:[%s201 + $0xfd0] sm:$0xff]
        %v826 = vld [vmem:[%s201 + $0xfd8] sm:$0xff]
        %v827 = vld [vmem:[%s201 + $0xfe0] sm:$0xf]
        %v828 = vld [vmem:[%s201 + $0xfe4] sm:$0xff]
        %v829 = vld [vmem:[%s201 + $0xfec] sm:$0xff]
        %v830 = vld [vmem:[%s201 + $0xff4] sm:$0xff]
        %v831 = vld [vmem:[%s201 + $0xffc] sm:$0xff]
        %v832 = vld [vmem:[%s201 + $0x1004] sm:$0xf]
        %v833 = vld [vmem:[%s201 + $0x1008] sm:$0xff]
        %v834 = vld [vmem:[%s201 + $0x1010] sm:$0xff]
        %v835 = vld [vmem:[%s201 + $0x1018] sm:$0xff]
        %v836 = vld [vmem:[%s201 + $0x1020] sm:$0xff]
        %v837 = vld [vmem:[%s201 + $0x1028] sm:$0xf]
        %v838 = vld [vmem:[%s201 + $0x102c] sm:$0xff]
        %v839 = vld [vmem:[%s201 + $0x1034] sm:$0xff]
        %v840 = vld [vmem:[%s201 + $0x103c] sm:$0xff]
        %v841 = vld [vmem:[%s201 + $0x1044] sm:$0xff]
        %v842 = vld [vmem:[%s201 + $0x104c] sm:$0xf]
        %v843 = vld [vmem:[%s201 + $0x1050] sm:$0xff]
        %v844 = vld [vmem:[%s201 + $0x1058] sm:$0xff]
        %v845 = vld [vmem:[%s201 + $0x1060] sm:$0xff]
        %v846 = vld [vmem:[%s201 + $0x1068] sm:$0xff]
        %v847 = vld [vmem:[%s201 + $0x1070] sm:$0xf]
        %v848 = vld [vmem:[%s201 + $0x1074] sm:$0xff]
        %v849 = vld [vmem:[%s201 + $0x107c] sm:$0xff]
        %v850 = vld [vmem:[%s201 + $0x1084] sm:$0xff]
        %v851 = vld [vmem:[%s201 + $0x108c] sm:$0xff]
        %v852 = vld [vmem:[%s201 + $0x1094] sm:$0xf]
        %v853 = vld [vmem:[%s201 + $0x1098] sm:$0xff]
        %v854 = vld [vmem:[%s201 + $0x10a0] sm:$0xff]
        %v855 = vld [vmem:[%s201 + $0x10a8] sm:$0xff]
        %v856 = vld [vmem:[%s201 + $0x10b0] sm:$0xff]
        %v857 = vld [vmem:[%s201 + $0x10b8] sm:$0xf]
        %v858 = vld [vmem:[%s201 + $0x10bc] sm:$0xff]
        %v859 = vld [vmem:[%s201 + $0x10c4] sm:$0xff]
        %v860 = vld [vmem:[%s201 + $0x10cc] sm:$0xff]
        %v861 = vld [vmem:[%s201 + $0x10d4] sm:$0xff]
        %v862 = vld [vmem:[%s201 + $0x10dc] sm:$0xf]
        %v863 = vld [vmem:[%s201 + $0x10e0] sm:$0xff]
        %v864 = vld [vmem:[%s201 + $0x10e8] sm:$0xff]
        %v865 = vld [vmem:[%s201 + $0x10f0] sm:$0xff]
        %v866 = vld [vmem:[%s201 + $0x10f8] sm:$0xff]
        %v867 = vld [vmem:[%s201 + $0x1100] sm:$0xf]
        %v868 = vld [vmem:[%s201 + $0x1104] sm:$0xff]
        %v869 = vld [vmem:[%s201 + $0x110c] sm:$0xff]
        %v870 = vld [vmem:[%s201 + $0x1114] sm:$0xff]
        %v871 = vld [vmem:[%s201 + $0x111c] sm:$0xff]
        %v872 = vld [vmem:[%s201 + $0x1124] sm:$0xf]
        %v873 = vld [vmem:[%s201 + $0x1128] sm:$0xff]
        %v874 = vld [vmem:[%s201 + $0x1130] sm:$0xff]
        %v875 = vld [vmem:[%s201 + $0x1138] sm:$0xff]
        %v876 = vld [vmem:[%s201 + $0x1140] sm:$0xff]
        %v877 = vld [vmem:[%s201 + $0x1148] sm:$0xf]
        %v878 = vld [vmem:[%s201 + $0x114c] sm:$0xff]
        %v879 = vld [vmem:[%s201 + $0x1154] sm:$0xff]
        %v880 = vld [vmem:[%s201 + $0x115c] sm:$0xff]
        %v881 = vld [vmem:[%s201 + $0x1164] sm:$0xff]
        %v882 = vld [vmem:[%s201 + $0x116c] sm:$0xf]
        %v883 = vld [vmem:[%s201 + $0x1170] sm:$0xff]
        %v884 = vld [vmem:[%s201 + $0x1178] sm:$0xff]
        %v885 = vld [vmem:[%s201 + $0x1180] sm:$0xff]
        %v886 = vld [vmem:[%s201 + $0x1188] sm:$0xff]
        %v887 = vld [vmem:[%s201 + $0x1190] sm:$0xf]
        %v888 = vld [vmem:[%s201 + $0x1194] sm:$0xff]
        %v889 = vld [vmem:[%s201 + $0x119c] sm:$0xff]
        %v890 = vld [vmem:[%s201 + $0x11a4] sm:$0xff]
        %v891 = vld [vmem:[%s201 + $0x11ac] sm:$0xff]
        %v892 = vld [vmem:[%s201 + $0x11b4] sm:$0xf]
        %v893 = vld [vmem:[%s201 + $0x11b8] sm:$0xff]
        %v894 = vld [vmem:[%s201 + $0x11c0] sm:$0xff]
        %v895 = vld [vmem:[%s201 + $0x11c8] sm:$0xff]
        %v896 = vld [vmem:[%s201 + $0x11d0] sm:$0xff]
        %v897 = vld [vmem:[%s201 + $0x11d8] sm:$0xf]
        %v898 = vld [vmem:[%s201 + $0x11dc] sm:$0xff]
        %v899 = vld [vmem:[%s201 + $0x11e4] sm:$0xff]
        %v900 = vld [vmem:[%s201 + $0x11ec] sm:$0xff]
        %v901 = vld [vmem:[%s201 + $0x11f4] sm:$0xff]
        %v902 = vld [vmem:[%s201 + $0x11fc] sm:$0xf]
        %v903 = vld [vmem:[%s201 + $0x1200] sm:$0xff]
        %v904 = vld [vmem:[%s201 + $0x1208] sm:$0xff]
        %v905 = vld [vmem:[%s201 + $0x1210] sm:$0xff]
        %v906 = vld [vmem:[%s201 + $0x1218] sm:$0xff]
        %v907 = vld [vmem:[%s201 + $0x1220] sm:$0xf]
        %v908 = vld [vmem:[%s201 + $0x1224] sm:$0xff]
        %v909 = vld [vmem:[%s201 + $0x122c] sm:$0xff]
        %v910 = vld [vmem:[%s201 + $0x1234] sm:$0xff]
        %v911 = vld [vmem:[%s201 + $0x123c] sm:$0xff]
        %v912 = vld [vmem:[%s201 + $0x1244] sm:$0xf]
        %v913 = vld [vmem:[%s201 + $0x1248] sm:$0xff]
        %v914 = vld [vmem:[%s201 + $0x1250] sm:$0xff]
        %v915 = vld [vmem:[%s201 + $0x1258] sm:$0xff]
        %v916 = vld [vmem:[%s201 + $0x1260] sm:$0xff]
        %v917 = vld [vmem:[%s201 + $0x1268] sm:$0xf]
        %v918 = vld [vmem:[%s201 + $0x126c] sm:$0xff]
        %v919 = vld [vmem:[%s201 + $0x1274] sm:$0xff]
        %v920 = vld [vmem:[%s201 + $0x127c] sm:$0xff]
        %v921 = vld [vmem:[%s201 + $0x1284] sm:$0xff]
        %v922 = vld [vmem:[%s201 + $0x128c] sm:$0xf]
        %v923 = vld [vmem:[%s201 + $0x1290] sm:$0xff]
        %v924 = vld [vmem:[%s201 + $0x1298] sm:$0xff]
        %v925 = vld [vmem:[%s201 + $0x12a0] sm:$0xff]
        %v926 = vld [vmem:[%s201 + $0x12a8] sm:$0xff]
        %v927 = vld [vmem:[%s201 + $0x12b0] sm:$0xf]
        %v928 = vld [vmem:[%s201 + $0x12b4] sm:$0xff]
        %v929 = vld [vmem:[%s201 + $0x12bc] sm:$0xff]
        %v930 = vld [vmem:[%s201 + $0x12c4] sm:$0xff]
        %v931 = vld [vmem:[%s201 + $0x12cc] sm:$0xff]
        %v932 = vld [vmem:[%s201 + $0x12d4] sm:$0xf]
        %v933 = vld [vmem:[%s201 + $0x12d8] sm:$0xff]
        %v934 = vld [vmem:[%s201 + $0x12e0] sm:$0xff]
        %v935 = vld [vmem:[%s201 + $0x12e8] sm:$0xff]
        %v936 = vld [vmem:[%s201 + $0x12f0] sm:$0xff]
        %v937 = vld [vmem:[%s201 + $0x12f8] sm:$0xf]
        %v938 = vld [vmem:[%s201 + $0x12fc] sm:$0xff]
        %v939 = vld [vmem:[%s201 + $0x1304] sm:$0xff]
        %v940 = vld [vmem:[%s201 + $0x130c] sm:$0xff]
        %v941 = vld [vmem:[%s201 + $0x1314] sm:$0xff]
        %v942 = vld [vmem:[%s201 + $0x131c] sm:$0xf]
        %v943 = vld [vmem:[%s201 + $0x1320] sm:$0xff]
        %v944 = vld [vmem:[%s201 + $0x1328] sm:$0xff]
        %v945 = vld [vmem:[%s201 + $0x1330] sm:$0xff]
        %v946 = vld [vmem:[%s201 + $0x1338] sm:$0xff]
        %v947 = vld [vmem:[%s201 + $0x1340] sm:$0xf]
        %v948 = vld [vmem:[%s201 + $0x1344] sm:$0xff]
        %v949 = vld [vmem:[%s201 + $0x134c] sm:$0xff]
        %v950 = vld [vmem:[%s201 + $0x1354] sm:$0xff]
        %v951 = vld [vmem:[%s201 + $0x135c] sm:$0xff]
        %v952 = vld [vmem:[%s201 + $0x1364] sm:$0xf]
        %v953 = vld [vmem:[%s201 + $0x1368] sm:$0xff]
        %v954 = vld [vmem:[%s201 + $0x1370] sm:$0xff]
        %v955 = vld [vmem:[%s201 + $0x1378] sm:$0xff]
        %v956 = vld [vmem:[%s201 + $0x1380] sm:$0xff]
        %v957 = vld [vmem:[%s201 + $0x1388] sm:$0xf]
        %v958 = vld [vmem:[%s201 + $0x138c] sm:$0xff]
        %v959 = vld [vmem:[%s201 + $0x1394] sm:$0xff]
        %v960 = vld [vmem:[%s201 + $0x139c] sm:$0xff]
        %v961 = vld [vmem:[%s201 + $0x13a4] sm:$0xff]
        %v962 = vld [vmem:[%s201 + $0x13ac] sm:$0xf]
        %v963 = vld [vmem:[%s201 + $0x13b0] sm:$0xff]
        %v964 = vld [vmem:[%s201 + $0x13b8] sm:$0xff]
        %v965 = vld [vmem:[%s201 + $0x13c0] sm:$0xff]
        %v966 = vld [vmem:[%s201 + $0x13c8] sm:$0xff]
        %v967 = vld [vmem:[%s201 + $0x13d0] sm:$0xf]
        %v968 = vld [vmem:[%s201 + $0x13d4] sm:$0xff]
        %v969 = vld [vmem:[%s201 + $0x13dc] sm:$0xff]
        %v970 = vld [vmem:[%s201 + $0x13e4] sm:$0xff]
        %v971 = vld [vmem:[%s201 + $0x13ec] sm:$0xff]
        %v972 = vld [vmem:[%s201 + $0x13f4] sm:$0xf]
        %v973 = vld [vmem:[%s201 + $0x13f8] sm:$0xff]
        %v974 = vld [vmem:[%s201 + $0x1400] sm:$0xff]
        %v975 = vld [vmem:[%s201 + $0x1408] sm:$0xff]
        %v976 = vld [vmem:[%s201 + $0x1410] sm:$0xff]
        %v977 = vld [vmem:[%s201 + $0x1418] sm:$0xf]
        %v978 = vld [vmem:[%s201 + $0x141c] sm:$0xff]
        %v979 = vld [vmem:[%s201 + $0x1424] sm:$0xff]
        %v980 = vld [vmem:[%s201 + $0x142c] sm:$0xff]
        %v981 = vld [vmem:[%s201 + $0x1434] sm:$0xff]
        %v982 = vld [vmem:[%s201 + $0x143c] sm:$0xf]
        %v983 = vld [vmem:[%s201 + $0x1440] sm:$0xff]
        %v984 = vld [vmem:[%s201 + $0x1448] sm:$0xff]
        %v985 = vld [vmem:[%s201 + $0x1450] sm:$0xff]
        %v986 = vld [vmem:[%s201 + $0x1458] sm:$0xff]
        %v987 = vld [vmem:[%s201 + $0x1460] sm:$0xf]
        %v988 = vld [vmem:[%s201 + $0x1464] sm:$0xff]
        %v989 = vld [vmem:[%s201 + $0x146c] sm:$0xff]
        %v990 = vld [vmem:[%s201 + $0x1474] sm:$0xff]
        %v991 = vld [vmem:[%s201 + $0x147c] sm:$0xff]
        %v992 = vld [vmem:[%s201 + $0x1484] sm:$0xf]
        %v993 = vld [vmem:[%s201 + $0x1488] sm:$0xff]
        %v994 = vld [vmem:[%s201 + $0x1490] sm:$0xff]
        %v995 = vld [vmem:[%s201 + $0x1498] sm:$0xff]
        %v996 = vld [vmem:[%s201 + $0x14a0] sm:$0xff]
        %v997 = vld [vmem:[%s201 + $0x14a8] sm:$0xf]
        %v998 = vld [vmem:[%s201 + $0x14ac] sm:$0xff]
        %v999 = vld [vmem:[%s201 + $0x14b4] sm:$0xff]
        %v1000 = vld [vmem:[%s201 + $0x14bc] sm:$0xff]
        %v1001 = vld [vmem:[%s201 + $0x14c4] sm:$0xff]
        %v1002 = vld [vmem:[%s201 + $0x14cc] sm:$0xf]
        %v1003 = vld [vmem:[%s201 + $0x14d0] sm:$0xff]
        %v1004 = vld [vmem:[%s201 + $0x14d8] sm:$0xff]
        %v1005 = vld [vmem:[%s201 + $0x14e0] sm:$0xff]
        %v1006 = vld [vmem:[%s201 + $0x14e8] sm:$0xff]
        %v1007 = vld [vmem:[%s201 + $0x14f0] sm:$0xf]
        %v1008 = vld [vmem:[%s201 + $0x14f4] sm:$0xff]
        %v1009 = vld [vmem:[%s201 + $0x14fc] sm:$0xff]
        %v1010 = vld [vmem:[%s201 + $0x1504] sm:$0xff]
        %v1011 = vld [vmem:[%s201 + $0x150c] sm:$0xff]
        %v1012 = vld [vmem:[%s201 + $0x1514] sm:$0xf]
        %v1013 = vld [vmem:[%s201 + $0x1518] sm:$0xff]
        %v1014 = vld [vmem:[%s201 + $0x1520] sm:$0xff]
        %v1015 = vld [vmem:[%s201 + $0x1528] sm:$0xff]
        %v1016 = vld [vmem:[%s201 + $0x1530] sm:$0xff]
        %v1017 = vld [vmem:[%s201 + $0x1538] sm:$0xf]
        %v1018 = vld [vmem:[%s201 + $0x153c] sm:$0xff]
        %v1019 = vld [vmem:[%s201 + $0x1544] sm:$0xff]
        %v1020 = vld [vmem:[%s201 + $0x154c] sm:$0xff]
        %v1021 = vld [vmem:[%s201 + $0x1554] sm:$0xff]
        %v1022 = vld [vmem:[%s201 + $0x155c] sm:$0xf]
        %v1023 = vld [vmem:[%s201 + $0x1560] sm:$0xff]
        %v1024 = vld [vmem:[%s201 + $0x1568] sm:$0xff]
        %v1025 = vld [vmem:[%s201 + $0x1570] sm:$0xff]
        %v1026 = vld [vmem:[%s201 + $0x1578] sm:$0xff]
        %v1027 = vld [vmem:[%s201 + $0x1580] sm:$0xf]
        %v1028 = vld [vmem:[%s201 + $0x1584] sm:$0xff]
        %v1029 = vld [vmem:[%s201 + $0x158c] sm:$0xff]
        %v1030 = vld [vmem:[%s201 + $0x1594] sm:$0xff]
        %v1031 = vld [vmem:[%s201 + $0x159c] sm:$0xff]
        %v1032 = vld [vmem:[%s201 + $0x15a4] sm:$0xf]
        %v1033 = vld [vmem:[%s201 + $0x15a8] sm:$0xff]
        %v1034 = vld [vmem:[%s201 + $0x15b0] sm:$0xff]
        %v1035 = vld [vmem:[%s201 + $0x15b8] sm:$0xff]
        %v1036 = vld [vmem:[%s201 + $0x15c0] sm:$0xff]
        %v1037 = vld [vmem:[%s201 + $0x15c8] sm:$0xf]
        %v1038 = vld [vmem:[%s201 + $0x15cc] sm:$0xff]
        %v1039 = vld [vmem:[%s201 + $0x15d4] sm:$0xff]
        %v1040 = vld [vmem:[%s201 + $0x15dc] sm:$0xff]
        %v1041 = vld [vmem:[%s201 + $0x15e4] sm:$0xff]
        %v1042 = vld [vmem:[%s201 + $0x15ec] sm:$0xf]
        %v1043 = vld [vmem:[%s201 + $0x15f0] sm:$0xff]
        %v1044 = vld [vmem:[%s201 + $0x15f8] sm:$0xff]
        %v1045 = vld [vmem:[%s201 + $0x1600] sm:$0xff]
        %v1046 = vld [vmem:[%s201 + $0x1608] sm:$0xff]
        %v1047 = vld [vmem:[%s201 + $0x1610] sm:$0xf]
        %v1048 = vld [vmem:[%s201 + $0x1614] sm:$0xff]
        %v1049 = vld [vmem:[%s201 + $0x161c] sm:$0xff]
        %v1050 = vld [vmem:[%s201 + $0x1624] sm:$0xff]
        %v1051 = vld [vmem:[%s201 + $0x162c] sm:$0xff]
        %v1052 = vld [vmem:[%s201 + $0x1634] sm:$0xf]
        %v1053 = vld [vmem:[%s201 + $0x1638] sm:$0xff]
        %v1054 = vld [vmem:[%s201 + $0x1640] sm:$0xff]
        %v1055 = vld [vmem:[%s201 + $0x1648] sm:$0xff]
        %v1056 = vld [vmem:[%s201 + $0x1650] sm:$0xff]
        %v1057 = vld [vmem:[%s201 + $0x1658] sm:$0xf]
        %v1058 = vld [vmem:[%s201 + $0x165c] sm:$0xff]
        %v1059 = vld [vmem:[%s201 + $0x1664] sm:$0xff]
        %v1060 = vld [vmem:[%s201 + $0x166c] sm:$0xff]
        %v1061 = vld [vmem:[%s201 + $0x1674] sm:$0xff]
        %v1062 = vld [vmem:[%s201 + $0x167c] sm:$0xf]
        %1064 = vst [vmem:[#allocation1] ss:$9 sm:$0xff] %v261
        %v1065 = vld [vmem:[#allocation1] sm:$0xff]
        %v1066 = vld [vmem:[#allocation1 + $0x9] sm:$0xff]
        %v1067 = vld [vmem:[#allocation1 + $0x12] sm:$0xff]
        %v1068 = vld [vmem:[#allocation1 + $0x1b] sm:$0xff]
        %v1069 = vld [vmem:[#allocation1 + $0x24] sm:$0xff]
        %v1070 = vld [vmem:[#allocation1 + $0x2d] sm:$0xff]
        %v1071 = vld [vmem:[#allocation1 + $0x36] sm:$0xff]
        %v1072 = vld [vmem:[#allocation1 + $0x3f] sm:$0xff]
        %1074 = vst [vmem:[#allocation1] ss:$9 sm:$0xff] %v262
        %v1075 = vld [vmem:[#allocation1] sm:$0xff]
        %v1076 = vld [vmem:[#allocation1 + $0x9] sm:$0xff]
        %v1887 = vunpack.c.l.b16 %v263
        %v1888 = vunpack.c.h.b16 %v263
        %v1889 = vunpack.c.l.b16 %v264
        %v1890 = vunpack.c.h.b16 %v264
        %v1891 = vunpack.c.l.b16 %v265
        %v1892 = vunpack.c.h.b16 %v265
        %v1893 = vunpack.c.l.b16 %v266
        %v1894 = vunpack.c.h.b16 %v266
        %v1895 = vunpack.c.l.b16 %v267
        %v1896 = vunpack.c.l.b16 %v268
        %v1897 = vunpack.c.h.b16 %v268
        %v1898 = vunpack.c.l.b16 %v269
        %v1899 = vunpack.c.h.b16 %v269
        %v1900 = vunpack.c.l.b16 %v270
        %v1901 = vunpack.c.h.b16 %v270
        %v1902 = vunpack.c.l.b16 %v271
        %v1903 = vunpack.c.h.b16 %v271
        %v1904 = vunpack.c.l.b16 %v272
        %v1905 = vunpack.c.l.b16 %v273
        %v1906 = vunpack.c.h.b16 %v273
        %v1907 = vunpack.c.l.b16 %v274
        %v1908 = vunpack.c.h.b16 %v274
        %v1909 = vunpack.c.l.b16 %v275
        %v1910 = vunpack.c.h.b16 %v275
        %v1911 = vunpack.c.l.b16 %v276
        %v1912 = vunpack.c.h.b16 %v276
        %v1913 = vunpack.c.l.b16 %v277
        %v1914 = vunpack.c.l.b16 %v278
        %v1915 = vunpack.c.h.b16 %v278
        %v1916 = vunpack.c.l.b16 %v279
        %v1917 = vunpack.c.h.b16 %v279
        %v1918 = vunpack.c.l.b16 %v280
        %v1919 = vunpack.c.h.b16 %v280
        %v1920 = vunpack.c.l.b16 %v281
        %v1921 = vunpack.c.h.b16 %v281
        %v1922 = vunpack.c.l.b16 %v282
        %v1923 = vunpack.c.l.b16 %v283
        %v1924 = vunpack.c.h.b16 %v283
        %v1925 = vunpack.c.l.b16 %v284
        %v1926 = vunpack.c.h.b16 %v284
        %v1927 = vunpack.c.l.b16 %v285
        %v1928 = vunpack.c.h.b16 %v285
        %v1929 = vunpack.c.l.b16 %v286
        %v1930 = vunpack.c.h.b16 %v286
        %v1931 = vunpack.c.l.b16 %v287
        %v1932 = vunpack.c.l.b16 %v288
        %v1933 = vunpack.c.h.b16 %v288
        %v1934 = vunpack.c.l.b16 %v289
        %v1935 = vunpack.c.h.b16 %v289
        %v1936 = vunpack.c.l.b16 %v290
        %v1937 = vunpack.c.h.b16 %v290
        %v1938 = vunpack.c.l.b16 %v291
        %v1939 = vunpack.c.h.b16 %v291
        %v1940 = vunpack.c.l.b16 %v292
        %v1941 = vunpack.c.l.b16 %v293
        %v1942 = vunpack.c.h.b16 %v293
        %v1943 = vunpack.c.l.b16 %v294
        %v1944 = vunpack.c.h.b16 %v294
        %v1945 = vunpack.c.l.b16 %v295
        %v1946 = vunpack.c.h.b16 %v295
        %v1947 = vunpack.c.l.b16 %v296
        %v1948 = vunpack.c.h.b16 %v296
        %v1949 = vunpack.c.l.b16 %v297
        %v1950 = vunpack.c.l.b16 %v298
        %v1951 = vunpack.c.h.b16 %v298
        %v1952 = vunpack.c.l.b16 %v299
        %v1953 = vunpack.c.h.b16 %v299
        %v1954 = vunpack.c.l.b16 %v300
        %v1955 = vunpack.c.h.b16 %v300
        %v1956 = vunpack.c.l.b16 %v301
        %v1957 = vunpack.c.h.b16 %v301
        %v1958 = vunpack.c.l.b16 %v302
        %v1959 = vunpack.c.l.b16 %v303
        %v1960 = vunpack.c.h.b16 %v303
        %v1961 = vunpack.c.l.b16 %v304
        %v1962 = vunpack.c.h.b16 %v304
        %v1963 = vunpack.c.l.b16 %v305
        %v1964 = vunpack.c.h.b16 %v305
        %v1965 = vunpack.c.l.b16 %v306
        %v1966 = vunpack.c.h.b16 %v306
        %v1967 = vunpack.c.l.b16 %v307
        %v1968 = vunpack.c.l.b16 %v308
        %v1969 = vunpack.c.h.b16 %v308
        %v1970 = vunpack.c.l.b16 %v309
        %v1971 = vunpack.c.h.b16 %v309
        %v1972 = vunpack.c.l.b16 %v310
        %v1973 = vunpack.c.h.b16 %v310
        %v1974 = vunpack.c.l.b16 %v311
        %v1975 = vunpack.c.h.b16 %v311
        %v1976 = vunpack.c.l.b16 %v312
        %v1977 = vunpack.c.l.b16 %v313
        %v1978 = vunpack.c.h.b16 %v313
        %v1979 = vunpack.c.l.b16 %v314
        %v1980 = vunpack.c.h.b16 %v314
        %v1981 = vunpack.c.l.b16 %v315
        %v1982 = vunpack.c.h.b16 %v315
        %v1983 = vunpack.c.l.b16 %v316
        %v1984 = vunpack.c.h.b16 %v316
        %v1985 = vunpack.c.l.b16 %v317
        %v1986 = vunpack.c.l.b16 %v318
        %v1987 = vunpack.c.h.b16 %v318
        %v1988 = vunpack.c.l.b16 %v319
        %v1989 = vunpack.c.h.b16 %v319
        %v1990 = vunpack.c.l.b16 %v320
        %v1991 = vunpack.c.h.b16 %v320
        %v1992 = vunpack.c.l.b16 %v321
        %v1993 = vunpack.c.h.b16 %v321
        %v1994 = vunpack.c.l.b16 %v322
        %v1995 = vunpack.c.l.b16 %v323
        %v1996 = vunpack.c.h.b16 %v323
        %v1997 = vunpack.c.l.b16 %v324
        %v1998 = vunpack.c.h.b16 %v324
        %v1999 = vunpack.c.l.b16 %v325
        %v2000 = vunpack.c.h.b16 %v325
        %v2001 = vunpack.c.l.b16 %v326
        %v2002 = vunpack.c.h.b16 %v326
        %v2003 = vunpack.c.l.b16 %v327
        %v2004 = vunpack.c.l.b16 %v328
        %v2005 = vunpack.c.h.b16 %v328
        %v2006 = vunpack.c.l.b16 %v329
        %v2007 = vunpack.c.h.b16 %v329
        %v2008 = vunpack.c.l.b16 %v330
        %v2009 = vunpack.c.h.b16 %v330
        %v2010 = vunpack.c.l.b16 %v331
        %v2011 = vunpack.c.h.b16 %v331
        %v2012 = vunpack.c.l.b16 %v332
        %v2013 = vunpack.c.l.b16 %v333
        %v2014 = vunpack.c.h.b16 %v333
        %v2015 = vunpack.c.l.b16 %v334
        %v2016 = vunpack.c.h.b16 %v334
        %v2017 = vunpack.c.l.b16 %v335
        %v2018 = vunpack.c.h.b16 %v335
        %v2019 = vunpack.c.l.b16 %v336
        %v2020 = vunpack.c.h.b16 %v336
        %v2021 = vunpack.c.l.b16 %v337
        %v2022 = vunpack.c.l.b16 %v338
        %v2023 = vunpack.c.h.b16 %v338
        %v2024 = vunpack.c.l.b16 %v339
        %v2025 = vunpack.c.h.b16 %v339
        %v2026 = vunpack.c.l.b16 %v340
        %v2027 = vunpack.c.h.b16 %v340
        %v2028 = vunpack.c.l.b16 %v341
        %v2029 = vunpack.c.h.b16 %v341
        %v2030 = vunpack.c.l.b16 %v342
        %v2031 = vunpack.c.l.b16 %v343
        %v2032 = vunpack.c.h.b16 %v343
        %v2033 = vunpack.c.l.b16 %v344
        %v2034 = vunpack.c.h.b16 %v344
        %v2035 = vunpack.c.l.b16 %v345
        %v2036 = vunpack.c.h.b16 %v345
        %v2037 = vunpack.c.l.b16 %v346
        %v2038 = vunpack.c.h.b16 %v346
        %v2039 = vunpack.c.l.b16 %v347
        %v2040 = vunpack.c.l.b16 %v348
        %v2041 = vunpack.c.h.b16 %v348
        %v2042 = vunpack.c.l.b16 %v349
        %v2043 = vunpack.c.h.b16 %v349
        %v2044 = vunpack.c.l.b16 %v350
        %v2045 = vunpack.c.h.b16 %v350
        %v2046 = vunpack.c.l.b16 %v351
        %v2047 = vunpack.c.h.b16 %v351
        %v2048 = vunpack.c.l.b16 %v352
        %v2049 = vunpack.c.l.b16 %v353
        %v2050 = vunpack.c.h.b16 %v353
        %v2051 = vunpack.c.l.b16 %v354
        %v2052 = vunpack.c.h.b16 %v354
        %v2053 = vunpack.c.l.b16 %v355
        %v2054 = vunpack.c.h.b16 %v355
        %v2055 = vunpack.c.l.b16 %v356
        %v2056 = vunpack.c.h.b16 %v356
        %v2057 = vunpack.c.l.b16 %v357
        %v2058 = vunpack.c.l.b16 %v358
        %v2059 = vunpack.c.h.b16 %v358
        %v2060 = vunpack.c.l.b16 %v359
        %v2061 = vunpack.c.h.b16 %v359
        %v2062 = vunpack.c.l.b16 %v360
        %v2063 = vunpack.c.h.b16 %v360
        %v2064 = vunpack.c.l.b16 %v361
        %v2065 = vunpack.c.h.b16 %v361
        %v2066 = vunpack.c.l.b16 %v362
        %v2067 = vunpack.c.l.b16 %v363
        %v2068 = vunpack.c.h.b16 %v363
        %v2069 = vunpack.c.l.b16 %v364
        %v2070 = vunpack.c.h.b16 %v364
        %v2071 = vunpack.c.l.b16 %v365
        %v2072 = vunpack.c.h.b16 %v365
        %v2073 = vunpack.c.l.b16 %v366
        %v2074 = vunpack.c.h.b16 %v366
        %v2075 = vunpack.c.l.b16 %v367
        %v2076 = vunpack.c.l.b16 %v368
        %v2077 = vunpack.c.h.b16 %v368
        %v2078 = vunpack.c.l.b16 %v369
        %v2079 = vunpack.c.h.b16 %v369
        %v2080 = vunpack.c.l.b16 %v370
        %v2081 = vunpack.c.h.b16 %v370
        %v2082 = vunpack.c.l.b16 %v371
        %v2083 = vunpack.c.h.b16 %v371
        %v2084 = vunpack.c.l.b16 %v372
        %v2085 = vunpack.c.l.b16 %v373
        %v2086 = vunpack.c.h.b16 %v373
        %v2087 = vunpack.c.l.b16 %v374
        %v2088 = vunpack.c.h.b16 %v374
        %v2089 = vunpack.c.l.b16 %v375
        %v2090 = vunpack.c.h.b16 %v375
        %v2091 = vunpack.c.l.b16 %v376
        %v2092 = vunpack.c.h.b16 %v376
        %v2093 = vunpack.c.l.b16 %v377
        %v2094 = vunpack.c.l.b16 %v378
        %v2095 = vunpack.c.h.b16 %v378
        %v2096 = vunpack.c.l.b16 %v379
        %v2097 = vunpack.c.h.b16 %v379
        %v2098 = vunpack.c.l.b16 %v380
        %v2099 = vunpack.c.h.b16 %v380
        %v2100 = vunpack.c.l.b16 %v381
        %v2101 = vunpack.c.h.b16 %v381
        %v2102 = vunpack.c.l.b16 %v382
        %v2103 = vunpack.c.l.b16 %v383
        %v2104 = vunpack.c.h.b16 %v383
        %v2105 = vunpack.c.l.b16 %v384
        %v2106 = vunpack.c.h.b16 %v384
        %v2107 = vunpack.c.l.b16 %v385
        %v2108 = vunpack.c.h.b16 %v385
        %v2109 = vunpack.c.l.b16 %v386
        %v2110 = vunpack.c.h.b16 %v386
        %v2111 = vunpack.c.l.b16 %v387
        %v2112 = vunpack.c.l.b16 %v388
        %v2113 = vunpack.c.h.b16 %v388
        %v2114 = vunpack.c.l.b16 %v389
        %v2115 = vunpack.c.h.b16 %v389
        %v2116 = vunpack.c.l.b16 %v390
        %v2117 = vunpack.c.h.b16 %v390
        %v2118 = vunpack.c.l.b16 %v391
        %v2119 = vunpack.c.h.b16 %v391
        %v2120 = vunpack.c.l.b16 %v392
        %v2121 = vunpack.c.l.b16 %v393
        %v2122 = vunpack.c.h.b16 %v393
        %v2123 = vunpack.c.l.b16 %v394
        %v2124 = vunpack.c.h.b16 %v394
        %v2125 = vunpack.c.l.b16 %v395
        %v2126 = vunpack.c.h.b16 %v395
        %v2127 = vunpack.c.l.b16 %v396
        %v2128 = vunpack.c.h.b16 %v396
        %v2129 = vunpack.c.l.b16 %v397
        %v2130 = vunpack.c.l.b16 %v398
        %v2131 = vunpack.c.h.b16 %v398
        %v2132 = vunpack.c.l.b16 %v399
        %v2133 = vunpack.c.h.b16 %v399
        %v2134 = vunpack.c.l.b16 %v400
        %v2135 = vunpack.c.h.b16 %v400
        %v2136 = vunpack.c.l.b16 %v401
        %v2137 = vunpack.c.h.b16 %v401
        %v2138 = vunpack.c.l.b16 %v402
        %v2139 = vunpack.c.l.b16 %v403
        %v2140 = vunpack.c.h.b16 %v403
        %v2141 = vunpack.c.l.b16 %v404
        %v2142 = vunpack.c.h.b16 %v404
        %v2143 = vunpack.c.l.b16 %v405
        %v2144 = vunpack.c.h.b16 %v405
        %v2145 = vunpack.c.l.b16 %v406
        %v2146 = vunpack.c.h.b16 %v406
        %v2147 = vunpack.c.l.b16 %v407
        %v2148 = vunpack.c.l.b16 %v408
        %v2149 = vunpack.c.h.b16 %v408
        %v2150 = vunpack.c.l.b16 %v409
        %v2151 = vunpack.c.h.b16 %v409
        %v2152 = vunpack.c.l.b16 %v410
        %v2153 = vunpack.c.h.b16 %v410
        %v2154 = vunpack.c.l.b16 %v411
        %v2155 = vunpack.c.h.b16 %v411
        %v2156 = vunpack.c.l.b16 %v412
        %v2157 = vunpack.c.l.b16 %v413
        %v2158 = vunpack.c.h.b16 %v413
        %v2159 = vunpack.c.l.b16 %v414
        %v2160 = vunpack.c.h.b16 %v414
        %v2161 = vunpack.c.l.b16 %v415
        %v2162 = vunpack.c.h.b16 %v415
        %v2163 = vunpack.c.l.b16 %v416
        %v2164 = vunpack.c.h.b16 %v416
        %v2165 = vunpack.c.l.b16 %v417
        %v2166 = vunpack.c.l.b16 %v418
        %v2167 = vunpack.c.h.b16 %v418
        %v2168 = vunpack.c.l.b16 %v419
        %v2169 = vunpack.c.h.b16 %v419
        %v2170 = vunpack.c.l.b16 %v420
        %v2171 = vunpack.c.h.b16 %v420
        %v2172 = vunpack.c.l.b16 %v421
        %v2173 = vunpack.c.h.b16 %v421
        %v2174 = vunpack.c.l.b16 %v422
        %v2175 = vunpack.c.l.b16 %v423
        %v2176 = vunpack.c.h.b16 %v423
        %v2177 = vunpack.c.l.b16 %v424
        %v2178 = vunpack.c.h.b16 %v424
        %v2179 = vunpack.c.l.b16 %v425
        %v2180 = vunpack.c.h.b16 %v425
        %v2181 = vunpack.c.l.b16 %v426
        %v2182 = vunpack.c.h.b16 %v426
        %v2183 = vunpack.c.l.b16 %v427
        %v2184 = vunpack.c.l.b16 %v428
        %v2185 = vunpack.c.h.b16 %v428
        %v2186 = vunpack.c.l.b16 %v429
        %v2187 = vunpack.c.h.b16 %v429
        %v2188 = vunpack.c.l.b16 %v430
        %v2189 = vunpack.c.h.b16 %v430
        %v2190 = vunpack.c.l.b16 %v431
        %v2191 = vunpack.c.h.b16 %v431
        %v2192 = vunpack.c.l.b16 %v432
        %v2193 = vunpack.c.l.b16 %v433
        %v2194 = vunpack.c.h.b16 %v433
        %v2195 = vunpack.c.l.b16 %v434
        %v2196 = vunpack.c.h.b16 %v434
        %v2197 = vunpack.c.l.b16 %v435
        %v2198 = vunpack.c.h.b16 %v435
        %v2199 = vunpack.c.l.b16 %v436
        %v2200 = vunpack.c.h.b16 %v436
        %v2201 = vunpack.c.l.b16 %v437
        %v2202 = vunpack.c.l.b16 %v438
        %v2203 = vunpack.c.h.b16 %v438
        %v2204 = vunpack.c.l.b16 %v439
        %v2205 = vunpack.c.h.b16 %v439
        %v2206 = vunpack.c.l.b16 %v440
        %v2207 = vunpack.c.h.b16 %v440
        %v2208 = vunpack.c.l.b16 %v441
        %v2209 = vunpack.c.h.b16 %v441
        %v2210 = vunpack.c.l.b16 %v442
        %v2211 = vunpack.c.l.b16 %v443
        %v2212 = vunpack.c.h.b16 %v443
        %v2213 = vunpack.c.l.b16 %v444
        %v2214 = vunpack.c.h.b16 %v444
        %v2215 = vunpack.c.l.b16 %v445
        %v2216 = vunpack.c.h.b16 %v445
        %v2217 = vunpack.c.l.b16 %v446
        %v2218 = vunpack.c.h.b16 %v446
        %v2219 = vunpack.c.l.b16 %v447
        %v2220 = vunpack.c.l.b16 %v448
        %v2221 = vunpack.c.h.b16 %v448
        %v2222 = vunpack.c.l.b16 %v449
        %v2223 = vunpack.c.h.b16 %v449
        %v2224 = vunpack.c.l.b16 %v450
        %v2225 = vunpack.c.h.b16 %v450
        %v2226 = vunpack.c.l.b16 %v451
        %v2227 = vunpack.c.h.b16 %v451
        %v2228 = vunpack.c.l.b16 %v452
        %v2229 = vunpack.c.l.b16 %v453
        %v2230 = vunpack.c.h.b16 %v453
        %v2231 = vunpack.c.l.b16 %v454
        %v2232 = vunpack.c.h.b16 %v454
        %v2233 = vunpack.c.l.b16 %v455
        %v2234 = vunpack.c.h.b16 %v455
        %v2235 = vunpack.c.l.b16 %v456
        %v2236 = vunpack.c.h.b16 %v456
        %v2237 = vunpack.c.l.b16 %v457
        %v2238 = vunpack.c.l.b16 %v458
        %v2239 = vunpack.c.h.b16 %v458
        %v2240 = vunpack.c.l.b16 %v459
        %v2241 = vunpack.c.h.b16 %v459
        %v2242 = vunpack.c.l.b16 %v460
        %v2243 = vunpack.c.h.b16 %v460
        %v2244 = vunpack.c.l.b16 %v461
        %v2245 = vunpack.c.h.b16 %v461
        %v2246 = vunpack.c.l.b16 %v462
        %v2247 = vunpack.c.l.b16 %v463
        %v2248 = vunpack.c.h.b16 %v463
        %v2249 = vunpack.c.l.b16 %v464
        %v2250 = vunpack.c.h.b16 %v464
        %v2251 = vunpack.c.l.b16 %v465
        %v2252 = vunpack.c.h.b16 %v465
        %v2253 = vunpack.c.l.b16 %v466
        %v2254 = vunpack.c.h.b16 %v466
        %v2255 = vunpack.c.l.b16 %v467
        %v2256 = vunpack.c.l.b16 %v468
        %v2257 = vunpack.c.h.b16 %v468
        %v2258 = vunpack.c.l.b16 %v469
        %v2259 = vunpack.c.h.b16 %v469
        %v2260 = vunpack.c.l.b16 %v470
        %v2261 = vunpack.c.h.b16 %v470
        %v2262 = vunpack.c.l.b16 %v471
        %v2263 = vunpack.c.h.b16 %v471
        %v2264 = vunpack.c.l.b16 %v472
        %v2265 = vunpack.c.l.b16 %v473
        %v2266 = vunpack.c.h.b16 %v473
        %v2267 = vunpack.c.l.b16 %v474
        %v2268 = vunpack.c.h.b16 %v474
        %v2269 = vunpack.c.l.b16 %v475
        %v2270 = vunpack.c.h.b16 %v475
        %v2271 = vunpack.c.l.b16 %v476
        %v2272 = vunpack.c.h.b16 %v476
        %v2273 = vunpack.c.l.b16 %v477
        %v2274 = vunpack.c.l.b16 %v478
        %v2275 = vunpack.c.h.b16 %v478
        %v2276 = vunpack.c.l.b16 %v479
        %v2277 = vunpack.c.h.b16 %v479
        %v2278 = vunpack.c.l.b16 %v480
        %v2279 = vunpack.c.h.b16 %v480
        %v2280 = vunpack.c.l.b16 %v481
        %v2281 = vunpack.c.h.b16 %v481
        %v2282 = vunpack.c.l.b16 %v482
        %v2283 = vunpack.c.l.b16 %v483
        %v2284 = vunpack.c.h.b16 %v483
        %v2285 = vunpack.c.l.b16 %v484
        %v2286 = vunpack.c.h.b16 %v484
        %v2287 = vunpack.c.l.b16 %v485
        %v2288 = vunpack.c.h.b16 %v485
        %v2289 = vunpack.c.l.b16 %v486
        %v2290 = vunpack.c.h.b16 %v486
        %v2291 = vunpack.c.l.b16 %v487
        %v2292 = vunpack.c.l.b16 %v488
        %v2293 = vunpack.c.h.b16 %v488
        %v2294 = vunpack.c.l.b16 %v489
        %v2295 = vunpack.c.h.b16 %v489
        %v2296 = vunpack.c.l.b16 %v490
        %v2297 = vunpack.c.h.b16 %v490
        %v2298 = vunpack.c.l.b16 %v491
        %v2299 = vunpack.c.h.b16 %v491
        %v2300 = vunpack.c.l.b16 %v492
        %v2301 = vunpack.c.l.b16 %v493
        %v2302 = vunpack.c.h.b16 %v493
        %v2303 = vunpack.c.l.b16 %v494
        %v2304 = vunpack.c.h.b16 %v494
        %v2305 = vunpack.c.l.b16 %v495
        %v2306 = vunpack.c.h.b16 %v495
        %v2307 = vunpack.c.l.b16 %v496
        %v2308 = vunpack.c.h.b16 %v496
        %v2309 = vunpack.c.l.b16 %v497
        %v2310 = vunpack.c.l.b16 %v498
        %v2311 = vunpack.c.h.b16 %v498
        %v2312 = vunpack.c.l.b16 %v499
        %v2313 = vunpack.c.h.b16 %v499
        %v2314 = vunpack.c.l.b16 %v500
        %v2315 = vunpack.c.h.b16 %v500
        %v2316 = vunpack.c.l.b16 %v501
        %v2317 = vunpack.c.h.b16 %v501
        %v2318 = vunpack.c.l.b16 %v502
        %v2319 = vunpack.c.l.b16 %v503
        %v2320 = vunpack.c.h.b16 %v503
        %v2321 = vunpack.c.l.b16 %v504
        %v2322 = vunpack.c.h.b16 %v504
        %v2323 = vunpack.c.l.b16 %v505
        %v2324 = vunpack.c.h.b16 %v505
        %v2325 = vunpack.c.l.b16 %v506
        %v2326 = vunpack.c.h.b16 %v506
        %v2327 = vunpack.c.l.b16 %v507
        %v2328 = vunpack.c.l.b16 %v508
        %v2329 = vunpack.c.h.b16 %v508
        %v2330 = vunpack.c.l.b16 %v509
        %v2331 = vunpack.c.h.b16 %v509
        %v2332 = vunpack.c.l.b16 %v510
        %v2333 = vunpack.c.h.b16 %v510
        %v2334 = vunpack.c.l.b16 %v511
        %v2335 = vunpack.c.h.b16 %v511
        %v2336 = vunpack.c.l.b16 %v512
        %v2337 = vunpack.c.l.b16 %v513
        %v2338 = vunpack.c.h.b16 %v513
        %v2339 = vunpack.c.l.b16 %v514
        %v2340 = vunpack.c.h.b16 %v514
        %v2341 = vunpack.c.l.b16 %v515
        %v2342 = vunpack.c.h.b16 %v515
        %v2343 = vunpack.c.l.b16 %v516
        %v2344 = vunpack.c.h.b16 %v516
        %v2345 = vunpack.c.l.b16 %v517
        %v2346 = vunpack.c.l.b16 %v518
        %v2347 = vunpack.c.h.b16 %v518
        %v2348 = vunpack.c.l.b16 %v519
        %v2349 = vunpack.c.h.b16 %v519
        %v2350 = vunpack.c.l.b16 %v520
        %v2351 = vunpack.c.h.b16 %v520
        %v2352 = vunpack.c.l.b16 %v521
        %v2353 = vunpack.c.h.b16 %v521
        %v2354 = vunpack.c.l.b16 %v522
        %v2355 = vunpack.c.l.b16 %v523
        %v2356 = vunpack.c.h.b16 %v523
        %v2357 = vunpack.c.l.b16 %v524
        %v2358 = vunpack.c.h.b16 %v524
        %v2359 = vunpack.c.l.b16 %v525
        %v2360 = vunpack.c.h.b16 %v525
        %v2361 = vunpack.c.l.b16 %v526
        %v2362 = vunpack.c.h.b16 %v526
        %v2363 = vunpack.c.l.b16 %v527
        %v2364 = vunpack.c.l.b16 %v528
        %v2365 = vunpack.c.h.b16 %v528
        %v2366 = vunpack.c.l.b16 %v529
        %v2367 = vunpack.c.h.b16 %v529
        %v2368 = vunpack.c.l.b16 %v530
        %v2369 = vunpack.c.h.b16 %v530
        %v2370 = vunpack.c.l.b16 %v531
        %v2371 = vunpack.c.h.b16 %v531
        %v2372 = vunpack.c.l.b16 %v532
        %v2373 = vunpack.c.l.b16 %v533
        %v2374 = vunpack.c.h.b16 %v533
        %v2375 = vunpack.c.l.b16 %v534
        %v2376 = vunpack.c.h.b16 %v534
        %v2377 = vunpack.c.l.b16 %v535
        %v2378 = vunpack.c.h.b16 %v535
        %v2379 = vunpack.c.l.b16 %v536
        %v2380 = vunpack.c.h.b16 %v536
        %v2381 = vunpack.c.l.b16 %v537
        %v2382 = vunpack.c.l.b16 %v538
        %v2383 = vunpack.c.h.b16 %v538
        %v2384 = vunpack.c.l.b16 %v539
        %v2385 = vunpack.c.h.b16 %v539
        %v2386 = vunpack.c.l.b16 %v540
        %v2387 = vunpack.c.h.b16 %v540
        %v2388 = vunpack.c.l.b16 %v541
        %v2389 = vunpack.c.h.b16 %v541
        %v2390 = vunpack.c.l.b16 %v542
        %v2391 = vunpack.c.l.b16 %v543
        %v2392 = vunpack.c.h.b16 %v543
        %v2393 = vunpack.c.l.b16 %v544
        %v2394 = vunpack.c.h.b16 %v544
        %v2395 = vunpack.c.l.b16 %v545
        %v2396 = vunpack.c.h.b16 %v545
        %v2397 = vunpack.c.l.b16 %v546
        %v2398 = vunpack.c.h.b16 %v546
        %v2399 = vunpack.c.l.b16 %v547
        %v2400 = vunpack.c.l.b16 %v548
        %v2401 = vunpack.c.h.b16 %v548
        %v2402 = vunpack.c.l.b16 %v549
        %v2403 = vunpack.c.h.b16 %v549
        %v2404 = vunpack.c.l.b16 %v550
        %v2405 = vunpack.c.h.b16 %v550
        %v2406 = vunpack.c.l.b16 %v551
        %v2407 = vunpack.c.h.b16 %v551
        %v2408 = vunpack.c.l.b16 %v552
        %v2409 = vunpack.c.l.b16 %v553
        %v2410 = vunpack.c.h.b16 %v553
        %v2411 = vunpack.c.l.b16 %v554
        %v2412 = vunpack.c.h.b16 %v554
        %v2413 = vunpack.c.l.b16 %v555
        %v2414 = vunpack.c.h.b16 %v555
        %v2415 = vunpack.c.l.b16 %v556
        %v2416 = vunpack.c.h.b16 %v556
        %v2417 = vunpack.c.l.b16 %v557
        %v2418 = vunpack.c.l.b16 %v558
        %v2419 = vunpack.c.h.b16 %v558
        %v2420 = vunpack.c.l.b16 %v559
        %v2421 = vunpack.c.h.b16 %v559
        %v2422 = vunpack.c.l.b16 %v560
        %v2423 = vunpack.c.h.b16 %v560
        %v2424 = vunpack.c.l.b16 %v561
        %v2425 = vunpack.c.h.b16 %v561
        %v2426 = vunpack.c.l.b16 %v562
        %v2427 = vunpack.c.l.b16 %v563
        %v2428 = vunpack.c.h.b16 %v563
        %v2429 = vunpack.c.l.b16 %v564
        %v2430 = vunpack.c.h.b16 %v564
        %v2431 = vunpack.c.l.b16 %v565
        %v2432 = vunpack.c.h.b16 %v565
        %v2433 = vunpack.c.l.b16 %v566
        %v2434 = vunpack.c.h.b16 %v566
        %v2435 = vunpack.c.l.b16 %v567
        %v2436 = vunpack.c.l.b16 %v568
        %v2437 = vunpack.c.h.b16 %v568
        %v2438 = vunpack.c.l.b16 %v569
        %v2439 = vunpack.c.h.b16 %v569
        %v2440 = vunpack.c.l.b16 %v570
        %v2441 = vunpack.c.h.b16 %v570
        %v2442 = vunpack.c.l.b16 %v571
        %v2443 = vunpack.c.h.b16 %v571
        %v2444 = vunpack.c.l.b16 %v572
        %v2445 = vunpack.c.l.b16 %v573
        %v2446 = vunpack.c.h.b16 %v573
        %v2447 = vunpack.c.l.b16 %v574
        %v2448 = vunpack.c.h.b16 %v574
        %v2449 = vunpack.c.l.b16 %v575
        %v2450 = vunpack.c.h.b16 %v575
        %v2451 = vunpack.c.l.b16 %v576
        %v2452 = vunpack.c.h.b16 %v576
        %v2453 = vunpack.c.l.b16 %v577
        %v2454 = vunpack.c.l.b16 %v578
        %v2455 = vunpack.c.h.b16 %v578
        %v2456 = vunpack.c.l.b16 %v579
        %v2457 = vunpack.c.h.b16 %v579
        %v2458 = vunpack.c.l.b16 %v580
        %v2459 = vunpack.c.h.b16 %v580
        %v2460 = vunpack.c.l.b16 %v581
        %v2461 = vunpack.c.h.b16 %v581
        %v2462 = vunpack.c.l.b16 %v582
        %v2463 = vunpack.c.l.b16 %v583
        %v2464 = vunpack.c.h.b16 %v583
        %v2465 = vunpack.c.l.b16 %v584
        %v2466 = vunpack.c.h.b16 %v584
        %v2467 = vunpack.c.l.b16 %v585
        %v2468 = vunpack.c.h.b16 %v585
        %v2469 = vunpack.c.l.b16 %v586
        %v2470 = vunpack.c.h.b16 %v586
        %v2471 = vunpack.c.l.b16 %v587
        %v2472 = vunpack.c.l.b16 %v588
        %v2473 = vunpack.c.h.b16 %v588
        %v2474 = vunpack.c.l.b16 %v589
        %v2475 = vunpack.c.h.b16 %v589
        %v2476 = vunpack.c.l.b16 %v590
        %v2477 = vunpack.c.h.b16 %v590
        %v2478 = vunpack.c.l.b16 %v591
        %v2479 = vunpack.c.h.b16 %v591
        %v2480 = vunpack.c.l.b16 %v592
        %v2481 = vunpack.c.l.b16 %v593
        %v2482 = vunpack.c.h.b16 %v593
        %v2483 = vunpack.c.l.b16 %v594
        %v2484 = vunpack.c.h.b16 %v594
        %v2485 = vunpack.c.l.b16 %v595
        %v2486 = vunpack.c.h.b16 %v595
        %v2487 = vunpack.c.l.b16 %v596
        %v2488 = vunpack.c.h.b16 %v596
        %v2489 = vunpack.c.l.b16 %v597
        %v2490 = vunpack.c.l.b16 %v598
        %v2491 = vunpack.c.h.b16 %v598
        %v2492 = vunpack.c.l.b16 %v599
        %v2493 = vunpack.c.h.b16 %v599
        %v2494 = vunpack.c.l.b16 %v600
        %v2495 = vunpack.c.h.b16 %v600
        %v2496 = vunpack.c.l.b16 %v601
        %v2497 = vunpack.c.h.b16 %v601
        %v2498 = vunpack.c.l.b16 %v602
        %v2499 = vunpack.c.l.b16 %v603
        %v2500 = vunpack.c.h.b16 %v603
        %v2501 = vunpack.c.l.b16 %v604
        %v2502 = vunpack.c.h.b16 %v604
        %v2503 = vunpack.c.l.b16 %v605
        %v2504 = vunpack.c.h.b16 %v605
        %v2505 = vunpack.c.l.b16 %v606
        %v2506 = vunpack.c.h.b16 %v606
        %v2507 = vunpack.c.l.b16 %v607
        %v2508 = vunpack.c.l.b16 %v608
        %v2509 = vunpack.c.h.b16 %v608
        %v2510 = vunpack.c.l.b16 %v609
        %v2511 = vunpack.c.h.b16 %v609
        %v2512 = vunpack.c.l.b16 %v610
        %v2513 = vunpack.c.h.b16 %v610
        %v2514 = vunpack.c.l.b16 %v611
        %v2515 = vunpack.c.h.b16 %v611
        %v2516 = vunpack.c.l.b16 %v612
        %v2517 = vunpack.c.l.b16 %v613
        %v2518 = vunpack.c.h.b16 %v613
        %v2519 = vunpack.c.l.b16 %v614
        %v2520 = vunpack.c.h.b16 %v614
        %v2521 = vunpack.c.l.b16 %v615
        %v2522 = vunpack.c.h.b16 %v615
        %v2523 = vunpack.c.l.b16 %v616
        %v2524 = vunpack.c.h.b16 %v616
        %v2525 = vunpack.c.l.b16 %v617
        %v2526 = vunpack.c.l.b16 %v618
        %v2527 = vunpack.c.h.b16 %v618
        %v2528 = vunpack.c.l.b16 %v619
        %v2529 = vunpack.c.h.b16 %v619
        %v2530 = vunpack.c.l.b16 %v620
        %v2531 = vunpack.c.h.b16 %v620
        %v2532 = vunpack.c.l.b16 %v621
        %v2533 = vunpack.c.h.b16 %v621
        %v2534 = vunpack.c.l.b16 %v622
        %v2535 = vunpack.c.l.b16 %v623
        %v2536 = vunpack.c.h.b16 %v623
        %v2537 = vunpack.c.l.b16 %v624
        %v2538 = vunpack.c.h.b16 %v624
        %v2539 = vunpack.c.l.b16 %v625
        %v2540 = vunpack.c.h.b16 %v625
        %v2541 = vunpack.c.l.b16 %v626
        %v2542 = vunpack.c.h.b16 %v626
        %v2543 = vunpack.c.l.b16 %v627
        %v2544 = vunpack.c.l.b16 %v628
        %v2545 = vunpack.c.h.b16 %v628
        %v2546 = vunpack.c.l.b16 %v629
        %v2547 = vunpack.c.h.b16 %v629
        %v2548 = vunpack.c.l.b16 %v630
        %v2549 = vunpack.c.h.b16 %v630
        %v2550 = vunpack.c.l.b16 %v631
        %v2551 = vunpack.c.h.b16 %v631
        %v2552 = vunpack.c.l.b16 %v632
        %v2553 = vunpack.c.l.b16 %v633
        %v2554 = vunpack.c.h.b16 %v633
        %v2555 = vunpack.c.l.b16 %v634
        %v2556 = vunpack.c.h.b16 %v634
        %v2557 = vunpack.c.l.b16 %v635
        %v2558 = vunpack.c.h.b16 %v635
        %v2559 = vunpack.c.l.b16 %v636
        %v2560 = vunpack.c.h.b16 %v636
        %v2561 = vunpack.c.l.b16 %v637
        %v2562 = vunpack.c.l.b16 %v638
        %v2563 = vunpack.c.h.b16 %v638
        %v2564 = vunpack.c.l.b16 %v639
        %v2565 = vunpack.c.h.b16 %v639
        %v2566 = vunpack.c.l.b16 %v640
        %v2567 = vunpack.c.h.b16 %v640
        %v2568 = vunpack.c.l.b16 %v641
        %v2569 = vunpack.c.h.b16 %v641
        %v2570 = vunpack.c.l.b16 %v642
        %v2571 = vunpack.c.l.b16 %v643
        %v2572 = vunpack.c.h.b16 %v643
        %v2573 = vunpack.c.l.b16 %v644
        %v2574 = vunpack.c.h.b16 %v644
        %v2575 = vunpack.c.l.b16 %v645
        %v2576 = vunpack.c.h.b16 %v645
        %v2577 = vunpack.c.l.b16 %v646
        %v2578 = vunpack.c.h.b16 %v646
        %v2579 = vunpack.c.l.b16 %v647
        %v2580 = vunpack.c.l.b16 %v648
        %v2581 = vunpack.c.h.b16 %v648
        %v2582 = vunpack.c.l.b16 %v649
        %v2583 = vunpack.c.h.b16 %v649
        %v2584 = vunpack.c.l.b16 %v650
        %v2585 = vunpack.c.h.b16 %v650
        %v2586 = vunpack.c.l.b16 %v651
        %v2587 = vunpack.c.h.b16 %v651
        %v2588 = vunpack.c.l.b16 %v652
        %v2589 = vunpack.c.l.b16 %v653
        %v2590 = vunpack.c.h.b16 %v653
        %v2591 = vunpack.c.l.b16 %v654
        %v2592 = vunpack.c.h.b16 %v654
        %v2593 = vunpack.c.l.b16 %v655
        %v2594 = vunpack.c.h.b16 %v655
        %v2595 = vunpack.c.l.b16 %v656
        %v2596 = vunpack.c.h.b16 %v656
        %v2597 = vunpack.c.l.b16 %v657
        %v2598 = vunpack.c.l.b16 %v658
        %v2599 = vunpack.c.h.b16 %v658
        %v2600 = vunpack.c.l.b16 %v659
        %v2601 = vunpack.c.h.b16 %v659
        %v2602 = vunpack.c.l.b16 %v660
        %v2603 = vunpack.c.h.b16 %v660
        %v2604 = vunpack.c.l.b16 %v661
        %v2605 = vunpack.c.h.b16 %v661
        %v2606 = vunpack.c.l.b16 %v662
        %v2607 = vunpack.c.l.b16 %v663
        %v2608 = vunpack.c.h.b16 %v663
        %v2609 = vunpack.c.l.b16 %v664
        %v2610 = vunpack.c.h.b16 %v664
        %v2611 = vunpack.c.l.b16 %v665
        %v2612 = vunpack.c.h.b16 %v665
        %v2613 = vunpack.c.l.b16 %v666
        %v2614 = vunpack.c.h.b16 %v666
        %v2615 = vunpack.c.l.b16 %v667
        %v2616 = vunpack.c.l.b16 %v668
        %v2617 = vunpack.c.h.b16 %v668
        %v2618 = vunpack.c.l.b16 %v669
        %v2619 = vunpack.c.h.b16 %v669
        %v2620 = vunpack.c.l.b16 %v670
        %v2621 = vunpack.c.h.b16 %v670
        %v2622 = vunpack.c.l.b16 %v671
        %v2623 = vunpack.c.h.b16 %v671
        %v2624 = vunpack.c.l.b16 %v672
        %v2625 = vunpack.c.l.b16 %v673
        %v2626 = vunpack.c.h.b16 %v673
        %v2627 = vunpack.c.l.b16 %v674
        %v2628 = vunpack.c.h.b16 %v674
        %v2629 = vunpack.c.l.b16 %v675
        %v2630 = vunpack.c.h.b16 %v675
        %v2631 = vunpack.c.l.b16 %v676
        %v2632 = vunpack.c.h.b16 %v676
        %v2633 = vunpack.c.l.b16 %v677
        %v2634 = vunpack.c.l.b16 %v678
        %v2635 = vunpack.c.h.b16 %v678
        %v2636 = vunpack.c.l.b16 %v679
        %v2637 = vunpack.c.h.b16 %v679
        %v2638 = vunpack.c.l.b16 %v680
        %v2639 = vunpack.c.h.b16 %v680
        %v2640 = vunpack.c.l.b16 %v681
        %v2641 = vunpack.c.h.b16 %v681
        %v2642 = vunpack.c.l.b16 %v682
        %v2643 = vunpack.c.l.b16 %v683
        %v2644 = vunpack.c.h.b16 %v683
        %v2645 = vunpack.c.l.b16 %v684
        %v2646 = vunpack.c.h.b16 %v684
        %v2647 = vunpack.c.l.b16 %v685
        %v2648 = vunpack.c.h.b16 %v685
        %v2649 = vunpack.c.l.b16 %v686
        %v2650 = vunpack.c.h.b16 %v686
        %v2651 = vunpack.c.l.b16 %v687
        %v2652 = vunpack.c.l.b16 %v688
        %v2653 = vunpack.c.h.b16 %v688
        %v2654 = vunpack.c.l.b16 %v689
        %v2655 = vunpack.c.h.b16 %v689
        %v2656 = vunpack.c.l.b16 %v690
        %v2657 = vunpack.c.h.b16 %v690
        %v2658 = vunpack.c.l.b16 %v691
        %v2659 = vunpack.c.h.b16 %v691
        %v2660 = vunpack.c.l.b16 %v692
        %v2661 = vunpack.c.l.b16 %v693
        %v2662 = vunpack.c.h.b16 %v693
        %v2663 = vunpack.c.l.b16 %v694
        %v2664 = vunpack.c.h.b16 %v694
        %v2665 = vunpack.c.l.b16 %v695
        %v2666 = vunpack.c.h.b16 %v695
        %v2667 = vunpack.c.l.b16 %v696
        %v2668 = vunpack.c.h.b16 %v696
        %v2669 = vunpack.c.l.b16 %v697
        %v2670 = vunpack.c.l.b16 %v698
        %v2671 = vunpack.c.h.b16 %v698
        %v2672 = vunpack.c.l.b16 %v699
        %v2673 = vunpack.c.h.b16 %v699
        %v2674 = vunpack.c.l.b16 %v700
        %v2675 = vunpack.c.h.b16 %v700
        %v2676 = vunpack.c.l.b16 %v701
        %v2677 = vunpack.c.h.b16 %v701
        %v2678 = vunpack.c.l.b16 %v702
        %v2679 = vunpack.c.l.b16 %v703
        %v2680 = vunpack.c.h.b16 %v703
        %v2681 = vunpack.c.l.b16 %v704
        %v2682 = vunpack.c.h.b16 %v704
        %v2683 = vunpack.c.l.b16 %v705
        %v2684 = vunpack.c.h.b16 %v705
        %v2685 = vunpack.c.l.b16 %v706
        %v2686 = vunpack.c.h.b16 %v706
        %v2687 = vunpack.c.l.b16 %v707
        %v2688 = vunpack.c.l.b16 %v708
        %v2689 = vunpack.c.h.b16 %v708
        %v2690 = vunpack.c.l.b16 %v709
        %v2691 = vunpack.c.h.b16 %v709
        %v2692 = vunpack.c.l.b16 %v710
        %v2693 = vunpack.c.h.b16 %v710
        %v2694 = vunpack.c.l.b16 %v711
        %v2695 = vunpack.c.h.b16 %v711
        %v2696 = vunpack.c.l.b16 %v712
        %v2697 = vunpack.c.l.b16 %v713
        %v2698 = vunpack.c.h.b16 %v713
        %v2699 = vunpack.c.l.b16 %v714
        %v2700 = vunpack.c.h.b16 %v714
        %v2701 = vunpack.c.l.b16 %v715
        %v2702 = vunpack.c.h.b16 %v715
        %v2703 = vunpack.c.l.b16 %v716
        %v2704 = vunpack.c.h.b16 %v716
        %v2705 = vunpack.c.l.b16 %v717
        %v2706 = vunpack.c.l.b16 %v718
        %v2707 = vunpack.c.h.b16 %v718
        %v2708 = vunpack.c.l.b16 %v719
        %v2709 = vunpack.c.h.b16 %v719
        %v2710 = vunpack.c.l.b16 %v720
        %v2711 = vunpack.c.h.b16 %v720
        %v2712 = vunpack.c.l.b16 %v721
        %v2713 = vunpack.c.h.b16 %v721
        %v2714 = vunpack.c.l.b16 %v722
        %v2715 = vunpack.c.l.b16 %v723
        %v2716 = vunpack.c.h.b16 %v723
        %v2717 = vunpack.c.l.b16 %v724
        %v2718 = vunpack.c.h.b16 %v724
        %v2719 = vunpack.c.l.b16 %v725
        %v2720 = vunpack.c.h.b16 %v725
        %v2721 = vunpack.c.l.b16 %v726
        %v2722 = vunpack.c.h.b16 %v726
        %v2723 = vunpack.c.l.b16 %v727
        %v2724 = vunpack.c.l.b16 %v728
        %v2725 = vunpack.c.h.b16 %v728
        %v2726 = vunpack.c.l.b16 %v729
        %v2727 = vunpack.c.h.b16 %v729
        %v2728 = vunpack.c.l.b16 %v730
        %v2729 = vunpack.c.h.b16 %v730
        %v2730 = vunpack.c.l.b16 %v731
        %v2731 = vunpack.c.h.b16 %v731
        %v2732 = vunpack.c.l.b16 %v732
        %v2733 = vunpack.c.l.b16 %v733
        %v2734 = vunpack.c.h.b16 %v733
        %v2735 = vunpack.c.l.b16 %v734
        %v2736 = vunpack.c.h.b16 %v734
        %v2737 = vunpack.c.l.b16 %v735
        %v2738 = vunpack.c.h.b16 %v735
        %v2739 = vunpack.c.l.b16 %v736
        %v2740 = vunpack.c.h.b16 %v736
        %v2741 = vunpack.c.l.b16 %v737
        %v2742 = vunpack.c.l.b16 %v738
        %v2743 = vunpack.c.h.b16 %v738
        %v2744 = vunpack.c.l.b16 %v739
        %v2745 = vunpack.c.h.b16 %v739
        %v2746 = vunpack.c.l.b16 %v740
        %v2747 = vunpack.c.h.b16 %v740
        %v2748 = vunpack.c.l.b16 %v741
        %v2749 = vunpack.c.h.b16 %v741
        %v2750 = vunpack.c.l.b16 %v742
        %v2751 = vunpack.c.l.b16 %v743
        %v2752 = vunpack.c.h.b16 %v743
        %v2753 = vunpack.c.l.b16 %v744
        %v2754 = vunpack.c.h.b16 %v744
        %v2755 = vunpack.c.l.b16 %v745
        %v2756 = vunpack.c.h.b16 %v745
        %v2757 = vunpack.c.l.b16 %v746
        %v2758 = vunpack.c.h.b16 %v746
        %v2759 = vunpack.c.l.b16 %v747
        %v2760 = vunpack.c.l.b16 %v748
        %v2761 = vunpack.c.h.b16 %v748
        %v2762 = vunpack.c.l.b16 %v749
        %v2763 = vunpack.c.h.b16 %v749
        %v2764 = vunpack.c.l.b16 %v750
        %v2765 = vunpack.c.h.b16 %v750
        %v2766 = vunpack.c.l.b16 %v751
        %v2767 = vunpack.c.h.b16 %v751
        %v2768 = vunpack.c.l.b16 %v752
        %v2769 = vunpack.c.l.b16 %v753
        %v2770 = vunpack.c.h.b16 %v753
        %v2771 = vunpack.c.l.b16 %v754
        %v2772 = vunpack.c.h.b16 %v754
        %v2773 = vunpack.c.l.b16 %v755
        %v2774 = vunpack.c.h.b16 %v755
        %v2775 = vunpack.c.l.b16 %v756
        %v2776 = vunpack.c.h.b16 %v756
        %v2777 = vunpack.c.l.b16 %v757
        %v2778 = vunpack.c.l.b16 %v758
        %v2779 = vunpack.c.h.b16 %v758
        %v2780 = vunpack.c.l.b16 %v759
        %v2781 = vunpack.c.h.b16 %v759
        %v2782 = vunpack.c.l.b16 %v760
        %v2783 = vunpack.c.h.b16 %v760
        %v2784 = vunpack.c.l.b16 %v761
        %v2785 = vunpack.c.h.b16 %v761
        %v2786 = vunpack.c.l.b16 %v762
        %v2787 = vunpack.c.l.b16 %v763
        %v2788 = vunpack.c.h.b16 %v763
        %v2789 = vunpack.c.l.b16 %v764
        %v2790 = vunpack.c.h.b16 %v764
        %v2791 = vunpack.c.l.b16 %v765
        %v2792 = vunpack.c.h.b16 %v765
        %v2793 = vunpack.c.l.b16 %v766
        %v2794 = vunpack.c.h.b16 %v766
        %v2795 = vunpack.c.l.b16 %v767
        %v2796 = vunpack.c.l.b16 %v768
        %v2797 = vunpack.c.h.b16 %v768
        %v2798 = vunpack.c.l.b16 %v769
        %v2799 = vunpack.c.h.b16 %v769
        %v2800 = vunpack.c.l.b16 %v770
        %v2801 = vunpack.c.h.b16 %v770
        %v2802 = vunpack.c.l.b16 %v771
        %v2803 = vunpack.c.h.b16 %v771
        %v2804 = vunpack.c.l.b16 %v772
        %v2805 = vunpack.c.l.b16 %v773
        %v2806 = vunpack.c.h.b16 %v773
        %v2807 = vunpack.c.l.b16 %v774
        %v2808 = vunpack.c.h.b16 %v774
        %v2809 = vunpack.c.l.b16 %v775
        %v2810 = vunpack.c.h.b16 %v775
        %v2811 = vunpack.c.l.b16 %v776
        %v2812 = vunpack.c.h.b16 %v776
        %v2813 = vunpack.c.l.b16 %v777
        %v2814 = vunpack.c.l.b16 %v778
        %v2815 = vunpack.c.h.b16 %v778
        %v2816 = vunpack.c.l.b16 %v779
        %v2817 = vunpack.c.h.b16 %v779
        %v2818 = vunpack.c.l.b16 %v780
        %v2819 = vunpack.c.h.b16 %v780
        %v2820 = vunpack.c.l.b16 %v781
        %v2821 = vunpack.c.h.b16 %v781
        %v2822 = vunpack.c.l.b16 %v782
        %v2823 = vunpack.c.l.b16 %v783
        %v2824 = vunpack.c.h.b16 %v783
        %v2825 = vunpack.c.l.b16 %v784
        %v2826 = vunpack.c.h.b16 %v784
        %v2827 = vunpack.c.l.b16 %v785
        %v2828 = vunpack.c.h.b16 %v785
        %v2829 = vunpack.c.l.b16 %v786
        %v2830 = vunpack.c.h.b16 %v786
        %v2831 = vunpack.c.l.b16 %v787
        %v2832 = vunpack.c.l.b16 %v788
        %v2833 = vunpack.c.h.b16 %v788
        %v2834 = vunpack.c.l.b16 %v789
        %v2835 = vunpack.c.h.b16 %v789
        %v2836 = vunpack.c.l.b16 %v790
        %v2837 = vunpack.c.h.b16 %v790
        %v2838 = vunpack.c.l.b16 %v791
        %v2839 = vunpack.c.h.b16 %v791
        %v2840 = vunpack.c.l.b16 %v792
        %v2841 = vunpack.c.l.b16 %v793
        %v2842 = vunpack.c.h.b16 %v793
        %v2843 = vunpack.c.l.b16 %v794
        %v2844 = vunpack.c.h.b16 %v794
        %v2845 = vunpack.c.l.b16 %v795
        %v2846 = vunpack.c.h.b16 %v795
        %v2847 = vunpack.c.l.b16 %v796
        %v2848 = vunpack.c.h.b16 %v796
        %v2849 = vunpack.c.l.b16 %v797
        %v2850 = vunpack.c.l.b16 %v798
        %v2851 = vunpack.c.h.b16 %v798
        %v2852 = vunpack.c.l.b16 %v799
        %v2853 = vunpack.c.h.b16 %v799
        %v2854 = vunpack.c.l.b16 %v800
        %v2855 = vunpack.c.h.b16 %v800
        %v2856 = vunpack.c.l.b16 %v801
        %v2857 = vunpack.c.h.b16 %v801
        %v2858 = vunpack.c.l.b16 %v802
        %v2859 = vunpack.c.l.b16 %v803
        %v2860 = vunpack.c.h.b16 %v803
        %v2861 = vunpack.c.l.b16 %v804
        %v2862 = vunpack.c.h.b16 %v804
        %v2863 = vunpack.c.l.b16 %v805
        %v2864 = vunpack.c.h.b16 %v805
        %v2865 = vunpack.c.l.b16 %v806
        %v2866 = vunpack.c.h.b16 %v806
        %v2867 = vunpack.c.l.b16 %v807
        %v2868 = vunpack.c.l.b16 %v808
        %v2869 = vunpack.c.h.b16 %v808
        %v2870 = vunpack.c.l.b16 %v809
        %v2871 = vunpack.c.h.b16 %v809
        %v2872 = vunpack.c.l.b16 %v810
        %v2873 = vunpack.c.h.b16 %v810
        %v2874 = vunpack.c.l.b16 %v811
        %v2875 = vunpack.c.h.b16 %v811
        %v2876 = vunpack.c.l.b16 %v812
        %v2877 = vunpack.c.l.b16 %v813
        %v2878 = vunpack.c.h.b16 %v813
        %v2879 = vunpack.c.l.b16 %v814
        %v2880 = vunpack.c.h.b16 %v814
        %v2881 = vunpack.c.l.b16 %v815
        %v2882 = vunpack.c.h.b16 %v815
        %v2883 = vunpack.c.l.b16 %v816
        %v2884 = vunpack.c.h.b16 %v816
        %v2885 = vunpack.c.l.b16 %v817
        %v2886 = vunpack.c.l.b16 %v818
        %v2887 = vunpack.c.h.b16 %v818
        %v2888 = vunpack.c.l.b16 %v819
        %v2889 = vunpack.c.h.b16 %v819
        %v2890 = vunpack.c.l.b16 %v820
        %v2891 = vunpack.c.h.b16 %v820
        %v2892 = vunpack.c.l.b16 %v821
        %v2893 = vunpack.c.h.b16 %v821
        %v2894 = vunpack.c.l.b16 %v822
        %v2895 = vunpack.c.l.b16 %v823
        %v2896 = vunpack.c.h.b16 %v823
        %v2897 = vunpack.c.l.b16 %v824
        %v2898 = vunpack.c.h.b16 %v824
        %v2899 = vunpack.c.l.b16 %v825
        %v2900 = vunpack.c.h.b16 %v825
        %v2901 = vunpack.c.l.b16 %v826
        %v2902 = vunpack.c.h.b16 %v826
        %v2903 = vunpack.c.l.b16 %v827
        %v2904 = vunpack.c.l.b16 %v828
        %v2905 = vunpack.c.h.b16 %v828
        %v2906 = vunpack.c.l.b16 %v829
        %v2907 = vunpack.c.h.b16 %v829
        %v2908 = vunpack.c.l.b16 %v830
        %v2909 = vunpack.c.h.b16 %v830
        %v2910 = vunpack.c.l.b16 %v831
        %v2911 = vunpack.c.h.b16 %v831
        %v2912 = vunpack.c.l.b16 %v832
        %v2913 = vunpack.c.l.b16 %v833
        %v2914 = vunpack.c.h.b16 %v833
        %v2915 = vunpack.c.l.b16 %v834
        %v2916 = vunpack.c.h.b16 %v834
        %v2917 = vunpack.c.l.b16 %v835
        %v2918 = vunpack.c.h.b16 %v835
        %v2919 = vunpack.c.l.b16 %v836
        %v2920 = vunpack.c.h.b16 %v836
        %v2921 = vunpack.c.l.b16 %v837
        %v2922 = vunpack.c.l.b16 %v838
        %v2923 = vunpack.c.h.b16 %v838
        %v2924 = vunpack.c.l.b16 %v839
        %v2925 = vunpack.c.h.b16 %v839
        %v2926 = vunpack.c.l.b16 %v840
        %v2927 = vunpack.c.h.b16 %v840
        %v2928 = vunpack.c.l.b16 %v841
        %v2929 = vunpack.c.h.b16 %v841
        %v2930 = vunpack.c.l.b16 %v842
        %v2931 = vunpack.c.l.b16 %v843
        %v2932 = vunpack.c.h.b16 %v843
        %v2933 = vunpack.c.l.b16 %v844
        %v2934 = vunpack.c.h.b16 %v844
        %v2935 = vunpack.c.l.b16 %v845
        %v2936 = vunpack.c.h.b16 %v845
        %v2937 = vunpack.c.l.b16 %v846
        %v2938 = vunpack.c.h.b16 %v846
        %v2939 = vunpack.c.l.b16 %v847
        %v2940 = vunpack.c.l.b16 %v848
        %v2941 = vunpack.c.h.b16 %v848
        %v2942 = vunpack.c.l.b16 %v849
        %v2943 = vunpack.c.h.b16 %v849
        %v2944 = vunpack.c.l.b16 %v850
        %v2945 = vunpack.c.h.b16 %v850
        %v2946 = vunpack.c.l.b16 %v851
        %v2947 = vunpack.c.h.b16 %v851
        %v2948 = vunpack.c.l.b16 %v852
        %v2949 = vunpack.c.l.b16 %v853
        %v2950 = vunpack.c.h.b16 %v853
        %v2951 = vunpack.c.l.b16 %v854
        %v2952 = vunpack.c.h.b16 %v854
        %v2953 = vunpack.c.l.b16 %v855
        %v2954 = vunpack.c.h.b16 %v855
        %v2955 = vunpack.c.l.b16 %v856
        %v2956 = vunpack.c.h.b16 %v856
        %v2957 = vunpack.c.l.b16 %v857
        %v2958 = vunpack.c.l.b16 %v858
        %v2959 = vunpack.c.h.b16 %v858
        %v2960 = vunpack.c.l.b16 %v859
        %v2961 = vunpack.c.h.b16 %v859
        %v2962 = vunpack.c.l.b16 %v860
        %v2963 = vunpack.c.h.b16 %v860
        %v2964 = vunpack.c.l.b16 %v861
        %v2965 = vunpack.c.h.b16 %v861
        %v2966 = vunpack.c.l.b16 %v862
        %v2967 = vunpack.c.l.b16 %v863
        %v2968 = vunpack.c.h.b16 %v863
        %v2969 = vunpack.c.l.b16 %v864
        %v2970 = vunpack.c.h.b16 %v864
        %v2971 = vunpack.c.l.b16 %v865
        %v2972 = vunpack.c.h.b16 %v865
        %v2973 = vunpack.c.l.b16 %v866
        %v2974 = vunpack.c.h.b16 %v866
        %v2975 = vunpack.c.l.b16 %v867
        %v2976 = vunpack.c.l.b16 %v868
        %v2977 = vunpack.c.h.b16 %v868
        %v2978 = vunpack.c.l.b16 %v869
        %v2979 = vunpack.c.h.b16 %v869
        %v2980 = vunpack.c.l.b16 %v870
        %v2981 = vunpack.c.h.b16 %v870
        %v2982 = vunpack.c.l.b16 %v871
        %v2983 = vunpack.c.h.b16 %v871
        %v2984 = vunpack.c.l.b16 %v872
        %v2985 = vunpack.c.l.b16 %v873
        %v2986 = vunpack.c.h.b16 %v873
        %v2987 = vunpack.c.l.b16 %v874
        %v2988 = vunpack.c.h.b16 %v874
        %v2989 = vunpack.c.l.b16 %v875
        %v2990 = vunpack.c.h.b16 %v875
        %v2991 = vunpack.c.l.b16 %v876
        %v2992 = vunpack.c.h.b16 %v876
        %v2993 = vunpack.c.l.b16 %v877
        %v2994 = vunpack.c.l.b16 %v878
        %v2995 = vunpack.c.h.b16 %v878
        %v2996 = vunpack.c.l.b16 %v879
        %v2997 = vunpack.c.h.b16 %v879
        %v2998 = vunpack.c.l.b16 %v880
        %v2999 = vunpack.c.h.b16 %v880
        %v3000 = vunpack.c.l.b16 %v881
        %v3001 = vunpack.c.h.b16 %v881
        %v3002 = vunpack.c.l.b16 %v882
        %v3003 = vunpack.c.l.b16 %v883
        %v3004 = vunpack.c.h.b16 %v883
        %v3005 = vunpack.c.l.b16 %v884
        %v3006 = vunpack.c.h.b16 %v884
        %v3007 = vunpack.c.l.b16 %v885
        %v3008 = vunpack.c.h.b16 %v885
        %v3009 = vunpack.c.l.b16 %v886
        %v3010 = vunpack.c.h.b16 %v886
        %v3011 = vunpack.c.l.b16 %v887
        %v3012 = vunpack.c.l.b16 %v888
        %v3013 = vunpack.c.h.b16 %v888
        %v3014 = vunpack.c.l.b16 %v889
        %v3015 = vunpack.c.h.b16 %v889
        %v3016 = vunpack.c.l.b16 %v890
        %v3017 = vunpack.c.h.b16 %v890
        %v3018 = vunpack.c.l.b16 %v891
        %v3019 = vunpack.c.h.b16 %v891
        %v3020 = vunpack.c.l.b16 %v892
        %v3021 = vunpack.c.l.b16 %v893
        %v3022 = vunpack.c.h.b16 %v893
        %v3023 = vunpack.c.l.b16 %v894
        %v3024 = vunpack.c.h.b16 %v894
        %v3025 = vunpack.c.l.b16 %v895
        %v3026 = vunpack.c.h.b16 %v895
        %v3027 = vunpack.c.l.b16 %v896
        %v3028 = vunpack.c.h.b16 %v896
        %v3029 = vunpack.c.l.b16 %v897
        %v3030 = vunpack.c.l.b16 %v898
        %v3031 = vunpack.c.h.b16 %v898
        %v3032 = vunpack.c.l.b16 %v899
        %v3033 = vunpack.c.h.b16 %v899
        %v3034 = vunpack.c.l.b16 %v900
        %v3035 = vunpack.c.h.b16 %v900
        %v3036 = vunpack.c.l.b16 %v901
        %v3037 = vunpack.c.h.b16 %v901
        %v3038 = vunpack.c.l.b16 %v902
        %v3039 = vunpack.c.l.b16 %v903
        %v3040 = vunpack.c.h.b16 %v903
        %v3041 = vunpack.c.l.b16 %v904
        %v3042 = vunpack.c.h.b16 %v904
        %v3043 = vunpack.c.l.b16 %v905
        %v3044 = vunpack.c.h.b16 %v905
        %v3045 = vunpack.c.l.b16 %v906
        %v3046 = vunpack.c.h.b16 %v906
        %v3047 = vunpack.c.l.b16 %v907
        %v3048 = vunpack.c.l.b16 %v908
        %v3049 = vunpack.c.h.b16 %v908
        %v3050 = vunpack.c.l.b16 %v909
        %v3051 = vunpack.c.h.b16 %v909
        %v3052 = vunpack.c.l.b16 %v910
        %v3053 = vunpack.c.h.b16 %v910
        %v3054 = vunpack.c.l.b16 %v911
        %v3055 = vunpack.c.h.b16 %v911
        %v3056 = vunpack.c.l.b16 %v912
        %v3057 = vunpack.c.l.b16 %v913
        %v3058 = vunpack.c.h.b16 %v913
        %v3059 = vunpack.c.l.b16 %v914
        %v3060 = vunpack.c.h.b16 %v914
        %v3061 = vunpack.c.l.b16 %v915
        %v3062 = vunpack.c.h.b16 %v915
        %v3063 = vunpack.c.l.b16 %v916
        %v3064 = vunpack.c.h.b16 %v916
        %v3065 = vunpack.c.l.b16 %v917
        %v3066 = vunpack.c.l.b16 %v918
        %v3067 = vunpack.c.h.b16 %v918
        %v3068 = vunpack.c.l.b16 %v919
        %v3069 = vunpack.c.h.b16 %v919
        %v3070 = vunpack.c.l.b16 %v920
        %v3071 = vunpack.c.h.b16 %v920
        %v3072 = vunpack.c.l.b16 %v921
        %v3073 = vunpack.c.h.b16 %v921
        %v3074 = vunpack.c.l.b16 %v922
        %v3075 = vunpack.c.l.b16 %v923
        %v3076 = vunpack.c.h.b16 %v923
        %v3077 = vunpack.c.l.b16 %v924
        %v3078 = vunpack.c.h.b16 %v924
        %v3079 = vunpack.c.l.b16 %v925
        %v3080 = vunpack.c.h.b16 %v925
        %v3081 = vunpack.c.l.b16 %v926
        %v3082 = vunpack.c.h.b16 %v926
        %v3083 = vunpack.c.l.b16 %v927
        %v3084 = vunpack.c.l.b16 %v928
        %v3085 = vunpack.c.h.b16 %v928
        %v3086 = vunpack.c.l.b16 %v929
        %v3087 = vunpack.c.h.b16 %v929
        %v3088 = vunpack.c.l.b16 %v930
        %v3089 = vunpack.c.h.b16 %v930
        %v3090 = vunpack.c.l.b16 %v931
        %v3091 = vunpack.c.h.b16 %v931
        %v3092 = vunpack.c.l.b16 %v932
        %v3093 = vunpack.c.l.b16 %v933
        %v3094 = vunpack.c.h.b16 %v933
        %v3095 = vunpack.c.l.b16 %v934
        %v3096 = vunpack.c.h.b16 %v934
        %v3097 = vunpack.c.l.b16 %v935
        %v3098 = vunpack.c.h.b16 %v935
        %v3099 = vunpack.c.l.b16 %v936
        %v3100 = vunpack.c.h.b16 %v936
        %v3101 = vunpack.c.l.b16 %v937
        %v3102 = vunpack.c.l.b16 %v938
        %v3103 = vunpack.c.h.b16 %v938
        %v3104 = vunpack.c.l.b16 %v939
        %v3105 = vunpack.c.h.b16 %v939
        %v3106 = vunpack.c.l.b16 %v940
        %v3107 = vunpack.c.h.b16 %v940
        %v3108 = vunpack.c.l.b16 %v941
        %v3109 = vunpack.c.h.b16 %v941
        %v3110 = vunpack.c.l.b16 %v942
        %v3111 = vunpack.c.l.b16 %v943
        %v3112 = vunpack.c.h.b16 %v943
        %v3113 = vunpack.c.l.b16 %v944
        %v3114 = vunpack.c.h.b16 %v944
        %v3115 = vunpack.c.l.b16 %v945
        %v3116 = vunpack.c.h.b16 %v945
        %v3117 = vunpack.c.l.b16 %v946
        %v3118 = vunpack.c.h.b16 %v946
        %v3119 = vunpack.c.l.b16 %v947
        %v3120 = vunpack.c.l.b16 %v948
        %v3121 = vunpack.c.h.b16 %v948
        %v3122 = vunpack.c.l.b16 %v949
        %v3123 = vunpack.c.h.b16 %v949
        %v3124 = vunpack.c.l.b16 %v950
        %v3125 = vunpack.c.h.b16 %v950
        %v3126 = vunpack.c.l.b16 %v951
        %v3127 = vunpack.c.h.b16 %v951
        %v3128 = vunpack.c.l.b16 %v952
        %v3129 = vunpack.c.l.b16 %v953
        %v3130 = vunpack.c.h.b16 %v953
        %v3131 = vunpack.c.l.b16 %v954
        %v3132 = vunpack.c.h.b16 %v954
        %v3133 = vunpack.c.l.b16 %v955
        %v3134 = vunpack.c.h.b16 %v955
        %v3135 = vunpack.c.l.b16 %v956
        %v3136 = vunpack.c.h.b16 %v956
        %v3137 = vunpack.c.l.b16 %v957
        %v3138 = vunpack.c.l.b16 %v958
        %v3139 = vunpack.c.h.b16 %v958
        %v3140 = vunpack.c.l.b16 %v959
        %v3141 = vunpack.c.h.b16 %v959
        %v3142 = vunpack.c.l.b16 %v960
        %v3143 = vunpack.c.h.b16 %v960
        %v3144 = vunpack.c.l.b16 %v961
        %v3145 = vunpack.c.h.b16 %v961
        %v3146 = vunpack.c.l.b16 %v962
        %v3147 = vunpack.c.l.b16 %v963
        %v3148 = vunpack.c.h.b16 %v963
        %v3149 = vunpack.c.l.b16 %v964
        %v3150 = vunpack.c.h.b16 %v964
        %v3151 = vunpack.c.l.b16 %v965
        %v3152 = vunpack.c.h.b16 %v965
        %v3153 = vunpack.c.l.b16 %v966
        %v3154 = vunpack.c.h.b16 %v966
        %v3155 = vunpack.c.l.b16 %v967
        %v3156 = vunpack.c.l.b16 %v968
        %v3157 = vunpack.c.h.b16 %v968
        %v3158 = vunpack.c.l.b16 %v969
        %v3159 = vunpack.c.h.b16 %v969
        %v3160 = vunpack.c.l.b16 %v970
        %v3161 = vunpack.c.h.b16 %v970
        %v3162 = vunpack.c.l.b16 %v971
        %v3163 = vunpack.c.h.b16 %v971
        %v3164 = vunpack.c.l.b16 %v972
        %v3165 = vunpack.c.l.b16 %v973
        %v3166 = vunpack.c.h.b16 %v973
        %v3167 = vunpack.c.l.b16 %v974
        %v3168 = vunpack.c.h.b16 %v974
        %v3169 = vunpack.c.l.b16 %v975
        %v3170 = vunpack.c.h.b16 %v975
        %v3171 = vunpack.c.l.b16 %v976
        %v3172 = vunpack.c.h.b16 %v976
        %v3173 = vunpack.c.l.b16 %v977
        %v3174 = vunpack.c.l.b16 %v978
        %v3175 = vunpack.c.h.b16 %v978
        %v3176 = vunpack.c.l.b16 %v979
        %v3177 = vunpack.c.h.b16 %v979
        %v3178 = vunpack.c.l.b16 %v980
        %v3179 = vunpack.c.h.b16 %v980
        %v3180 = vunpack.c.l.b16 %v981
        %v3181 = vunpack.c.h.b16 %v981
        %v3182 = vunpack.c.l.b16 %v982
        %v3183 = vunpack.c.l.b16 %v983
        %v3184 = vunpack.c.h.b16 %v983
        %v3185 = vunpack.c.l.b16 %v984
        %v3186 = vunpack.c.h.b16 %v984
        %v3187 = vunpack.c.l.b16 %v985
        %v3188 = vunpack.c.h.b16 %v985
        %v3189 = vunpack.c.l.b16 %v986
        %v3190 = vunpack.c.h.b16 %v986
        %v3191 = vunpack.c.l.b16 %v987
        %v3192 = vunpack.c.l.b16 %v988
        %v3193 = vunpack.c.h.b16 %v988
        %v3194 = vunpack.c.l.b16 %v989
        %v3195 = vunpack.c.h.b16 %v989
        %v3196 = vunpack.c.l.b16 %v990
        %v3197 = vunpack.c.h.b16 %v990
        %v3198 = vunpack.c.l.b16 %v991
        %v3199 = vunpack.c.h.b16 %v991
        %v3200 = vunpack.c.l.b16 %v992
        %v3201 = vunpack.c.l.b16 %v993
        %v3202 = vunpack.c.h.b16 %v993
        %v3203 = vunpack.c.l.b16 %v994
        %v3204 = vunpack.c.h.b16 %v994
        %v3205 = vunpack.c.l.b16 %v995
        %v3206 = vunpack.c.h.b16 %v995
        %v3207 = vunpack.c.l.b16 %v996
        %v3208 = vunpack.c.h.b16 %v996
        %v3209 = vunpack.c.l.b16 %v997
        %v3210 = vunpack.c.l.b16 %v998
        %v3211 = vunpack.c.h.b16 %v998
        %v3212 = vunpack.c.l.b16 %v999
        %v3213 = vunpack.c.h.b16 %v999
        %v3214 = vunpack.c.l.b16 %v1000
        %v3215 = vunpack.c.h.b16 %v1000
        %v3216 = vunpack.c.l.b16 %v1001
        %v3217 = vunpack.c.h.b16 %v1001
        %v3218 = vunpack.c.l.b16 %v1002
        %v3219 = vunpack.c.l.b16 %v1003
        %v3220 = vunpack.c.h.b16 %v1003
        %v3221 = vunpack.c.l.b16 %v1004
        %v3222 = vunpack.c.h.b16 %v1004
        %v3223 = vunpack.c.l.b16 %v1005
        %v3224 = vunpack.c.h.b16 %v1005
        %v3225 = vunpack.c.l.b16 %v1006
        %v3226 = vunpack.c.h.b16 %v1006
        %v3227 = vunpack.c.l.b16 %v1007
        %v3228 = vunpack.c.l.b16 %v1008
        %v3229 = vunpack.c.h.b16 %v1008
        %v3230 = vunpack.c.l.b16 %v1009
        %v3231 = vunpack.c.h.b16 %v1009
        %v3232 = vunpack.c.l.b16 %v1010
        %v3233 = vunpack.c.h.b16 %v1010
        %v3234 = vunpack.c.l.b16 %v1011
        %v3235 = vunpack.c.h.b16 %v1011
        %v3236 = vunpack.c.l.b16 %v1012
        %v3237 = vunpack.c.l.b16 %v1013
        %v3238 = vunpack.c.h.b16 %v1013
        %v3239 = vunpack.c.l.b16 %v1014
        %v3240 = vunpack.c.h.b16 %v1014
        %v3241 = vunpack.c.l.b16 %v1015
        %v3242 = vunpack.c.h.b16 %v1015
        %v3243 = vunpack.c.l.b16 %v1016
        %v3244 = vunpack.c.h.b16 %v1016
        %v3245 = vunpack.c.l.b16 %v1017
        %v3246 = vunpack.c.l.b16 %v1018
        %v3247 = vunpack.c.h.b16 %v1018
        %v3248 = vunpack.c.l.b16 %v1019
        %v3249 = vunpack.c.h.b16 %v1019
        %v3250 = vunpack.c.l.b16 %v1020
        %v3251 = vunpack.c.h.b16 %v1020
        %v3252 = vunpack.c.l.b16 %v1021
        %v3253 = vunpack.c.h.b16 %v1021
        %v3254 = vunpack.c.l.b16 %v1022
        %v3255 = vunpack.c.l.b16 %v1023
        %v3256 = vunpack.c.h.b16 %v1023
        %v3257 = vunpack.c.l.b16 %v1024
        %v3258 = vunpack.c.h.b16 %v1024
        %v3259 = vunpack.c.l.b16 %v1025
        %v3260 = vunpack.c.h.b16 %v1025
        %v3261 = vunpack.c.l.b16 %v1026
        %v3262 = vunpack.c.h.b16 %v1026
        %v3263 = vunpack.c.l.b16 %v1027
        %v3264 = vunpack.c.l.b16 %v1028
        %v3265 = vunpack.c.h.b16 %v1028
        %v3266 = vunpack.c.l.b16 %v1029
        %v3267 = vunpack.c.h.b16 %v1029
        %v3268 = vunpack.c.l.b16 %v1030
        %v3269 = vunpack.c.h.b16 %v1030
        %v3270 = vunpack.c.l.b16 %v1031
        %v3271 = vunpack.c.h.b16 %v1031
        %v3272 = vunpack.c.l.b16 %v1032
        %v3273 = vunpack.c.l.b16 %v1033
        %v3274 = vunpack.c.h.b16 %v1033
        %v3275 = vunpack.c.l.b16 %v1034
        %v3276 = vunpack.c.h.b16 %v1034
        %v3277 = vunpack.c.l.b16 %v1035
        %v3278 = vunpack.c.h.b16 %v1035
        %v3279 = vunpack.c.l.b16 %v1036
        %v3280 = vunpack.c.h.b16 %v1036
        %v3281 = vunpack.c.l.b16 %v1037
        %v3282 = vunpack.c.l.b16 %v1038
        %v3283 = vunpack.c.h.b16 %v1038
        %v3284 = vunpack.c.l.b16 %v1039
        %v3285 = vunpack.c.h.b16 %v1039
        %v3286 = vunpack.c.l.b16 %v1040
        %v3287 = vunpack.c.h.b16 %v1040
        %v3288 = vunpack.c.l.b16 %v1041
        %v3289 = vunpack.c.h.b16 %v1041
        %v3290 = vunpack.c.l.b16 %v1042
        %v3291 = vunpack.c.l.b16 %v1043
        %v3292 = vunpack.c.h.b16 %v1043
        %v3293 = vunpack.c.l.b16 %v1044
        %v3294 = vunpack.c.h.b16 %v1044
        %v3295 = vunpack.c.l.b16 %v1045
        %v3296 = vunpack.c.h.b16 %v1045
        %v3297 = vunpack.c.l.b16 %v1046
        %v3298 = vunpack.c.h.b16 %v1046
        %v3299 = vunpack.c.l.b16 %v1047
        %v3300 = vunpack.c.l.b16 %v1048
        %v3301 = vunpack.c.h.b16 %v1048
        %v3302 = vunpack.c.l.b16 %v1049
        %v3303 = vunpack.c.h.b16 %v1049
        %v3304 = vunpack.c.l.b16 %v1050
        %v3305 = vunpack.c.h.b16 %v1050
        %v3306 = vunpack.c.l.b16 %v1051
        %v3307 = vunpack.c.h.b16 %v1051
        %v3308 = vunpack.c.l.b16 %v1052
        %v3309 = vunpack.c.l.b16 %v1053
        %v3310 = vunpack.c.h.b16 %v1053
        %v3311 = vunpack.c.l.b16 %v1054
        %v3312 = vunpack.c.h.b16 %v1054
        %v3313 = vunpack.c.l.b16 %v1055
        %v3314 = vunpack.c.h.b16 %v1055
        %v3315 = vunpack.c.l.b16 %v1056
        %v3316 = vunpack.c.h.b16 %v1056
        %v3317 = vunpack.c.l.b16 %v1057
        %v3318 = vunpack.c.l.b16 %v1058
        %v3319 = vunpack.c.h.b16 %v1058
        %v3320 = vunpack.c.l.b16 %v1059
        %v3321 = vunpack.c.h.b16 %v1059
        %v3322 = vunpack.c.l.b16 %v1060
        %v3323 = vunpack.c.h.b16 %v1060
        %v3324 = vunpack.c.l.b16 %v1061
        %v3325 = vunpack.c.h.b16 %v1061
        %v3326 = vunpack.c.l.b16 %v1062
        %v3327 = vpack.c.b16 %v1896, %v1887
        %v3328 = vpack.c.b16 %v1897, %v1888
        %v3329 = vpack.c.b16 %v1898, %v1889
        %v3330 = vpack.c.b16 %v1899, %v1890
        %v3331 = vpack.c.b16 %v1900, %v1891
        %v3332 = vpack.c.b16 %v1901, %v1892
        %v3333 = vpack.c.b16 %v1902, %v1893
        %v3334 = vpack.c.b16 %v1903, %v1894
        %v3335 = vpack.c.b16 %v1904, %v1895
        %v3336 = vpack.c.b16 %v1914, %v1905
        %v3337 = vpack.c.b16 %v1915, %v1906
        %v3338 = vpack.c.b16 %v1916, %v1907
        %v3339 = vpack.c.b16 %v1917, %v1908
        %v3340 = vpack.c.b16 %v1918, %v1909
        %v3341 = vpack.c.b16 %v1919, %v1910
        %v3342 = vpack.c.b16 %v1920, %v1911
        %v3343 = vpack.c.b16 %v1921, %v1912
        %v3344 = vpack.c.b16 %v1922, %v1913
        %v3345 = vpack.c.b16 %v1932, %v1923
        %v3346 = vpack.c.b16 %v1933, %v1924
        %v3347 = vpack.c.b16 %v1934, %v1925
        %v3348 = vpack.c.b16 %v1935, %v1926
        %v3349 = vpack.c.b16 %v1936, %v1927
        %v3350 = vpack.c.b16 %v1937, %v1928
        %v3351 = vpack.c.b16 %v1938, %v1929
        %v3352 = vpack.c.b16 %v1939, %v1930
        %v3353 = vpack.c.b16 %v1940, %v1931
        %v3354 = vpack.c.b16 %v1950, %v1941
        %v3355 = vpack.c.b16 %v1951, %v1942
        %v3356 = vpack.c.b16 %v1952, %v1943
        %v3357 = vpack.c.b16 %v1953, %v1944
        %v3358 = vpack.c.b16 %v1954, %v1945
        %v3359 = vpack.c.b16 %v1955, %v1946
        %v3360 = vpack.c.b16 %v1956, %v1947
        %v3361 = vpack.c.b16 %v1957, %v1948
        %v3362 = vpack.c.b16 %v1958, %v1949
        %v3363 = vpack.c.b16 %v1968, %v1959
        %v3364 = vpack.c.b16 %v1969, %v1960
        %v3365 = vpack.c.b16 %v1970, %v1961
        %v3366 = vpack.c.b16 %v1971, %v1962
        %v3367 = vpack.c.b16 %v1972, %v1963
        %v3368 = vpack.c.b16 %v1973, %v1964
        %v3369 = vpack.c.b16 %v1974, %v1965
        %v3370 = vpack.c.b16 %v1975, %v1966
        %v3371 = vpack.c.b16 %v1976, %v1967
        %v3372 = vpack.c.b16 %v1986, %v1977
        %v3373 = vpack.c.b16 %v1987, %v1978
        %v3374 = vpack.c.b16 %v1988, %v1979
        %v3375 = vpack.c.b16 %v1989, %v1980
        %v3376 = vpack.c.b16 %v1990, %v1981
        %v3377 = vpack.c.b16 %v1991, %v1982
        %v3378 = vpack.c.b16 %v1992, %v1983
        %v3379 = vpack.c.b16 %v1993, %v1984
        %v3380 = vpack.c.b16 %v1994, %v1985
        %v3381 = vpack.c.b16 %v2004, %v1995
        %v3382 = vpack.c.b16 %v2005, %v1996
        %v3383 = vpack.c.b16 %v2006, %v1997
        %v3384 = vpack.c.b16 %v2007, %v1998
        %v3385 = vpack.c.b16 %v2008, %v1999
        %v3386 = vpack.c.b16 %v2009, %v2000
        %v3387 = vpack.c.b16 %v2010, %v2001
        %v3388 = vpack.c.b16 %v2011, %v2002
        %v3389 = vpack.c.b16 %v2012, %v2003
        %v3390 = vpack.c.b16 %v2022, %v2013
        %v3391 = vpack.c.b16 %v2023, %v2014
        %v3392 = vpack.c.b16 %v2024, %v2015
        %v3393 = vpack.c.b16 %v2025, %v2016
        %v3394 = vpack.c.b16 %v2026, %v2017
        %v3395 = vpack.c.b16 %v2027, %v2018
        %v3396 = vpack.c.b16 %v2028, %v2019
        %v3397 = vpack.c.b16 %v2029, %v2020
        %v3398 = vpack.c.b16 %v2030, %v2021
        %v3399 = vpack.c.b16 %v2040, %v2031
        %v3400 = vpack.c.b16 %v2041, %v2032
        %v3401 = vpack.c.b16 %v2042, %v2033
        %v3402 = vpack.c.b16 %v2043, %v2034
        %v3403 = vpack.c.b16 %v2044, %v2035
        %v3404 = vpack.c.b16 %v2045, %v2036
        %v3405 = vpack.c.b16 %v2046, %v2037
        %v3406 = vpack.c.b16 %v2047, %v2038
        %v3407 = vpack.c.b16 %v2048, %v2039
        %v3408 = vpack.c.b16 %v2058, %v2049
        %v3409 = vpack.c.b16 %v2059, %v2050
        %v3410 = vpack.c.b16 %v2060, %v2051
        %v3411 = vpack.c.b16 %v2061, %v2052
        %v3412 = vpack.c.b16 %v2062, %v2053
        %v3413 = vpack.c.b16 %v2063, %v2054
        %v3414 = vpack.c.b16 %v2064, %v2055
        %v3415 = vpack.c.b16 %v2065, %v2056
        %v3416 = vpack.c.b16 %v2066, %v2057
        %v3417 = vpack.c.b16 %v2076, %v2067
        %v3418 = vpack.c.b16 %v2077, %v2068
        %v3419 = vpack.c.b16 %v2078, %v2069
        %v3420 = vpack.c.b16 %v2079, %v2070
        %v3421 = vpack.c.b16 %v2080, %v2071
        %v3422 = vpack.c.b16 %v2081, %v2072
        %v3423 = vpack.c.b16 %v2082, %v2073
        %v3424 = vpack.c.b16 %v2083, %v2074
        %v3425 = vpack.c.b16 %v2084, %v2075
        %v3426 = vpack.c.b16 %v2094, %v2085
        %v3427 = vpack.c.b16 %v2095, %v2086
        %v3428 = vpack.c.b16 %v2096, %v2087
        %v3429 = vpack.c.b16 %v2097, %v2088
        %v3430 = vpack.c.b16 %v2098, %v2089
        %v3431 = vpack.c.b16 %v2099, %v2090
        %v3432 = vpack.c.b16 %v2100, %v2091
        %v3433 = vpack.c.b16 %v2101, %v2092
        %v3434 = vpack.c.b16 %v2102, %v2093
        %v3435 = vpack.c.b16 %v2112, %v2103
        %v3436 = vpack.c.b16 %v2113, %v2104
        %v3437 = vpack.c.b16 %v2114, %v2105
        %v3438 = vpack.c.b16 %v2115, %v2106
        %v3439 = vpack.c.b16 %v2116, %v2107
        %v3440 = vpack.c.b16 %v2117, %v2108
        %v3441 = vpack.c.b16 %v2118, %v2109
        %v3442 = vpack.c.b16 %v2119, %v2110
        %v3443 = vpack.c.b16 %v2120, %v2111
        %v3444 = vpack.c.b16 %v2130, %v2121
        %v3445 = vpack.c.b16 %v2131, %v2122
        %v3446 = vpack.c.b16 %v2132, %v2123
        %v3447 = vpack.c.b16 %v2133, %v2124
        %v3448 = vpack.c.b16 %v2134, %v2125
        %v3449 = vpack.c.b16 %v2135, %v2126
        %v3450 = vpack.c.b16 %v2136, %v2127
        %v3451 = vpack.c.b16 %v2137, %v2128
        %v3452 = vpack.c.b16 %v2138, %v2129
        %v3453 = vpack.c.b16 %v2148, %v2139
        %v3454 = vpack.c.b16 %v2149, %v2140
        %v3455 = vpack.c.b16 %v2150, %v2141
        %v3456 = vpack.c.b16 %v2151, %v2142
        %v3457 = vpack.c.b16 %v2152, %v2143
        %v3458 = vpack.c.b16 %v2153, %v2144
        %v3459 = vpack.c.b16 %v2154, %v2145
        %v3460 = vpack.c.b16 %v2155, %v2146
        %v3461 = vpack.c.b16 %v2156, %v2147
        %v3462 = vpack.c.b16 %v2166, %v2157
        %v3463 = vpack.c.b16 %v2167, %v2158
        %v3464 = vpack.c.b16 %v2168, %v2159
        %v3465 = vpack.c.b16 %v2169, %v2160
        %v3466 = vpack.c.b16 %v2170, %v2161
        %v3467 = vpack.c.b16 %v2171, %v2162
        %v3468 = vpack.c.b16 %v2172, %v2163
        %v3469 = vpack.c.b16 %v2173, %v2164
        %v3470 = vpack.c.b16 %v2174, %v2165
        %v3471 = vpack.c.b16 %v2184, %v2175
        %v3472 = vpack.c.b16 %v2185, %v2176
        %v3473 = vpack.c.b16 %v2186, %v2177
        %v3474 = vpack.c.b16 %v2187, %v2178
        %v3475 = vpack.c.b16 %v2188, %v2179
        %v3476 = vpack.c.b16 %v2189, %v2180
        %v3477 = vpack.c.b16 %v2190, %v2181
        %v3478 = vpack.c.b16 %v2191, %v2182
        %v3479 = vpack.c.b16 %v2192, %v2183
        %v3480 = vpack.c.b16 %v2202, %v2193
        %v3481 = vpack.c.b16 %v2203, %v2194
        %v3482 = vpack.c.b16 %v2204, %v2195
        %v3483 = vpack.c.b16 %v2205, %v2196
        %v3484 = vpack.c.b16 %v2206, %v2197
        %v3485 = vpack.c.b16 %v2207, %v2198
        %v3486 = vpack.c.b16 %v2208, %v2199
        %v3487 = vpack.c.b16 %v2209, %v2200
        %v3488 = vpack.c.b16 %v2210, %v2201
        %v3489 = vpack.c.b16 %v2220, %v2211
        %v3490 = vpack.c.b16 %v2221, %v2212
        %v3491 = vpack.c.b16 %v2222, %v2213
        %v3492 = vpack.c.b16 %v2223, %v2214
        %v3493 = vpack.c.b16 %v2224, %v2215
        %v3494 = vpack.c.b16 %v2225, %v2216
        %v3495 = vpack.c.b16 %v2226, %v2217
        %v3496 = vpack.c.b16 %v2227, %v2218
        %v3497 = vpack.c.b16 %v2228, %v2219
        %v3498 = vpack.c.b16 %v2238, %v2229
        %v3499 = vpack.c.b16 %v2239, %v2230
        %v3500 = vpack.c.b16 %v2240, %v2231
        %v3501 = vpack.c.b16 %v2241, %v2232
        %v3502 = vpack.c.b16 %v2242, %v2233
        %v3503 = vpack.c.b16 %v2243, %v2234
        %v3504 = vpack.c.b16 %v2244, %v2235
        %v3505 = vpack.c.b16 %v2245, %v2236
        %v3506 = vpack.c.b16 %v2246, %v2237
        %v3507 = vpack.c.b16 %v2256, %v2247
        %v3508 = vpack.c.b16 %v2257, %v2248
        %v3509 = vpack.c.b16 %v2258, %v2249
        %v3510 = vpack.c.b16 %v2259, %v2250
        %v3511 = vpack.c.b16 %v2260, %v2251
        %v3512 = vpack.c.b16 %v2261, %v2252
        %v3513 = vpack.c.b16 %v2262, %v2253
        %v3514 = vpack.c.b16 %v2263, %v2254
        %v3515 = vpack.c.b16 %v2264, %v2255
        %v3516 = vpack.c.b16 %v2274, %v2265
        %v3517 = vpack.c.b16 %v2275, %v2266
        %v3518 = vpack.c.b16 %v2276, %v2267
        %v3519 = vpack.c.b16 %v2277, %v2268
        %v3520 = vpack.c.b16 %v2278, %v2269
        %v3521 = vpack.c.b16 %v2279, %v2270
        %v3522 = vpack.c.b16 %v2280, %v2271
        %v3523 = vpack.c.b16 %v2281, %v2272
        %v3524 = vpack.c.b16 %v2282, %v2273
        %v3525 = vpack.c.b16 %v2292, %v2283
        %v3526 = vpack.c.b16 %v2293, %v2284
        %v3527 = vpack.c.b16 %v2294, %v2285
        %v3528 = vpack.c.b16 %v2295, %v2286
        %v3529 = vpack.c.b16 %v2296, %v2287
        %v3530 = vpack.c.b16 %v2297, %v2288
        %v3531 = vpack.c.b16 %v2298, %v2289
        %v3532 = vpack.c.b16 %v2299, %v2290
        %v3533 = vpack.c.b16 %v2300, %v2291
        %v3534 = vpack.c.b16 %v2310, %v2301
        %v3535 = vpack.c.b16 %v2311, %v2302
        %v3536 = vpack.c.b16 %v2312, %v2303
        %v3537 = vpack.c.b16 %v2313, %v2304
        %v3538 = vpack.c.b16 %v2314, %v2305
        %v3539 = vpack.c.b16 %v2315, %v2306
        %v3540 = vpack.c.b16 %v2316, %v2307
        %v3541 = vpack.c.b16 %v2317, %v2308
        %v3542 = vpack.c.b16 %v2318, %v2309
        %v3543 = vpack.c.b16 %v2328, %v2319
        %v3544 = vpack.c.b16 %v2329, %v2320
        %v3545 = vpack.c.b16 %v2330, %v2321
        %v3546 = vpack.c.b16 %v2331, %v2322
        %v3547 = vpack.c.b16 %v2332, %v2323
        %v3548 = vpack.c.b16 %v2333, %v2324
        %v3549 = vpack.c.b16 %v2334, %v2325
        %v3550 = vpack.c.b16 %v2335, %v2326
        %v3551 = vpack.c.b16 %v2336, %v2327
        %v3552 = vpack.c.b16 %v2346, %v2337
        %v3553 = vpack.c.b16 %v2347, %v2338
        %v3554 = vpack.c.b16 %v2348, %v2339
        %v3555 = vpack.c.b16 %v2349, %v2340
        %v3556 = vpack.c.b16 %v2350, %v2341
        %v3557 = vpack.c.b16 %v2351, %v2342
        %v3558 = vpack.c.b16 %v2352, %v2343
        %v3559 = vpack.c.b16 %v2353, %v2344
        %v3560 = vpack.c.b16 %v2354, %v2345
        %v3561 = vpack.c.b16 %v2364, %v2355
        %v3562 = vpack.c.b16 %v2365, %v2356
        %v3563 = vpack.c.b16 %v2366, %v2357
        %v3564 = vpack.c.b16 %v2367, %v2358
        %v3565 = vpack.c.b16 %v2368, %v2359
        %v3566 = vpack.c.b16 %v2369, %v2360
        %v3567 = vpack.c.b16 %v2370, %v2361
        %v3568 = vpack.c.b16 %v2371, %v2362
        %v3569 = vpack.c.b16 %v2372, %v2363
        %v3570 = vpack.c.b16 %v2382, %v2373
        %v3571 = vpack.c.b16 %v2383, %v2374
        %v3572 = vpack.c.b16 %v2384, %v2375
        %v3573 = vpack.c.b16 %v2385, %v2376
        %v3574 = vpack.c.b16 %v2386, %v2377
        %v3575 = vpack.c.b16 %v2387, %v2378
        %v3576 = vpack.c.b16 %v2388, %v2379
        %v3577 = vpack.c.b16 %v2389, %v2380
        %v3578 = vpack.c.b16 %v2390, %v2381
        %v3579 = vpack.c.b16 %v2400, %v2391
        %v3580 = vpack.c.b16 %v2401, %v2392
        %v3581 = vpack.c.b16 %v2402, %v2393
        %v3582 = vpack.c.b16 %v2403, %v2394
        %v3583 = vpack.c.b16 %v2404, %v2395
        %v3584 = vpack.c.b16 %v2405, %v2396
        %v3585 = vpack.c.b16 %v2406, %v2397
        %v3586 = vpack.c.b16 %v2407, %v2398
        %v3587 = vpack.c.b16 %v2408, %v2399
        %v3588 = vpack.c.b16 %v2418, %v2409
        %v3589 = vpack.c.b16 %v2419, %v2410
        %v3590 = vpack.c.b16 %v2420, %v2411
        %v3591 = vpack.c.b16 %v2421, %v2412
        %v3592 = vpack.c.b16 %v2422, %v2413
        %v3593 = vpack.c.b16 %v2423, %v2414
        %v3594 = vpack.c.b16 %v2424, %v2415
        %v3595 = vpack.c.b16 %v2425, %v2416
        %v3596 = vpack.c.b16 %v2426, %v2417
        %v3597 = vpack.c.b16 %v2436, %v2427
        %v3598 = vpack.c.b16 %v2437, %v2428
        %v3599 = vpack.c.b16 %v2438, %v2429
        %v3600 = vpack.c.b16 %v2439, %v2430
        %v3601 = vpack.c.b16 %v2440, %v2431
        %v3602 = vpack.c.b16 %v2441, %v2432
        %v3603 = vpack.c.b16 %v2442, %v2433
        %v3604 = vpack.c.b16 %v2443, %v2434
        %v3605 = vpack.c.b16 %v2444, %v2435
        %v3606 = vpack.c.b16 %v2454, %v2445
        %v3607 = vpack.c.b16 %v2455, %v2446
        %v3608 = vpack.c.b16 %v2456, %v2447
        %v3609 = vpack.c.b16 %v2457, %v2448
        %v3610 = vpack.c.b16 %v2458, %v2449
        %v3611 = vpack.c.b16 %v2459, %v2450
        %v3612 = vpack.c.b16 %v2460, %v2451
        %v3613 = vpack.c.b16 %v2461, %v2452
        %v3614 = vpack.c.b16 %v2462, %v2453
        %v3615 = vpack.c.b16 %v2472, %v2463
        %v3616 = vpack.c.b16 %v2473, %v2464
        %v3617 = vpack.c.b16 %v2474, %v2465
        %v3618 = vpack.c.b16 %v2475, %v2466
        %v3619 = vpack.c.b16 %v2476, %v2467
        %v3620 = vpack.c.b16 %v2477, %v2468
        %v3621 = vpack.c.b16 %v2478, %v2469
        %v3622 = vpack.c.b16 %v2479, %v2470
        %v3623 = vpack.c.b16 %v2480, %v2471
        %v3624 = vpack.c.b16 %v2490, %v2481
        %v3625 = vpack.c.b16 %v2491, %v2482
        %v3626 = vpack.c.b16 %v2492, %v2483
        %v3627 = vpack.c.b16 %v2493, %v2484
        %v3628 = vpack.c.b16 %v2494, %v2485
        %v3629 = vpack.c.b16 %v2495, %v2486
        %v3630 = vpack.c.b16 %v2496, %v2487
        %v3631 = vpack.c.b16 %v2497, %v2488
        %v3632 = vpack.c.b16 %v2498, %v2489
        %v3633 = vpack.c.b16 %v2508, %v2499
        %v3634 = vpack.c.b16 %v2509, %v2500
        %v3635 = vpack.c.b16 %v2510, %v2501
        %v3636 = vpack.c.b16 %v2511, %v2502
        %v3637 = vpack.c.b16 %v2512, %v2503
        %v3638 = vpack.c.b16 %v2513, %v2504
        %v3639 = vpack.c.b16 %v2514, %v2505
        %v3640 = vpack.c.b16 %v2515, %v2506
        %v3641 = vpack.c.b16 %v2516, %v2507
        %v3642 = vpack.c.b16 %v2526, %v2517
        %v3643 = vpack.c.b16 %v2527, %v2518
        %v3644 = vpack.c.b16 %v2528, %v2519
        %v3645 = vpack.c.b16 %v2529, %v2520
        %v3646 = vpack.c.b16 %v2530, %v2521
        %v3647 = vpack.c.b16 %v2531, %v2522
        %v3648 = vpack.c.b16 %v2532, %v2523
        %v3649 = vpack.c.b16 %v2533, %v2524
        %v3650 = vpack.c.b16 %v2534, %v2525
        %v3651 = vpack.c.b16 %v2544, %v2535
        %v3652 = vpack.c.b16 %v2545, %v2536
        %v3653 = vpack.c.b16 %v2546, %v2537
        %v3654 = vpack.c.b16 %v2547, %v2538
        %v3655 = vpack.c.b16 %v2548, %v2539
        %v3656 = vpack.c.b16 %v2549, %v2540
        %v3657 = vpack.c.b16 %v2550, %v2541
        %v3658 = vpack.c.b16 %v2551, %v2542
        %v3659 = vpack.c.b16 %v2552, %v2543
        %v3660 = vpack.c.b16 %v2562, %v2553
        %v3661 = vpack.c.b16 %v2563, %v2554
        %v3662 = vpack.c.b16 %v2564, %v2555
        %v3663 = vpack.c.b16 %v2565, %v2556
        %v3664 = vpack.c.b16 %v2566, %v2557
        %v3665 = vpack.c.b16 %v2567, %v2558
        %v3666 = vpack.c.b16 %v2568, %v2559
        %v3667 = vpack.c.b16 %v2569, %v2560
        %v3668 = vpack.c.b16 %v2570, %v2561
        %v3669 = vpack.c.b16 %v2580, %v2571
        %v3670 = vpack.c.b16 %v2581, %v2572
        %v3671 = vpack.c.b16 %v2582, %v2573
        %v3672 = vpack.c.b16 %v2583, %v2574
        %v3673 = vpack.c.b16 %v2584, %v2575
        %v3674 = vpack.c.b16 %v2585, %v2576
        %v3675 = vpack.c.b16 %v2586, %v2577
        %v3676 = vpack.c.b16 %v2587, %v2578
        %v3677 = vpack.c.b16 %v2588, %v2579
        %v3678 = vpack.c.b16 %v2598, %v2589
        %v3679 = vpack.c.b16 %v2599, %v2590
        %v3680 = vpack.c.b16 %v2600, %v2591
        %v3681 = vpack.c.b16 %v2601, %v2592
        %v3682 = vpack.c.b16 %v2602, %v2593
        %v3683 = vpack.c.b16 %v2603, %v2594
        %v3684 = vpack.c.b16 %v2604, %v2595
        %v3685 = vpack.c.b16 %v2605, %v2596
        %v3686 = vpack.c.b16 %v2606, %v2597
        %v3687 = vpack.c.b16 %v2616, %v2607
        %v3688 = vpack.c.b16 %v2617, %v2608
        %v3689 = vpack.c.b16 %v2618, %v2609
        %v3690 = vpack.c.b16 %v2619, %v2610
        %v3691 = vpack.c.b16 %v2620, %v2611
        %v3692 = vpack.c.b16 %v2621, %v2612
        %v3693 = vpack.c.b16 %v2622, %v2613
        %v3694 = vpack.c.b16 %v2623, %v2614
        %v3695 = vpack.c.b16 %v2624, %v2615
        %v3696 = vpack.c.b16 %v2634, %v2625
        %v3697 = vpack.c.b16 %v2635, %v2626
        %v3698 = vpack.c.b16 %v2636, %v2627
        %v3699 = vpack.c.b16 %v2637, %v2628
        %v3700 = vpack.c.b16 %v2638, %v2629
        %v3701 = vpack.c.b16 %v2639, %v2630
        %v3702 = vpack.c.b16 %v2640, %v2631
        %v3703 = vpack.c.b16 %v2641, %v2632
        %v3704 = vpack.c.b16 %v2642, %v2633
        %v3705 = vpack.c.b16 %v2652, %v2643
        %v3706 = vpack.c.b16 %v2653, %v2644
        %v3707 = vpack.c.b16 %v2654, %v2645
        %v3708 = vpack.c.b16 %v2655, %v2646
        %v3709 = vpack.c.b16 %v2656, %v2647
        %v3710 = vpack.c.b16 %v2657, %v2648
        %v3711 = vpack.c.b16 %v2658, %v2649
        %v3712 = vpack.c.b16 %v2659, %v2650
        %v3713 = vpack.c.b16 %v2660, %v2651
        %v3714 = vpack.c.b16 %v2670, %v2661
        %v3715 = vpack.c.b16 %v2671, %v2662
        %v3716 = vpack.c.b16 %v2672, %v2663
        %v3717 = vpack.c.b16 %v2673, %v2664
        %v3718 = vpack.c.b16 %v2674, %v2665
        %v3719 = vpack.c.b16 %v2675, %v2666
        %v3720 = vpack.c.b16 %v2676, %v2667
        %v3721 = vpack.c.b16 %v2677, %v2668
        %v3722 = vpack.c.b16 %v2678, %v2669
        %v3723 = vpack.c.b16 %v2688, %v2679
        %v3724 = vpack.c.b16 %v2689, %v2680
        %v3725 = vpack.c.b16 %v2690, %v2681
        %v3726 = vpack.c.b16 %v2691, %v2682
        %v3727 = vpack.c.b16 %v2692, %v2683
        %v3728 = vpack.c.b16 %v2693, %v2684
        %v3729 = vpack.c.b16 %v2694, %v2685
        %v3730 = vpack.c.b16 %v2695, %v2686
        %v3731 = vpack.c.b16 %v2696, %v2687
        %v3732 = vpack.c.b16 %v2706, %v2697
        %v3733 = vpack.c.b16 %v2707, %v2698
        %v3734 = vpack.c.b16 %v2708, %v2699
        %v3735 = vpack.c.b16 %v2709, %v2700
        %v3736 = vpack.c.b16 %v2710, %v2701
        %v3737 = vpack.c.b16 %v2711, %v2702
        %v3738 = vpack.c.b16 %v2712, %v2703
        %v3739 = vpack.c.b16 %v2713, %v2704
        %v3740 = vpack.c.b16 %v2714, %v2705
        %v3741 = vpack.c.b16 %v2724, %v2715
        %v3742 = vpack.c.b16 %v2725, %v2716
        %v3743 = vpack.c.b16 %v2726, %v2717
        %v3744 = vpack.c.b16 %v2727, %v2718
        %v3745 = vpack.c.b16 %v2728, %v2719
        %v3746 = vpack.c.b16 %v2729, %v2720
        %v3747 = vpack.c.b16 %v2730, %v2721
        %v3748 = vpack.c.b16 %v2731, %v2722
        %v3749 = vpack.c.b16 %v2732, %v2723
        %v3750 = vpack.c.b16 %v2742, %v2733
        %v3751 = vpack.c.b16 %v2743, %v2734
        %v3752 = vpack.c.b16 %v2744, %v2735
        %v3753 = vpack.c.b16 %v2745, %v2736
        %v3754 = vpack.c.b16 %v2746, %v2737
        %v3755 = vpack.c.b16 %v2747, %v2738
        %v3756 = vpack.c.b16 %v2748, %v2739
        %v3757 = vpack.c.b16 %v2749, %v2740
        %v3758 = vpack.c.b16 %v2750, %v2741
        %v3759 = vpack.c.b16 %v2760, %v2751
        %v3760 = vpack.c.b16 %v2761, %v2752
        %v3761 = vpack.c.b16 %v2762, %v2753
        %v3762 = vpack.c.b16 %v2763, %v2754
        %v3763 = vpack.c.b16 %v2764, %v2755
        %v3764 = vpack.c.b16 %v2765, %v2756
        %v3765 = vpack.c.b16 %v2766, %v2757
        %v3766 = vpack.c.b16 %v2767, %v2758
        %v3767 = vpack.c.b16 %v2768, %v2759
        %v3768 = vpack.c.b16 %v2778, %v2769
        %v3769 = vpack.c.b16 %v2779, %v2770
        %v3770 = vpack.c.b16 %v2780, %v2771
        %v3771 = vpack.c.b16 %v2781, %v2772
        %v3772 = vpack.c.b16 %v2782, %v2773
        %v3773 = vpack.c.b16 %v2783, %v2774
        %v3774 = vpack.c.b16 %v2784, %v2775
        %v3775 = vpack.c.b16 %v2785, %v2776
        %v3776 = vpack.c.b16 %v2786, %v2777
        %v3777 = vpack.c.b16 %v2796, %v2787
        %v3778 = vpack.c.b16 %v2797, %v2788
        %v3779 = vpack.c.b16 %v2798, %v2789
        %v3780 = vpack.c.b16 %v2799, %v2790
        %v3781 = vpack.c.b16 %v2800, %v2791
        %v3782 = vpack.c.b16 %v2801, %v2792
        %v3783 = vpack.c.b16 %v2802, %v2793
        %v3784 = vpack.c.b16 %v2803, %v2794
        %v3785 = vpack.c.b16 %v2804, %v2795
        %v3786 = vpack.c.b16 %v2814, %v2805
        %v3787 = vpack.c.b16 %v2815, %v2806
        %v3788 = vpack.c.b16 %v2816, %v2807
        %v3789 = vpack.c.b16 %v2817, %v2808
        %v3790 = vpack.c.b16 %v2818, %v2809
        %v3791 = vpack.c.b16 %v2819, %v2810
        %v3792 = vpack.c.b16 %v2820, %v2811
        %v3793 = vpack.c.b16 %v2821, %v2812
        %v3794 = vpack.c.b16 %v2822, %v2813
        %v3795 = vpack.c.b16 %v2832, %v2823
        %v3796 = vpack.c.b16 %v2833, %v2824
        %v3797 = vpack.c.b16 %v2834, %v2825
        %v3798 = vpack.c.b16 %v2835, %v2826
        %v3799 = vpack.c.b16 %v2836, %v2827
        %v3800 = vpack.c.b16 %v2837, %v2828
        %v3801 = vpack.c.b16 %v2838, %v2829
        %v3802 = vpack.c.b16 %v2839, %v2830
        %v3803 = vpack.c.b16 %v2840, %v2831
        %v3804 = vpack.c.b16 %v2850, %v2841
        %v3805 = vpack.c.b16 %v2851, %v2842
        %v3806 = vpack.c.b16 %v2852, %v2843
        %v3807 = vpack.c.b16 %v2853, %v2844
        %v3808 = vpack.c.b16 %v2854, %v2845
        %v3809 = vpack.c.b16 %v2855, %v2846
        %v3810 = vpack.c.b16 %v2856, %v2847
        %v3811 = vpack.c.b16 %v2857, %v2848
        %v3812 = vpack.c.b16 %v2858, %v2849
        %v3813 = vpack.c.b16 %v2868, %v2859
        %v3814 = vpack.c.b16 %v2869, %v2860
        %v3815 = vpack.c.b16 %v2870, %v2861
        %v3816 = vpack.c.b16 %v2871, %v2862
        %v3817 = vpack.c.b16 %v2872, %v2863
        %v3818 = vpack.c.b16 %v2873, %v2864
        %v3819 = vpack.c.b16 %v2874, %v2865
        %v3820 = vpack.c.b16 %v2875, %v2866
        %v3821 = vpack.c.b16 %v2876, %v2867
        %v3822 = vpack.c.b16 %v2886, %v2877
        %v3823 = vpack.c.b16 %v2887, %v2878
        %v3824 = vpack.c.b16 %v2888, %v2879
        %v3825 = vpack.c.b16 %v2889, %v2880
        %v3826 = vpack.c.b16 %v2890, %v2881
        %v3827 = vpack.c.b16 %v2891, %v2882
        %v3828 = vpack.c.b16 %v2892, %v2883
        %v3829 = vpack.c.b16 %v2893, %v2884
        %v3830 = vpack.c.b16 %v2894, %v2885
        %v3831 = vpack.c.b16 %v2904, %v2895
        %v3832 = vpack.c.b16 %v2905, %v2896
        %v3833 = vpack.c.b16 %v2906, %v2897
        %v3834 = vpack.c.b16 %v2907, %v2898
        %v3835 = vpack.c.b16 %v2908, %v2899
        %v3836 = vpack.c.b16 %v2909, %v2900
        %v3837 = vpack.c.b16 %v2910, %v2901
        %v3838 = vpack.c.b16 %v2911, %v2902
        %v3839 = vpack.c.b16 %v2912, %v2903
        %v3840 = vpack.c.b16 %v2922, %v2913
        %v3841 = vpack.c.b16 %v2923, %v2914
        %v3842 = vpack.c.b16 %v2924, %v2915
        %v3843 = vpack.c.b16 %v2925, %v2916
        %v3844 = vpack.c.b16 %v2926, %v2917
        %v3845 = vpack.c.b16 %v2927, %v2918
        %v3846 = vpack.c.b16 %v2928, %v2919
        %v3847 = vpack.c.b16 %v2929, %v2920
        %v3848 = vpack.c.b16 %v2930, %v2921
        %v3849 = vpack.c.b16 %v2940, %v2931
        %v3850 = vpack.c.b16 %v2941, %v2932
        %v3851 = vpack.c.b16 %v2942, %v2933
        %v3852 = vpack.c.b16 %v2943, %v2934
        %v3853 = vpack.c.b16 %v2944, %v2935
        %v3854 = vpack.c.b16 %v2945, %v2936
        %v3855 = vpack.c.b16 %v2946, %v2937
        %v3856 = vpack.c.b16 %v2947, %v2938
        %v3857 = vpack.c.b16 %v2948, %v2939
        %v3858 = vpack.c.b16 %v2958, %v2949
        %v3859 = vpack.c.b16 %v2959, %v2950
        %v3860 = vpack.c.b16 %v2960, %v2951
        %v3861 = vpack.c.b16 %v2961, %v2952
        %v3862 = vpack.c.b16 %v2962, %v2953
        %v3863 = vpack.c.b16 %v2963, %v2954
        %v3864 = vpack.c.b16 %v2964, %v2955
        %v3865 = vpack.c.b16 %v2965, %v2956
        %v3866 = vpack.c.b16 %v2966, %v2957
        %v3867 = vpack.c.b16 %v2976, %v2967
        %v3868 = vpack.c.b16 %v2977, %v2968
        %v3869 = vpack.c.b16 %v2978, %v2969
        %v3870 = vpack.c.b16 %v2979, %v2970
        %v3871 = vpack.c.b16 %v2980, %v2971
        %v3872 = vpack.c.b16 %v2981, %v2972
        %v3873 = vpack.c.b16 %v2982, %v2973
        %v3874 = vpack.c.b16 %v2983, %v2974
        %v3875 = vpack.c.b16 %v2984, %v2975
        %v3876 = vpack.c.b16 %v2994, %v2985
        %v3877 = vpack.c.b16 %v2995, %v2986
        %v3878 = vpack.c.b16 %v2996, %v2987
        %v3879 = vpack.c.b16 %v2997, %v2988
        %v3880 = vpack.c.b16 %v2998, %v2989
        %v3881 = vpack.c.b16 %v2999, %v2990
        %v3882 = vpack.c.b16 %v3000, %v2991
        %v3883 = vpack.c.b16 %v3001, %v2992
        %v3884 = vpack.c.b16 %v3002, %v2993
        %v3885 = vpack.c.b16 %v3012, %v3003
        %v3886 = vpack.c.b16 %v3013, %v3004
        %v3887 = vpack.c.b16 %v3014, %v3005
        %v3888 = vpack.c.b16 %v3015, %v3006
        %v3889 = vpack.c.b16 %v3016, %v3007
        %v3890 = vpack.c.b16 %v3017, %v3008
        %v3891 = vpack.c.b16 %v3018, %v3009
        %v3892 = vpack.c.b16 %v3019, %v3010
        %v3893 = vpack.c.b16 %v3020, %v3011
        %v3894 = vpack.c.b16 %v3030, %v3021
        %v3895 = vpack.c.b16 %v3031, %v3022
        %v3896 = vpack.c.b16 %v3032, %v3023
        %v3897 = vpack.c.b16 %v3033, %v3024
        %v3898 = vpack.c.b16 %v3034, %v3025
        %v3899 = vpack.c.b16 %v3035, %v3026
        %v3900 = vpack.c.b16 %v3036, %v3027
        %v3901 = vpack.c.b16 %v3037, %v3028
        %v3902 = vpack.c.b16 %v3038, %v3029
        %v3903 = vpack.c.b16 %v3048, %v3039
        %v3904 = vpack.c.b16 %v3049, %v3040
        %v3905 = vpack.c.b16 %v3050, %v3041
        %v3906 = vpack.c.b16 %v3051, %v3042
        %v3907 = vpack.c.b16 %v3052, %v3043
        %v3908 = vpack.c.b16 %v3053, %v3044
        %v3909 = vpack.c.b16 %v3054, %v3045
        %v3910 = vpack.c.b16 %v3055, %v3046
        %v3911 = vpack.c.b16 %v3056, %v3047
        %v3912 = vpack.c.b16 %v3066, %v3057
        %v3913 = vpack.c.b16 %v3067, %v3058
        %v3914 = vpack.c.b16 %v3068, %v3059
        %v3915 = vpack.c.b16 %v3069, %v3060
        %v3916 = vpack.c.b16 %v3070, %v3061
        %v3917 = vpack.c.b16 %v3071, %v3062
        %v3918 = vpack.c.b16 %v3072, %v3063
        %v3919 = vpack.c.b16 %v3073, %v3064
        %v3920 = vpack.c.b16 %v3074, %v3065
        %v3921 = vpack.c.b16 %v3084, %v3075
        %v3922 = vpack.c.b16 %v3085, %v3076
        %v3923 = vpack.c.b16 %v3086, %v3077
        %v3924 = vpack.c.b16 %v3087, %v3078
        %v3925 = vpack.c.b16 %v3088, %v3079
        %v3926 = vpack.c.b16 %v3089, %v3080
        %v3927 = vpack.c.b16 %v3090, %v3081
        %v3928 = vpack.c.b16 %v3091, %v3082
        %v3929 = vpack.c.b16 %v3092, %v3083
        %v3930 = vpack.c.b16 %v3102, %v3093
        %v3931 = vpack.c.b16 %v3103, %v3094
        %v3932 = vpack.c.b16 %v3104, %v3095
        %v3933 = vpack.c.b16 %v3105, %v3096
        %v3934 = vpack.c.b16 %v3106, %v3097
        %v3935 = vpack.c.b16 %v3107, %v3098
        %v3936 = vpack.c.b16 %v3108, %v3099
        %v3937 = vpack.c.b16 %v3109, %v3100
        %v3938 = vpack.c.b16 %v3110, %v3101
        %v3939 = vpack.c.b16 %v3120, %v3111
        %v3940 = vpack.c.b16 %v3121, %v3112
        %v3941 = vpack.c.b16 %v3122, %v3113
        %v3942 = vpack.c.b16 %v3123, %v3114
        %v3943 = vpack.c.b16 %v3124, %v3115
        %v3944 = vpack.c.b16 %v3125, %v3116
        %v3945 = vpack.c.b16 %v3126, %v3117
        %v3946 = vpack.c.b16 %v3127, %v3118
        %v3947 = vpack.c.b16 %v3128, %v3119
        %v3948 = vpack.c.b16 %v3138, %v3129
        %v3949 = vpack.c.b16 %v3139, %v3130
        %v3950 = vpack.c.b16 %v3140, %v3131
        %v3951 = vpack.c.b16 %v3141, %v3132
        %v3952 = vpack.c.b16 %v3142, %v3133
        %v3953 = vpack.c.b16 %v3143, %v3134
        %v3954 = vpack.c.b16 %v3144, %v3135
        %v3955 = vpack.c.b16 %v3145, %v3136
        %v3956 = vpack.c.b16 %v3146, %v3137
        %v3957 = vpack.c.b16 %v3156, %v3147
        %v3958 = vpack.c.b16 %v3157, %v3148
        %v3959 = vpack.c.b16 %v3158, %v3149
        %v3960 = vpack.c.b16 %v3159, %v3150
        %v3961 = vpack.c.b16 %v3160, %v3151
        %v3962 = vpack.c.b16 %v3161, %v3152
        %v3963 = vpack.c.b16 %v3162, %v3153
        %v3964 = vpack.c.b16 %v3163, %v3154
        %v3965 = vpack.c.b16 %v3164, %v3155
        %v3966 = vpack.c.b16 %v3174, %v3165
        %v3967 = vpack.c.b16 %v3175, %v3166
        %v3968 = vpack.c.b16 %v3176, %v3167
        %v3969 = vpack.c.b16 %v3177, %v3168
        %v3970 = vpack.c.b16 %v3178, %v3169
        %v3971 = vpack.c.b16 %v3179, %v3170
        %v3972 = vpack.c.b16 %v3180, %v3171
        %v3973 = vpack.c.b16 %v3181, %v3172
        %v3974 = vpack.c.b16 %v3182, %v3173
        %v3975 = vpack.c.b16 %v3192, %v3183
        %v3976 = vpack.c.b16 %v3193, %v3184
        %v3977 = vpack.c.b16 %v3194, %v3185
        %v3978 = vpack.c.b16 %v3195, %v3186
        %v3979 = vpack.c.b16 %v3196, %v3187
        %v3980 = vpack.c.b16 %v3197, %v3188
        %v3981 = vpack.c.b16 %v3198, %v3189
        %v3982 = vpack.c.b16 %v3199, %v3190
        %v3983 = vpack.c.b16 %v3200, %v3191
        %v3984 = vpack.c.b16 %v3210, %v3201
        %v3985 = vpack.c.b16 %v3211, %v3202
        %v3986 = vpack.c.b16 %v3212, %v3203
        %v3987 = vpack.c.b16 %v3213, %v3204
        %v3988 = vpack.c.b16 %v3214, %v3205
        %v3989 = vpack.c.b16 %v3215, %v3206
        %v3990 = vpack.c.b16 %v3216, %v3207
        %v3991 = vpack.c.b16 %v3217, %v3208
        %v3992 = vpack.c.b16 %v3218, %v3209
        %v3993 = vpack.c.b16 %v3228, %v3219
        %v3994 = vpack.c.b16 %v3229, %v3220
        %v3995 = vpack.c.b16 %v3230, %v3221
        %v3996 = vpack.c.b16 %v3231, %v3222
        %v3997 = vpack.c.b16 %v3232, %v3223
        %v3998 = vpack.c.b16 %v3233, %v3224
        %v3999 = vpack.c.b16 %v3234, %v3225
        %v4000 = vpack.c.b16 %v3235, %v3226
        %v4001 = vpack.c.b16 %v3236, %v3227
        %v4002 = vpack.c.b16 %v3246, %v3237
        %v4003 = vpack.c.b16 %v3247, %v3238
        %v4004 = vpack.c.b16 %v3248, %v3239
        %v4005 = vpack.c.b16 %v3249, %v3240
        %v4006 = vpack.c.b16 %v3250, %v3241
        %v4007 = vpack.c.b16 %v3251, %v3242
        %v4008 = vpack.c.b16 %v3252, %v3243
        %v4009 = vpack.c.b16 %v3253, %v3244
        %v4010 = vpack.c.b16 %v3254, %v3245
        %v4011 = vpack.c.b16 %v3264, %v3255
        %v4012 = vpack.c.b16 %v3265, %v3256
        %v4013 = vpack.c.b16 %v3266, %v3257
        %v4014 = vpack.c.b16 %v3267, %v3258
        %v4015 = vpack.c.b16 %v3268, %v3259
        %v4016 = vpack.c.b16 %v3269, %v3260
        %v4017 = vpack.c.b16 %v3270, %v3261
        %v4018 = vpack.c.b16 %v3271, %v3262
        %v4019 = vpack.c.b16 %v3272, %v3263
        %v4020 = vpack.c.b16 %v3282, %v3273
        %v4021 = vpack.c.b16 %v3283, %v3274
        %v4022 = vpack.c.b16 %v3284, %v3275
        %v4023 = vpack.c.b16 %v3285, %v3276
        %v4024 = vpack.c.b16 %v3286, %v3277
        %v4025 = vpack.c.b16 %v3287, %v3278
        %v4026 = vpack.c.b16 %v3288, %v3279
        %v4027 = vpack.c.b16 %v3289, %v3280
        %v4028 = vpack.c.b16 %v3290, %v3281
        %v4029 = vpack.c.b16 %v3300, %v3291
        %v4030 = vpack.c.b16 %v3301, %v3292
        %v4031 = vpack.c.b16 %v3302, %v3293
        %v4032 = vpack.c.b16 %v3303, %v3294
        %v4033 = vpack.c.b16 %v3304, %v3295
        %v4034 = vpack.c.b16 %v3305, %v3296
        %v4035 = vpack.c.b16 %v3306, %v3297
        %v4036 = vpack.c.b16 %v3307, %v3298
        %v4037 = vpack.c.b16 %v3308, %v3299
        %v4038 = vpack.c.b16 %v3318, %v3309
        %v4039 = vpack.c.b16 %v3319, %v3310
        %v4040 = vpack.c.b16 %v3320, %v3311
        %v4041 = vpack.c.b16 %v3321, %v3312
        %v4042 = vpack.c.b16 %v3322, %v3313
        %v4043 = vpack.c.b16 %v3323, %v3314
        %v4044 = vpack.c.b16 %v3324, %v3315
        %v4045 = vpack.c.b16 %v3325, %v3316
        %v4046 = vpack.c.b16 %v3326, %v3317
        %4767 = vmatpush.bf16.msra.mxu0 %v3390
        %4768 = vmatpush.bf16.msra.mxu0 %v3381
        %4769 = vmatpush.bf16.msra.mxu0 %v3372
        %4770 = vmatpush.bf16.msra.mxu0 %v3363
        %4771 = vmatpush.bf16.msra.mxu0 %v3354
        %4772 = vmatpush.bf16.msra.mxu0 %v3345
        %4773 = vmatpush.bf16.msra.mxu0 %v3336
        %4774 = vmatpush.bf16.msra.mxu0 %v3327
        %4775 = vmatmul.bf16.gmra.mxu0 %v1065
        %v4776 = vpop.f32.mrf.mxu0
        %v4777 = vadd.f32 0.0, %v4776
        %v4778 = vpop.f32.mrf.mxu0
        %4779 = vdwg.mxu0
        %4780 = vmatpush.bf16.msra.mxu0 %v3462
        %4781 = vmatpush.bf16.msra.mxu0 %v3453
        %4782 = vmatpush.bf16.msra.mxu0 %v3444
        %4783 = vmatpush.bf16.msra.mxu0 %v3435
        %4784 = vmatpush.bf16.msra.mxu0 %v3426
        %4785 = vmatpush.bf16.msra.mxu0 %v3417
        %4786 = vmatpush.bf16.msra.mxu0 %v3408
        %4787 = vmatpush.bf16.msra.mxu0 %v3399
        %4788 = vmatmul.bf16.gmra.mxu0 %v1066
        %v4789 = vpop.f32.mrf.mxu0
        %v4790 = vadd.f32 %v4777, %v4789
        %v4791 = vpop.f32.mrf.mxu0
        %4792 = vdwg.mxu0
        %4793 = vmatpush.bf16.msra.mxu0 %v3534
        %4794 = vmatpush.bf16.msra.mxu0 %v3525
        %4795 = vmatpush.bf16.msra.mxu0 %v3516
        %4796 = vmatpush.bf16.msra.mxu0 %v3507
        %4797 = vmatpush.bf16.msra.mxu0 %v3498
        %4798 = vmatpush.bf16.msra.mxu0 %v3489
        %4799 = vmatpush.bf16.msra.mxu0 %v3480
        %4800 = vmatpush.bf16.msra.mxu0 %v3471
        %4801 = vmatmul.bf16.gmra.mxu0 %v1067
        %v4802 = vpop.f32.mrf.mxu0
        %v4803 = vadd.f32 %v4790, %v4802
        %v4804 = vpop.f32.mrf.mxu0
        %4805 = vdwg.mxu0
        %4806 = vmatpush.bf16.msra.mxu0 %v3606
        %4807 = vmatpush.bf16.msra.mxu0 %v3597
        %4808 = vmatpush.bf16.msra.mxu0 %v3588
        %4809 = vmatpush.bf16.msra.mxu0 %v3579
        %4810 = vmatpush.bf16.msra.mxu0 %v3570
        %4811 = vmatpush.bf16.msra.mxu0 %v3561
        %4812 = vmatpush.bf16.msra.mxu0 %v3552
        %4813 = vmatpush.bf16.msra.mxu0 %v3543
        %4814 = vmatmul.bf16.gmra.mxu0 %v1068
        %v4815 = vpop.f32.mrf.mxu0
        %v4816 = vadd.f32 %v4803, %v4815
        %v4817 = vpop.f32.mrf.mxu0
        %4818 = vdwg.mxu0
        %4819 = vmatpush.bf16.msra.mxu0 %v3678
        %4820 = vmatpush.bf16.msra.mxu0 %v3669
        %4821 = vmatpush.bf16.msra.mxu0 %v3660
        %4822 = vmatpush.bf16.msra.mxu0 %v3651
        %4823 = vmatpush.bf16.msra.mxu0 %v3642
        %4824 = vmatpush.bf16.msra.mxu0 %v3633
        %4825 = vmatpush.bf16.msra.mxu0 %v3624
        %4826 = vmatpush.bf16.msra.mxu0 %v3615
        %4827 = vmatmul.bf16.gmra.mxu0 %v1069
        %v4828 = vpop.f32.mrf.mxu0
        %v4829 = vadd.f32 %v4816, %v4828
        %v4830 = vpop.f32.mrf.mxu0
        %4831 = vdwg.mxu0
        %4832 = vmatpush.bf16.msra.mxu0 %v3750
        %4833 = vmatpush.bf16.msra.mxu0 %v3741
        %4834 = vmatpush.bf16.msra.mxu0 %v3732
        %4835 = vmatpush.bf16.msra.mxu0 %v3723
        %4836 = vmatpush.bf16.msra.mxu0 %v3714
        %4837 = vmatpush.bf16.msra.mxu0 %v3705
        %4838 = vmatpush.bf16.msra.mxu0 %v3696
        %4839 = vmatpush.bf16.msra.mxu0 %v3687
        %4840 = vmatmul.bf16.gmra.mxu0 %v1070
        %v4841 = vpop.f32.mrf.mxu0
        %v4842 = vadd.f32 %v4829, %v4841
        %v4843 = vpop.f32.mrf.mxu0
        %4844 = vdwg.mxu0
        %4845 = vmatpush.bf16.msra.mxu0 %v3822
        %4846 = vmatpush.bf16.msra.mxu0 %v3813
        %4847 = vmatpush.bf16.msra.mxu0 %v3804
        %4848 = vmatpush.bf16.msra.mxu0 %v3795
        %4849 = vmatpush.bf16.msra.mxu0 %v3786
        %4850 = vmatpush.bf16.msra.mxu0 %v3777
        %4851 = vmatpush.bf16.msra.mxu0 %v3768
        %4852 = vmatpush.bf16.msra.mxu0 %v3759
        %4853 = vmatmul.bf16.gmra.mxu0 %v1071
        %v4854 = vpop.f32.mrf.mxu0
        %v4855 = vadd.f32 %v4842, %v4854
        %v4856 = vpop.f32.mrf.mxu0
        %4857 = vdwg.mxu0
        %4858 = vmatpush.bf16.msra.mxu0 %v3894
        %4859 = vmatpush.bf16.msra.mxu0 %v3885
        %4860 = vmatpush.bf16.msra.mxu0 %v3876
        %4861 = vmatpush.bf16.msra.mxu0 %v3867
        %4862 = vmatpush.bf16.msra.mxu0 %v3858
        %4863 = vmatpush.bf16.msra.mxu0 %v3849
        %4864 = vmatpush.bf16.msra.mxu0 %v3840
        %4865 = vmatpush.bf16.msra.mxu0 %v3831
        %4866 = vmatmul.bf16.gmra.mxu0 %v1072
        %v4867 = vpop.f32.mrf.mxu0
        %v4868 = vadd.f32 %v4855, %v4867
        %v4869 = vpop.f32.mrf.mxu0
        %4870 = vdwg.mxu0
        %4871 = vmatpush.bf16.msra.mxu0 %v3966
        %4872 = vmatpush.bf16.msra.mxu0 %v3957
        %4873 = vmatpush.bf16.msra.mxu0 %v3948
        %4874 = vmatpush.bf16.msra.mxu0 %v3939
        %4875 = vmatpush.bf16.msra.mxu0 %v3930
        %4876 = vmatpush.bf16.msra.mxu0 %v3921
        %4877 = vmatpush.bf16.msra.mxu0 %v3912
        %4878 = vmatpush.bf16.msra.mxu0 %v3903
        %4879 = vmatmul.bf16.gmra.mxu0 %v1075
        %v4880 = vpop.f32.mrf.mxu0
        %v4881 = vadd.f32 %v4868, %v4880
        %v4882 = vpop.f32.mrf.mxu0
        %4883 = vdwg.mxu0
        %4884 = vmatpush.bf16.msra.mxu0 %v4038
        %4885 = vmatpush.bf16.msra.mxu0 %v4029
        %4886 = vmatpush.bf16.msra.mxu0 %v4020
        %4887 = vmatpush.bf16.msra.mxu0 %v4011
        %4888 = vmatpush.bf16.msra.mxu0 %v4002
        %4889 = vmatpush.bf16.msra.mxu0 %v3993
        %4890 = vmatpush.bf16.msra.mxu0 %v3984
        %4891 = vmatpush.bf16.msra.mxu0 %v3975
        %4892 = vmatmul.bf16.gmra.mxu0 %v1076
        %v4893 = vpop.f32.mrf.mxu0
        %v4894 = vadd.f32 %v4881, %v4893
        %v4895 = vpop.f32.mrf.mxu0
        %4896 = vdwg.mxu0
        %4897 = vmatpush.bf16.msra.mxu0 %v3391
        %4898 = vmatpush.bf16.msra.mxu0 %v3382
        %4899 = vmatpush.bf16.msra.mxu0 %v3373
        %4900 = vmatpush.bf16.msra.mxu0 %v3364
        %4901 = vmatpush.bf16.msra.mxu0 %v3355
        %4902 = vmatpush.bf16.msra.mxu0 %v3346
        %4903 = vmatpush.bf16.msra.mxu0 %v3337
        %4904 = vmatpush.bf16.msra.mxu0 %v3328
        %4905 = vmatmul.bf16.gmra.mxu0 %v1065
        %v4906 = vpop.f32.mrf.mxu0
        %v4907 = vadd.f32 0.0, %v4906
        %v4908 = vpop.f32.mrf.mxu0
        %4909 = vdwg.mxu0
        %4910 = vmatpush.bf16.msra.mxu0 %v3463
        %4911 = vmatpush.bf16.msra.mxu0 %v3454
        %4912 = vmatpush.bf16.msra.mxu0 %v3445
        %4913 = vmatpush.bf16.msra.mxu0 %v3436
        %4914 = vmatpush.bf16.msra.mxu0 %v3427
        %4915 = vmatpush.bf16.msra.mxu0 %v3418
        %4916 = vmatpush.bf16.msra.mxu0 %v3409
        %4917 = vmatpush.bf16.msra.mxu0 %v3400
        %4918 = vmatmul.bf16.gmra.mxu0 %v1066
        %v4919 = vpop.f32.mrf.mxu0
        %v4920 = vadd.f32 %v4907, %v4919
        %v4921 = vpop.f32.mrf.mxu0
        %4922 = vdwg.mxu0
        %4923 = vmatpush.bf16.msra.mxu0 %v3535
        %4924 = vmatpush.bf16.msra.mxu0 %v3526
        %4925 = vmatpush.bf16.msra.mxu0 %v3517
        %4926 = vmatpush.bf16.msra.mxu0 %v3508
        %4927 = vmatpush.bf16.msra.mxu0 %v3499
        %4928 = vmatpush.bf16.msra.mxu0 %v3490
        %4929 = vmatpush.bf16.msra.mxu0 %v3481
        %4930 = vmatpush.bf16.msra.mxu0 %v3472
        %4931 = vmatmul.bf16.gmra.mxu0 %v1067
        %v4932 = vpop.f32.mrf.mxu0
        %v4933 = vadd.f32 %v4920, %v4932
        %v4934 = vpop.f32.mrf.mxu0
        %4935 = vdwg.mxu0
        %4936 = vmatpush.bf16.msra.mxu0 %v3607
        %4937 = vmatpush.bf16.msra.mxu0 %v3598
        %4938 = vmatpush.bf16.msra.mxu0 %v3589
        %4939 = vmatpush.bf16.msra.mxu0 %v3580
        %4940 = vmatpush.bf16.msra.mxu0 %v3571
        %4941 = vmatpush.bf16.msra.mxu0 %v3562
        %4942 = vmatpush.bf16.msra.mxu0 %v3553
        %4943 = vmatpush.bf16.msra.mxu0 %v3544
        %4944 = vmatmul.bf16.gmra.mxu0 %v1068
        %v4945 = vpop.f32.mrf.mxu0
        %v4946 = vadd.f32 %v4933, %v4945
        %v4947 = vpop.f32.mrf.mxu0
        %4948 = vdwg.mxu0
        %4949 = vmatpush.bf16.msra.mxu0 %v3679
        %4950 = vmatpush.bf16.msra.mxu0 %v3670
        %4951 = vmatpush.bf16.msra.mxu0 %v3661
        %4952 = vmatpush.bf16.msra.mxu0 %v3652
        %4953 = vmatpush.bf16.msra.mxu0 %v3643
        %4954 = vmatpush.bf16.msra.mxu0 %v3634
        %4955 = vmatpush.bf16.msra.mxu0 %v3625
        %4956 = vmatpush.bf16.msra.mxu0 %v3616
        %4957 = vmatmul.bf16.gmra.mxu0 %v1069
        %v4958 = vpop.f32.mrf.mxu0
        %v4959 = vadd.f32 %v4946, %v4958
        %v4960 = vpop.f32.mrf.mxu0
        %4961 = vdwg.mxu0
        %4962 = vmatpush.bf16.msra.mxu0 %v3751
        %4963 = vmatpush.bf16.msra.mxu0 %v3742
        %4964 = vmatpush.bf16.msra.mxu0 %v3733
        %4965 = vmatpush.bf16.msra.mxu0 %v3724
        %4966 = vmatpush.bf16.msra.mxu0 %v3715
        %4967 = vmatpush.bf16.msra.mxu0 %v3706
        %4968 = vmatpush.bf16.msra.mxu0 %v3697
        %4969 = vmatpush.bf16.msra.mxu0 %v3688
        %4970 = vmatmul.bf16.gmra.mxu0 %v1070
        %v4971 = vpop.f32.mrf.mxu0
        %v4972 = vadd.f32 %v4959, %v4971
        %v4973 = vpop.f32.mrf.mxu0
        %4974 = vdwg.mxu0
        %4975 = vmatpush.bf16.msra.mxu0 %v3823
        %4976 = vmatpush.bf16.msra.mxu0 %v3814
        %4977 = vmatpush.bf16.msra.mxu0 %v3805
        %4978 = vmatpush.bf16.msra.mxu0 %v3796
        %4979 = vmatpush.bf16.msra.mxu0 %v3787
        %4980 = vmatpush.bf16.msra.mxu0 %v3778
        %4981 = vmatpush.bf16.msra.mxu0 %v3769
        %4982 = vmatpush.bf16.msra.mxu0 %v3760
        %4983 = vmatmul.bf16.gmra.mxu0 %v1071
        %v4984 = vpop.f32.mrf.mxu0
        %v4985 = vadd.f32 %v4972, %v4984
        %v4986 = vpop.f32.mrf.mxu0
        %4987 = vdwg.mxu0
        %4988 = vmatpush.bf16.msra.mxu0 %v3895
        %4989 = vmatpush.bf16.msra.mxu0 %v3886
        %4990 = vmatpush.bf16.msra.mxu0 %v3877
        %4991 = vmatpush.bf16.msra.mxu0 %v3868
        %4992 = vmatpush.bf16.msra.mxu0 %v3859
        %4993 = vmatpush.bf16.msra.mxu0 %v3850
        %4994 = vmatpush.bf16.msra.mxu0 %v3841
        %4995 = vmatpush.bf16.msra.mxu0 %v3832
        %4996 = vmatmul.bf16.gmra.mxu0 %v1072
        %v4997 = vpop.f32.mrf.mxu0
        %v4998 = vadd.f32 %v4985, %v4997
        %v4999 = vpop.f32.mrf.mxu0
        %5000 = vdwg.mxu0
        %5001 = vmatpush.bf16.msra.mxu0 %v3967
        %5002 = vmatpush.bf16.msra.mxu0 %v3958
        %5003 = vmatpush.bf16.msra.mxu0 %v3949
        %5004 = vmatpush.bf16.msra.mxu0 %v3940
        %5005 = vmatpush.bf16.msra.mxu0 %v3931
        %5006 = vmatpush.bf16.msra.mxu0 %v3922
        %5007 = vmatpush.bf16.msra.mxu0 %v3913
        %5008 = vmatpush.bf16.msra.mxu0 %v3904
        %5009 = vmatmul.bf16.gmra.mxu0 %v1075
        %v5010 = vpop.f32.mrf.mxu0
        %v5011 = vadd.f32 %v4998, %v5010
        %v5012 = vpop.f32.mrf.mxu0
        %5013 = vdwg.mxu0
        %5014 = vmatpush.bf16.msra.mxu0 %v4039
        %5015 = vmatpush.bf16.msra.mxu0 %v4030
        %5016 = vmatpush.bf16.msra.mxu0 %v4021
        %5017 = vmatpush.bf16.msra.mxu0 %v4012
        %5018 = vmatpush.bf16.msra.mxu0 %v4003
        %5019 = vmatpush.bf16.msra.mxu0 %v3994
        %5020 = vmatpush.bf16.msra.mxu0 %v3985
        %5021 = vmatpush.bf16.msra.mxu0 %v3976
        %5022 = vmatmul.bf16.gmra.mxu0 %v1076
        %v5023 = vpop.f32.mrf.mxu0
        %v5024 = vadd.f32 %v5011, %v5023
        %v5025 = vpop.f32.mrf.mxu0
        %5026 = vdwg.mxu0
        %5027 = vmatpush.bf16.msra.mxu0 %v3392
        %5028 = vmatpush.bf16.msra.mxu0 %v3383
        %5029 = vmatpush.bf16.msra.mxu0 %v3374
        %5030 = vmatpush.bf16.msra.mxu0 %v3365
        %5031 = vmatpush.bf16.msra.mxu0 %v3356
        %5032 = vmatpush.bf16.msra.mxu0 %v3347
        %5033 = vmatpush.bf16.msra.mxu0 %v3338
        %5034 = vmatpush.bf16.msra.mxu0 %v3329
        %5035 = vmatmul.bf16.gmra.mxu0 %v1065
        %v5036 = vpop.f32.mrf.mxu0
        %v5037 = vadd.f32 0.0, %v5036
        %v5038 = vpop.f32.mrf.mxu0
        %5039 = vdwg.mxu0
        %5040 = vmatpush.bf16.msra.mxu0 %v3464
        %5041 = vmatpush.bf16.msra.mxu0 %v3455
        %5042 = vmatpush.bf16.msra.mxu0 %v3446
        %5043 = vmatpush.bf16.msra.mxu0 %v3437
        %5044 = vmatpush.bf16.msra.mxu0 %v3428
        %5045 = vmatpush.bf16.msra.mxu0 %v3419
        %5046 = vmatpush.bf16.msra.mxu0 %v3410
        %5047 = vmatpush.bf16.msra.mxu0 %v3401
        %5048 = vmatmul.bf16.gmra.mxu0 %v1066
        %v5049 = vpop.f32.mrf.mxu0
        %v5050 = vadd.f32 %v5037, %v5049
        %v5051 = vpop.f32.mrf.mxu0
        %5052 = vdwg.mxu0
        %5053 = vmatpush.bf16.msra.mxu0 %v3536
        %5054 = vmatpush.bf16.msra.mxu0 %v3527
        %5055 = vmatpush.bf16.msra.mxu0 %v3518
        %5056 = vmatpush.bf16.msra.mxu0 %v3509
        %5057 = vmatpush.bf16.msra.mxu0 %v3500
        %5058 = vmatpush.bf16.msra.mxu0 %v3491
        %5059 = vmatpush.bf16.msra.mxu0 %v3482
        %5060 = vmatpush.bf16.msra.mxu0 %v3473
        %5061 = vmatmul.bf16.gmra.mxu0 %v1067
        %v5062 = vpop.f32.mrf.mxu0
        %v5063 = vadd.f32 %v5050, %v5062
        %v5064 = vpop.f32.mrf.mxu0
        %5065 = vdwg.mxu0
        %5066 = vmatpush.bf16.msra.mxu0 %v3608
        %5067 = vmatpush.bf16.msra.mxu0 %v3599
        %5068 = vmatpush.bf16.msra.mxu0 %v3590
        %5069 = vmatpush.bf16.msra.mxu0 %v3581
        %5070 = vmatpush.bf16.msra.mxu0 %v3572
        %5071 = vmatpush.bf16.msra.mxu0 %v3563
        %5072 = vmatpush.bf16.msra.mxu0 %v3554
        %5073 = vmatpush.bf16.msra.mxu0 %v3545
        %5074 = vmatmul.bf16.gmra.mxu0 %v1068
        %v5075 = vpop.f32.mrf.mxu0
        %v5076 = vadd.f32 %v5063, %v5075
        %v5077 = vpop.f32.mrf.mxu0
        %5078 = vdwg.mxu0
        %5079 = vmatpush.bf16.msra.mxu0 %v3680
        %5080 = vmatpush.bf16.msra.mxu0 %v3671
        %5081 = vmatpush.bf16.msra.mxu0 %v3662
        %5082 = vmatpush.bf16.msra.mxu0 %v3653
        %5083 = vmatpush.bf16.msra.mxu0 %v3644
        %5084 = vmatpush.bf16.msra.mxu0 %v3635
        %5085 = vmatpush.bf16.msra.mxu0 %v3626
        %5086 = vmatpush.bf16.msra.mxu0 %v3617
        %5087 = vmatmul.bf16.gmra.mxu0 %v1069
        %v5088 = vpop.f32.mrf.mxu0
        %v5089 = vadd.f32 %v5076, %v5088
        %v5090 = vpop.f32.mrf.mxu0
        %5091 = vdwg.mxu0
        %5092 = vmatpush.bf16.msra.mxu0 %v3752
        %5093 = vmatpush.bf16.msra.mxu0 %v3743
        %5094 = vmatpush.bf16.msra.mxu0 %v3734
        %5095 = vmatpush.bf16.msra.mxu0 %v3725
        %5096 = vmatpush.bf16.msra.mxu0 %v3716
        %5097 = vmatpush.bf16.msra.mxu0 %v3707
        %5098 = vmatpush.bf16.msra.mxu0 %v3698
        %5099 = vmatpush.bf16.msra.mxu0 %v3689
        %5100 = vmatmul.bf16.gmra.mxu0 %v1070
        %v5101 = vpop.f32.mrf.mxu0
        %v5102 = vadd.f32 %v5089, %v5101
        %v5103 = vpop.f32.mrf.mxu0
        %5104 = vdwg.mxu0
        %5105 = vmatpush.bf16.msra.mxu0 %v3824
        %5106 = vmatpush.bf16.msra.mxu0 %v3815
        %5107 = vmatpush.bf16.msra.mxu0 %v3806
        %5108 = vmatpush.bf16.msra.mxu0 %v3797
        %5109 = vmatpush.bf16.msra.mxu0 %v3788
        %5110 = vmatpush.bf16.msra.mxu0 %v3779
        %5111 = vmatpush.bf16.msra.mxu0 %v3770
        %5112 = vmatpush.bf16.msra.mxu0 %v3761
        %5113 = vmatmul.bf16.gmra.mxu0 %v1071
        %v5114 = vpop.f32.mrf.mxu0
        %v5115 = vadd.f32 %v5102, %v5114
        %v5116 = vpop.f32.mrf.mxu0
        %5117 = vdwg.mxu0
        %5118 = vmatpush.bf16.msra.mxu0 %v3896
        %5119 = vmatpush.bf16.msra.mxu0 %v3887
        %5120 = vmatpush.bf16.msra.mxu0 %v3878
        %5121 = vmatpush.bf16.msra.mxu0 %v3869
        %5122 = vmatpush.bf16.msra.mxu0 %v3860
        %5123 = vmatpush.bf16.msra.mxu0 %v3851
        %5124 = vmatpush.bf16.msra.mxu0 %v3842
        %5125 = vmatpush.bf16.msra.mxu0 %v3833
        %5126 = vmatmul.bf16.gmra.mxu0 %v1072
        %v5127 = vpop.f32.mrf.mxu0
        %v5128 = vadd.f32 %v5115, %v5127
        %v5129 = vpop.f32.mrf.mxu0
        %5130 = vdwg.mxu0
        %5131 = vmatpush.bf16.msra.mxu0 %v3968
        %5132 = vmatpush.bf16.msra.mxu0 %v3959
        %5133 = vmatpush.bf16.msra.mxu0 %v3950
        %5134 = vmatpush.bf16.msra.mxu0 %v3941
        %5135 = vmatpush.bf16.msra.mxu0 %v3932
        %5136 = vmatpush.bf16.msra.mxu0 %v3923
        %5137 = vmatpush.bf16.msra.mxu0 %v3914
        %5138 = vmatpush.bf16.msra.mxu0 %v3905
        %5139 = vmatmul.bf16.gmra.mxu0 %v1075
        %v5140 = vpop.f32.mrf.mxu0
        %v5141 = vadd.f32 %v5128, %v5140
        %v5142 = vpop.f32.mrf.mxu0
        %5143 = vdwg.mxu0
        %5144 = vmatpush.bf16.msra.mxu0 %v4040
        %5145 = vmatpush.bf16.msra.mxu0 %v4031
        %5146 = vmatpush.bf16.msra.mxu0 %v4022
        %5147 = vmatpush.bf16.msra.mxu0 %v4013
        %5148 = vmatpush.bf16.msra.mxu0 %v4004
        %5149 = vmatpush.bf16.msra.mxu0 %v3995
        %5150 = vmatpush.bf16.msra.mxu0 %v3986
        %5151 = vmatpush.bf16.msra.mxu0 %v3977
        %5152 = vmatmul.bf16.gmra.mxu0 %v1076
        %v5153 = vpop.f32.mrf.mxu0
        %v5154 = vadd.f32 %v5141, %v5153
        %v5155 = vpop.f32.mrf.mxu0
        %5156 = vdwg.mxu0
        %5157 = vmatpush.bf16.msra.mxu0 %v3393
        %5158 = vmatpush.bf16.msra.mxu0 %v3384
        %5159 = vmatpush.bf16.msra.mxu0 %v3375
        %5160 = vmatpush.bf16.msra.mxu0 %v3366
        %5161 = vmatpush.bf16.msra.mxu0 %v3357
        %5162 = vmatpush.bf16.msra.mxu0 %v3348
        %5163 = vmatpush.bf16.msra.mxu0 %v3339
        %5164 = vmatpush.bf16.msra.mxu0 %v3330
        %5165 = vmatmul.bf16.gmra.mxu0 %v1065
        %v5166 = vpop.f32.mrf.mxu0
        %v5167 = vadd.f32 0.0, %v5166
        %v5168 = vpop.f32.mrf.mxu0
        %5169 = vdwg.mxu0
        %5170 = vmatpush.bf16.msra.mxu0 %v3465
        %5171 = vmatpush.bf16.msra.mxu0 %v3456
        %5172 = vmatpush.bf16.msra.mxu0 %v3447
        %5173 = vmatpush.bf16.msra.mxu0 %v3438
        %5174 = vmatpush.bf16.msra.mxu0 %v3429
        %5175 = vmatpush.bf16.msra.mxu0 %v3420
        %5176 = vmatpush.bf16.msra.mxu0 %v3411
        %5177 = vmatpush.bf16.msra.mxu0 %v3402
        %5178 = vmatmul.bf16.gmra.mxu0 %v1066
        %v5179 = vpop.f32.mrf.mxu0
        %v5180 = vadd.f32 %v5167, %v5179
        %v5181 = vpop.f32.mrf.mxu0
        %5182 = vdwg.mxu0
        %5183 = vmatpush.bf16.msra.mxu0 %v3537
        %5184 = vmatpush.bf16.msra.mxu0 %v3528
        %5185 = vmatpush.bf16.msra.mxu0 %v3519
        %5186 = vmatpush.bf16.msra.mxu0 %v3510
        %5187 = vmatpush.bf16.msra.mxu0 %v3501
        %5188 = vmatpush.bf16.msra.mxu0 %v3492
        %5189 = vmatpush.bf16.msra.mxu0 %v3483
        %5190 = vmatpush.bf16.msra.mxu0 %v3474
        %5191 = vmatmul.bf16.gmra.mxu0 %v1067
        %v5192 = vpop.f32.mrf.mxu0
        %v5193 = vadd.f32 %v5180, %v5192
        %v5194 = vpop.f32.mrf.mxu0
        %5195 = vdwg.mxu0
        %5196 = vmatpush.bf16.msra.mxu0 %v3609
        %5197 = vmatpush.bf16.msra.mxu0 %v3600
        %5198 = vmatpush.bf16.msra.mxu0 %v3591
        %5199 = vmatpush.bf16.msra.mxu0 %v3582
        %5200 = vmatpush.bf16.msra.mxu0 %v3573
        %5201 = vmatpush.bf16.msra.mxu0 %v3564
        %5202 = vmatpush.bf16.msra.mxu0 %v3555
        %5203 = vmatpush.bf16.msra.mxu0 %v3546
        %5204 = vmatmul.bf16.gmra.mxu0 %v1068
        %v5205 = vpop.f32.mrf.mxu0
        %v5206 = vadd.f32 %v5193, %v5205
        %v5207 = vpop.f32.mrf.mxu0
        %5208 = vdwg.mxu0
        %5209 = vmatpush.bf16.msra.mxu0 %v3681
        %5210 = vmatpush.bf16.msra.mxu0 %v3672
        %5211 = vmatpush.bf16.msra.mxu0 %v3663
        %5212 = vmatpush.bf16.msra.mxu0 %v3654
        %5213 = vmatpush.bf16.msra.mxu0 %v3645
        %5214 = vmatpush.bf16.msra.mxu0 %v3636
        %5215 = vmatpush.bf16.msra.mxu0 %v3627
        %5216 = vmatpush.bf16.msra.mxu0 %v3618
        %5217 = vmatmul.bf16.gmra.mxu0 %v1069
        %v5218 = vpop.f32.mrf.mxu0
        %v5219 = vadd.f32 %v5206, %v5218
        %v5220 = vpop.f32.mrf.mxu0
        %5221 = vdwg.mxu0
        %5222 = vmatpush.bf16.msra.mxu0 %v3753
        %5223 = vmatpush.bf16.msra.mxu0 %v3744
        %5224 = vmatpush.bf16.msra.mxu0 %v3735
        %5225 = vmatpush.bf16.msra.mxu0 %v3726
        %5226 = vmatpush.bf16.msra.mxu0 %v3717
        %5227 = vmatpush.bf16.msra.mxu0 %v3708
        %5228 = vmatpush.bf16.msra.mxu0 %v3699
        %5229 = vmatpush.bf16.msra.mxu0 %v3690
        %5230 = vmatmul.bf16.gmra.mxu0 %v1070
        %v5231 = vpop.f32.mrf.mxu0
        %v5232 = vadd.f32 %v5219, %v5231
        %v5233 = vpop.f32.mrf.mxu0
        %5234 = vdwg.mxu0
        %5235 = vmatpush.bf16.msra.mxu0 %v3825
        %5236 = vmatpush.bf16.msra.mxu0 %v3816
        %5237 = vmatpush.bf16.msra.mxu0 %v3807
        %5238 = vmatpush.bf16.msra.mxu0 %v3798
        %5239 = vmatpush.bf16.msra.mxu0 %v3789
        %5240 = vmatpush.bf16.msra.mxu0 %v3780
        %5241 = vmatpush.bf16.msra.mxu0 %v3771
        %5242 = vmatpush.bf16.msra.mxu0 %v3762
        %5243 = vmatmul.bf16.gmra.mxu0 %v1071
        %v5244 = vpop.f32.mrf.mxu0
        %v5245 = vadd.f32 %v5232, %v5244
        %v5246 = vpop.f32.mrf.mxu0
        %5247 = vdwg.mxu0
        %5248 = vmatpush.bf16.msra.mxu0 %v3897
        %5249 = vmatpush.bf16.msra.mxu0 %v3888
        %5250 = vmatpush.bf16.msra.mxu0 %v3879
        %5251 = vmatpush.bf16.msra.mxu0 %v3870
        %5252 = vmatpush.bf16.msra.mxu0 %v3861
        %5253 = vmatpush.bf16.msra.mxu0 %v3852
        %5254 = vmatpush.bf16.msra.mxu0 %v3843
        %5255 = vmatpush.bf16.msra.mxu0 %v3834
        %5256 = vmatmul.bf16.gmra.mxu0 %v1072
        %v5257 = vpop.f32.mrf.mxu0
        %v5258 = vadd.f32 %v5245, %v5257
        %v5259 = vpop.f32.mrf.mxu0
        %5260 = vdwg.mxu0
        %5261 = vmatpush.bf16.msra.mxu0 %v3969
        %5262 = vmatpush.bf16.msra.mxu0 %v3960
        %5263 = vmatpush.bf16.msra.mxu0 %v3951
        %5264 = vmatpush.bf16.msra.mxu0 %v3942
        %5265 = vmatpush.bf16.msra.mxu0 %v3933
        %5266 = vmatpush.bf16.msra.mxu0 %v3924
        %5267 = vmatpush.bf16.msra.mxu0 %v3915
        %5268 = vmatpush.bf16.msra.mxu0 %v3906
        %5269 = vmatmul.bf16.gmra.mxu0 %v1075
        %v5270 = vpop.f32.mrf.mxu0
        %v5271 = vadd.f32 %v5258, %v5270
        %v5272 = vpop.f32.mrf.mxu0
        %5273 = vdwg.mxu0
        %5274 = vmatpush.bf16.msra.mxu0 %v4041
        %5275 = vmatpush.bf16.msra.mxu0 %v4032
        %5276 = vmatpush.bf16.msra.mxu0 %v4023
        %5277 = vmatpush.bf16.msra.mxu0 %v4014
        %5278 = vmatpush.bf16.msra.mxu0 %v4005
        %5279 = vmatpush.bf16.msra.mxu0 %v3996
        %5280 = vmatpush.bf16.msra.mxu0 %v3987
        %5281 = vmatpush.bf16.msra.mxu0 %v3978
        %5282 = vmatmul.bf16.gmra.mxu0 %v1076
        %v5283 = vpop.f32.mrf.mxu0
        %v5284 = vadd.f32 %v5271, %v5283
        %v5285 = vpop.f32.mrf.mxu0
        %5286 = vdwg.mxu0
        %5287 = vmatpush.bf16.msra.mxu0 %v3394
        %5288 = vmatpush.bf16.msra.mxu0 %v3385
        %5289 = vmatpush.bf16.msra.mxu0 %v3376
        %5290 = vmatpush.bf16.msra.mxu0 %v3367
        %5291 = vmatpush.bf16.msra.mxu0 %v3358
        %5292 = vmatpush.bf16.msra.mxu0 %v3349
        %5293 = vmatpush.bf16.msra.mxu0 %v3340
        %5294 = vmatpush.bf16.msra.mxu0 %v3331
        %5295 = vmatmul.bf16.gmra.mxu0 %v1065
        %v5296 = vpop.f32.mrf.mxu0
        %v5297 = vadd.f32 0.0, %v5296
        %v5298 = vpop.f32.mrf.mxu0
        %5299 = vdwg.mxu0
        %5300 = vmatpush.bf16.msra.mxu0 %v3466
        %5301 = vmatpush.bf16.msra.mxu0 %v3457
        %5302 = vmatpush.bf16.msra.mxu0 %v3448
        %5303 = vmatpush.bf16.msra.mxu0 %v3439
        %5304 = vmatpush.bf16.msra.mxu0 %v3430
        %5305 = vmatpush.bf16.msra.mxu0 %v3421
        %5306 = vmatpush.bf16.msra.mxu0 %v3412
        %5307 = vmatpush.bf16.msra.mxu0 %v3403
        %5308 = vmatmul.bf16.gmra.mxu0 %v1066
        %v5309 = vpop.f32.mrf.mxu0
        %v5310 = vadd.f32 %v5297, %v5309
        %v5311 = vpop.f32.mrf.mxu0
        %5312 = vdwg.mxu0
        %5313 = vmatpush.bf16.msra.mxu0 %v3538
        %5314 = vmatpush.bf16.msra.mxu0 %v3529
        %5315 = vmatpush.bf16.msra.mxu0 %v3520
        %5316 = vmatpush.bf16.msra.mxu0 %v3511
        %5317 = vmatpush.bf16.msra.mxu0 %v3502
        %5318 = vmatpush.bf16.msra.mxu0 %v3493
        %5319 = vmatpush.bf16.msra.mxu0 %v3484
        %5320 = vmatpush.bf16.msra.mxu0 %v3475
        %5321 = vmatmul.bf16.gmra.mxu0 %v1067
        %v5322 = vpop.f32.mrf.mxu0
        %v5323 = vadd.f32 %v5310, %v5322
        %v5324 = vpop.f32.mrf.mxu0
        %5325 = vdwg.mxu0
        %5326 = vmatpush.bf16.msra.mxu0 %v3610
        %5327 = vmatpush.bf16.msra.mxu0 %v3601
        %5328 = vmatpush.bf16.msra.mxu0 %v3592
        %5329 = vmatpush.bf16.msra.mxu0 %v3583
        %5330 = vmatpush.bf16.msra.mxu0 %v3574
        %5331 = vmatpush.bf16.msra.mxu0 %v3565
        %5332 = vmatpush.bf16.msra.mxu0 %v3556
        %5333 = vmatpush.bf16.msra.mxu0 %v3547
        %5334 = vmatmul.bf16.gmra.mxu0 %v1068
        %v5335 = vpop.f32.mrf.mxu0
        %v5336 = vadd.f32 %v5323, %v5335
        %v5337 = vpop.f32.mrf.mxu0
        %5338 = vdwg.mxu0
        %5339 = vmatpush.bf16.msra.mxu0 %v3682
        %5340 = vmatpush.bf16.msra.mxu0 %v3673
        %5341 = vmatpush.bf16.msra.mxu0 %v3664
        %5342 = vmatpush.bf16.msra.mxu0 %v3655
        %5343 = vmatpush.bf16.msra.mxu0 %v3646
        %5344 = vmatpush.bf16.msra.mxu0 %v3637
        %5345 = vmatpush.bf16.msra.mxu0 %v3628
        %5346 = vmatpush.bf16.msra.mxu0 %v3619
        %5347 = vmatmul.bf16.gmra.mxu0 %v1069
        %v5348 = vpop.f32.mrf.mxu0
        %v5349 = vadd.f32 %v5336, %v5348
        %v5350 = vpop.f32.mrf.mxu0
        %5351 = vdwg.mxu0
        %5352 = vmatpush.bf16.msra.mxu0 %v3754
        %5353 = vmatpush.bf16.msra.mxu0 %v3745
        %5354 = vmatpush.bf16.msra.mxu0 %v3736
        %5355 = vmatpush.bf16.msra.mxu0 %v3727
        %5356 = vmatpush.bf16.msra.mxu0 %v3718
        %5357 = vmatpush.bf16.msra.mxu0 %v3709
        %5358 = vmatpush.bf16.msra.mxu0 %v3700
        %5359 = vmatpush.bf16.msra.mxu0 %v3691
        %5360 = vmatmul.bf16.gmra.mxu0 %v1070
        %v5361 = vpop.f32.mrf.mxu0
        %v5362 = vadd.f32 %v5349, %v5361
        %v5363 = vpop.f32.mrf.mxu0
        %5364 = vdwg.mxu0
        %5365 = vmatpush.bf16.msra.mxu0 %v3826
        %5366 = vmatpush.bf16.msra.mxu0 %v3817
        %5367 = vmatpush.bf16.msra.mxu0 %v3808
        %5368 = vmatpush.bf16.msra.mxu0 %v3799
        %5369 = vmatpush.bf16.msra.mxu0 %v3790
        %5370 = vmatpush.bf16.msra.mxu0 %v3781
        %5371 = vmatpush.bf16.msra.mxu0 %v3772
        %5372 = vmatpush.bf16.msra.mxu0 %v3763
        %5373 = vmatmul.bf16.gmra.mxu0 %v1071
        %v5374 = vpop.f32.mrf.mxu0
        %v5375 = vadd.f32 %v5362, %v5374
        %v5376 = vpop.f32.mrf.mxu0
        %5377 = vdwg.mxu0
        %5378 = vmatpush.bf16.msra.mxu0 %v3898
        %5379 = vmatpush.bf16.msra.mxu0 %v3889
        %5380 = vmatpush.bf16.msra.mxu0 %v3880
        %5381 = vmatpush.bf16.msra.mxu0 %v3871
        %5382 = vmatpush.bf16.msra.mxu0 %v3862
        %5383 = vmatpush.bf16.msra.mxu0 %v3853
        %5384 = vmatpush.bf16.msra.mxu0 %v3844
        %5385 = vmatpush.bf16.msra.mxu0 %v3835
        %5386 = vmatmul.bf16.gmra.mxu0 %v1072
        %v5387 = vpop.f32.mrf.mxu0
        %v5388 = vadd.f32 %v5375, %v5387
        %v5389 = vpop.f32.mrf.mxu0
        %5390 = vdwg.mxu0
        %5391 = vmatpush.bf16.msra.mxu0 %v3970
        %5392 = vmatpush.bf16.msra.mxu0 %v3961
        %5393 = vmatpush.bf16.msra.mxu0 %v3952
        %5394 = vmatpush.bf16.msra.mxu0 %v3943
        %5395 = vmatpush.bf16.msra.mxu0 %v3934
        %5396 = vmatpush.bf16.msra.mxu0 %v3925
        %5397 = vmatpush.bf16.msra.mxu0 %v3916
        %5398 = vmatpush.bf16.msra.mxu0 %v3907
        %5399 = vmatmul.bf16.gmra.mxu0 %v1075
        %v5400 = vpop.f32.mrf.mxu0
        %v5401 = vadd.f32 %v5388, %v5400
        %v5402 = vpop.f32.mrf.mxu0
        %5403 = vdwg.mxu0
        %5404 = vmatpush.bf16.msra.mxu0 %v4042
        %5405 = vmatpush.bf16.msra.mxu0 %v4033
        %5406 = vmatpush.bf16.msra.mxu0 %v4024
        %5407 = vmatpush.bf16.msra.mxu0 %v4015
        %5408 = vmatpush.bf16.msra.mxu0 %v4006
        %5409 = vmatpush.bf16.msra.mxu0 %v3997
        %5410 = vmatpush.bf16.msra.mxu0 %v3988
        %5411 = vmatpush.bf16.msra.mxu0 %v3979
        %5412 = vmatmul.bf16.gmra.mxu0 %v1076
        %v5413 = vpop.f32.mrf.mxu0
        %v5414 = vadd.f32 %v5401, %v5413
        %v5415 = vpop.f32.mrf.mxu0
        %5416 = vdwg.mxu0
        %5417 = vmatpush.bf16.msra.mxu0 %v3395
        %5418 = vmatpush.bf16.msra.mxu0 %v3386
        %5419 = vmatpush.bf16.msra.mxu0 %v3377
        %5420 = vmatpush.bf16.msra.mxu0 %v3368
        %5421 = vmatpush.bf16.msra.mxu0 %v3359
        %5422 = vmatpush.bf16.msra.mxu0 %v3350
        %5423 = vmatpush.bf16.msra.mxu0 %v3341
        %5424 = vmatpush.bf16.msra.mxu0 %v3332
        %5425 = vmatmul.bf16.gmra.mxu0 %v1065
        %v5426 = vpop.f32.mrf.mxu0
        %v5427 = vadd.f32 0.0, %v5426
        %v5428 = vpop.f32.mrf.mxu0
        %5429 = vdwg.mxu0
        %5430 = vmatpush.bf16.msra.mxu0 %v3467
        %5431 = vmatpush.bf16.msra.mxu0 %v3458
        %5432 = vmatpush.bf16.msra.mxu0 %v3449
        %5433 = vmatpush.bf16.msra.mxu0 %v3440
        %5434 = vmatpush.bf16.msra.mxu0 %v3431
        %5435 = vmatpush.bf16.msra.mxu0 %v3422
        %5436 = vmatpush.bf16.msra.mxu0 %v3413
        %5437 = vmatpush.bf16.msra.mxu0 %v3404
        %5438 = vmatmul.bf16.gmra.mxu0 %v1066
        %v5439 = vpop.f32.mrf.mxu0
        %v5440 = vadd.f32 %v5427, %v5439
        %v5441 = vpop.f32.mrf.mxu0
        %5442 = vdwg.mxu0
        %5443 = vmatpush.bf16.msra.mxu0 %v3539
        %5444 = vmatpush.bf16.msra.mxu0 %v3530
        %5445 = vmatpush.bf16.msra.mxu0 %v3521
        %5446 = vmatpush.bf16.msra.mxu0 %v3512
        %5447 = vmatpush.bf16.msra.mxu0 %v3503
        %5448 = vmatpush.bf16.msra.mxu0 %v3494
        %5449 = vmatpush.bf16.msra.mxu0 %v3485
        %5450 = vmatpush.bf16.msra.mxu0 %v3476
        %5451 = vmatmul.bf16.gmra.mxu0 %v1067
        %v5452 = vpop.f32.mrf.mxu0
        %v5453 = vadd.f32 %v5440, %v5452
        %v5454 = vpop.f32.mrf.mxu0
        %5455 = vdwg.mxu0
        %5456 = vmatpush.bf16.msra.mxu0 %v3611
        %5457 = vmatpush.bf16.msra.mxu0 %v3602
        %5458 = vmatpush.bf16.msra.mxu0 %v3593
        %5459 = vmatpush.bf16.msra.mxu0 %v3584
        %5460 = vmatpush.bf16.msra.mxu0 %v3575
        %5461 = vmatpush.bf16.msra.mxu0 %v3566
        %5462 = vmatpush.bf16.msra.mxu0 %v3557
        %5463 = vmatpush.bf16.msra.mxu0 %v3548
        %5464 = vmatmul.bf16.gmra.mxu0 %v1068
        %v5465 = vpop.f32.mrf.mxu0
        %v5466 = vadd.f32 %v5453, %v5465
        %v5467 = vpop.f32.mrf.mxu0
        %5468 = vdwg.mxu0
        %5469 = vmatpush.bf16.msra.mxu0 %v3683
        %5470 = vmatpush.bf16.msra.mxu0 %v3674
        %5471 = vmatpush.bf16.msra.mxu0 %v3665
        %5472 = vmatpush.bf16.msra.mxu0 %v3656
        %5473 = vmatpush.bf16.msra.mxu0 %v3647
        %5474 = vmatpush.bf16.msra.mxu0 %v3638
        %5475 = vmatpush.bf16.msra.mxu0 %v3629
        %5476 = vmatpush.bf16.msra.mxu0 %v3620
        %5477 = vmatmul.bf16.gmra.mxu0 %v1069
        %v5478 = vpop.f32.mrf.mxu0
        %v5479 = vadd.f32 %v5466, %v5478
        %v5480 = vpop.f32.mrf.mxu0
        %5481 = vdwg.mxu0
        %5482 = vmatpush.bf16.msra.mxu0 %v3755
        %5483 = vmatpush.bf16.msra.mxu0 %v3746
        %5484 = vmatpush.bf16.msra.mxu0 %v3737
        %5485 = vmatpush.bf16.msra.mxu0 %v3728
        %5486 = vmatpush.bf16.msra.mxu0 %v3719
        %5487 = vmatpush.bf16.msra.mxu0 %v3710
        %5488 = vmatpush.bf16.msra.mxu0 %v3701
        %5489 = vmatpush.bf16.msra.mxu0 %v3692
        %5490 = vmatmul.bf16.gmra.mxu0 %v1070
        %v5491 = vpop.f32.mrf.mxu0
        %v5492 = vadd.f32 %v5479, %v5491
        %v5493 = vpop.f32.mrf.mxu0
        %5494 = vdwg.mxu0
        %5495 = vmatpush.bf16.msra.mxu0 %v3827
        %5496 = vmatpush.bf16.msra.mxu0 %v3818
        %5497 = vmatpush.bf16.msra.mxu0 %v3809
        %5498 = vmatpush.bf16.msra.mxu0 %v3800
        %5499 = vmatpush.bf16.msra.mxu0 %v3791
        %5500 = vmatpush.bf16.msra.mxu0 %v3782
        %5501 = vmatpush.bf16.msra.mxu0 %v3773
        %5502 = vmatpush.bf16.msra.mxu0 %v3764
        %5503 = vmatmul.bf16.gmra.mxu0 %v1071
        %v5504 = vpop.f32.mrf.mxu0
        %v5505 = vadd.f32 %v5492, %v5504
        %v5506 = vpop.f32.mrf.mxu0
        %5507 = vdwg.mxu0
        %5508 = vmatpush.bf16.msra.mxu0 %v3899
        %5509 = vmatpush.bf16.msra.mxu0 %v3890
        %5510 = vmatpush.bf16.msra.mxu0 %v3881
        %5511 = vmatpush.bf16.msra.mxu0 %v3872
        %5512 = vmatpush.bf16.msra.mxu0 %v3863
        %5513 = vmatpush.bf16.msra.mxu0 %v3854
        %5514 = vmatpush.bf16.msra.mxu0 %v3845
        %5515 = vmatpush.bf16.msra.mxu0 %v3836
        %5516 = vmatmul.bf16.gmra.mxu0 %v1072
        %v5517 = vpop.f32.mrf.mxu0
        %v5518 = vadd.f32 %v5505, %v5517
        %v5519 = vpop.f32.mrf.mxu0
        %5520 = vdwg.mxu0
        %5521 = vmatpush.bf16.msra.mxu0 %v3971
        %5522 = vmatpush.bf16.msra.mxu0 %v3962
        %5523 = vmatpush.bf16.msra.mxu0 %v3953
        %5524 = vmatpush.bf16.msra.mxu0 %v3944
        %5525 = vmatpush.bf16.msra.mxu0 %v3935
        %5526 = vmatpush.bf16.msra.mxu0 %v3926
        %5527 = vmatpush.bf16.msra.mxu0 %v3917
        %5528 = vmatpush.bf16.msra.mxu0 %v3908
        %5529 = vmatmul.bf16.gmra.mxu0 %v1075
        %v5530 = vpop.f32.mrf.mxu0
        %v5531 = vadd.f32 %v5518, %v5530
        %v5532 = vpop.f32.mrf.mxu0
        %5533 = vdwg.mxu0
        %5534 = vmatpush.bf16.msra.mxu0 %v4043
        %5535 = vmatpush.bf16.msra.mxu0 %v4034
        %5536 = vmatpush.bf16.msra.mxu0 %v4025
        %5537 = vmatpush.bf16.msra.mxu0 %v4016
        %5538 = vmatpush.bf16.msra.mxu0 %v4007
        %5539 = vmatpush.bf16.msra.mxu0 %v3998
        %5540 = vmatpush.bf16.msra.mxu0 %v3989
        %5541 = vmatpush.bf16.msra.mxu0 %v3980
        %5542 = vmatmul.bf16.gmra.mxu0 %v1076
        %v5543 = vpop.f32.mrf.mxu0
        %v5544 = vadd.f32 %v5531, %v5543
        %v5545 = vpop.f32.mrf.mxu0
        %5546 = vdwg.mxu0
        %5547 = vmatpush.bf16.msra.mxu0 %v3396
        %5548 = vmatpush.bf16.msra.mxu0 %v3387
        %5549 = vmatpush.bf16.msra.mxu0 %v3378
        %5550 = vmatpush.bf16.msra.mxu0 %v3369
        %5551 = vmatpush.bf16.msra.mxu0 %v3360
        %5552 = vmatpush.bf16.msra.mxu0 %v3351
        %5553 = vmatpush.bf16.msra.mxu0 %v3342
        %5554 = vmatpush.bf16.msra.mxu0 %v3333
        %5555 = vmatmul.bf16.gmra.mxu0 %v1065
        %v5556 = vpop.f32.mrf.mxu0
        %v5557 = vadd.f32 0.0, %v5556
        %v5558 = vpop.f32.mrf.mxu0
        %5559 = vdwg.mxu0
        %5560 = vmatpush.bf16.msra.mxu0 %v3468
        %5561 = vmatpush.bf16.msra.mxu0 %v3459
        %5562 = vmatpush.bf16.msra.mxu0 %v3450
        %5563 = vmatpush.bf16.msra.mxu0 %v3441
        %5564 = vmatpush.bf16.msra.mxu0 %v3432
        %5565 = vmatpush.bf16.msra.mxu0 %v3423
        %5566 = vmatpush.bf16.msra.mxu0 %v3414
        %5567 = vmatpush.bf16.msra.mxu0 %v3405
        %5568 = vmatmul.bf16.gmra.mxu0 %v1066
        %v5569 = vpop.f32.mrf.mxu0
        %v5570 = vadd.f32 %v5557, %v5569
        %v5571 = vpop.f32.mrf.mxu0
        %5572 = vdwg.mxu0
        %5573 = vmatpush.bf16.msra.mxu0 %v3540
        %5574 = vmatpush.bf16.msra.mxu0 %v3531
        %5575 = vmatpush.bf16.msra.mxu0 %v3522
        %5576 = vmatpush.bf16.msra.mxu0 %v3513
        %5577 = vmatpush.bf16.msra.mxu0 %v3504
        %5578 = vmatpush.bf16.msra.mxu0 %v3495
        %5579 = vmatpush.bf16.msra.mxu0 %v3486
        %5580 = vmatpush.bf16.msra.mxu0 %v3477
        %5581 = vmatmul.bf16.gmra.mxu0 %v1067
        %v5582 = vpop.f32.mrf.mxu0
        %v5583 = vadd.f32 %v5570, %v5582
        %v5584 = vpop.f32.mrf.mxu0
        %5585 = vdwg.mxu0
        %5586 = vmatpush.bf16.msra.mxu0 %v3612
        %5587 = vmatpush.bf16.msra.mxu0 %v3603
        %5588 = vmatpush.bf16.msra.mxu0 %v3594
        %5589 = vmatpush.bf16.msra.mxu0 %v3585
        %5590 = vmatpush.bf16.msra.mxu0 %v3576
        %5591 = vmatpush.bf16.msra.mxu0 %v3567
        %5592 = vmatpush.bf16.msra.mxu0 %v3558
        %5593 = vmatpush.bf16.msra.mxu0 %v3549
        %5594 = vmatmul.bf16.gmra.mxu0 %v1068
        %v5595 = vpop.f32.mrf.mxu0
        %v5596 = vadd.f32 %v5583, %v5595
        %v5597 = vpop.f32.mrf.mxu0
        %5598 = vdwg.mxu0
        %5599 = vmatpush.bf16.msra.mxu0 %v3684
        %5600 = vmatpush.bf16.msra.mxu0 %v3675
        %5601 = vmatpush.bf16.msra.mxu0 %v3666
        %5602 = vmatpush.bf16.msra.mxu0 %v3657
        %5603 = vmatpush.bf16.msra.mxu0 %v3648
        %5604 = vmatpush.bf16.msra.mxu0 %v3639
        %5605 = vmatpush.bf16.msra.mxu0 %v3630
        %5606 = vmatpush.bf16.msra.mxu0 %v3621
        %5607 = vmatmul.bf16.gmra.mxu0 %v1069
        %v5608 = vpop.f32.mrf.mxu0
        %v5609 = vadd.f32 %v5596, %v5608
        %v5610 = vpop.f32.mrf.mxu0
        %5611 = vdwg.mxu0
        %5612 = vmatpush.bf16.msra.mxu0 %v3756
        %5613 = vmatpush.bf16.msra.mxu0 %v3747
        %5614 = vmatpush.bf16.msra.mxu0 %v3738
        %5615 = vmatpush.bf16.msra.mxu0 %v3729
        %5616 = vmatpush.bf16.msra.mxu0 %v3720
        %5617 = vmatpush.bf16.msra.mxu0 %v3711
        %5618 = vmatpush.bf16.msra.mxu0 %v3702
        %5619 = vmatpush.bf16.msra.mxu0 %v3693
        %5620 = vmatmul.bf16.gmra.mxu0 %v1070
        %v5621 = vpop.f32.mrf.mxu0
        %v5622 = vadd.f32 %v5609, %v5621
        %v5623 = vpop.f32.mrf.mxu0
        %5624 = vdwg.mxu0
        %5625 = vmatpush.bf16.msra.mxu0 %v3828
        %5626 = vmatpush.bf16.msra.mxu0 %v3819
        %5627 = vmatpush.bf16.msra.mxu0 %v3810
        %5628 = vmatpush.bf16.msra.mxu0 %v3801
        %5629 = vmatpush.bf16.msra.mxu0 %v3792
        %5630 = vmatpush.bf16.msra.mxu0 %v3783
        %5631 = vmatpush.bf16.msra.mxu0 %v3774
        %5632 = vmatpush.bf16.msra.mxu0 %v3765
        %5633 = vmatmul.bf16.gmra.mxu0 %v1071
        %v5634 = vpop.f32.mrf.mxu0
        %v5635 = vadd.f32 %v5622, %v5634
        %v5636 = vpop.f32.mrf.mxu0
        %5637 = vdwg.mxu0
        %5638 = vmatpush.bf16.msra.mxu0 %v3900
        %5639 = vmatpush.bf16.msra.mxu0 %v3891
        %5640 = vmatpush.bf16.msra.mxu0 %v3882
        %5641 = vmatpush.bf16.msra.mxu0 %v3873
        %5642 = vmatpush.bf16.msra.mxu0 %v3864
        %5643 = vmatpush.bf16.msra.mxu0 %v3855
        %5644 = vmatpush.bf16.msra.mxu0 %v3846
        %5645 = vmatpush.bf16.msra.mxu0 %v3837
        %5646 = vmatmul.bf16.gmra.mxu0 %v1072
        %v5647 = vpop.f32.mrf.mxu0
        %v5648 = vadd.f32 %v5635, %v5647
        %v5649 = vpop.f32.mrf.mxu0
        %5650 = vdwg.mxu0
        %5651 = vmatpush.bf16.msra.mxu0 %v3972
        %5652 = vmatpush.bf16.msra.mxu0 %v3963
        %5653 = vmatpush.bf16.msra.mxu0 %v3954
        %5654 = vmatpush.bf16.msra.mxu0 %v3945
        %5655 = vmatpush.bf16.msra.mxu0 %v3936
        %5656 = vmatpush.bf16.msra.mxu0 %v3927
        %5657 = vmatpush.bf16.msra.mxu0 %v3918
        %5658 = vmatpush.bf16.msra.mxu0 %v3909
        %5659 = vmatmul.bf16.gmra.mxu0 %v1075
        %v5660 = vpop.f32.mrf.mxu0
        %v5661 = vadd.f32 %v5648, %v5660
        %v5662 = vpop.f32.mrf.mxu0
        %5663 = vdwg.mxu0
        %5664 = vmatpush.bf16.msra.mxu0 %v4044
        %5665 = vmatpush.bf16.msra.mxu0 %v4035
        %5666 = vmatpush.bf16.msra.mxu0 %v4026
        %5667 = vmatpush.bf16.msra.mxu0 %v4017
        %5668 = vmatpush.bf16.msra.mxu0 %v4008
        %5669 = vmatpush.bf16.msra.mxu0 %v3999
        %5670 = vmatpush.bf16.msra.mxu0 %v3990
        %5671 = vmatpush.bf16.msra.mxu0 %v3981
        %5672 = vmatmul.bf16.gmra.mxu0 %v1076
        %v5673 = vpop.f32.mrf.mxu0
        %v5674 = vadd.f32 %v5661, %v5673
        %v5675 = vpop.f32.mrf.mxu0
        %5676 = vdwg.mxu0
        %5677 = vmatpush.bf16.msra.mxu0 %v3397
        %5678 = vmatpush.bf16.msra.mxu0 %v3388
        %5679 = vmatpush.bf16.msra.mxu0 %v3379
        %5680 = vmatpush.bf16.msra.mxu0 %v3370
        %5681 = vmatpush.bf16.msra.mxu0 %v3361
        %5682 = vmatpush.bf16.msra.mxu0 %v3352
        %5683 = vmatpush.bf16.msra.mxu0 %v3343
        %5684 = vmatpush.bf16.msra.mxu0 %v3334
        %5685 = vmatmul.bf16.gmra.mxu0 %v1065
        %v5686 = vpop.f32.mrf.mxu0
        %v5687 = vadd.f32 0.0, %v5686
        %v5688 = vpop.f32.mrf.mxu0
        %5689 = vdwg.mxu0
        %5690 = vmatpush.bf16.msra.mxu0 %v3469
        %5691 = vmatpush.bf16.msra.mxu0 %v3460
        %5692 = vmatpush.bf16.msra.mxu0 %v3451
        %5693 = vmatpush.bf16.msra.mxu0 %v3442
        %5694 = vmatpush.bf16.msra.mxu0 %v3433
        %5695 = vmatpush.bf16.msra.mxu0 %v3424
        %5696 = vmatpush.bf16.msra.mxu0 %v3415
        %5697 = vmatpush.bf16.msra.mxu0 %v3406
        %5698 = vmatmul.bf16.gmra.mxu0 %v1066
        %v5699 = vpop.f32.mrf.mxu0
        %v5700 = vadd.f32 %v5687, %v5699
        %v5701 = vpop.f32.mrf.mxu0
        %5702 = vdwg.mxu0
        %5703 = vmatpush.bf16.msra.mxu0 %v3541
        %5704 = vmatpush.bf16.msra.mxu0 %v3532
        %5705 = vmatpush.bf16.msra.mxu0 %v3523
        %5706 = vmatpush.bf16.msra.mxu0 %v3514
        %5707 = vmatpush.bf16.msra.mxu0 %v3505
        %5708 = vmatpush.bf16.msra.mxu0 %v3496
        %5709 = vmatpush.bf16.msra.mxu0 %v3487
        %5710 = vmatpush.bf16.msra.mxu0 %v3478
        %5711 = vmatmul.bf16.gmra.mxu0 %v1067
        %v5712 = vpop.f32.mrf.mxu0
        %v5713 = vadd.f32 %v5700, %v5712
        %v5714 = vpop.f32.mrf.mxu0
        %5715 = vdwg.mxu0
        %5716 = vmatpush.bf16.msra.mxu0 %v3613
        %5717 = vmatpush.bf16.msra.mxu0 %v3604
        %5718 = vmatpush.bf16.msra.mxu0 %v3595
        %5719 = vmatpush.bf16.msra.mxu0 %v3586
        %5720 = vmatpush.bf16.msra.mxu0 %v3577
        %5721 = vmatpush.bf16.msra.mxu0 %v3568
        %5722 = vmatpush.bf16.msra.mxu0 %v3559
        %5723 = vmatpush.bf16.msra.mxu0 %v3550
        %5724 = vmatmul.bf16.gmra.mxu0 %v1068
        %v5725 = vpop.f32.mrf.mxu0
        %v5726 = vadd.f32 %v5713, %v5725
        %v5727 = vpop.f32.mrf.mxu0
        %5728 = vdwg.mxu0
        %5729 = vmatpush.bf16.msra.mxu0 %v3685
        %5730 = vmatpush.bf16.msra.mxu0 %v3676
        %5731 = vmatpush.bf16.msra.mxu0 %v3667
        %5732 = vmatpush.bf16.msra.mxu0 %v3658
        %5733 = vmatpush.bf16.msra.mxu0 %v3649
        %5734 = vmatpush.bf16.msra.mxu0 %v3640
        %5735 = vmatpush.bf16.msra.mxu0 %v3631
        %5736 = vmatpush.bf16.msra.mxu0 %v3622
        %5737 = vmatmul.bf16.gmra.mxu0 %v1069
        %v5738 = vpop.f32.mrf.mxu0
        %v5739 = vadd.f32 %v5726, %v5738
        %v5740 = vpop.f32.mrf.mxu0
        %5741 = vdwg.mxu0
        %5742 = vmatpush.bf16.msra.mxu0 %v3757
        %5743 = vmatpush.bf16.msra.mxu0 %v3748
        %5744 = vmatpush.bf16.msra.mxu0 %v3739
        %5745 = vmatpush.bf16.msra.mxu0 %v3730
        %5746 = vmatpush.bf16.msra.mxu0 %v3721
        %5747 = vmatpush.bf16.msra.mxu0 %v3712
        %5748 = vmatpush.bf16.msra.mxu0 %v3703
        %5749 = vmatpush.bf16.msra.mxu0 %v3694
        %5750 = vmatmul.bf16.gmra.mxu0 %v1070
        %v5751 = vpop.f32.mrf.mxu0
        %v5752 = vadd.f32 %v5739, %v5751
        %v5753 = vpop.f32.mrf.mxu0
        %5754 = vdwg.mxu0
        %5755 = vmatpush.bf16.msra.mxu0 %v3829
        %5756 = vmatpush.bf16.msra.mxu0 %v3820
        %5757 = vmatpush.bf16.msra.mxu0 %v3811
        %5758 = vmatpush.bf16.msra.mxu0 %v3802
        %5759 = vmatpush.bf16.msra.mxu0 %v3793
        %5760 = vmatpush.bf16.msra.mxu0 %v3784
        %5761 = vmatpush.bf16.msra.mxu0 %v3775
        %5762 = vmatpush.bf16.msra.mxu0 %v3766
        %5763 = vmatmul.bf16.gmra.mxu0 %v1071
        %v5764 = vpop.f32.mrf.mxu0
        %v5765 = vadd.f32 %v5752, %v5764
        %v5766 = vpop.f32.mrf.mxu0
        %5767 = vdwg.mxu0
        %5768 = vmatpush.bf16.msra.mxu0 %v3901
        %5769 = vmatpush.bf16.msra.mxu0 %v3892
        %5770 = vmatpush.bf16.msra.mxu0 %v3883
        %5771 = vmatpush.bf16.msra.mxu0 %v3874
        %5772 = vmatpush.bf16.msra.mxu0 %v3865
        %5773 = vmatpush.bf16.msra.mxu0 %v3856
        %5774 = vmatpush.bf16.msra.mxu0 %v3847
        %5775 = vmatpush.bf16.msra.mxu0 %v3838
        %5776 = vmatmul.bf16.gmra.mxu0 %v1072
        %v5777 = vpop.f32.mrf.mxu0
        %v5778 = vadd.f32 %v5765, %v5777
        %v5779 = vpop.f32.mrf.mxu0
        %5780 = vdwg.mxu0
        %5781 = vmatpush.bf16.msra.mxu0 %v3973
        %5782 = vmatpush.bf16.msra.mxu0 %v3964
        %5783 = vmatpush.bf16.msra.mxu0 %v3955
        %5784 = vmatpush.bf16.msra.mxu0 %v3946
        %5785 = vmatpush.bf16.msra.mxu0 %v3937
        %5786 = vmatpush.bf16.msra.mxu0 %v3928
        %5787 = vmatpush.bf16.msra.mxu0 %v3919
        %5788 = vmatpush.bf16.msra.mxu0 %v3910
        %5789 = vmatmul.bf16.gmra.mxu0 %v1075
        %v5790 = vpop.f32.mrf.mxu0
        %v5791 = vadd.f32 %v5778, %v5790
        %v5792 = vpop.f32.mrf.mxu0
        %5793 = vdwg.mxu0
        %5794 = vmatpush.bf16.msra.mxu0 %v4045
        %5795 = vmatpush.bf16.msra.mxu0 %v4036
        %5796 = vmatpush.bf16.msra.mxu0 %v4027
        %5797 = vmatpush.bf16.msra.mxu0 %v4018
        %5798 = vmatpush.bf16.msra.mxu0 %v4009
        %5799 = vmatpush.bf16.msra.mxu0 %v4000
        %5800 = vmatpush.bf16.msra.mxu0 %v3991
        %5801 = vmatpush.bf16.msra.mxu0 %v3982
        %5802 = vmatmul.bf16.gmra.mxu0 %v1076
        %v5803 = vpop.f32.mrf.mxu0
        %v5804 = vadd.f32 %v5791, %v5803
        %v5805 = vpop.f32.mrf.mxu0
        %5806 = vdwg.mxu0
        %5807 = vmatpush.bf16.msra.mxu0 %v3398
        %5808 = vmatpush.bf16.msra.mxu0 %v3389
        %5809 = vmatpush.bf16.msra.mxu0 %v3380
        %5810 = vmatpush.bf16.msra.mxu0 %v3371
        %5811 = vmatpush.bf16.msra.mxu0 %v3362
        %5812 = vmatpush.bf16.msra.mxu0 %v3353
        %5813 = vmatpush.bf16.msra.mxu0 %v3344
        %5814 = vmatpush.bf16.msra.mxu0 %v3335
        %5815 = vmatmul.bf16.gmra.mxu0 %v1065
        %v5816 = vpop.f32.mrf.mxu0
        %v5817 = vadd.f32 0.0, %v5816
        %v5818 = vpop.f32.mrf.mxu0
        %5819 = vdwg.mxu0
        %5820 = vmatpush.bf16.msra.mxu0 %v3470
        %5821 = vmatpush.bf16.msra.mxu0 %v3461
        %5822 = vmatpush.bf16.msra.mxu0 %v3452
        %5823 = vmatpush.bf16.msra.mxu0 %v3443
        %5824 = vmatpush.bf16.msra.mxu0 %v3434
        %5825 = vmatpush.bf16.msra.mxu0 %v3425
        %5826 = vmatpush.bf16.msra.mxu0 %v3416
        %5827 = vmatpush.bf16.msra.mxu0 %v3407
        %5828 = vmatmul.bf16.gmra.mxu0 %v1066
        %v5829 = vpop.f32.mrf.mxu0
        %v5830 = vadd.f32 %v5817, %v5829
        %v5831 = vpop.f32.mrf.mxu0
        %5832 = vdwg.mxu0
        %5833 = vmatpush.bf16.msra.mxu0 %v3542
        %5834 = vmatpush.bf16.msra.mxu0 %v3533
        %5835 = vmatpush.bf16.msra.mxu0 %v3524
        %5836 = vmatpush.bf16.msra.mxu0 %v3515
        %5837 = vmatpush.bf16.msra.mxu0 %v3506
        %5838 = vmatpush.bf16.msra.mxu0 %v3497
        %5839 = vmatpush.bf16.msra.mxu0 %v3488
        %5840 = vmatpush.bf16.msra.mxu0 %v3479
        %5841 = vmatmul.bf16.gmra.mxu0 %v1067
        %v5842 = vpop.f32.mrf.mxu0
        %v5843 = vadd.f32 %v5830, %v5842
        %v5844 = vpop.f32.mrf.mxu0
        %5845 = vdwg.mxu0
        %5846 = vmatpush.bf16.msra.mxu0 %v3614
        %5847 = vmatpush.bf16.msra.mxu0 %v3605
        %5848 = vmatpush.bf16.msra.mxu0 %v3596
        %5849 = vmatpush.bf16.msra.mxu0 %v3587
        %5850 = vmatpush.bf16.msra.mxu0 %v3578
        %5851 = vmatpush.bf16.msra.mxu0 %v3569
        %5852 = vmatpush.bf16.msra.mxu0 %v3560
        %5853 = vmatpush.bf16.msra.mxu0 %v3551
        %5854 = vmatmul.bf16.gmra.mxu0 %v1068
        %v5855 = vpop.f32.mrf.mxu0
        %v5856 = vadd.f32 %v5843, %v5855
        %v5857 = vpop.f32.mrf.mxu0
        %5858 = vdwg.mxu0
        %5859 = vmatpush.bf16.msra.mxu0 %v3686
        %5860 = vmatpush.bf16.msra.mxu0 %v3677
        %5861 = vmatpush.bf16.msra.mxu0 %v3668
        %5862 = vmatpush.bf16.msra.mxu0 %v3659
        %5863 = vmatpush.bf16.msra.mxu0 %v3650
        %5864 = vmatpush.bf16.msra.mxu0 %v3641
        %5865 = vmatpush.bf16.msra.mxu0 %v3632
        %5866 = vmatpush.bf16.msra.mxu0 %v3623
        %5867 = vmatmul.bf16.gmra.mxu0 %v1069
        %v5868 = vpop.f32.mrf.mxu0
        %v5869 = vadd.f32 %v5856, %v5868
        %v5870 = vpop.f32.mrf.mxu0
        %5871 = vdwg.mxu0
        %5872 = vmatpush.bf16.msra.mxu0 %v3758
        %5873 = vmatpush.bf16.msra.mxu0 %v3749
        %5874 = vmatpush.bf16.msra.mxu0 %v3740
        %5875 = vmatpush.bf16.msra.mxu0 %v3731
        %5876 = vmatpush.bf16.msra.mxu0 %v3722
        %5877 = vmatpush.bf16.msra.mxu0 %v3713
        %5878 = vmatpush.bf16.msra.mxu0 %v3704
        %5879 = vmatpush.bf16.msra.mxu0 %v3695
        %5880 = vmatmul.bf16.gmra.mxu0 %v1070
        %v5881 = vpop.f32.mrf.mxu0
        %v5882 = vadd.f32 %v5869, %v5881
        %v5883 = vpop.f32.mrf.mxu0
        %5884 = vdwg.mxu0
        %5885 = vmatpush.bf16.msra.mxu0 %v3830
        %5886 = vmatpush.bf16.msra.mxu0 %v3821
        %5887 = vmatpush.bf16.msra.mxu0 %v3812
        %5888 = vmatpush.bf16.msra.mxu0 %v3803
        %5889 = vmatpush.bf16.msra.mxu0 %v3794
        %5890 = vmatpush.bf16.msra.mxu0 %v3785
        %5891 = vmatpush.bf16.msra.mxu0 %v3776
        %5892 = vmatpush.bf16.msra.mxu0 %v3767
        %5893 = vmatmul.bf16.gmra.mxu0 %v1071
        %v5894 = vpop.f32.mrf.mxu0
        %v5895 = vadd.f32 %v5882, %v5894
        %v5896 = vpop.f32.mrf.mxu0
        %5897 = vdwg.mxu0
        %5898 = vmatpush.bf16.msra.mxu0 %v3902
        %5899 = vmatpush.bf16.msra.mxu0 %v3893
        %5900 = vmatpush.bf16.msra.mxu0 %v3884
        %5901 = vmatpush.bf16.msra.mxu0 %v3875
        %5902 = vmatpush.bf16.msra.mxu0 %v3866
        %5903 = vmatpush.bf16.msra.mxu0 %v3857
        %5904 = vmatpush.bf16.msra.mxu0 %v3848
        %5905 = vmatpush.bf16.msra.mxu0 %v3839
        %5906 = vmatmul.bf16.gmra.mxu0 %v1072
        %v5907 = vpop.f32.mrf.mxu0
        %v5908 = vadd.f32 %v5895, %v5907
        %v5909 = vpop.f32.mrf.mxu0
        %5910 = vdwg.mxu0
        %5911 = vmatpush.bf16.msra.mxu0 %v3974
        %5912 = vmatpush.bf16.msra.mxu0 %v3965
        %5913 = vmatpush.bf16.msra.mxu0 %v3956
        %5914 = vmatpush.bf16.msra.mxu0 %v3947
        %5915 = vmatpush.bf16.msra.mxu0 %v3938
        %5916 = vmatpush.bf16.msra.mxu0 %v3929
        %5917 = vmatpush.bf16.msra.mxu0 %v3920
        %5918 = vmatpush.bf16.msra.mxu0 %v3911
        %5919 = vmatmul.bf16.gmra.mxu0 %v1075
        %v5920 = vpop.f32.mrf.mxu0
        %v5921 = vadd.f32 %v5908, %v5920
        %v5922 = vpop.f32.mrf.mxu0
        %5923 = vdwg.mxu0
        %5924 = vmatpush.bf16.msra.mxu0 %v4046
        %5925 = vmatpush.bf16.msra.mxu0 %v4037
        %5926 = vmatpush.bf16.msra.mxu0 %v4028
        %5927 = vmatpush.bf16.msra.mxu0 %v4019
        %5928 = vmatpush.bf16.msra.mxu0 %v4010
        %5929 = vmatpush.bf16.msra.mxu0 %v4001
        %5930 = vmatpush.bf16.msra.mxu0 %v3992
        %5931 = vmatpush.bf16.msra.mxu0 %v3983
        %5932 = vmatmul.bf16.gmra.mxu0 %v1076
        %v5933 = vpop.f32.mrf.mxu0
        %v5934 = vadd.f32 %v5921, %v5933
        %v5935 = vpop.f32.mrf.mxu0
        %5936 = vdwg.mxu0
        %v5945 = vrot.slane %v5024, 6
        %v5946 = vrot.slane %v5154, 4
        %v5947 = vrot.slane %v5284, 2
        %v5948 = vrot.slane %v5544, 6
        %v5949 = vrot.slane %v5674, 4
        %v5950 = vrot.slane %v5804, 2
        %vm5951 = vcmask 1041408
        %v5952 = vsel %vm5951, %v4894, %v5945
        %vm5953 = vcmask 1045508
        %v5954 = vsel %vm5953, %v5946, %v5947
        %vm5955 = vcmask 1043456
        %v5956 = vsel %vm5955, %v5952, %v5954
        %v5957 = vsel %vm5951, %v5414, %v5948
        %v5958 = vsel %vm5953, %v5949, %v5950
        %v5959 = vsel %vm5955, %v5957, %v5958
        %v5962 = vadd.f32 %v258, %v5956
        %v5963 = vadd.f32 %v259, %v5959
        %v5964 = vadd.f32 %v260, %v5934
        %5965 = vst [vmem:[#allocation2] sm:$0xff] %v5962
        %5966 = vst [vmem:[#allocation2 + $0x8] sm:$0xff] %v5963
        %5967 = vst [vmem:[#allocation2 + $0x10] sm:$0x3] %v5964
        // Predicated region
        $region41: #{vae_forward.7} parent=31 // pred_check
          %p5968 = pneg %p251
        $region42: #{vae_forward.7} parent=31 // pred_check_branch
          %5970 = sbr.rel (%p5968) target = $region44
        $region43: #{vae_forward.7} parent=31 // pred_region
          %v5971 = vld [vmem:[#allocation2] sm:$0xff]
          %v5972 = vld [vmem:[#allocation2 + $0x8] sm:$0xff]
          %v5973 = vld [vmem:[#allocation2 + $0x10] sm:$0x3]
          %v5974 = vld [vmem:[%s243] sm:$0xff]
          %v5975 = vld [vmem:[%s243 + $0x8] sm:$0x1]
          %v5978 = vperm.slane %v5974, 0
          %v5979 = vperm.slane %v5974, 1
          %v5980 = vperm.slane %v5974, 2
          %v5981 = vperm.slane %v5974, 3
          %v5982 = vperm.slane %v5974, 4
          %v5983 = vperm.slane %v5974, 5
          %v5984 = vperm.slane %v5974, 6
          %v5985 = vperm.slane %v5974, 7
          %v5986 = vperm.slane %v5975, 0
          %v5988 = vrot.slane %v5979, 6
          %v5989 = vrot.slane %v5980, 4
          %v5990 = vrot.slane %v5981, 2
          %v5991 = vrot.slane %v5983, 6
          %v5992 = vrot.slane %v5984, 4
          %v5993 = vrot.slane %v5985, 2
          %v5994 = vsel %vm5951, %v5978, %v5988
          %v5995 = vsel %vm5953, %v5989, %v5990
          %v5996 = vsel %vm5955, %v5994, %v5995
          %v5997 = vsel %vm5951, %v5982, %v5991
          %v5998 = vsel %vm5953, %v5992, %v5993
          %v5999 = vsel %vm5955, %v5997, %v5998
          %v6002 = vadd.f32 %v5971, %v5996
          %v6003 = vadd.f32 %v5972, %v5999
          %v6004 = vadd.f32 %v5973, %v5986
          %6005 = vst [vmem:[%s249] sm:$0xff] %v6002
          %6006 = vst [vmem:[%s249 + $0x8] sm:$0xff] %v6003
          %6007 = vst [vmem:[%s249 + $0x10] sm:$0x3] %v6004
        $region44: #{vae_forward.7} parent=31 // pred_fallthru
          _
        %s6008 = smul.u32 9, %s21
        %p6009 = scmp.lt.s32.totalorder %s6008, 17
        %s6010 = scalar_select %p6009, %s6008, 17
        %s6011 = smul.addr %s6010, 2
        %s6012 = scalar_lea.vmem %s3, %s6011
        // Predicated region
        $region45: #{vae_forward.7} parent=31 // pred_check
          %p6013 = pneg %p127
        $region46: #{vae_forward.7} parent=31 // pred_check_branch
          %6015 = sbr.rel (%p6013) target = $region48
        $region47: #{vae_forward.7} parent=31 // pred_region
          %s6016 = smul.u32 9, %s21
        $region48: #{vae_forward.7} parent=31 // pred_fallthru
          _
      $region32: #{vae_forward.7} parent=5 // pred_fallthru
        _
      %p6017 = scmp.le.s32.totalorder 2, %s12
      // Predicated region
      $region49: #{vae_forward.7} parent=5 // pred_check
        %p6018 = pneg %p6017
      $region50: #{vae_forward.7} parent=5 // pred_check_branch
        %6020 = sbr.rel (%p6018) target = $region52
      $region51: #{vae_forward.7} parent=5 // pred_region
        %s6021 = ssub.s32 %s12, 2
        // Predicated region
        $region53: #{vae_forward.7} parent=51 // pred_check
          %p6022 = pneg %p133
        $region54: #{vae_forward.7} parent=51 // pred_check_branch
          %6024 = sbr.rel (%p6022) target = $region56
        $region55: #{vae_forward.7} parent=51 // pred_region
          %s6025 = smul.u32 9, %s23
          %p6026 = scmp.lt.s32.totalorder %s6025, 17
          %s6027 = scalar_select %p6026, %s6025, 17
          %s6028 = smul.addr %s6027, 2
          %s6029 = scalar_lea.vmem %s3, %s6028
        $region56: #{vae_forward.7} parent=51 // pred_fallthru
          _
      $region52: #{vae_forward.7} parent=5 // pred_fallthru
        _
    $region6: #{vae_forward.7} parent=1 // loop_footer
      %s16 = sadd.s32 1, %s12
    $region7: #{vae_forward.7} parent=1 // loop_footer_branch
      %11 = sbr.rel target = $region3
    $region8: #{vae_forward.7} parent=1 // loop_exit
      _
    %6030 = vsyncpa [#allocation4], 1
    %s6031 = scalar_lea.sflag [#allocation4], 1
    %6032 = vsyncpa %s6031, 1

</llo_original>
